<compile_context>
chip_gen: v5e
topology: v5e:2x2
jax: 0.10.0
libtpu: 0.0.40
codegen_flags: <defaults>
</compile_context>

<pallas_src>
import functools

import jax
import jax.numpy as jnp
from jax import lax
from jax.experimental import pallas as pl
from jax.experimental.pallas import tpu as pltpu

F32 = jnp.float32
BF16 = jnp.bfloat16
EPS = 1e-5


def _cp(sem):
    return pltpu.CompilerParams(dimension_semantics=sem,
                                vmem_limit_bytes=32 << 20)


# ---------------------------------------------------------------------------
# Linear (bias=False) + ReLU
# ---------------------------------------------------------------------------
def _linear_relu_kernel(x_ref, w_ref, o_ref):
    acc = jnp.dot(x_ref[...], w_ref[...], preferred_element_type=jnp.float32)
    o_ref[...] = jnp.maximum(acc, 0.0).astype(o_ref.dtype)


def linear_relu(x, w_t):
    # x: [B, F] ; w_t: [F, O] (transposed PyTorch Linear weight) -> [B, O] bf16
    B, Fin = x.shape
    O = w_t.shape[1]
    return pl.pallas_call(
        _linear_relu_kernel,
        out_shape=jax.ShapeDtypeStruct((B, O), BF16),
        grid=(1,),
        in_specs=[pl.BlockSpec((B, Fin), lambda i: (0, 0)),
                  pl.BlockSpec((Fin, O), lambda i: (0, 0))],
        out_specs=pl.BlockSpec((B, O), lambda i: (0, 0)),
        compiler_params=_cp(("arbitrary",)),
    )(x.astype(BF16), w_t.astype(BF16))


# ---------------------------------------------------------------------------
# Shared helpers: im2col (3x3, pad=1) and parity-packed ConvT weight
# ---------------------------------------------------------------------------
def _im2col_3x3(x_nhwc):
    """x:[B,H,W,C] -> [B, H*W, 9*C]  (tap order dy-major, dx-minor), zero pad=1."""
    B, H, W, C = x_nhwc.shape
    xp = jnp.pad(x_nhwc, ((0, 0), (1, 1), (1, 1), (0, 0)))
    cols = [xp[:, dy:dy + H, dx:dx + W, :] for dy in range(3) for dx in range(3)]
    return jnp.concatenate(cols, axis=-1).reshape(B, H * W, 9 * C)


def pack_convT_weight(w_pt):
    """PyTorch ConvTranspose2d weight [IC,OC,4,4] -> parity-packed [9*IC, 4*OC].

    Row block t = dy*3+dx holds the weight applied to padded-input tap
    xp[i+dy, j+dx]; column block p = r*2+c is output parity (2i+r, 2j+c).
    kernel index: kh = 3-2*dy+r, kw = 3-2*dx+c  (zero where out of [0,4)).
    """
    IC, OC = w_pt.shape[0], w_pt.shape[1]
    w_hw = jnp.transpose(w_pt, (2, 3, 0, 1))            # [4(kh),4(kw),IC,OC]
    d = jnp.arange(3)
    r = jnp.arange(2)
    k = 3 - 2 * d[:, None] + r[None, :]                  # [3,2]
    valid = (k >= 0) & (k <= 3)
    kc = jnp.clip(k, 0, 3)
    # result[dy,dx,r,c,ic,oc] = w_hw[kh(dy,r), kw(dx,c)]
    wb = w_hw[kc[:, None, :, None], kc[None, :, None, :]]
    mask = valid[:, None, :, None] & valid[None, :, None, :]
    wb = wb * mask[..., None, None].astype(wb.dtype)
    wb = jnp.transpose(wb, (0, 1, 4, 2, 3, 5))           # [dy,dx,IC,r,c,OC]
    return wb.reshape(9 * IC, 4 * OC)


# ---------------------------------------------------------------------------
# ConvTranspose2d(4,2,1) as one parity-packed matmul + fused BN partial stats
# ---------------------------------------------------------------------------
def _convt_mm_kernel(x_ref, w_ref, o_ref, s_ref):
    acc = jnp.dot(x_ref[0], w_ref[...], preferred_element_type=jnp.float32)
    o_ref[0] = acc.astype(o_ref.dtype)
    s_ref[0, 0] = jnp.concatenate(
        [jnp.sum(acc, axis=0, keepdims=True),
         jnp.sum(acc * acc, axis=0, keepdims=True)], axis=0)


def conv_transpose_bn_relu(x_nhwc, w_packed, gamma, beta, *, tile_m=512):
    """x:[B,H,W,IC] bf16 -> ConvT(4,2,1) + BatchNorm(train) + ReLU -> [B,2H,2W,OC] bf16."""
    B, H, W, IC = x_nhwc.shape
    OC4 = w_packed.shape[1]
    OC = OC4 // 4
    M = H * W
    tm = min(M, tile_m)
    nT = M // tm

    xcol = _im2col_3x3(x_nhwc).astype(BF16)               # [B, M, 9*IC]
    y_packed, stats = pl.pallas_call(
        _convt_mm_kernel,
        out_shape=(jax.ShapeDtypeStruct((B, M, OC4), BF16),
                   jax.ShapeDtypeStruct((B, nT, 2, OC4), F32)),
        grid=(B, nT),
        in_specs=[pl.BlockSpec((1, tm, 9 * IC), lambda b, t: (b, t, 0)),
                  pl.BlockSpec((9 * IC, OC4), lambda b, t: (0, 0))],
        out_specs=(pl.BlockSpec((1, tm, OC4), lambda b, t: (b, t, 0)),
                   pl.BlockSpec((1, 1, 2, OC4), lambda b, t: (b, t, 0, 0))),
        compiler_params=_cp(("parallel", "parallel")),
    )(xcol, w_packed.astype(BF16))

    # BatchNorm (training mode, biased variance, eps=1e-5) from fused partials.
    tot = jnp.sum(stats, axis=(0, 1))                     # [2, 4*OC]
    cnt = float(B * M * 4)                                # = B * (2H) * (2W)
    mean = jnp.sum(tot[0].reshape(4, OC), axis=0) / cnt
    ex2 = jnp.sum(tot[1].reshape(4, OC), axis=0) / cnt
    var = ex2 - mean * mean
    scale = gamma * lax.rsqrt(var + EPS)
    shift = beta - mean * scale
    # TODO(synk): running_mean / running_var buffer updates (stateful training
    # bookkeeping) are skipped; they do not affect the forward output.

    # Parity un-pack -> [B, 2H, 2W, OC], then BN + ReLU (f32 math, bf16 out).
    y = y_packed.reshape(B, H, W, 2, 2, OC)
    y = y.transpose(0, 1, 3, 2, 4, 5).reshape(B, 2 * H, 2 * W, OC)
    y = jnp.maximum(y.astype(F32) * scale + shift, 0.0)
    return y.astype(BF16)


# ---------------------------------------------------------------------------
# Conv2d(IC, 3, 3, 1, 1, bias=False) + tanh
# ---------------------------------------------------------------------------
def _conv_tanh_kernel(x_ref, w_ref, o_ref):
    acc = jnp.dot(x_ref[0], w_ref[...], preferred_element_type=jnp.float32)
    o_ref[0] = jnp.tanh(acc).astype(o_ref.dtype)


def conv3x3_tanh(x_nhwc, w_pt, *, tile_m=2048):
    """x:[B,H,W,IC] bf16 ; w_pt:[OC,IC,3,3] -> tanh(conv) [B,H,W,OC] f32."""
    B, H, W, IC = x_nhwc.shape
    OC = w_pt.shape[0]
    M = H * W
    tm = min(M, tile_m)
    nT = M // tm

    xcol = _im2col_3x3(x_nhwc).astype(BF16)               # [B, M, 9*IC]
    wf = jnp.transpose(w_pt, (2, 3, 1, 0)).reshape(9 * IC, OC).astype(BF16)
    y = pl.pallas_call(
        _conv_tanh_kernel,
        out_shape=jax.ShapeDtypeStruct((B, M, OC), F32),
        grid=(B, nT),
        in_specs=[pl.BlockSpec((1, tm, 9 * IC), lambda b, t: (b, t, 0)),
                  pl.BlockSpec((9 * IC, OC), lambda b, t: (0, 0))],
        out_specs=pl.BlockSpec((1, tm, OC), lambda b, t: (b, t, 0)),
        compiler_params=_cp(("parallel", "parallel")),
    )(xcol, wf)
    return y.reshape(B, H, W, OC)


# ---------------------------------------------------------------------------
# G: parameter init + forward
# ---------------------------------------------------------------------------
def init_g_params(features, key):
    ks = jax.random.split(key, 7)
    p = {}
    # nn.Linear(F, 16F, bias=False).weight is [16F, F]; we store its transpose.
    p['fc_w'] = jax.random.normal(ks[0], (features, 16 * features), F32) * 0.05
    for i in range(5):
        # nn.ConvTranspose2d(F, F, 4, 2, 1, bias=False).weight: [F, F, 4, 4]
        p[f'up{i}_w'] = jax.random.normal(ks[1 + i], (features, features, 4, 4),
                                          F32) * 0.05
        # nn.BatchNorm2d(F): weight=1, bias=0 at init
        p[f'up{i}_gamma'] = jnp.ones((features,), F32)
        p[f'up{i}_beta'] = jnp.zeros((features,), F32)
    # nn.Conv2d(F, 3, 3, 1, 1, bias=False).weight: [3, F, 3, 3]
    p['final_w'] = jax.random.normal(ks[6], (3, features, 3, 3), F32) * 0.05
    return p


def g_forward(x, params, features):
    # x: [B, features]  ->  [B, 3, 128, 128]  (NCHW, same as PyTorch G)
    h = linear_relu(x, params['fc_w'])                    # [B, 16F] bf16
    B = h.shape[0]
    h = h.reshape(B, features, 4, 4)                      # PyTorch .view (NCHW)
    h = jnp.transpose(h, (0, 2, 3, 1))                    # -> NHWC [B,4,4,F]
    for i in range(5):
        wp = pack_convT_weight(params[f'up{i}_w'])        # [9F, 4F]
        h = conv_transpose_bn_relu(h, wp, params[f'up{i}_gamma'],
                                   params[f'up{i}_beta'])
    y = conv3x3_tanh(h, params['final_w'])                # [B,128,128,3] f32
    return jnp.transpose(y, (0, 3, 1, 2))                 # -> NCHW


if __name__ == "__main__":
    features = 32
    batch = 2
    key = jax.random.PRNGKey(0)
    kx, kp = jax.random.split(key)
    x = jax.random.normal(kx, (batch, features), F32)
    params = init_g_params(features, kp)

    fwd = jax.jit(functools.partial(g_forward, features=features))
    out = fwd(x, params)
    out = jax.block_until_ready(out)

    assert out.shape == (batch, 3, 128, 128), out.shape
    assert out.dtype == F32
    assert bool(jnp.all(jnp.isfinite(out)))
    assert bool(jnp.all(jnp.abs(out) <= 1.0))  # tanh range
    print("KERNEL_OK")
</pallas_src>

<mosaic_0001>
module attributes {stable_mosaic.version = 11 : i64} {
  func.func @_linear_relu_kernel(%arg0: i32, %arg1: memref<2x32xbf16, #tpu.memory_space<vmem>>, %arg2: memref<32x512xbf16, #tpu.memory_space<vmem>>, %arg3: memref<2x512xbf16, #tpu.memory_space<vmem>>) attributes {dimension_semantics = [#tpu.dimension_semantics<arbitrary>], iteration_bounds = array<i64: 1>, scalar_prefetch = 0 : i64, scratch_operands = 0 : i64, tpu.core_type = #tpu.core_type<tc>, window_params = [{pipeline_mode = #tpu.pipeline_mode<synchronous>, transform_indices = @transform_0, window_bounds = array<i64: 2, 32>}, {pipeline_mode = #tpu.pipeline_mode<synchronous>, transform_indices = @transform_1, window_bounds = array<i64: 32, 512>}, {pipeline_mode = #tpu.pipeline_mode<synchronous>, transform_indices = @transform_2, window_bounds = array<i64: 2, 512>}]} {
    %c0 = arith.constant 0 : index
    %c0_0 = arith.constant 0 : index
    %0 = vector.load %arg1[%c0, %c0_0] : memref<2x32xbf16, #tpu.memory_space<vmem>>, vector<2x32xbf16>
    %c0_1 = arith.constant 0 : index
    %c0_2 = arith.constant 0 : index
    %1 = vector.load %arg2[%c0_1, %c0_2] : memref<32x512xbf16, #tpu.memory_space<vmem>>, vector<32x512xbf16>
    %cst = arith.constant dense<0.000000e+00> : vector<2x512xf32>
    %2 = tpu.matmul %0, %1, %cst {dimension_numbers = #tpu.dot_dimension_numbers<[1], [0], [0], [1], [0, 0, 1, 1], [], []>} : vector<2x32xbf16>, vector<32x512xbf16>, vector<2x512xf32> -> vector<2x512xf32>
    %cst_3 = arith.constant 0.000000e+00 : f32
    %3 = vector.broadcast %cst_3 : f32 to vector<2x512xf32>
    %4 = arith.maximumf %2, %3 : vector<2x512xf32>
    %5 = arith.truncf %4 : vector<2x512xf32> to vector<2x512xbf16>
    %c0_4 = arith.constant 0 : index
    %c0_5 = arith.constant 0 : index
    %6 = vector.load %arg3[%c0_4, %c0_5] : memref<2x512xbf16, #tpu.memory_space<vmem>>, vector<2x512xbf16>
    tpu.vector_store %arg3[%c0_4, %c0_5], %5 {strides = array<i32>} : memref<2x512xbf16, #tpu.memory_space<vmem>>, vector<2x512xbf16>,
    return
  }
  func.func @transform_0(%arg0: i32) -> (i32, i32) {
    %c0_i32 = arith.constant 0 : i32
    %c0_i32_0 = arith.constant 0 : i32
    %c0_i32_1 = arith.constant 0 : i32
    return %c0_i32, %c0_i32_0 : i32, i32
  }
  func.func @transform_1(%arg0: i32) -> (i32, i32) {
    %c0_i32 = arith.constant 0 : i32
    %c0_i32_0 = arith.constant 0 : i32
    %c0_i32_1 = arith.constant 0 : i32
    return %c0_i32, %c0_i32_0 : i32, i32
  }
  func.func @transform_2(%arg0: i32) -> (i32, i32) {
    %c0_i32 = arith.constant 0 : i32
    %c0_i32_0 = arith.constant 0 : i32
    %c0_i32_1 = arith.constant 0 : i32
    return %c0_i32, %c0_i32_0 : i32, i32
  }
}

module attributes {stable_mosaic.version = 11 : i64} {
  func.func @_convt_mm_kernel(%arg0: i32, %arg1: i32, %arg2: memref<1x16x288xbf16, #tpu.memory_space<vmem>>, %arg3: memref<288x128xbf16, #tpu.memory_space<vmem>>, %arg4: memref<1x16x128xbf16, #tpu.memory_space<vmem>>, %arg5: memref<1x1x2x128xf32, #tpu.memory_space<vmem>>) attributes {dimension_semantics = [#tpu.dimension_semantics<parallel>, #tpu.dimension_semantics<parallel>], iteration_bounds = array<i64: 2, 1>, scalar_prefetch = 0 : i64, scratch_operands = 0 : i64, tpu.core_type = #tpu.core_type<tc>, window_params = [{transform_indices = @transform_0, window_bounds = array<i64: 1, 16, 288>}, {pipeline_mode = #tpu.pipeline_mode<synchronous>, transform_indices = @transform_1, window_bounds = array<i64: 288, 128>}, {transform_indices = @transform_2, window_bounds = array<i64: 1, 16, 128>}, {transform_indices = @transform_3, window_bounds = array<i64: 1, 1, 2, 128>}]} {
    %c0 = arith.constant 0 : index
    %c0_0 = arith.constant 0 : index
    %c0_1 = arith.constant 0 : index
    %0 = vector.load %arg2[%c0, %c0_0, %c0_1] : memref<1x16x288xbf16, #tpu.memory_space<vmem>>, vector<1x16x288xbf16>
    %1 = vector.shape_cast %0 : vector<1x16x288xbf16> to vector<16x288xbf16>
    %c0_2 = arith.constant 0 : index
    %c0_3 = arith.constant 0 : index
    %2 = vector.load %arg3[%c0_2, %c0_3] : memref<288x128xbf16, #tpu.memory_space<vmem>>, vector<288x128xbf16>
    %cst = arith.constant dense<0.000000e+00> : vector<16x128xf32>
    %3 = tpu.matmul %1, %2, %cst {dimension_numbers = #tpu.dot_dimension_numbers<[1], [0], [0], [1], [0, 0, 1, 1], [], []>} : vector<16x288xbf16>, vector<288x128xbf16>, vector<16x128xf32> -> vector<16x128xf32>
    %4 = arith.truncf %3 : vector<16x128xf32> to vector<16x128xbf16>
    %c0_4 = arith.constant 0 : index
    %c0_5 = arith.constant 0 : index
    %c0_6 = arith.constant 0 : index
    %5 = vector.load %arg4[%c0_4, %c0_5, %c0_6] : memref<1x16x128xbf16, #tpu.memory_space<vmem>>, vector<1x16x128xbf16>
    %6 = vector.shape_cast %5 : vector<1x16x128xbf16> to vector<16x128xbf16>
    %7 = vector.shape_cast %4 : vector<16x128xbf16> to vector<1x16x128xbf16>
    tpu.vector_store %arg4[%c0_4, %c0_5, %c0_6], %7 {strides = array<i32>} : memref<1x16x128xbf16, #tpu.memory_space<vmem>>, vector<1x16x128xbf16>,
    %cst_7 = arith.constant dense<0.000000e+00> : vector<128xf32>
    %8 = vector.multi_reduction <add>, %3, %cst_7 [0] : vector<16x128xf32> to vector<128xf32>
    %9 = vector.shape_cast %8 : vector<128xf32> to vector<1x128xf32>
    %10 = arith.mulf %3, %3 : vector<16x128xf32>
    %cst_8 = arith.constant dense<0.000000e+00> : vector<128xf32>
    %11 = vector.multi_reduction <add>, %10, %cst_8 [0] : vector<16x128xf32> to vector<128xf32>
    %12 = vector.shape_cast %11 : vector<128xf32> to vector<1x128xf32>
    %13 = tpu.concatenate %9, %12 in 0 : vector<1x128xf32>, vector<1x128xf32> -> vector<2x128xf32>
    %c0_9 = arith.constant 0 : index
    %c0_10 = arith.constant 0 : index
    %c0_11 = arith.constant 0 : index
    %c0_12 = arith.constant 0 : index
    %14 = vector.load %arg5[%c0_9, %c0_10, %c0_11, %c0_12] : memref<1x1x2x128xf32, #tpu.memory_space<vmem>>, vector<1x1x2x128xf32>
    %15 = vector.shape_cast %14 : vector<1x1x2x128xf32> to vector<2x128xf32>
    %16 = vector.shape_cast %13 : vector<2x128xf32> to vector<1x1x2x128xf32>
    tpu.vector_store %arg5[%c0_9, %c0_10, %c0_11, %c0_12], %16 {strides = array<i32>} : memref<1x1x2x128xf32, #tpu.memory_space<vmem>>, vector<1x1x2x128xf32>,
    return
  }
  func.func @transform_0(%arg0: i32, %arg1: i32) -> (i32, i32, i32) {
    %c0_i32 = arith.constant 0 : i32
    %c0_i32_0 = arith.constant 0 : i32
    return %arg0, %arg1, %c0_i32 : i32, i32, i32
  }
  func.func @transform_1(%arg0: i32, %arg1: i32) -> (i32, i32) {
    %c0_i32 = arith.constant 0 : i32
    %c0_i32_0 = arith.constant 0 : i32
    %c0_i32_1 = arith.constant 0 : i32
    return %c0_i32, %c0_i32_0 : i32, i32
  }
  func.func @transform_2(%arg0: i32, %arg1: i32) -> (i32, i32, i32) {
    %c0_i32 = arith.constant 0 : i32
    %c0_i32_0 = arith.constant 0 : i32
    return %arg0, %arg1, %c0_i32 : i32, i32, i32
  }
  func.func @transform_3(%arg0: i32, %arg1: i32) -> (i32, i32, i32, i32) {
    %c0_i32 = arith.constant 0 : i32
    %c0_i32_0 = arith.constant 0 : i32
    %c0_i32_1 = arith.constant 0 : i32
    return %arg0, %arg1, %c0_i32, %c0_i32_0 : i32, i32, i32, i32
  }
}

module attributes {stable_mosaic.version = 11 : i64} {
  func.func @_convt_mm_kernel(%arg0: i32, %arg1: i32, %arg2: memref<1x64x288xbf16, #tpu.memory_space<vmem>>, %arg3: memref<288x128xbf16, #tpu.memory_space<vmem>>, %arg4: memref<1x64x128xbf16, #tpu.memory_space<vmem>>, %arg5: memref<1x1x2x128xf32, #tpu.memory_space<vmem>>) attributes {dimension_semantics = [#tpu.dimension_semantics<parallel>, #tpu.dimension_semantics<parallel>], iteration_bounds = array<i64: 2, 1>, scalar_prefetch = 0 : i64, scratch_operands = 0 : i64, tpu.core_type = #tpu.core_type<tc>, window_params = [{transform_indices = @transform_0, window_bounds = array<i64: 1, 64, 288>}, {pipeline_mode = #tpu.pipeline_mode<synchronous>, transform_indices = @transform_1, window_bounds = array<i64: 288, 128>}, {transform_indices = @transform_2, window_bounds = array<i64: 1, 64, 128>}, {transform_indices = @transform_3, window_bounds = array<i64: 1, 1, 2, 128>}]} {
    %c0 = arith.constant 0 : index
    %c0_0 = arith.constant 0 : index
    %c0_1 = arith.constant 0 : index
    %0 = vector.load %arg2[%c0, %c0_0, %c0_1] : memref<1x64x288xbf16, #tpu.memory_space<vmem>>, vector<1x64x288xbf16>
    %1 = vector.shape_cast %0 : vector<1x64x288xbf16> to vector<64x288xbf16>
    %c0_2 = arith.constant 0 : index
    %c0_3 = arith.constant 0 : index
    %2 = vector.load %arg3[%c0_2, %c0_3] : memref<288x128xbf16, #tpu.memory_space<vmem>>, vector<288x128xbf16>
    %cst = arith.constant dense<0.000000e+00> : vector<64x128xf32>
    %3 = tpu.matmul %1, %2, %cst {dimension_numbers = #tpu.dot_dimension_numbers<[1], [0], [0], [1], [0, 0, 1, 1], [], []>} : vector<64x288xbf16>, vector<288x128xbf16>, vector<64x128xf32> -> vector<64x128xf32>
    %4 = arith.truncf %3 : vector<64x128xf32> to vector<64x128xbf16>
    %c0_4 = arith.constant 0 : index
    %c0_5 = arith.constant 0 : index
    %c0_6 = arith.constant 0 : index
    %5 = vector.load %arg4[%c0_4, %c0_5, %c0_6] : memref<1x64x128xbf16, #tpu.memory_space<vmem>>, vector<1x64x128xbf16>
    %6 = vector.shape_cast %5 : vector<1x64x128xbf16> to vector<64x128xbf16>
    %7 = vector.shape_cast %4 : vector<64x128xbf16> to vector<1x64x128xbf16>
    tpu.vector_store %arg4[%c0_4, %c0_5, %c0_6], %7 {strides = array<i32>} : memref<1x64x128xbf16, #tpu.memory_space<vmem>>, vector<1x64x128xbf16>,
    %cst_7 = arith.constant dense<0.000000e+00> : vector<128xf32>
    %8 = vector.multi_reduction <add>, %3, %cst_7 [0] : vector<64x128xf32> to vector<128xf32>
    %9 = vector.shape_cast %8 : vector<128xf32> to vector<1x128xf32>
    %10 = arith.mulf %3, %3 : vector<64x128xf32>
    %cst_8 = arith.constant dense<0.000000e+00> : vector<128xf32>
    %11 = vector.multi_reduction <add>, %10, %cst_8 [0] : vector<64x128xf32> to vector<128xf32>
    %12 = vector.shape_cast %11 : vector<128xf32> to vector<1x128xf32>
    %13 = tpu.concatenate %9, %12 in 0 : vector<1x128xf32>, vector<1x128xf32> -> vector<2x128xf32>
    %c0_9 = arith.constant 0 : index
    %c0_10 = arith.constant 0 : index
    %c0_11 = arith.constant 0 : index
    %c0_12 = arith.constant 0 : index
    %14 = vector.load %arg5[%c0_9, %c0_10, %c0_11, %c0_12] : memref<1x1x2x128xf32, #tpu.memory_space<vmem>>, vector<1x1x2x128xf32>
    %15 = vector.shape_cast %14 : vector<1x1x2x128xf32> to vector<2x128xf32>
    %16 = vector.shape_cast %13 : vector<2x128xf32> to vector<1x1x2x128xf32>
    tpu.vector_store %arg5[%c0_9, %c0_10, %c0_11, %c0_12], %16 {strides = array<i32>} : memref<1x1x2x128xf32, #tpu.memory_space<vmem>>, vector<1x1x2x128xf32>,
    return
  }
  func.func @transform_0(%arg0: i32, %arg1: i32) -> (i32, i32, i32) {
    %c0_i32 = arith.constant 0 : i32
    %c0_i32_0 = arith.constant 0 : i32
    return %arg0, %arg1, %c0_i32 : i32, i32, i32
  }
  func.func @transform_1(%arg0: i32, %arg1: i32) -> (i32, i32) {
    %c0_i32 = arith.constant 0 : i32
    %c0_i32_0 = arith.constant 0 : i32
    %c0_i32_1 = arith.constant 0 : i32
    return %c0_i32, %c0_i32_0 : i32, i32
  }
  func.func @transform_2(%arg0: i32, %arg1: i32) -> (i32, i32, i32) {
    %c0_i32 = arith.constant 0 : i32
    %c0_i32_0 = arith.constant 0 : i32
    return %arg0, %arg1, %c0_i32 : i32, i32, i32
  }
  func.func @transform_3(%arg0: i32, %arg1: i32) -> (i32, i32, i32, i32) {
    %c0_i32 = arith.constant 0 : i32
    %c0_i32_0 = arith.constant 0 : i32
    %c0_i32_1 = arith.constant 0 : i32
    return %arg0, %arg1, %c0_i32, %c0_i32_0 : i32, i32, i32, i32
  }
}

module attributes {stable_mosaic.version = 11 : i64} {
  func.func @_convt_mm_kernel(%arg0: i32, %arg1: i32, %arg2: memref<1x256x288xbf16, #tpu.memory_space<vmem>>, %arg3: memref<288x128xbf16, #tpu.memory_space<vmem>>, %arg4: memref<1x256x128xbf16, #tpu.memory_space<vmem>>, %arg5: memref<1x1x2x128xf32, #tpu.memory_space<vmem>>) attributes {dimension_semantics = [#tpu.dimension_semantics<parallel>, #tpu.dimension_semantics<parallel>], iteration_bounds = array<i64: 2, 1>, scalar_prefetch = 0 : i64, scratch_operands = 0 : i64, tpu.core_type = #tpu.core_type<tc>, window_params = [{transform_indices = @transform_0, window_bounds = array<i64: 1, 256, 288>}, {pipeline_mode = #tpu.pipeline_mode<synchronous>, transform_indices = @transform_1, window_bounds = array<i64: 288, 128>}, {transform_indices = @transform_2, window_bounds = array<i64: 1, 256, 128>}, {transform_indices = @transform_3, window_bounds = array<i64: 1, 1, 2, 128>}]} {
    %c0 = arith.constant 0 : index
    %c0_0 = arith.constant 0 : index
    %c0_1 = arith.constant 0 : index
    %0 = vector.load %arg2[%c0, %c0_0, %c0_1] : memref<1x256x288xbf16, #tpu.memory_space<vmem>>, vector<1x256x288xbf16>
    %1 = vector.shape_cast %0 : vector<1x256x288xbf16> to vector<256x288xbf16>
    %c0_2 = arith.constant 0 : index
    %c0_3 = arith.constant 0 : index
    %2 = vector.load %arg3[%c0_2, %c0_3] : memref<288x128xbf16, #tpu.memory_space<vmem>>, vector<288x128xbf16>
    %cst = arith.constant dense<0.000000e+00> : vector<256x128xf32>
    %3 = tpu.matmul %1, %2, %cst {dimension_numbers = #tpu.dot_dimension_numbers<[1], [0], [0], [1], [0, 0, 1, 1], [], []>} : vector<256x288xbf16>, vector<288x128xbf16>, vector<256x128xf32> -> vector<256x128xf32>
    %4 = arith.truncf %3 : vector<256x128xf32> to vector<256x128xbf16>
    %c0_4 = arith.constant 0 : index
    %c0_5 = arith.constant 0 : index
    %c0_6 = arith.constant 0 : index
    %5 = vector.load %arg4[%c0_4, %c0_5, %c0_6] : memref<1x256x128xbf16, #tpu.memory_space<vmem>>, vector<1x256x128xbf16>
    %6 = vector.shape_cast %5 : vector<1x256x128xbf16> to vector<256x128xbf16>
    %7 = vector.shape_cast %4 : vector<256x128xbf16> to vector<1x256x128xbf16>
    tpu.vector_store %arg4[%c0_4, %c0_5, %c0_6], %7 {strides = array<i32>} : memref<1x256x128xbf16, #tpu.memory_space<vmem>>, vector<1x256x128xbf16>,
    %cst_7 = arith.constant dense<0.000000e+00> : vector<128xf32>
    %8 = vector.multi_reduction <add>, %3, %cst_7 [0] : vector<256x128xf32> to vector<128xf32>
    %9 = vector.shape_cast %8 : vector<128xf32> to vector<1x128xf32>
    %10 = arith.mulf %3, %3 : vector<256x128xf32>
    %cst_8 = arith.constant dense<0.000000e+00> : vector<128xf32>
    %11 = vector.multi_reduction <add>, %10, %cst_8 [0] : vector<256x128xf32> to vector<128xf32>
    %12 = vector.shape_cast %11 : vector<128xf32> to vector<1x128xf32>
    %13 = tpu.concatenate %9, %12 in 0 : vector<1x128xf32>, vector<1x128xf32> -> vector<2x128xf32>
    %c0_9 = arith.constant 0 : index
    %c0_10 = arith.constant 0 : index
    %c0_11 = arith.constant 0 : index
    %c0_12 = arith.constant 0 : index
    %14 = vector.load %arg5[%c0_9, %c0_10, %c0_11, %c0_12] : memref<1x1x2x128xf32, #tpu.memory_space<vmem>>, vector<1x1x2x128xf32>
    %15 = vector.shape_cast %14 : vector<1x1x2x128xf32> to vector<2x128xf32>
    %16 = vector.shape_cast %13 : vector<2x128xf32> to vector<1x1x2x128xf32>
    tpu.vector_store %arg5[%c0_9, %c0_10, %c0_11, %c0_12], %16 {strides = array<i32>} : memref<1x1x2x128xf32, #tpu.memory_space<vmem>>, vector<1x1x2x128xf32>,
    return
  }
  func.func @transform_0(%arg0: i32, %arg1: i32) -> (i32, i32, i32) {
    %c0_i32 = arith.constant 0 : i32
    %c0_i32_0 = arith.constant 0 : i32
    return %arg0, %arg1, %c0_i32 : i32, i32, i32
  }
  func.func @transform_1(%arg0: i32, %arg1: i32) -> (i32, i32) {
    %c0_i32 = arith.constant 0 : i32
    %c0_i32_0 = arith.constant 0 : i32
    %c0_i32_1 = arith.constant 0 : i32
    return %c0_i32, %c0_i32_0 : i32, i32
  }
  func.func @transform_2(%arg0: i32, %arg1: i32) -> (i32, i32, i32) {
    %c0_i32 = arith.constant 0 : i32
    %c0_i32_0 = arith.constant 0 : i32
    return %arg0, %arg1, %c0_i32 : i32, i32, i32
  }
  func.func @transform_3(%arg0: i32, %arg1: i32) -> (i32, i32, i32, i32) {
    %c0_i32 = arith.constant 0 : i32
    %c0_i32_0 = arith.constant 0 : i32
    %c0_i32_1 = arith.constant 0 : i32
    return %arg0, %arg1, %c0_i32, %c0_i32_0 : i32, i32, i32, i32
  }
}

module attributes {stable_mosaic.version = 11 : i64} {
  func.func @_convt_mm_kernel(%arg0: i32, %arg1: i32, %arg2: memref<1x512x288xbf16, #tpu.memory_space<vmem>>, %arg3: memref<288x128xbf16, #tpu.memory_space<vmem>>, %arg4: memref<1x512x128xbf16, #tpu.memory_space<vmem>>, %arg5: memref<1x1x2x128xf32, #tpu.memory_space<vmem>>) attributes {dimension_semantics = [#tpu.dimension_semantics<parallel>, #tpu.dimension_semantics<parallel>], iteration_bounds = array<i64: 2, 2>, scalar_prefetch = 0 : i64, scratch_operands = 0 : i64, tpu.core_type = #tpu.core_type<tc>, window_params = [{transform_indices = @transform_0, window_bounds = array<i64: 1, 512, 288>}, {pipeline_mode = #tpu.pipeline_mode<synchronous>, transform_indices = @transform_1, window_bounds = array<i64: 288, 128>}, {transform_indices = @transform_2, window_bounds = array<i64: 1, 512, 128>}, {transform_indices = @transform_3, window_bounds = array<i64: 1, 1, 2, 128>}]} {
    %c0 = arith.constant 0 : index
    %c0_0 = arith.constant 0 : index
    %c0_1 = arith.constant 0 : index
    %0 = vector.load %arg2[%c0, %c0_0, %c0_1] : memref<1x512x288xbf16, #tpu.memory_space<vmem>>, vector<1x512x288xbf16>
    %1 = vector.shape_cast %0 : vector<1x512x288xbf16> to vector<512x288xbf16>
    %c0_2 = arith.constant 0 : index
    %c0_3 = arith.constant 0 : index
    %2 = vector.load %arg3[%c0_2, %c0_3] : memref<288x128xbf16, #tpu.memory_space<vmem>>, vector<288x128xbf16>
    %cst = arith.constant dense<0.000000e+00> : vector<512x128xf32>
    %3 = tpu.matmul %1, %2, %cst {dimension_numbers = #tpu.dot_dimension_numbers<[1], [0], [0], [1], [0, 0, 1, 1], [], []>} : vector<512x288xbf16>, vector<288x128xbf16>, vector<512x128xf32> -> vector<512x128xf32>
    %4 = arith.truncf %3 : vector<512x128xf32> to vector<512x128xbf16>
    %c0_4 = arith.constant 0 : index
    %c0_5 = arith.constant 0 : index
    %c0_6 = arith.constant 0 : index
    %5 = vector.load %arg4[%c0_4, %c0_5, %c0_6] : memref<1x512x128xbf16, #tpu.memory_space<vmem>>, vector<1x512x128xbf16>
    %6 = vector.shape_cast %5 : vector<1x512x128xbf16> to vector<512x128xbf16>
    %7 = vector.shape_cast %4 : vector<512x128xbf16> to vector<1x512x128xbf16>
    tpu.vector_store %arg4[%c0_4, %c0_5, %c0_6], %7 {strides = array<i32>} : memref<1x512x128xbf16, #tpu.memory_space<vmem>>, vector<1x512x128xbf16>,
    %cst_7 = arith.constant dense<0.000000e+00> : vector<128xf32>
    %8 = vector.multi_reduction <add>, %3, %cst_7 [0] : vector<512x128xf32> to vector<128xf32>
    %9 = vector.shape_cast %8 : vector<128xf32> to vector<1x128xf32>
    %10 = arith.mulf %3, %3 : vector<512x128xf32>
    %cst_8 = arith.constant dense<0.000000e+00> : vector<128xf32>
    %11 = vector.multi_reduction <add>, %10, %cst_8 [0] : vector<512x128xf32> to vector<128xf32>
    %12 = vector.shape_cast %11 : vector<128xf32> to vector<1x128xf32>
    %13 = tpu.concatenate %9, %12 in 0 : vector<1x128xf32>, vector<1x128xf32> -> vector<2x128xf32>
    %c0_9 = arith.constant 0 : index
    %c0_10 = arith.constant 0 : index
    %c0_11 = arith.constant 0 : index
    %c0_12 = arith.constant 0 : index
    %14 = vector.load %arg5[%c0_9, %c0_10, %c0_11, %c0_12] : memref<1x1x2x128xf32, #tpu.memory_space<vmem>>, vector<1x1x2x128xf32>
    %15 = vector.shape_cast %14 : vector<1x1x2x128xf32> to vector<2x128xf32>
    %16 = vector.shape_cast %13 : vector<2x128xf32> to vector<1x1x2x128xf32>
    tpu.vector_store %arg5[%c0_9, %c0_10, %c0_11, %c0_12], %16 {strides = array<i32>} : memref<1x1x2x128xf32, #tpu.memory_space<vmem>>, vector<1x1x2x128xf32>,
    return
  }
  func.func @transform_0(%arg0: i32, %arg1: i32) -> (i32, i32, i32) {
    %c0_i32 = arith.constant 0 : i32
    %c0_i32_0 = arith.constant 0 : i32
    return %arg0, %arg1, %c0_i32 : i32, i32, i32
  }
  func.func @transform_1(%arg0: i32, %arg1: i32) -> (i32, i32) {
    %c0_i32 = arith.constant 0 : i32
    %c0_i32_0 = arith.constant 0 : i32
    %c0_i32_1 = arith.constant 0 : i32
    return %c0_i32, %c0_i32_0 : i32, i32
  }
  func.func @transform_2(%arg0: i32, %arg1: i32) -> (i32, i32, i32) {
    %c0_i32 = arith.constant 0 : i32
    %c0_i32_0 = arith.constant 0 : i32
    return %arg0, %arg1, %c0_i32 : i32, i32, i32
  }
  func.func @transform_3(%arg0: i32, %arg1: i32) -> (i32, i32, i32, i32) {
    %c0_i32 = arith.constant 0 : i32
    %c0_i32_0 = arith.constant 0 : i32
    %c0_i32_1 = arith.constant 0 : i32
    return %arg0, %arg1, %c0_i32, %c0_i32_0 : i32, i32, i32, i32
  }
}

module attributes {stable_mosaic.version = 11 : i64} {
  func.func @_convt_mm_kernel(%arg0: i32, %arg1: i32, %arg2: memref<1x512x288xbf16, #tpu.memory_space<vmem>>, %arg3: memref<288x128xbf16, #tpu.memory_space<vmem>>, %arg4: memref<1x512x128xbf16, #tpu.memory_space<vmem>>, %arg5: memref<1x1x2x128xf32, #tpu.memory_space<vmem>>) attributes {dimension_semantics = [#tpu.dimension_semantics<parallel>, #tpu.dimension_semantics<parallel>], iteration_bounds = array<i64: 2, 8>, scalar_prefetch = 0 : i64, scratch_operands = 0 : i64, tpu.core_type = #tpu.core_type<tc>, window_params = [{transform_indices = @transform_0, window_bounds = array<i64: 1, 512, 288>}, {pipeline_mode = #tpu.pipeline_mode<synchronous>, transform_indices = @transform_1, window_bounds = array<i64: 288, 128>}, {transform_indices = @transform_2, window_bounds = array<i64: 1, 512, 128>}, {transform_indices = @transform_3, window_bounds = array<i64: 1, 1, 2, 128>}]} {
    %c0 = arith.constant 0 : index
    %c0_0 = arith.constant 0 : index
    %c0_1 = arith.constant 0 : index
    %0 = vector.load %arg2[%c0, %c0_0, %c0_1] : memref<1x512x288xbf16, #tpu.memory_space<vmem>>, vector<1x512x288xbf16>
    %1 = vector.shape_cast %0 : vector<1x512x288xbf16> to vector<512x288xbf16>
    %c0_2 = arith.constant 0 : index
    %c0_3 = arith.constant 0 : index
    %2 = vector.load %arg3[%c0_2, %c0_3] : memref<288x128xbf16, #tpu.memory_space<vmem>>, vector<288x128xbf16>
    %cst = arith.constant dense<0.000000e+00> : vector<512x128xf32>
    %3 = tpu.matmul %1, %2, %cst {dimension_numbers = #tpu.dot_dimension_numbers<[1], [0], [0], [1], [0, 0, 1, 1], [], []>} : vector<512x288xbf16>, vector<288x128xbf16>, vector<512x128xf32> -> vector<512x128xf32>
    %4 = arith.truncf %3 : vector<512x128xf32> to vector<512x128xbf16>
    %c0_4 = arith.constant 0 : index
    %c0_5 = arith.constant 0 : index
    %c0_6 = arith.constant 0 : index
    %5 = vector.load %arg4[%c0_4, %c0_5, %c0_6] : memref<1x512x128xbf16, #tpu.memory_space<vmem>>, vector<1x512x128xbf16>
    %6 = vector.shape_cast %5 : vector<1x512x128xbf16> to vector<512x128xbf16>
    %7 = vector.shape_cast %4 : vector<512x128xbf16> to vector<1x512x128xbf16>
    tpu.vector_store %arg4[%c0_4, %c0_5, %c0_6], %7 {strides = array<i32>} : memref<1x512x128xbf16, #tpu.memory_space<vmem>>, vector<1x512x128xbf16>,
    %cst_7 = arith.constant dense<0.000000e+00> : vector<128xf32>
    %8 = vector.multi_reduction <add>, %3, %cst_7 [0] : vector<512x128xf32> to vector<128xf32>
    %9 = vector.shape_cast %8 : vector<128xf32> to vector<1x128xf32>
    %10 = arith.mulf %3, %3 : vector<512x128xf32>
    %cst_8 = arith.constant dense<0.000000e+00> : vector<128xf32>
    %11 = vector.multi_reduction <add>, %10, %cst_8 [0] : vector<512x128xf32> to vector<128xf32>
    %12 = vector.shape_cast %11 : vector<128xf32> to vector<1x128xf32>
    %13 = tpu.concatenate %9, %12 in 0 : vector<1x128xf32>, vector<1x128xf32> -> vector<2x128xf32>
    %c0_9 = arith.constant 0 : index
    %c0_10 = arith.constant 0 : index
    %c0_11 = arith.constant 0 : index
    %c0_12 = arith.constant 0 : index
    %14 = vector.load %arg5[%c0_9, %c0_10, %c0_11, %c0_12] : memref<1x1x2x128xf32, #tpu.memory_space<vmem>>, vector<1x1x2x128xf32>
    %15 = vector.shape_cast %14 : vector<1x1x2x128xf32> to vector<2x128xf32>
    %16 = vector.shape_cast %13 : vector<2x128xf32> to vector<1x1x2x128xf32>
    tpu.vector_store %arg5[%c0_9, %c0_10, %c0_11, %c0_12], %16 {strides = array<i32>} : memref<1x1x2x128xf32, #tpu.memory_space<vmem>>, vector<1x1x2x128xf32>,
    return
  }
  func.func @transform_0(%arg0: i32, %arg1: i32) -> (i32, i32, i32) {
    %c0_i32 = arith.constant 0 : i32
    %c0_i32_0 = arith.constant 0 : i32
    return %arg0, %arg1, %c0_i32 : i32, i32, i32
  }
  func.func @transform_1(%arg0: i32, %arg1: i32) -> (i32, i32) {
    %c0_i32 = arith.constant 0 : i32
    %c0_i32_0 = arith.constant 0 : i32
    %c0_i32_1 = arith.constant 0 : i32
    return %c0_i32, %c0_i32_0 : i32, i32
  }
  func.func @transform_2(%arg0: i32, %arg1: i32) -> (i32, i32, i32) {
    %c0_i32 = arith.constant 0 : i32
    %c0_i32_0 = arith.constant 0 : i32
    return %arg0, %arg1, %c0_i32 : i32, i32, i32
  }
  func.func @transform_3(%arg0: i32, %arg1: i32) -> (i32, i32, i32, i32) {
    %c0_i32 = arith.constant 0 : i32
    %c0_i32_0 = arith.constant 0 : i32
    %c0_i32_1 = arith.constant 0 : i32
    return %arg0, %arg1, %c0_i32, %c0_i32_0 : i32, i32, i32, i32
  }
}

module attributes {stable_mosaic.version = 11 : i64} {
  func.func @_conv_tanh_kernel(%arg0: i32, %arg1: i32, %arg2: memref<1x2048x288xbf16, #tpu.memory_space<vmem>>, %arg3: memref<288x3xbf16, #tpu.memory_space<vmem>>, %arg4: memref<1x2048x3xf32, #tpu.memory_space<vmem>>) attributes {dimension_semantics = [#tpu.dimension_semantics<parallel>, #tpu.dimension_semantics<parallel>], iteration_bounds = array<i64: 2, 8>, scalar_prefetch = 0 : i64, scratch_operands = 0 : i64, tpu.core_type = #tpu.core_type<tc>, window_params = [{transform_indices = @transform_0, window_bounds = array<i64: 1, 2048, 288>}, {pipeline_mode = #tpu.pipeline_mode<synchronous>, transform_indices = @transform_1, window_bounds = array<i64: 288, 3>}, {transform_indices = @transform_2, window_bounds = array<i64: 1, 2048, 3>}]} {
    %c0 = arith.constant 0 : index
    %c0_0 = arith.constant 0 : index
    %c0_1 = arith.constant 0 : index
    %0 = vector.load %arg2[%c0, %c0_0, %c0_1] : memref<1x2048x288xbf16, #tpu.memory_space<vmem>>, vector<1x2048x288xbf16>
    %1 = vector.shape_cast %0 : vector<1x2048x288xbf16> to vector<2048x288xbf16>
    %c0_2 = arith.constant 0 : index
    %c0_3 = arith.constant 0 : index
    %2 = vector.load %arg3[%c0_2, %c0_3] : memref<288x3xbf16, #tpu.memory_space<vmem>>, vector<288x3xbf16>
    %cst = arith.constant dense<0.000000e+00> : vector<2048x3xf32>
    %3 = tpu.matmul %1, %2, %cst {dimension_numbers = #tpu.dot_dimension_numbers<[1], [0], [0], [1], [0, 0, 1, 1], [], []>} : vector<2048x288xbf16>, vector<288x3xbf16>, vector<2048x3xf32> -> vector<2048x3xf32>
    %4 = math.tanh %3 : vector<2048x3xf32>
    %c0_4 = arith.constant 0 : index
    %c0_5 = arith.constant 0 : index
    %c0_6 = arith.constant 0 : index
    %5 = vector.load %arg4[%c0_4, %c0_5, %c0_6] : memref<1x2048x3xf32, #tpu.memory_space<vmem>>, vector<1x2048x3xf32>
    %6 = vector.shape_cast %5 : vector<1x2048x3xf32> to vector<2048x3xf32>
    %7 = vector.shape_cast %4 : vector<2048x3xf32> to vector<1x2048x3xf32>
    tpu.vector_store %arg4[%c0_4, %c0_5, %c0_6], %7 {strides = array<i32>} : memref<1x2048x3xf32, #tpu.memory_space<vmem>>, vector<1x2048x3xf32>,
    return
  }
  func.func @transform_0(%arg0: i32, %arg1: i32) -> (i32, i32, i32) {
    %c0_i32 = arith.constant 0 : i32
    %c0_i32_0 = arith.constant 0 : i32
    return %arg0, %arg1, %c0_i32 : i32, i32, i32
  }
  func.func @transform_1(%arg0: i32, %arg1: i32) -> (i32, i32) {
    %c0_i32 = arith.constant 0 : i32
    %c0_i32_0 = arith.constant 0 : i32
    %c0_i32_1 = arith.constant 0 : i32
    return %c0_i32, %c0_i32_0 : i32, i32
  }
  func.func @transform_2(%arg0: i32, %arg1: i32) -> (i32, i32, i32) {
    %c0_i32 = arith.constant 0 : i32
    %c0_i32_0 = arith.constant 0 : i32
    return %arg0, %arg1, %c0_i32 : i32, i32, i32
  }
}

</mosaic_0001>

<llo_original>
// kernel: g_forward.7
$region0: #{g_forward.7}
  #allocation0 [shape = 'u32[]', space=smem, size = 0x4, offset = 0x4, fixed_abs, tag = 'smem constant byte address 0x4 - core index']
  #allocation1 [shape = 'u32[72,128]{1,0:T(1,128)}', space=vmem, size = 0x9000, scoped, tag = 'internal scratch']
  %s0 = inlined_call_operand.vmem [shape: bf16[2,32], index: 0, kind: input, shape index: {}]
  %s1 = inlined_call_operand.vmem [shape: bf16[32,512], index: 1, kind: input, shape index: {}]
  %s2 = inlined_call_operand.vmem [shape: bf16[2,512], index: 2, kind: output, shape index: {}]
  %s3 = sld [smem:[#allocation0]]
  $region18: #{g_forward.7} parent=0
    _
  %s5 = ssub.s32 1, %s3
  %s6 = scalar_select 0, %s5, %s3
  // Predicated region
  $region2: #{g_forward.7} parent=0 // pred_check
    _
  $region3: #{g_forward.7} parent=0 // pred_check_branch
    %8 = sbr.rel (0) target = $region5
  $region4: #{g_forward.7} parent=0 // pred_region
    _
  $region5: #{g_forward.7} parent=0 // pred_fallthru
    _
  // Predicated region
  $region6: #{g_forward.7} parent=0 // pred_check
    _
  $region7: #{g_forward.7} parent=0 // pred_check_branch
    %10 = sbr.rel (0) target = $region9
  $region8: #{g_forward.7} parent=0 // pred_region
    _
  $region9: #{g_forward.7} parent=0 // pred_fallthru
    _
  %v12 = vld [vmem:[%s0] sm:$0x1]
  %v13 = vld [vmem:[%s1] sm:$0xff]
  %v14 = vld [vmem:[%s1 + $0x8] sm:$0xff]
  %v15 = vld [vmem:[%s1 + $0x10] sm:$0xff]
  %v16 = vld [vmem:[%s1 + $0x18] sm:$0xff]
  %v17 = vld [vmem:[%s1 + $0x20] sm:$0xff]
  %v18 = vld [vmem:[%s1 + $0x28] sm:$0xff]
  %v19 = vld [vmem:[%s1 + $0x30] sm:$0xff]
  %v20 = vld [vmem:[%s1 + $0x38] sm:$0xff]
  %v29 = vunpack.c.l.b16 %v13
  %v30 = vunpack.c.h.b16 %v13
  %v31 = vunpack.c.l.b16 %v14
  %v32 = vunpack.c.h.b16 %v14
  %v33 = vunpack.c.l.b16 %v15
  %v34 = vunpack.c.h.b16 %v15
  %v35 = vunpack.c.l.b16 %v16
  %v36 = vunpack.c.h.b16 %v16
  %v37 = vunpack.c.l.b16 %v17
  %v38 = vunpack.c.h.b16 %v17
  %v39 = vunpack.c.l.b16 %v18
  %v40 = vunpack.c.h.b16 %v18
  %v41 = vunpack.c.l.b16 %v19
  %v42 = vunpack.c.h.b16 %v19
  %v43 = vunpack.c.l.b16 %v20
  %v44 = vunpack.c.h.b16 %v20
  %v45 = vpack.c.b16 %v33, %v29
  %v46 = vpack.c.b16 %v34, %v30
  %v47 = vpack.c.b16 %v35, %v31
  %v48 = vpack.c.b16 %v36, %v32
  %v49 = vpack.c.b16 %v41, %v37
  %v50 = vpack.c.b16 %v42, %v38
  %v51 = vpack.c.b16 %v43, %v39
  %v52 = vpack.c.b16 %v44, %v40
  %vm61 = vcmask 261120
  %v63 = vsel %vm61, %v12, 0
  %65 = vmatpush.bf16.msra.mxu0 0
  %66 = vmatpush.bf16.msra.mxu0 0
  %67 = vmatpush.bf16.msra.mxu0 0
  %68 = vmatpush.bf16.msra.mxu0 0
  %69 = vmatpush.bf16.msra.mxu0 0
  %70 = vmatpush.bf16.msra.mxu0 0
  %71 = vmatpush.bf16.msra.mxu0 %v49
  %72 = vmatpush.bf16.msra.mxu0 %v45
  %73 = vmatmul.bf16.gmra.mxu0 %v63
  %v74 = vpop.f32.mrf.mxu0
  %v75 = vadd.f32 0.0, %v74
  %v76 = vpop.f32.mrf.mxu0
  %77 = vdwg.mxu0
  %78 = vmatpush.bf16.msra.mxu0 0
  %79 = vmatpush.bf16.msra.mxu0 0
  %80 = vmatpush.bf16.msra.mxu0 0
  %81 = vmatpush.bf16.msra.mxu0 0
  %82 = vmatpush.bf16.msra.mxu0 0
  %83 = vmatpush.bf16.msra.mxu0 0
  %84 = vmatpush.bf16.msra.mxu0 %v50
  %85 = vmatpush.bf16.msra.mxu0 %v46
  %86 = vmatmul.bf16.gmra.mxu0 %v63
  %v87 = vpop.f32.mrf.mxu0
  %v88 = vadd.f32 0.0, %v87
  %v89 = vpop.f32.mrf.mxu0
  %90 = vdwg.mxu0
  %91 = vmatpush.bf16.msra.mxu0 0
  %92 = vmatpush.bf16.msra.mxu0 0
  %93 = vmatpush.bf16.msra.mxu0 0
  %94 = vmatpush.bf16.msra.mxu0 0
  %95 = vmatpush.bf16.msra.mxu0 0
  %96 = vmatpush.bf16.msra.mxu0 0
  %97 = vmatpush.bf16.msra.mxu0 %v51
  %98 = vmatpush.bf16.msra.mxu0 %v47
  %99 = vmatmul.bf16.gmra.mxu0 %v63
  %v100 = vpop.f32.mrf.mxu0
  %v101 = vadd.f32 0.0, %v100
  %v102 = vpop.f32.mrf.mxu0
  %103 = vdwg.mxu0
  %104 = vmatpush.bf16.msra.mxu0 0
  %105 = vmatpush.bf16.msra.mxu0 0
  %106 = vmatpush.bf16.msra.mxu0 0
  %107 = vmatpush.bf16.msra.mxu0 0
  %108 = vmatpush.bf16.msra.mxu0 0
  %109 = vmatpush.bf16.msra.mxu0 0
  %110 = vmatpush.bf16.msra.mxu0 %v52
  %111 = vmatpush.bf16.msra.mxu0 %v48
  %112 = vmatmul.bf16.gmra.mxu0 %v63
  %v113 = vpop.f32.mrf.mxu0
  %v114 = vadd.f32 0.0, %v113
  %v115 = vpop.f32.mrf.mxu0
  %116 = vdwg.mxu0
  %v117 = vmax.f32 %v75, 0.0
  %v118 = vmax.f32 %v88, 0.0
  %v119 = vmax.f32 %v101, 0.0
  %v120 = vmax.f32 %v114, 0.0
  %v121 = vpack.c.bf16 %v118, %v117
  %v122 = vpack.c.bf16 %v120, %v119
  %v125 = vrot.slane %v121, 3
  %v126 = vrot.slane %v122, 6
  %v127 = vrot.slane %v122, 1
  %vm128 = vcmask 1040384
  %v131 = vsel %vm128, %v121, %v125
  %vm132 = vcmask 1042434
  %v135 = vsel %vm132, %v126, %v127
  %vm136 = vcmask 1041408
  %v137 = vsel %vm136, %v131, %v135
  %139 = vst [vmem:[%s2] sm:$0xf] %v137
  // Predicated region
  $region10: #{g_forward.7} parent=0 // pred_check
    _
  $region11: #{g_forward.7} parent=0 // pred_check_branch
    %141 = sbr.rel (0) target = $region13
  $region12: #{g_forward.7} parent=0 // pred_region
    _
  $region13: #{g_forward.7} parent=0 // pred_fallthru
    _
  // Predicated region
  $region14: #{g_forward.7} parent=0 // pred_check
    _
  $region15: #{g_forward.7} parent=0 // pred_check_branch
    %143 = sbr.rel (0) target = $region17
  $region16: #{g_forward.7} parent=0 // pred_region
    _
  $region17: #{g_forward.7} parent=0 // pred_fallthru
    _

// kernel: g_forward.8
$region0: #{g_forward.8}
  #allocation0 [shape = 'u32[]', space=smem, size = 0x4, offset = 0x4, fixed_abs, tag = 'smem constant byte address 0x4 - core index']
  #allocation1 [shape = 'u32[72,128]{1,0:T(1,128)}', space=vmem, size = 0x9000, scoped, tag = 'internal scratch']
  %s0 = inlined_call_operand.vmem [shape: bf16[2,16,288], index: 0, kind: input, shape index: {}]
  %s1 = inlined_call_operand.vmem [shape: bf16[288,128], index: 1, kind: input, shape index: {}]
  %s2 = inlined_call_operand.vmem [shape: bf16[2,16,128], index: 2, kind: output, shape index: {0}]
  %s3 = inlined_call_operand.vmem [shape: f32[2,1,2,128], index: 3, kind: output, shape index: {1}]
  %4 = xla_tuple %s2, %s3
  %s5 = sld [smem:[#allocation0]]
  $region49: #{g_forward.8} parent=0
    _
  %s7 = ssub.s32 1, %s5
  %s8 = scalar_select 0, %s7, %s5
  loop: start=0, step=1, limit=4
  $region2: #{g_forward.8} parent=0 // loop_pre_header
    _
  $region3: #{g_forward.8} parent=0 // loop_header
    %s10 = sphi 0, %s14
    %p11 = scmp.ge.s32.totalorder %s10, 4
    %s17 = sphi 0, %s29
    %s18 = sphi 0, %s25
    %s19 = sphi 0, %s17
    %s20 = sphi 0, %s18
    %s21 = sphi 0, %s19
    %s22 = sphi 0, %s20
    %s34 = sphi 0, %s36
    %s37 = sphi 0, %s34
    %s38 = sphi 0, %s37
    %s54 = sphi 0, %s38
    %s58 = sphi 0, %s58
    %s60 = sphi 0, %s58
    %s61 = sphi 0, %s60
    %s75 = sphi 0, %s61
    %s83 = sphi 0, %s85
    %s86 = sphi 0, %s83
    %s87 = sphi 0, %s86
    %s103 = sphi 0, %s87
    %s111 = sphi 0, %s113
    %s114 = sphi 0, %s111
    %s115 = sphi 0, %s114
    %s131 = sphi 0, %s115
  $region4: #{g_forward.8} parent=0 // loop_header_branch
    %13 = sbr.rel (%p11) target = $region8
  $region5: #{g_forward.8} parent=0 // loop_body
    %s15 = ssub.s32 %s10, 1
    %s16 = ssub.s32 %s10, 2
    %s23 = sadd.s32 1, %s18
    %p24 = scmp.ge.s32.totalorder %s23, 1
    %s25 = scalar_select %p24, 0, %s23
    %s26 = sadd.s32 1, %s17
    %s27 = scalar_select %p24, %s26, %s17
    %p28 = scmp.ge.s32.totalorder %s27, 2
    %s29 = scalar_select %p28, 0, %s27
    %s30 = ssub.s32 %s17, %s29
    %s31 = ssub.s32 %s18, %s25
    %s32 = sor.u32 %s30, %s31
    %p33 = scmp.eq.s32.totalorder %s32, 0
    %s35 = sadd.s32 %s34, 1
    %s36 = scalar_select %p33, %s34, %s35
    %p39 = pneg %p33
    %p40 = scmp.eq.s32.totalorder %s10, 1
    %p41 = por %p39, %p40
    %p42 = scmp.ne.s32.totalorder %s34, %s37
    %p43 = scmp.eq.s32.totalorder %s10, 0
    %p44 = por %p42, %p43
    %p45 = scmp.ne.s32.totalorder %s34, %s37
    %p46 = scmp.eq.s32.totalorder %s15, 1
    %p47 = por %p45, %p46
    %p48 = scmp.ne.s32.totalorder %s37, %s38
    %p49 = scmp.eq.s32.totalorder %s15, 0
    %p50 = por %p48, %p49
    %p51 = scmp.ne.s32.totalorder %s37, %s38
    %p52 = scmp.eq.s32.totalorder %s16, 1
    %p53 = por %p51, %p52
    %p55 = scmp.ne.s32.totalorder %s38, %s54
    %p56 = scmp.eq.s32.totalorder %s16, 0
    %p57 = por %p55, %p56
    %s59 = sadd.s32 %s58, 1
    %p62 = scmp.eq.s32.totalorder %s10, 1
    %p63 = scmp.ne.s32.totalorder %s58, %s60
    %p64 = scmp.eq.s32.totalorder %s10, 0
    %p65 = por %p63, %p64
    %p66 = scmp.ne.s32.totalorder %s58, %s60
    %p67 = scmp.eq.s32.totalorder %s15, 1
    %p68 = por %p66, %p67
    %p69 = scmp.ne.s32.totalorder %s60, %s61
    %p70 = scmp.eq.s32.totalorder %s15, 0
    %p71 = por %p69, %p70
    %p72 = scmp.ne.s32.totalorder %s60, %s61
    %p73 = scmp.eq.s32.totalorder %s16, 1
    %p74 = por %p72, %p73
    %p76 = scmp.ne.s32.totalorder %s61, %s75
    %p77 = scmp.eq.s32.totalorder %s16, 0
    %p78 = por %p76, %p77
    %s79 = ssub.s32 %s17, %s29
    %s80 = ssub.s32 %s18, %s25
    %s81 = sor.u32 %s79, %s80
    %p82 = scmp.eq.s32.totalorder %s81, 0
    %s84 = sadd.s32 %s83, 1
    %s85 = scalar_select %p82, %s83, %s84
    %p88 = pneg %p82
    %p89 = scmp.eq.s32.totalorder %s10, 1
    %p90 = por %p88, %p89
    %p91 = scmp.ne.s32.totalorder %s83, %s86
    %p92 = scmp.eq.s32.totalorder %s10, 0
    %p93 = por %p91, %p92
    %p94 = scmp.ne.s32.totalorder %s83, %s86
    %p95 = scmp.eq.s32.totalorder %s15, 1
    %p96 = por %p94, %p95
    %p97 = scmp.ne.s32.totalorder %s86, %s87
    %p98 = scmp.eq.s32.totalorder %s15, 0
    %p99 = por %p97, %p98
    %p100 = scmp.ne.s32.totalorder %s86, %s87
    %p101 = scmp.eq.s32.totalorder %s16, 1
    %p102 = por %p100, %p101
    %p104 = scmp.ne.s32.totalorder %s87, %s103
    %p105 = scmp.eq.s32.totalorder %s16, 0
    %p106 = por %p104, %p105
    %s107 = ssub.s32 %s17, %s29
    %s108 = ssub.s32 %s18, %s25
    %s109 = sor.u32 %s107, %s108
    %p110 = scmp.eq.s32.totalorder %s109, 0
    %s112 = sadd.s32 %s111, 1
    %s113 = scalar_select %p110, %s111, %s112
    %p116 = pneg %p110
    %p117 = scmp.eq.s32.totalorder %s10, 1
    %p118 = por %p116, %p117
    %p119 = scmp.ne.s32.totalorder %s111, %s114
    %p120 = scmp.eq.s32.totalorder %s10, 0
    %p121 = por %p119, %p120
    %p122 = scmp.ne.s32.totalorder %s111, %s114
    %p123 = scmp.eq.s32.totalorder %s15, 1
    %p124 = por %p122, %p123
    %p125 = scmp.ne.s32.totalorder %s114, %s115
    %p126 = scmp.eq.s32.totalorder %s15, 0
    %p127 = por %p125, %p126
    %p128 = scmp.ne.s32.totalorder %s114, %s115
    %p129 = scmp.eq.s32.totalorder %s16, 1
    %p130 = por %p128, %p129
    %p132 = scmp.ne.s32.totalorder %s115, %s131
    %p133 = scmp.eq.s32.totalorder %s16, 0
    %p134 = por %p132, %p133
    %p135 = scmp.le.s32.totalorder 1, %s10
    %p136 = scmp.lt.s32.totalorder %s10, 3
    %p137 = pnand %p135, %p136
    %p138 = pneg %p137
    // Predicated region
    $region9: #{g_forward.8} parent=5 // pred_check
      _
    $region10: #{g_forward.8} parent=5 // pred_check_branch
      %140 = sbr.rel (%p137) target = $region12
    $region11: #{g_forward.8} parent=5 // pred_region
      %s141 = ssub.s32 %s10, 1
      // Predicated region
      $region13: #{g_forward.8} parent=11 // pred_check
        %p142 = pneg %p71
      $region14: #{g_forward.8} parent=11 // pred_check_branch
        %144 = sbr.rel (%p142) target = $region16
      $region15: #{g_forward.8} parent=11 // pred_region
        _
      $region16: #{g_forward.8} parent=11 // pred_fallthru
        _
    $region12: #{g_forward.8} parent=5 // pred_fallthru
      _
    %p145 = scmp.lt.s32.totalorder %s10, 2
    // Predicated region
    $region17: #{g_forward.8} parent=5 // pred_check
      %p146 = pneg %p145
    $region18: #{g_forward.8} parent=5 // pred_check_branch
      %148 = sbr.rel (%p146) target = $region20
    $region19: #{g_forward.8} parent=5 // pred_region
      // Predicated region
      $region21: #{g_forward.8} parent=19 // pred_check
        %p149 = pneg %p44
      $region22: #{g_forward.8} parent=19 // pred_check_branch
        %151 = sbr.rel (%p149) target = $region24
      $region23: #{g_forward.8} parent=19 // pred_region
        %s152 = smul.u32 2, %s18
        %p153 = scmp.lt.s32.totalorder %s17, 1
        %s154 = scalar_select %p153, %s17, 1
        %p155 = scmp.lt.s32.totalorder %s152, 1
        %s156 = scalar_select %p155, %s152, 1
        %s157 = smul.addr %s156, 3
        %s158 = smul.addr %s154, 6
        %s159 = sadd.s32 %s157, %s158
        %s160 = smul.addr %s159, 4
        %s161 = scalar_lea.vmem %s0, %s160
        %s162 = smul.u32 2, %s18
      $region24: #{g_forward.8} parent=19 // pred_fallthru
        _
    $region20: #{g_forward.8} parent=5 // pred_fallthru
      _
    %p163 = scmp.le.s32.totalorder 1, %s10
    %p164 = scmp.lt.s32.totalorder %s10, 3
    %p165 = pnand %p163, %p164
    %p166 = pneg %p165
    // Predicated region
    $region25: #{g_forward.8} parent=5 // pred_check
      _
    $region26: #{g_forward.8} parent=5 // pred_check_branch
      %168 = sbr.rel (%p165) target = $region28
    $region27: #{g_forward.8} parent=5 // pred_region
      %s169 = ssub.s32 %s10, 1
      %s170 = smul.u32 2, %s20
      %p171 = scmp.lt.s32.totalorder %s19, 1
      %s172 = scalar_select %p171, %s19, 1
      %p173 = scmp.lt.s32.totalorder %s170, 1
      %s174 = scalar_select %p173, %s170, 1
      %s175 = smul.addr %s174, 3
      %s176 = smul.addr %s172, 6
      %s177 = sadd.s32 %s175, %s176
      %s178 = smul.addr %s177, 4
      %s179 = scalar_lea.vmem %s0, %s178
      %p180 = pneg %p50
      %p181 = pneg %p47
      %p182 = pneg %p71
      %p183 = pneg %p68
      %p184 = pneg %p99
      %p185 = pneg %p96
      %s186 = smul.u32 2, %s20
      %p187 = scmp.lt.s32.totalorder %s19, 1
      %s188 = scalar_select %p187, %s19, 1
      %p189 = scmp.lt.s32.totalorder %s186, 1
      %s190 = scalar_select %p189, %s186, 1
      %s191 = smul.addr %s188, 2
      %s192 = sadd.s32 %s190, %s191
      %s193 = smul.addr %s192, 4
      %s194 = scalar_lea.vmem %s2, %s193
      %p195 = pneg %p127
      %p196 = pneg %p124
      %p197 = scmp.lt.s32.totalorder %s19, 1
      %s198 = scalar_select %p197, %s19, 1
      %p199 = scmp.lt.s32.totalorder %s20, 0
      %s200 = scalar_select %p199, %s20, 0
      %s201 = sadd.s32 %s200, %s198
      %s202 = smul.addr %s201, 2
      %s203 = scalar_lea.vmem %s3, %s202
      %s204 = smul.u32 2, %s20
      %p205 = scmp.lt.s32.totalorder %s19, 1
      %s206 = scalar_select %p205, %s19, 1
      %p207 = scmp.lt.s32.totalorder %s204, 1
      %s208 = scalar_select %p207, %s204, 1
      %s209 = smul.addr %s208, 3
      %s210 = smul.addr %s206, 6
      %s211 = sadd.s32 %s209, %s210
      %s212 = smul.addr %s211, 4
      %s213 = scalar_lea.vmem %s0, %s212
      %s214 = smul.u32 2, %s20
      %s215 = smul.u32 2, %s20
      %p216 = scmp.lt.s32.totalorder %s19, 1
      %s217 = scalar_select %p216, %s19, 1
      %p218 = scmp.lt.s32.totalorder %s215, 1
      %s219 = scalar_select %p218, %s215, 1
      %s220 = smul.addr %s217, 2
      %s221 = sadd.s32 %s219, %s220
      %s222 = smul.addr %s221, 4
      %s223 = scalar_lea.vmem %s2, %s222
      %s224 = smul.u32 2, %s20
      %p225 = scmp.lt.s32.totalorder %s19, 1
      %s226 = scalar_select %p225, %s19, 1
      %p227 = scmp.lt.s32.totalorder %s20, 0
      %s228 = scalar_select %p227, %s20, 0
      %s229 = sadd.s32 %s228, %s226
      %s230 = smul.addr %s229, 2
      %s231 = scalar_lea.vmem %s3, %s230
      %v233 = vld [vmem:[%s213] sm:$0xff]
      %v234 = vld [vmem:[%s213 + $0x8] sm:$0xf]
      %v235 = vld [vmem:[%s213 + $0xc] sm:$0xff]
      %v236 = vld [vmem:[%s213 + $0x14] sm:$0xf]
      %v237 = vld [vmem:[%s1] sm:$0xf]
      %v238 = vld [vmem:[%s1 + $0x4] sm:$0xf]
      %v239 = vld [vmem:[%s1 + $0x8] sm:$0xf]
      %v240 = vld [vmem:[%s1 + $0xc] sm:$0xf]
      %v241 = vld [vmem:[%s1 + $0x10] sm:$0xf]
      %v242 = vld [vmem:[%s1 + $0x14] sm:$0xf]
      %v243 = vld [vmem:[%s1 + $0x18] sm:$0xf]
      %v244 = vld [vmem:[%s1 + $0x1c] sm:$0xf]
      %v245 = vld [vmem:[%s1 + $0x20] sm:$0xf]
      %v246 = vld [vmem:[%s1 + $0x24] sm:$0xf]
      %v247 = vld [vmem:[%s1 + $0x28] sm:$0xf]
      %v248 = vld [vmem:[%s1 + $0x2c] sm:$0xf]
      %v249 = vld [vmem:[%s1 + $0x30] sm:$0xf]
      %v250 = vld [vmem:[%s1 + $0x34] sm:$0xf]
      %v251 = vld [vmem:[%s1 + $0x38] sm:$0xf]
      %v252 = vld [vmem:[%s1 + $0x3c] sm:$0xf]
      %v253 = vld [vmem:[%s1 + $0x40] sm:$0xf]
      %v254 = vld [vmem:[%s1 + $0x44] sm:$0xf]
      %v255 = vld [vmem:[%s1 + $0x48] sm:$0xf]
      %v256 = vld [vmem:[%s1 + $0x4c] sm:$0xf]
      %v257 = vld [vmem:[%s1 + $0x50] sm:$0xf]
      %v258 = vld [vmem:[%s1 + $0x54] sm:$0xf]
      %v259 = vld [vmem:[%s1 + $0x58] sm:$0xf]
      %v260 = vld [vmem:[%s1 + $0x5c] sm:$0xf]
      %v261 = vld [vmem:[%s1 + $0x60] sm:$0xf]
      %v262 = vld [vmem:[%s1 + $0x64] sm:$0xf]
      %v263 = vld [vmem:[%s1 + $0x68] sm:$0xf]
      %v264 = vld [vmem:[%s1 + $0x6c] sm:$0xf]
      %v265 = vld [vmem:[%s1 + $0x70] sm:$0xf]
      %v266 = vld [vmem:[%s1 + $0x74] sm:$0xf]
      %v267 = vld [vmem:[%s1 + $0x78] sm:$0xf]
      %v268 = vld [vmem:[%s1 + $0x7c] sm:$0xf]
      %v269 = vld [vmem:[%s1 + $0x80] sm:$0xf]
      %v270 = vld [vmem:[%s1 + $0x84] sm:$0xf]
      %v271 = vld [vmem:[%s1 + $0x88] sm:$0xf]
      %v272 = vld [vmem:[%s1 + $0x8c] sm:$0xf]
      %v277 = vunpack.c.l.b16 %v233
      %v278 = vunpack.c.h.b16 %v233
      %v279 = vunpack.c.l.b16 %v234
      %v280 = vunpack.c.l.b16 %v235
      %v281 = vunpack.c.h.b16 %v235
      %v282 = vunpack.c.l.b16 %v236
      %v283 = vpack.c.b16 %v280, %v277
      %v284 = vpack.c.b16 %v281, %v278
      %v285 = vpack.c.b16 %v282, %v279
      %v324 = vunpack.c.l.b16 %v237
      %v325 = vunpack.c.l.b16 %v238
      %v326 = vunpack.c.l.b16 %v239
      %v327 = vunpack.c.l.b16 %v240
      %v328 = vunpack.c.l.b16 %v241
      %v329 = vunpack.c.l.b16 %v242
      %v330 = vunpack.c.l.b16 %v243
      %v331 = vunpack.c.l.b16 %v244
      %v332 = vunpack.c.l.b16 %v245
      %v333 = vunpack.c.l.b16 %v246
      %v334 = vunpack.c.l.b16 %v247
      %v335 = vunpack.c.l.b16 %v248
      %v336 = vunpack.c.l.b16 %v249
      %v337 = vunpack.c.l.b16 %v250
      %v338 = vunpack.c.l.b16 %v251
      %v339 = vunpack.c.l.b16 %v252
      %v340 = vunpack.c.l.b16 %v253
      %v341 = vunpack.c.l.b16 %v254
      %v342 = vunpack.c.l.b16 %v255
      %v343 = vunpack.c.l.b16 %v256
      %v344 = vunpack.c.l.b16 %v257
      %v345 = vunpack.c.l.b16 %v258
      %v346 = vunpack.c.l.b16 %v259
      %v347 = vunpack.c.l.b16 %v260
      %v348 = vunpack.c.l.b16 %v261
      %v349 = vunpack.c.l.b16 %v262
      %v350 = vunpack.c.l.b16 %v263
      %v351 = vunpack.c.l.b16 %v264
      %v352 = vunpack.c.l.b16 %v265
      %v353 = vunpack.c.l.b16 %v266
      %v354 = vunpack.c.l.b16 %v267
      %v355 = vunpack.c.l.b16 %v268
      %v356 = vunpack.c.l.b16 %v269
      %v357 = vunpack.c.l.b16 %v270
      %v358 = vunpack.c.l.b16 %v271
      %v359 = vunpack.c.l.b16 %v272
      %v360 = vpack.c.b16 %v325, %v324
      %v361 = vpack.c.b16 %v327, %v326
      %v362 = vpack.c.b16 %v329, %v328
      %v363 = vpack.c.b16 %v331, %v330
      %v364 = vpack.c.b16 %v333, %v332
      %v365 = vpack.c.b16 %v335, %v334
      %v366 = vpack.c.b16 %v337, %v336
      %v367 = vpack.c.b16 %v339, %v338
      %v368 = vpack.c.b16 %v341, %v340
      %v369 = vpack.c.b16 %v343, %v342
      %v370 = vpack.c.b16 %v345, %v344
      %v371 = vpack.c.b16 %v347, %v346
      %v372 = vpack.c.b16 %v349, %v348
      %v373 = vpack.c.b16 %v351, %v350
      %v374 = vpack.c.b16 %v353, %v352
      %v375 = vpack.c.b16 %v355, %v354
      %v376 = vpack.c.b16 %v357, %v356
      %v377 = vpack.c.b16 %v359, %v358
      %vm396 = vcmask 261120
      %v398 = vsel %vm396, %v285, 0
      %400 = vmatpush.bf16.msra.mxu0 %v367
      %401 = vmatpush.bf16.msra.mxu0 %v366
      %402 = vmatpush.bf16.msra.mxu0 %v365
      %403 = vmatpush.bf16.msra.mxu0 %v364
      %404 = vmatpush.bf16.msra.mxu0 %v363
      %405 = vmatpush.bf16.msra.mxu0 %v362
      %406 = vmatpush.bf16.msra.mxu0 %v361
      %407 = vmatpush.bf16.msra.mxu0 %v360
      %408 = vmatmul.bf16.gmra.mxu0 %v283
      %v409 = vpop.f32.mrf.mxu0
      %v410 = vadd.f32 0.0, %v409
      %v411 = vpop.f32.mrf.mxu0
      %v412 = vadd.f32 0.0, %v411
      %413 = vdwg.mxu0
      %414 = vmatpush.bf16.msra.mxu0 %v375
      %415 = vmatpush.bf16.msra.mxu0 %v374
      %416 = vmatpush.bf16.msra.mxu0 %v373
      %417 = vmatpush.bf16.msra.mxu0 %v372
      %418 = vmatpush.bf16.msra.mxu0 %v371
      %419 = vmatpush.bf16.msra.mxu0 %v370
      %420 = vmatpush.bf16.msra.mxu0 %v369
      %421 = vmatpush.bf16.msra.mxu0 %v368
      %422 = vmatmul.bf16.gmra.mxu0 %v284
      %v423 = vpop.f32.mrf.mxu0
      %v424 = vadd.f32 %v410, %v423
      %v425 = vpop.f32.mrf.mxu0
      %v426 = vadd.f32 %v412, %v425
      %427 = vdwg.mxu0
      %428 = vmatpush.bf16.msra.mxu0 0
      %429 = vmatpush.bf16.msra.mxu0 0
      %430 = vmatpush.bf16.msra.mxu0 0
      %431 = vmatpush.bf16.msra.mxu0 0
      %432 = vmatpush.bf16.msra.mxu0 0
      %433 = vmatpush.bf16.msra.mxu0 0
      %434 = vmatpush.bf16.msra.mxu0 %v377
      %435 = vmatpush.bf16.msra.mxu0 %v376
      %436 = vmatmul.bf16.gmra.mxu0 %v398
      %v437 = vpop.f32.mrf.mxu0
      %v438 = vadd.f32 %v424, %v437
      %v439 = vpop.f32.mrf.mxu0
      %v440 = vadd.f32 %v426, %v439
      %441 = vdwg.mxu0
      %v442 = vpack.c.bf16 %v438, %v438
      %v443 = vpack.c.bf16 %v440, %v440
      %444 = vst [vmem:[%s223] sm:$0xf] %v442
      %445 = vst [vmem:[%s223 + $0x4] sm:$0xf] %v443
      %v446 = vadd.f32 %v438, %v440
      %v447 = vrot.slane %v446, 4
      %v448 = vadd.f32 %v446, %v447
      %v449 = vrot.slane %v448, 2
      %v450 = vadd.f32 %v448, %v449
      %v451 = vrot.slane %v450, 1
      %v452 = vadd.f32 %v450, %v451
      %v453 = vmul.f32 %v438, %v438
      %v454 = vmul.f32 %v440, %v440
      %v455 = vadd.f32 %v453, %v454
      %v456 = vrot.slane %v455, 4
      %v457 = vadd.f32 %v455, %v456
      %v458 = vrot.slane %v457, 2
      %v459 = vadd.f32 %v457, %v458
      %v460 = vrot.slane %v459, 1
      %v461 = vadd.f32 %v459, %v460
      %vm462 = vcmask 1040384
      %v463 = vsel %vm462, %v452, %v461
      %464 = vst [vmem:[%s231] sm:$0x3] %v463
      %s465 = smul.u32 2, %s20
      %p466 = scmp.lt.s32.totalorder %s19, 1
      %s467 = scalar_select %p466, %s19, 1
      %p468 = scmp.lt.s32.totalorder %s465, 1
      %s469 = scalar_select %p468, %s465, 1
      %s470 = smul.addr %s467, 2
      %s471 = sadd.s32 %s469, %s470
      %s472 = smul.addr %s471, 4
      %s473 = scalar_lea.vmem %s2, %s472
      %p474 = scmp.lt.s32.totalorder %s19, 1
      %s475 = scalar_select %p474, %s19, 1
      %p476 = scmp.lt.s32.totalorder %s20, 0
      %s477 = scalar_select %p476, %s20, 0
      %s478 = sadd.s32 %s477, %s475
      %s479 = smul.addr %s478, 2
      %s480 = scalar_lea.vmem %s3, %s479
      // Predicated region
      $region29: #{g_forward.8} parent=27 // pred_check
        %p481 = pneg %p96
      $region30: #{g_forward.8} parent=27 // pred_check_branch
        %483 = sbr.rel (%p481) target = $region32
      $region31: #{g_forward.8} parent=27 // pred_region
        %s484 = smul.u32 2, %s20
      $region32: #{g_forward.8} parent=27 // pred_fallthru
        _
      // Predicated region
      $region33: #{g_forward.8} parent=27 // pred_check
        %p485 = pneg %p124
      $region34: #{g_forward.8} parent=27 // pred_check_branch
        %487 = sbr.rel (%p485) target = $region36
      $region35: #{g_forward.8} parent=27 // pred_region
        _
      $region36: #{g_forward.8} parent=27 // pred_fallthru
        _
    $region28: #{g_forward.8} parent=5 // pred_fallthru
      _
    %p488 = scmp.le.s32.totalorder 2, %s10
    // Predicated region
    $region37: #{g_forward.8} parent=5 // pred_check
      %p489 = pneg %p488
    $region38: #{g_forward.8} parent=5 // pred_check_branch
      %491 = sbr.rel (%p489) target = $region40
    $region39: #{g_forward.8} parent=5 // pred_region
      %s492 = ssub.s32 %s10, 2
      // Predicated region
      $region41: #{g_forward.8} parent=39 // pred_check
        %p493 = pneg %p102
      $region42: #{g_forward.8} parent=39 // pred_check_branch
        %495 = sbr.rel (%p493) target = $region44
      $region43: #{g_forward.8} parent=39 // pred_region
        %s496 = smul.u32 2, %s22
        %p497 = scmp.lt.s32.totalorder %s21, 1
        %s498 = scalar_select %p497, %s21, 1
        %p499 = scmp.lt.s32.totalorder %s496, 1
        %s500 = scalar_select %p499, %s496, 1
        %s501 = smul.addr %s498, 2
        %s502 = sadd.s32 %s500, %s501
        %s503 = smul.addr %s502, 4
        %s504 = scalar_lea.vmem %s2, %s503
      $region44: #{g_forward.8} parent=39 // pred_fallthru
        _
      // Predicated region
      $region45: #{g_forward.8} parent=39 // pred_check
        %p505 = pneg %p130
      $region46: #{g_forward.8} parent=39 // pred_check_branch
        %507 = sbr.rel (%p505) target = $region48
      $region47: #{g_forward.8} parent=39 // pred_region
        %p508 = scmp.lt.s32.totalorder %s21, 1
        %s509 = scalar_select %p508, %s21, 1
        %p510 = scmp.lt.s32.totalorder %s22, 0
        %s511 = scalar_select %p510, %s22, 0
        %s512 = sadd.s32 %s511, %s509
        %s513 = smul.addr %s512, 2
        %s514 = scalar_lea.vmem %s3, %s513
      $region48: #{g_forward.8} parent=39 // pred_fallthru
        _
    $region40: #{g_forward.8} parent=5 // pred_fallthru
      _
  $region6: #{g_forward.8} parent=0 // loop_footer
    %s14 = sadd.s32 1, %s10
  $region7: #{g_forward.8} parent=0 // loop_footer_branch
    %9 = sbr.rel target = $region3
  $region8: #{g_forward.8} parent=0 // loop_exit
    _

// kernel: squeeze.10
$region0: #{squeeze.10}
  %s0 = inlined_call_operand.vmem [shape: f32[128], index: 0, kind: input, shape index: {}]
  %s1 = inlined_call_operand.vmem [shape: f32[4,32], index: 1, kind: output, shape index: {}]
  $region1: #{squeeze.10} parent=0
    #allocation0 [shape = 'u8[4096]{0}', space=vmem, size = 0x1000, scoped, tag = 'scoped mem for output reshape']
    #allocation1 [shape = 'u8[4096]{0}', space=vmem, size = 0x1000, scoped, tag = 'scoped mem for input reshape']
    %s3 = ssub.s32 2, 1
    %v4 = vld [vmem:[%s0] sm:%s3]
    %5 = vst [vmem:[#allocation1] sm:%s3] %v4
    %v6 = vld [vmem:[#allocation1] sm:$0x1]
    %vm7 = vcmask 261120
    %8 = vst.msk [vmem:[#allocation0] sm:$0x1] %vm7, %v6
    %v9 = vld [vmem:[#allocation1] sm:$0x1]
    %10 = vrot.lane.b32.xlu0 %v9, 96
    %v11 = vpop.permute.xlu0 %10
    %vm12 = vcmask 261120
    %s13 = scalar_lea.vmem [#allocation0], 1
    %14 = vst.msk [vmem:[%s13] sm:$0x1] %vm12, %v11
    %v15 = vld [vmem:[#allocation1] sm:$0x1]
    %16 = vrot.lane.b32.xlu0 %v15, 64
    %v17 = vpop.permute.xlu0 %16
    %vm18 = vcmask 261120
    %s19 = scalar_lea.vmem [#allocation0], 2
    %20 = vst.msk [vmem:[%s19] sm:$0x1] %vm18, %v17
    %v21 = vld [vmem:[#allocation1] sm:$0x1]
    %22 = vrot.lane.b32.xlu0 %v21, 32
    %v23 = vpop.permute.xlu0 %22
    %vm24 = vcmask 261120
    %s25 = scalar_lea.vmem [#allocation0], 3
    %26 = vst.msk [vmem:[%s25] sm:$0x1] %vm24, %v23
    %s28 = ssub.s32 16, 1
    %v29 = vld [vmem:[#allocation0] sm:%s28]
    %s31 = ssub.s32 16, 1
    %32 = vst [vmem:[%s1] sm:%s31] %v29

// kernel: g_forward.9
$region0: #{g_forward.9}
  #allocation0 [shape = 'u32[]', space=smem, size = 0x4, offset = 0x4, fixed_abs, tag = 'smem constant byte address 0x4 - core index']
  #allocation1 [shape = 'u32[72,128]{1,0:T(1,128)}', space=vmem, size = 0x9000, scoped, tag = 'internal scratch']
  %s0 = inlined_call_operand.vmem [shape: bf16[2,64,288], index: 0, kind: input, shape index: {}]
  %s1 = inlined_call_operand.vmem [shape: bf16[288,128], index: 1, kind: input, shape index: {}]
  %s2 = inlined_call_operand.vmem [shape: bf16[2,64,128], index: 2, kind: output, shape index: {0}]
  %s3 = inlined_call_operand.vmem [shape: f32[2,1,2,128], index: 3, kind: output, shape index: {1}]
  %4 = xla_tuple %s2, %s3
  %s5 = sld [smem:[#allocation0]]
  $region49: #{g_forward.9} parent=0
    _
  %s7 = ssub.s32 1, %s5
  %s8 = scalar_select 0, %s7, %s5
  loop: start=0, step=1, limit=4
  $region2: #{g_forward.9} parent=0 // loop_pre_header
    _
  $region3: #{g_forward.9} parent=0 // loop_header
    %s10 = sphi 0, %s14
    %p11 = scmp.ge.s32.totalorder %s10, 4
    %s17 = sphi 0, %s29
    %s18 = sphi 0, %s25
    %s19 = sphi 0, %s17
    %s20 = sphi 0, %s18
    %s21 = sphi 0, %s19
    %s22 = sphi 0, %s20
    %s34 = sphi 0, %s36
    %s37 = sphi 0, %s34
    %s38 = sphi 0, %s37
    %s54 = sphi 0, %s38
    %s58 = sphi 0, %s58
    %s60 = sphi 0, %s58
    %s61 = sphi 0, %s60
    %s75 = sphi 0, %s61
    %s83 = sphi 0, %s85
    %s86 = sphi 0, %s83
    %s87 = sphi 0, %s86
    %s103 = sphi 0, %s87
    %s111 = sphi 0, %s113
    %s114 = sphi 0, %s111
    %s115 = sphi 0, %s114
    %s131 = sphi 0, %s115
  $region4: #{g_forward.9} parent=0 // loop_header_branch
    %13 = sbr.rel (%p11) target = $region8
  $region5: #{g_forward.9} parent=0 // loop_body
    %s15 = ssub.s32 %s10, 1
    %s16 = ssub.s32 %s10, 2
    %s23 = sadd.s32 1, %s18
    %p24 = scmp.ge.s32.totalorder %s23, 1
    %s25 = scalar_select %p24, 0, %s23
    %s26 = sadd.s32 1, %s17
    %s27 = scalar_select %p24, %s26, %s17
    %p28 = scmp.ge.s32.totalorder %s27, 2
    %s29 = scalar_select %p28, 0, %s27
    %s30 = ssub.s32 %s17, %s29
    %s31 = ssub.s32 %s18, %s25
    %s32 = sor.u32 %s30, %s31
    %p33 = scmp.eq.s32.totalorder %s32, 0
    %s35 = sadd.s32 %s34, 1
    %s36 = scalar_select %p33, %s34, %s35
    %p39 = pneg %p33
    %p40 = scmp.eq.s32.totalorder %s10, 1
    %p41 = por %p39, %p40
    %p42 = scmp.ne.s32.totalorder %s34, %s37
    %p43 = scmp.eq.s32.totalorder %s10, 0
    %p44 = por %p42, %p43
    %p45 = scmp.ne.s32.totalorder %s34, %s37
    %p46 = scmp.eq.s32.totalorder %s15, 1
    %p47 = por %p45, %p46
    %p48 = scmp.ne.s32.totalorder %s37, %s38
    %p49 = scmp.eq.s32.totalorder %s15, 0
    %p50 = por %p48, %p49
    %p51 = scmp.ne.s32.totalorder %s37, %s38
    %p52 = scmp.eq.s32.totalorder %s16, 1
    %p53 = por %p51, %p52
    %p55 = scmp.ne.s32.totalorder %s38, %s54
    %p56 = scmp.eq.s32.totalorder %s16, 0
    %p57 = por %p55, %p56
    %s59 = sadd.s32 %s58, 1
    %p62 = scmp.eq.s32.totalorder %s10, 1
    %p63 = scmp.ne.s32.totalorder %s58, %s60
    %p64 = scmp.eq.s32.totalorder %s10, 0
    %p65 = por %p63, %p64
    %p66 = scmp.ne.s32.totalorder %s58, %s60
    %p67 = scmp.eq.s32.totalorder %s15, 1
    %p68 = por %p66, %p67
    %p69 = scmp.ne.s32.totalorder %s60, %s61
    %p70 = scmp.eq.s32.totalorder %s15, 0
    %p71 = por %p69, %p70
    %p72 = scmp.ne.s32.totalorder %s60, %s61
    %p73 = scmp.eq.s32.totalorder %s16, 1
    %p74 = por %p72, %p73
    %p76 = scmp.ne.s32.totalorder %s61, %s75
    %p77 = scmp.eq.s32.totalorder %s16, 0
    %p78 = por %p76, %p77
    %s79 = ssub.s32 %s17, %s29
    %s80 = ssub.s32 %s18, %s25
    %s81 = sor.u32 %s79, %s80
    %p82 = scmp.eq.s32.totalorder %s81, 0
    %s84 = sadd.s32 %s83, 1
    %s85 = scalar_select %p82, %s83, %s84
    %p88 = pneg %p82
    %p89 = scmp.eq.s32.totalorder %s10, 1
    %p90 = por %p88, %p89
    %p91 = scmp.ne.s32.totalorder %s83, %s86
    %p92 = scmp.eq.s32.totalorder %s10, 0
    %p93 = por %p91, %p92
    %p94 = scmp.ne.s32.totalorder %s83, %s86
    %p95 = scmp.eq.s32.totalorder %s15, 1
    %p96 = por %p94, %p95
    %p97 = scmp.ne.s32.totalorder %s86, %s87
    %p98 = scmp.eq.s32.totalorder %s15, 0
    %p99 = por %p97, %p98
    %p100 = scmp.ne.s32.totalorder %s86, %s87
    %p101 = scmp.eq.s32.totalorder %s16, 1
    %p102 = por %p100, %p101
    %p104 = scmp.ne.s32.totalorder %s87, %s103
    %p105 = scmp.eq.s32.totalorder %s16, 0
    %p106 = por %p104, %p105
    %s107 = ssub.s32 %s17, %s29
    %s108 = ssub.s32 %s18, %s25
    %s109 = sor.u32 %s107, %s108
    %p110 = scmp.eq.s32.totalorder %s109, 0
    %s112 = sadd.s32 %s111, 1
    %s113 = scalar_select %p110, %s111, %s112
    %p116 = pneg %p110
    %p117 = scmp.eq.s32.totalorder %s10, 1
    %p118 = por %p116, %p117
    %p119 = scmp.ne.s32.totalorder %s111, %s114
    %p120 = scmp.eq.s32.totalorder %s10, 0
    %p121 = por %p119, %p120
    %p122 = scmp.ne.s32.totalorder %s111, %s114
    %p123 = scmp.eq.s32.totalorder %s15, 1
    %p124 = por %p122, %p123
    %p125 = scmp.ne.s32.totalorder %s114, %s115
    %p126 = scmp.eq.s32.totalorder %s15, 0
    %p127 = por %p125, %p126
    %p128 = scmp.ne.s32.totalorder %s114, %s115
    %p129 = scmp.eq.s32.totalorder %s16, 1
    %p130 = por %p128, %p129
    %p132 = scmp.ne.s32.totalorder %s115, %s131
    %p133 = scmp.eq.s32.totalorder %s16, 0
    %p134 = por %p132, %p133
    %p135 = scmp.le.s32.totalorder 1, %s10
    %p136 = scmp.lt.s32.totalorder %s10, 3
    %p137 = pnand %p135, %p136
    %p138 = pneg %p137
    // Predicated region
    $region9: #{g_forward.9} parent=5 // pred_check
      _
    $region10: #{g_forward.9} parent=5 // pred_check_branch
      %140 = sbr.rel (%p137) target = $region12
    $region11: #{g_forward.9} parent=5 // pred_region
      %s141 = ssub.s32 %s10, 1
      // Predicated region
      $region13: #{g_forward.9} parent=11 // pred_check
        %p142 = pneg %p71
      $region14: #{g_forward.9} parent=11 // pred_check_branch
        %144 = sbr.rel (%p142) target = $region16
      $region15: #{g_forward.9} parent=11 // pred_region
        _
      $region16: #{g_forward.9} parent=11 // pred_fallthru
        _
    $region12: #{g_forward.9} parent=5 // pred_fallthru
      _
    %p145 = scmp.lt.s32.totalorder %s10, 2
    // Predicated region
    $region17: #{g_forward.9} parent=5 // pred_check
      %p146 = pneg %p145
    $region18: #{g_forward.9} parent=5 // pred_check_branch
      %148 = sbr.rel (%p146) target = $region20
    $region19: #{g_forward.9} parent=5 // pred_region
      // Predicated region
      $region21: #{g_forward.9} parent=19 // pred_check
        %p149 = pneg %p44
      $region22: #{g_forward.9} parent=19 // pred_check_branch
        %151 = sbr.rel (%p149) target = $region24
      $region23: #{g_forward.9} parent=19 // pred_region
        %s152 = smul.u32 8, %s18
        %p153 = scmp.lt.s32.totalorder %s17, 1
        %s154 = scalar_select %p153, %s17, 1
        %p155 = scmp.lt.s32.totalorder %s152, 7
        %s156 = scalar_select %p155, %s152, 7
        %s157 = smul.addr %s156, 3
        %s158 = smul.addr %s154, 24
        %s159 = sadd.s32 %s157, %s158
        %s160 = smul.addr %s159, 4
        %s161 = scalar_lea.vmem %s0, %s160
        %s162 = smul.u32 8, %s18
      $region24: #{g_forward.9} parent=19 // pred_fallthru
        _
    $region20: #{g_forward.9} parent=5 // pred_fallthru
      _
    %p163 = scmp.le.s32.totalorder 1, %s10
    %p164 = scmp.lt.s32.totalorder %s10, 3
    %p165 = pnand %p163, %p164
    %p166 = pneg %p165
    // Predicated region
    $region25: #{g_forward.9} parent=5 // pred_check
      _
    $region26: #{g_forward.9} parent=5 // pred_check_branch
      %168 = sbr.rel (%p165) target = $region28
    $region27: #{g_forward.9} parent=5 // pred_region
      %s169 = ssub.s32 %s10, 1
      %s170 = smul.u32 8, %s20
      %p171 = scmp.lt.s32.totalorder %s19, 1
      %s172 = scalar_select %p171, %s19, 1
      %p173 = scmp.lt.s32.totalorder %s170, 7
      %s174 = scalar_select %p173, %s170, 7
      %s175 = smul.addr %s174, 3
      %s176 = smul.addr %s172, 24
      %s177 = sadd.s32 %s175, %s176
      %s178 = smul.addr %s177, 4
      %s179 = scalar_lea.vmem %s0, %s178
      %p180 = pneg %p50
      %p181 = pneg %p47
      %p182 = pneg %p71
      %p183 = pneg %p68
      %p184 = pneg %p99
      %p185 = pneg %p96
      %s186 = smul.u32 8, %s20
      %p187 = scmp.lt.s32.totalorder %s19, 1
      %s188 = scalar_select %p187, %s19, 1
      %p189 = scmp.lt.s32.totalorder %s186, 7
      %s190 = scalar_select %p189, %s186, 7
      %s191 = smul.addr %s188, 8
      %s192 = sadd.s32 %s190, %s191
      %s193 = smul.addr %s192, 4
      %s194 = scalar_lea.vmem %s2, %s193
      %p195 = pneg %p127
      %p196 = pneg %p124
      %p197 = scmp.lt.s32.totalorder %s19, 1
      %s198 = scalar_select %p197, %s19, 1
      %p199 = scmp.lt.s32.totalorder %s20, 0
      %s200 = scalar_select %p199, %s20, 0
      %s201 = sadd.s32 %s200, %s198
      %s202 = smul.addr %s201, 2
      %s203 = scalar_lea.vmem %s3, %s202
      %s204 = smul.u32 8, %s20
      %p205 = scmp.lt.s32.totalorder %s19, 1
      %s206 = scalar_select %p205, %s19, 1
      %p207 = scmp.lt.s32.totalorder %s204, 7
      %s208 = scalar_select %p207, %s204, 7
      %s209 = smul.addr %s208, 3
      %s210 = smul.addr %s206, 24
      %s211 = sadd.s32 %s209, %s210
      %s212 = smul.addr %s211, 4
      %s213 = scalar_lea.vmem %s0, %s212
      %s214 = smul.u32 8, %s20
      %s215 = smul.u32 8, %s20
      %p216 = scmp.lt.s32.totalorder %s19, 1
      %s217 = scalar_select %p216, %s19, 1
      %p218 = scmp.lt.s32.totalorder %s215, 7
      %s219 = scalar_select %p218, %s215, 7
      %s220 = smul.addr %s217, 8
      %s221 = sadd.s32 %s219, %s220
      %s222 = smul.addr %s221, 4
      %s223 = scalar_lea.vmem %s2, %s222
      %s224 = smul.u32 8, %s20
      %p225 = scmp.lt.s32.totalorder %s19, 1
      %s226 = scalar_select %p225, %s19, 1
      %p227 = scmp.lt.s32.totalorder %s20, 0
      %s228 = scalar_select %p227, %s20, 0
      %s229 = sadd.s32 %s228, %s226
      %s230 = smul.addr %s229, 2
      %s231 = scalar_lea.vmem %s3, %s230
      %v233 = vld [vmem:[%s213] sm:$0xff]
      %v234 = vld [vmem:[%s213 + $0x8] sm:$0xf]
      %v235 = vld [vmem:[%s213 + $0xc] sm:$0xff]
      %v236 = vld [vmem:[%s213 + $0x14] sm:$0xf]
      %v237 = vld [vmem:[%s213 + $0x18] sm:$0xff]
      %v238 = vld [vmem:[%s213 + $0x20] sm:$0xf]
      %v239 = vld [vmem:[%s213 + $0x24] sm:$0xff]
      %v240 = vld [vmem:[%s213 + $0x2c] sm:$0xf]
      %v241 = vld [vmem:[%s213 + $0x30] sm:$0xff]
      %v242 = vld [vmem:[%s213 + $0x38] sm:$0xf]
      %v243 = vld [vmem:[%s213 + $0x3c] sm:$0xff]
      %v244 = vld [vmem:[%s213 + $0x44] sm:$0xf]
      %v245 = vld [vmem:[%s213 + $0x48] sm:$0xff]
      %v246 = vld [vmem:[%s213 + $0x50] sm:$0xf]
      %v247 = vld [vmem:[%s213 + $0x54] sm:$0xff]
      %v248 = vld [vmem:[%s213 + $0x5c] sm:$0xf]
      %v249 = vld [vmem:[%s1] sm:$0xf]
      %v250 = vld [vmem:[%s1 + $0x4] sm:$0xf]
      %v251 = vld [vmem:[%s1 + $0x8] sm:$0xf]
      %v252 = vld [vmem:[%s1 + $0xc] sm:$0xf]
      %v253 = vld [vmem:[%s1 + $0x10] sm:$0xf]
      %v254 = vld [vmem:[%s1 + $0x14] sm:$0xf]
      %v255 = vld [vmem:[%s1 + $0x18] sm:$0xf]
      %v256 = vld [vmem:[%s1 + $0x1c] sm:$0xf]
      %v257 = vld [vmem:[%s1 + $0x20] sm:$0xf]
      %v258 = vld [vmem:[%s1 + $0x24] sm:$0xf]
      %v259 = vld [vmem:[%s1 + $0x28] sm:$0xf]
      %v260 = vld [vmem:[%s1 + $0x2c] sm:$0xf]
      %v261 = vld [vmem:[%s1 + $0x30] sm:$0xf]
      %v262 = vld [vmem:[%s1 + $0x34] sm:$0xf]
      %v263 = vld [vmem:[%s1 + $0x38] sm:$0xf]
      %v264 = vld [vmem:[%s1 + $0x3c] sm:$0xf]
      %v265 = vld [vmem:[%s1 + $0x40] sm:$0xf]
      %v266 = vld [vmem:[%s1 + $0x44] sm:$0xf]
      %v267 = vld [vmem:[%s1 + $0x48] sm:$0xf]
      %v268 = vld [vmem:[%s1 + $0x4c] sm:$0xf]
      %v269 = vld [vmem:[%s1 + $0x50] sm:$0xf]
      %v270 = vld [vmem:[%s1 + $0x54] sm:$0xf]
      %v271 = vld [vmem:[%s1 + $0x58] sm:$0xf]
      %v272 = vld [vmem:[%s1 + $0x5c] sm:$0xf]
      %v273 = vld [vmem:[%s1 + $0x60] sm:$0xf]
      %v274 = vld [vmem:[%s1 + $0x64] sm:$0xf]
      %v275 = vld [vmem:[%s1 + $0x68] sm:$0xf]
      %v276 = vld [vmem:[%s1 + $0x6c] sm:$0xf]
      %v277 = vld [vmem:[%s1 + $0x70] sm:$0xf]
      %v278 = vld [vmem:[%s1 + $0x74] sm:$0xf]
      %v279 = vld [vmem:[%s1 + $0x78] sm:$0xf]
      %v280 = vld [vmem:[%s1 + $0x7c] sm:$0xf]
      %v281 = vld [vmem:[%s1 + $0x80] sm:$0xf]
      %v282 = vld [vmem:[%s1 + $0x84] sm:$0xf]
      %v283 = vld [vmem:[%s1 + $0x88] sm:$0xf]
      %v284 = vld [vmem:[%s1 + $0x8c] sm:$0xf]
      %v301 = vunpack.c.l.b16 %v233
      %v302 = vunpack.c.h.b16 %v233
      %v303 = vunpack.c.l.b16 %v234
      %v304 = vunpack.c.l.b16 %v235
      %v305 = vunpack.c.h.b16 %v235
      %v306 = vunpack.c.l.b16 %v236
      %v307 = vunpack.c.l.b16 %v237
      %v308 = vunpack.c.h.b16 %v237
      %v309 = vunpack.c.l.b16 %v238
      %v310 = vunpack.c.l.b16 %v239
      %v311 = vunpack.c.h.b16 %v239
      %v312 = vunpack.c.l.b16 %v240
      %v313 = vunpack.c.l.b16 %v241
      %v314 = vunpack.c.h.b16 %v241
      %v315 = vunpack.c.l.b16 %v242
      %v316 = vunpack.c.l.b16 %v243
      %v317 = vunpack.c.h.b16 %v243
      %v318 = vunpack.c.l.b16 %v244
      %v319 = vunpack.c.l.b16 %v245
      %v320 = vunpack.c.h.b16 %v245
      %v321 = vunpack.c.l.b16 %v246
      %v322 = vunpack.c.l.b16 %v247
      %v323 = vunpack.c.h.b16 %v247
      %v324 = vunpack.c.l.b16 %v248
      %v325 = vpack.c.b16 %v304, %v301
      %v326 = vpack.c.b16 %v305, %v302
      %v327 = vpack.c.b16 %v306, %v303
      %v328 = vpack.c.b16 %v310, %v307
      %v329 = vpack.c.b16 %v311, %v308
      %v330 = vpack.c.b16 %v312, %v309
      %v331 = vpack.c.b16 %v316, %v313
      %v332 = vpack.c.b16 %v317, %v314
      %v333 = vpack.c.b16 %v318, %v315
      %v334 = vpack.c.b16 %v322, %v319
      %v335 = vpack.c.b16 %v323, %v320
      %v336 = vpack.c.b16 %v324, %v321
      %v381 = vunpack.c.l.b16 %v249
      %v382 = vunpack.c.l.b16 %v250
      %v383 = vunpack.c.l.b16 %v251
      %v384 = vunpack.c.l.b16 %v252
      %v385 = vunpack.c.l.b16 %v253
      %v386 = vunpack.c.l.b16 %v254
      %v387 = vunpack.c.l.b16 %v255
      %v388 = vunpack.c.l.b16 %v256
      %v389 = vunpack.c.l.b16 %v257
      %v390 = vunpack.c.l.b16 %v258
      %v391 = vunpack.c.l.b16 %v259
      %v392 = vunpack.c.l.b16 %v260
      %v393 = vunpack.c.l.b16 %v261
      %v394 = vunpack.c.l.b16 %v262
      %v395 = vunpack.c.l.b16 %v263
      %v396 = vunpack.c.l.b16 %v264
      %v397 = vunpack.c.l.b16 %v265
      %v398 = vunpack.c.l.b16 %v266
      %v399 = vunpack.c.l.b16 %v267
      %v400 = vunpack.c.l.b16 %v268
      %v401 = vunpack.c.l.b16 %v269
      %v402 = vunpack.c.l.b16 %v270
      %v403 = vunpack.c.l.b16 %v271
      %v404 = vunpack.c.l.b16 %v272
      %v405 = vunpack.c.l.b16 %v273
      %v406 = vunpack.c.l.b16 %v274
      %v407 = vunpack.c.l.b16 %v275
      %v408 = vunpack.c.l.b16 %v276
      %v409 = vunpack.c.l.b16 %v277
      %v410 = vunpack.c.l.b16 %v278
      %v411 = vunpack.c.l.b16 %v279
      %v412 = vunpack.c.l.b16 %v280
      %v413 = vunpack.c.l.b16 %v281
      %v414 = vunpack.c.l.b16 %v282
      %v415 = vunpack.c.l.b16 %v283
      %v416 = vunpack.c.l.b16 %v284
      %v417 = vpack.c.b16 %v382, %v381
      %v418 = vpack.c.b16 %v384, %v383
      %v419 = vpack.c.b16 %v386, %v385
      %v420 = vpack.c.b16 %v388, %v387
      %v421 = vpack.c.b16 %v390, %v389
      %v422 = vpack.c.b16 %v392, %v391
      %v423 = vpack.c.b16 %v394, %v393
      %v424 = vpack.c.b16 %v396, %v395
      %v425 = vpack.c.b16 %v398, %v397
      %v426 = vpack.c.b16 %v400, %v399
      %v427 = vpack.c.b16 %v402, %v401
      %v428 = vpack.c.b16 %v404, %v403
      %v429 = vpack.c.b16 %v406, %v405
      %v430 = vpack.c.b16 %v408, %v407
      %v431 = vpack.c.b16 %v410, %v409
      %v432 = vpack.c.b16 %v412, %v411
      %v433 = vpack.c.b16 %v414, %v413
      %v434 = vpack.c.b16 %v416, %v415
      %vm453 = vcmask 261120
      %v455 = vsel %vm453, %v327, 0
      %v458 = vsel %vm453, %v330, 0
      %v461 = vsel %vm453, %v333, 0
      %v464 = vsel %vm453, %v336, 0
      %466 = vmatpush.bf16.msra.mxu0 %v424
      %467 = vmatpush.bf16.msra.mxu0 %v423
      %468 = vmatpush.bf16.msra.mxu0 %v422
      %469 = vmatpush.bf16.msra.mxu0 %v421
      %470 = vmatpush.bf16.msra.mxu0 %v420
      %471 = vmatpush.bf16.msra.mxu0 %v419
      %472 = vmatpush.bf16.msra.mxu0 %v418
      %473 = vmatpush.bf16.msra.mxu0 %v417
      %474 = vmatmul.bf16.gmra.mxu0 %v325
      %v475 = vpop.f32.mrf.mxu0
      %v476 = vadd.f32 0.0, %v475
      %v477 = vpop.f32.mrf.mxu0
      %v478 = vadd.f32 0.0, %v477
      %479 = vmatmul.bf16.gmra.mxu0 %v328
      %v480 = vpop.f32.mrf.mxu0
      %v481 = vadd.f32 0.0, %v480
      %v482 = vpop.f32.mrf.mxu0
      %v483 = vadd.f32 0.0, %v482
      %484 = vmatmul.bf16.gmra.mxu0 %v331
      %v485 = vpop.f32.mrf.mxu0
      %v486 = vadd.f32 0.0, %v485
      %v487 = vpop.f32.mrf.mxu0
      %v488 = vadd.f32 0.0, %v487
      %489 = vmatmul.bf16.gmra.mxu0 %v334
      %v490 = vpop.f32.mrf.mxu0
      %v491 = vadd.f32 0.0, %v490
      %v492 = vpop.f32.mrf.mxu0
      %v493 = vadd.f32 0.0, %v492
      %494 = vdwg.mxu0
      %495 = vmatpush.bf16.msra.mxu0 %v432
      %496 = vmatpush.bf16.msra.mxu0 %v431
      %497 = vmatpush.bf16.msra.mxu0 %v430
      %498 = vmatpush.bf16.msra.mxu0 %v429
      %499 = vmatpush.bf16.msra.mxu0 %v428
      %500 = vmatpush.bf16.msra.mxu0 %v427
      %501 = vmatpush.bf16.msra.mxu0 %v426
      %502 = vmatpush.bf16.msra.mxu0 %v425
      %503 = vmatmul.bf16.gmra.mxu0 %v326
      %v504 = vpop.f32.mrf.mxu0
      %v505 = vadd.f32 %v476, %v504
      %v506 = vpop.f32.mrf.mxu0
      %v507 = vadd.f32 %v478, %v506
      %508 = vmatmul.bf16.gmra.mxu0 %v329
      %v509 = vpop.f32.mrf.mxu0
      %v510 = vadd.f32 %v481, %v509
      %v511 = vpop.f32.mrf.mxu0
      %v512 = vadd.f32 %v483, %v511
      %513 = vmatmul.bf16.gmra.mxu0 %v332
      %v514 = vpop.f32.mrf.mxu0
      %v515 = vadd.f32 %v486, %v514
      %v516 = vpop.f32.mrf.mxu0
      %v517 = vadd.f32 %v488, %v516
      %518 = vmatmul.bf16.gmra.mxu0 %v335
      %v519 = vpop.f32.mrf.mxu0
      %v520 = vadd.f32 %v491, %v519
      %v521 = vpop.f32.mrf.mxu0
      %v522 = vadd.f32 %v493, %v521
      %523 = vdwg.mxu0
      %524 = vmatpush.bf16.msra.mxu0 0
      %525 = vmatpush.bf16.msra.mxu0 0
      %526 = vmatpush.bf16.msra.mxu0 0
      %527 = vmatpush.bf16.msra.mxu0 0
      %528 = vmatpush.bf16.msra.mxu0 0
      %529 = vmatpush.bf16.msra.mxu0 0
      %530 = vmatpush.bf16.msra.mxu0 %v434
      %531 = vmatpush.bf16.msra.mxu0 %v433
      %532 = vmatmul.bf16.gmra.mxu0 %v455
      %v533 = vpop.f32.mrf.mxu0
      %v534 = vadd.f32 %v505, %v533
      %v535 = vpop.f32.mrf.mxu0
      %v536 = vadd.f32 %v507, %v535
      %537 = vmatmul.bf16.gmra.mxu0 %v458
      %v538 = vpop.f32.mrf.mxu0
      %v539 = vadd.f32 %v510, %v538
      %v540 = vpop.f32.mrf.mxu0
      %v541 = vadd.f32 %v512, %v540
      %542 = vmatmul.bf16.gmra.mxu0 %v461
      %v543 = vpop.f32.mrf.mxu0
      %v544 = vadd.f32 %v515, %v543
      %v545 = vpop.f32.mrf.mxu0
      %v546 = vadd.f32 %v517, %v545
      %547 = vmatmul.bf16.gmra.mxu0 %v464
      %v548 = vpop.f32.mrf.mxu0
      %v549 = vadd.f32 %v520, %v548
      %v550 = vpop.f32.mrf.mxu0
      %v551 = vadd.f32 %v522, %v550
      %552 = vdwg.mxu0
      %v553 = vpack.c.bf16 %v534, %v534
      %v554 = vpack.c.bf16 %v536, %v536
      %v555 = vpack.c.bf16 %v539, %v539
      %v556 = vpack.c.bf16 %v541, %v541
      %v557 = vpack.c.bf16 %v544, %v544
      %v558 = vpack.c.bf16 %v546, %v546
      %v559 = vpack.c.bf16 %v549, %v549
      %v560 = vpack.c.bf16 %v551, %v551
      %561 = vst [vmem:[%s223] sm:$0xf] %v553
      %562 = vst [vmem:[%s223 + $0x4] sm:$0xf] %v554
      %563 = vst [vmem:[%s223 + $0x8] sm:$0xf] %v555
      %564 = vst [vmem:[%s223 + $0xc] sm:$0xf] %v556
      %565 = vst [vmem:[%s223 + $0x10] sm:$0xf] %v557
      %566 = vst [vmem:[%s223 + $0x14] sm:$0xf] %v558
      %567 = vst [vmem:[%s223 + $0x18] sm:$0xf] %v559
      %568 = vst [vmem:[%s223 + $0x1c] sm:$0xf] %v560
      %v569 = vadd.f32 %v534, %v536
      %v570 = vadd.f32 %v569, %v539
      %v571 = vadd.f32 %v570, %v541
      %v572 = vadd.f32 %v571, %v544
      %v573 = vadd.f32 %v572, %v546
      %v574 = vadd.f32 %v573, %v549
      %v575 = vadd.f32 %v574, %v551
      %v576 = vrot.slane %v575, 4
      %v577 = vadd.f32 %v575, %v576
      %v578 = vrot.slane %v577, 2
      %v579 = vadd.f32 %v577, %v578
      %v580 = vrot.slane %v579, 1
      %v581 = vadd.f32 %v579, %v580
      %v582 = vmul.f32 %v534, %v534
      %v583 = vmul.f32 %v536, %v536
      %v584 = vmul.f32 %v539, %v539
      %v585 = vmul.f32 %v541, %v541
      %v586 = vmul.f32 %v544, %v544
      %v587 = vmul.f32 %v546, %v546
      %v588 = vmul.f32 %v549, %v549
      %v589 = vmul.f32 %v551, %v551
      %v590 = vadd.f32 %v582, %v583
      %v591 = vadd.f32 %v590, %v584
      %v592 = vadd.f32 %v591, %v585
      %v593 = vadd.f32 %v592, %v586
      %v594 = vadd.f32 %v593, %v587
      %v595 = vadd.f32 %v594, %v588
      %v596 = vadd.f32 %v595, %v589
      %v597 = vrot.slane %v596, 4
      %v598 = vadd.f32 %v596, %v597
      %v599 = vrot.slane %v598, 2
      %v600 = vadd.f32 %v598, %v599
      %v601 = vrot.slane %v600, 1
      %v602 = vadd.f32 %v600, %v601
      %vm603 = vcmask 1040384
      %v604 = vsel %vm603, %v581, %v602
      %605 = vst [vmem:[%s231] sm:$0x3] %v604
      %s606 = smul.u32 8, %s20
      %p607 = scmp.lt.s32.totalorder %s19, 1
      %s608 = scalar_select %p607, %s19, 1
      %p609 = scmp.lt.s32.totalorder %s606, 7
      %s610 = scalar_select %p609, %s606, 7
      %s611 = smul.addr %s608, 8
      %s612 = sadd.s32 %s610, %s611
      %s613 = smul.addr %s612, 4
      %s614 = scalar_lea.vmem %s2, %s613
      %p615 = scmp.lt.s32.totalorder %s19, 1
      %s616 = scalar_select %p615, %s19, 1
      %p617 = scmp.lt.s32.totalorder %s20, 0
      %s618 = scalar_select %p617, %s20, 0
      %s619 = sadd.s32 %s618, %s616
      %s620 = smul.addr %s619, 2
      %s621 = scalar_lea.vmem %s3, %s620
      // Predicated region
      $region29: #{g_forward.9} parent=27 // pred_check
        %p622 = pneg %p96
      $region30: #{g_forward.9} parent=27 // pred_check_branch
        %624 = sbr.rel (%p622) target = $region32
      $region31: #{g_forward.9} parent=27 // pred_region
        %s625 = smul.u32 8, %s20
      $region32: #{g_forward.9} parent=27 // pred_fallthru
        _
      // Predicated region
      $region33: #{g_forward.9} parent=27 // pred_check
        %p626 = pneg %p124
      $region34: #{g_forward.9} parent=27 // pred_check_branch
        %628 = sbr.rel (%p626) target = $region36
      $region35: #{g_forward.9} parent=27 // pred_region
        _
      $region36: #{g_forward.9} parent=27 // pred_fallthru
        _
    $region28: #{g_forward.9} parent=5 // pred_fallthru
      _
    %p629 = scmp.le.s32.totalorder 2, %s10
    // Predicated region
    $region37: #{g_forward.9} parent=5 // pred_check
      %p630 = pneg %p629
    $region38: #{g_forward.9} parent=5 // pred_check_branch
      %632 = sbr.rel (%p630) target = $region40
    $region39: #{g_forward.9} parent=5 // pred_region
      %s633 = ssub.s32 %s10, 2
      // Predicated region
      $region41: #{g_forward.9} parent=39 // pred_check
        %p634 = pneg %p102
      $region42: #{g_forward.9} parent=39 // pred_check_branch
        %636 = sbr.rel (%p634) target = $region44
      $region43: #{g_forward.9} parent=39 // pred_region
        %s637 = smul.u32 8, %s22
        %p638 = scmp.lt.s32.totalorder %s21, 1
        %s639 = scalar_select %p638, %s21, 1
        %p640 = scmp.lt.s32.totalorder %s637, 7
        %s641 = scalar_select %p640, %s637, 7
        %s642 = smul.addr %s639, 8
        %s643 = sadd.s32 %s641, %s642
        %s644 = smul.addr %s643, 4
        %s645 = scalar_lea.vmem %s2, %s644
      $region44: #{g_forward.9} parent=39 // pred_fallthru
        _
      // Predicated region
      $region45: #{g_forward.9} parent=39 // pred_check
        %p646 = pneg %p130
      $region46: #{g_forward.9} parent=39 // pred_check_branch
        %648 = sbr.rel (%p646) target = $region48
      $region47: #{g_forward.9} parent=39 // pred_region
        %p649 = scmp.lt.s32.totalorder %s21, 1
        %s650 = scalar_select %p649, %s21, 1
        %p651 = scmp.lt.s32.totalorder %s22, 0
        %s652 = scalar_select %p651, %s22, 0
        %s653 = sadd.s32 %s652, %s650
        %s654 = smul.addr %s653, 2
        %s655 = scalar_lea.vmem %s3, %s654
      $region48: #{g_forward.9} parent=39 // pred_fallthru
        _
    $region40: #{g_forward.9} parent=5 // pred_fallthru
      _
  $region6: #{g_forward.9} parent=0 // loop_footer
    %s14 = sadd.s32 1, %s10
  $region7: #{g_forward.9} parent=0 // loop_footer_branch
    %9 = sbr.rel target = $region3
  $region8: #{g_forward.9} parent=0 // loop_exit
    _

// kernel: g_forward.10
$region0: #{g_forward.10}
  #allocation0 [shape = 'u32[]', space=smem, size = 0x4, offset = 0x4, fixed_abs, tag = 'smem constant byte address 0x4 - core index']
  #allocation1 [shape = 'u32[72,128]{1,0:T(1,128)}', space=vmem, size = 0x9000, scoped, tag = 'internal scratch']
  %s0 = inlined_call_operand.vmem [shape: bf16[2,256,288], index: 0, kind: input, shape index: {}]
  %s1 = inlined_call_operand.vmem [shape: bf16[288,128], index: 1, kind: input, shape index: {}]
  %s2 = inlined_call_operand.vmem [shape: bf16[2,256,128], index: 2, kind: output, shape index: {0}]
  %s3 = inlined_call_operand.vmem [shape: f32[2,1,2,128], index: 3, kind: output, shape index: {1}]
  %4 = xla_tuple %s2, %s3
  %s5 = sld [smem:[#allocation0]]
  $region49: #{g_forward.10} parent=0
    _
  %s7 = ssub.s32 1, %s5
  %s8 = scalar_select 0, %s7, %s5
  loop: start=0, step=1, limit=4
  $region2: #{g_forward.10} parent=0 // loop_pre_header
    _
  $region3: #{g_forward.10} parent=0 // loop_header
    %s10 = sphi 0, %s14
    %p11 = scmp.ge.s32.totalorder %s10, 4
    %s17 = sphi 0, %s29
    %s18 = sphi 0, %s25
    %s19 = sphi 0, %s17
    %s20 = sphi 0, %s18
    %s21 = sphi 0, %s19
    %s22 = sphi 0, %s20
    %s34 = sphi 0, %s36
    %s37 = sphi 0, %s34
    %s38 = sphi 0, %s37
    %s54 = sphi 0, %s38
    %s58 = sphi 0, %s58
    %s60 = sphi 0, %s58
    %s61 = sphi 0, %s60
    %s75 = sphi 0, %s61
    %s83 = sphi 0, %s85
    %s86 = sphi 0, %s83
    %s87 = sphi 0, %s86
    %s103 = sphi 0, %s87
    %s111 = sphi 0, %s113
    %s114 = sphi 0, %s111
    %s115 = sphi 0, %s114
    %s131 = sphi 0, %s115
  $region4: #{g_forward.10} parent=0 // loop_header_branch
    %13 = sbr.rel (%p11) target = $region8
  $region5: #{g_forward.10} parent=0 // loop_body
    %s15 = ssub.s32 %s10, 1
    %s16 = ssub.s32 %s10, 2
    %s23 = sadd.s32 1, %s18
    %p24 = scmp.ge.s32.totalorder %s23, 1
    %s25 = scalar_select %p24, 0, %s23
    %s26 = sadd.s32 1, %s17
    %s27 = scalar_select %p24, %s26, %s17
    %p28 = scmp.ge.s32.totalorder %s27, 2
    %s29 = scalar_select %p28, 0, %s27
    %s30 = ssub.s32 %s17, %s29
    %s31 = ssub.s32 %s18, %s25
    %s32 = sor.u32 %s30, %s31
    %p33 = scmp.eq.s32.totalorder %s32, 0
    %s35 = sadd.s32 %s34, 1
    %s36 = scalar_select %p33, %s34, %s35
    %p39 = pneg %p33
    %p40 = scmp.eq.s32.totalorder %s10, 1
    %p41 = por %p39, %p40
    %p42 = scmp.ne.s32.totalorder %s34, %s37
    %p43 = scmp.eq.s32.totalorder %s10, 0
    %p44 = por %p42, %p43
    %p45 = scmp.ne.s32.totalorder %s34, %s37
    %p46 = scmp.eq.s32.totalorder %s15, 1
    %p47 = por %p45, %p46
    %p48 = scmp.ne.s32.totalorder %s37, %s38
    %p49 = scmp.eq.s32.totalorder %s15, 0
    %p50 = por %p48, %p49
    %p51 = scmp.ne.s32.totalorder %s37, %s38
    %p52 = scmp.eq.s32.totalorder %s16, 1
    %p53 = por %p51, %p52
    %p55 = scmp.ne.s32.totalorder %s38, %s54
    %p56 = scmp.eq.s32.totalorder %s16, 0
    %p57 = por %p55, %p56
    %s59 = sadd.s32 %s58, 1
    %p62 = scmp.eq.s32.totalorder %s10, 1
    %p63 = scmp.ne.s32.totalorder %s58, %s60
    %p64 = scmp.eq.s32.totalorder %s10, 0
    %p65 = por %p63, %p64
    %p66 = scmp.ne.s32.totalorder %s58, %s60
    %p67 = scmp.eq.s32.totalorder %s15, 1
    %p68 = por %p66, %p67
    %p69 = scmp.ne.s32.totalorder %s60, %s61
    %p70 = scmp.eq.s32.totalorder %s15, 0
    %p71 = por %p69, %p70
    %p72 = scmp.ne.s32.totalorder %s60, %s61
    %p73 = scmp.eq.s32.totalorder %s16, 1
    %p74 = por %p72, %p73
    %p76 = scmp.ne.s32.totalorder %s61, %s75
    %p77 = scmp.eq.s32.totalorder %s16, 0
    %p78 = por %p76, %p77
    %s79 = ssub.s32 %s17, %s29
    %s80 = ssub.s32 %s18, %s25
    %s81 = sor.u32 %s79, %s80
    %p82 = scmp.eq.s32.totalorder %s81, 0
    %s84 = sadd.s32 %s83, 1
    %s85 = scalar_select %p82, %s83, %s84
    %p88 = pneg %p82
    %p89 = scmp.eq.s32.totalorder %s10, 1
    %p90 = por %p88, %p89
    %p91 = scmp.ne.s32.totalorder %s83, %s86
    %p92 = scmp.eq.s32.totalorder %s10, 0
    %p93 = por %p91, %p92
    %p94 = scmp.ne.s32.totalorder %s83, %s86
    %p95 = scmp.eq.s32.totalorder %s15, 1
    %p96 = por %p94, %p95
    %p97 = scmp.ne.s32.totalorder %s86, %s87
    %p98 = scmp.eq.s32.totalorder %s15, 0
    %p99 = por %p97, %p98
    %p100 = scmp.ne.s32.totalorder %s86, %s87
    %p101 = scmp.eq.s32.totalorder %s16, 1
    %p102 = por %p100, %p101
    %p104 = scmp.ne.s32.totalorder %s87, %s103
    %p105 = scmp.eq.s32.totalorder %s16, 0
    %p106 = por %p104, %p105
    %s107 = ssub.s32 %s17, %s29
    %s108 = ssub.s32 %s18, %s25
    %s109 = sor.u32 %s107, %s108
    %p110 = scmp.eq.s32.totalorder %s109, 0
    %s112 = sadd.s32 %s111, 1
    %s113 = scalar_select %p110, %s111, %s112
    %p116 = pneg %p110
    %p117 = scmp.eq.s32.totalorder %s10, 1
    %p118 = por %p116, %p117
    %p119 = scmp.ne.s32.totalorder %s111, %s114
    %p120 = scmp.eq.s32.totalorder %s10, 0
    %p121 = por %p119, %p120
    %p122 = scmp.ne.s32.totalorder %s111, %s114
    %p123 = scmp.eq.s32.totalorder %s15, 1
    %p124 = por %p122, %p123
    %p125 = scmp.ne.s32.totalorder %s114, %s115
    %p126 = scmp.eq.s32.totalorder %s15, 0
    %p127 = por %p125, %p126
    %p128 = scmp.ne.s32.totalorder %s114, %s115
    %p129 = scmp.eq.s32.totalorder %s16, 1
    %p130 = por %p128, %p129
    %p132 = scmp.ne.s32.totalorder %s115, %s131
    %p133 = scmp.eq.s32.totalorder %s16, 0
    %p134 = por %p132, %p133
    %p135 = scmp.le.s32.totalorder 1, %s10
    %p136 = scmp.lt.s32.totalorder %s10, 3
    %p137 = pnand %p135, %p136
    %p138 = pneg %p137
    // Predicated region
    $region9: #{g_forward.10} parent=5 // pred_check
      _
    $region10: #{g_forward.10} parent=5 // pred_check_branch
      %140 = sbr.rel (%p137) target = $region12
    $region11: #{g_forward.10} parent=5 // pred_region
      %s141 = ssub.s32 %s10, 1
      // Predicated region
      $region13: #{g_forward.10} parent=11 // pred_check
        %p142 = pneg %p71
      $region14: #{g_forward.10} parent=11 // pred_check_branch
        %144 = sbr.rel (%p142) target = $region16
      $region15: #{g_forward.10} parent=11 // pred_region
        _
      $region16: #{g_forward.10} parent=11 // pred_fallthru
        _
    $region12: #{g_forward.10} parent=5 // pred_fallthru
      _
    %p145 = scmp.lt.s32.totalorder %s10, 2
    // Predicated region
    $region17: #{g_forward.10} parent=5 // pred_check
      %p146 = pneg %p145
    $region18: #{g_forward.10} parent=5 // pred_check_branch
      %148 = sbr.rel (%p146) target = $region20
    $region19: #{g_forward.10} parent=5 // pred_region
      // Predicated region
      $region21: #{g_forward.10} parent=19 // pred_check
        %p149 = pneg %p44
      $region22: #{g_forward.10} parent=19 // pred_check_branch
        %151 = sbr.rel (%p149) target = $region24
      $region23: #{g_forward.10} parent=19 // pred_region
        %s152 = smul.u32 32, %s18
        %p153 = scmp.lt.s32.totalorder %s17, 1
        %s154 = scalar_select %p153, %s17, 1
        %p155 = scmp.lt.s32.totalorder %s152, 31
        %s156 = scalar_select %p155, %s152, 31
        %s157 = smul.addr %s156, 3
        %s158 = smul.addr %s154, 96
        %s159 = sadd.s32 %s157, %s158
        %s160 = smul.addr %s159, 4
        %s161 = scalar_lea.vmem %s0, %s160
        %s162 = smul.u32 32, %s18
      $region24: #{g_forward.10} parent=19 // pred_fallthru
        _
    $region20: #{g_forward.10} parent=5 // pred_fallthru
      _
    %p163 = scmp.le.s32.totalorder 1, %s10
    %p164 = scmp.lt.s32.totalorder %s10, 3
    %p165 = pnand %p163, %p164
    %p166 = pneg %p165
    // Predicated region
    $region25: #{g_forward.10} parent=5 // pred_check
      _
    $region26: #{g_forward.10} parent=5 // pred_check_branch
      %168 = sbr.rel (%p165) target = $region28
    $region27: #{g_forward.10} parent=5 // pred_region
      %s169 = ssub.s32 %s10, 1
      %s170 = smul.u32 32, %s20
      %p171 = scmp.lt.s32.totalorder %s19, 1
      %s172 = scalar_select %p171, %s19, 1
      %p173 = scmp.lt.s32.totalorder %s170, 31
      %s174 = scalar_select %p173, %s170, 31
      %s175 = smul.addr %s174, 3
      %s176 = smul.addr %s172, 96
      %s177 = sadd.s32 %s175, %s176
      %s178 = smul.addr %s177, 4
      %s179 = scalar_lea.vmem %s0, %s178
      %p180 = pneg %p50
      %p181 = pneg %p47
      %p182 = pneg %p71
      %p183 = pneg %p68
      %p184 = pneg %p99
      %p185 = pneg %p96
      %s186 = smul.u32 32, %s20
      %p187 = scmp.lt.s32.totalorder %s19, 1
      %s188 = scalar_select %p187, %s19, 1
      %p189 = scmp.lt.s32.totalorder %s186, 31
      %s190 = scalar_select %p189, %s186, 31
      %s191 = smul.addr %s188, 32
      %s192 = sadd.s32 %s190, %s191
      %s193 = smul.addr %s192, 4
      %s194 = scalar_lea.vmem %s2, %s193
      %p195 = pneg %p127
      %p196 = pneg %p124
      %p197 = scmp.lt.s32.totalorder %s19, 1
      %s198 = scalar_select %p197, %s19, 1
      %p199 = scmp.lt.s32.totalorder %s20, 0
      %s200 = scalar_select %p199, %s20, 0
      %s201 = sadd.s32 %s200, %s198
      %s202 = smul.addr %s201, 2
      %s203 = scalar_lea.vmem %s3, %s202
      %s204 = smul.u32 32, %s20
      %p205 = scmp.lt.s32.totalorder %s19, 1
      %s206 = scalar_select %p205, %s19, 1
      %p207 = scmp.lt.s32.totalorder %s204, 31
      %s208 = scalar_select %p207, %s204, 31
      %s209 = smul.addr %s208, 3
      %s210 = smul.addr %s206, 96
      %s211 = sadd.s32 %s209, %s210
      %s212 = smul.addr %s211, 4
      %s213 = scalar_lea.vmem %s0, %s212
      %s214 = smul.u32 32, %s20
      %s215 = smul.u32 32, %s20
      %p216 = scmp.lt.s32.totalorder %s19, 1
      %s217 = scalar_select %p216, %s19, 1
      %p218 = scmp.lt.s32.totalorder %s215, 31
      %s219 = scalar_select %p218, %s215, 31
      %s220 = smul.addr %s217, 32
      %s221 = sadd.s32 %s219, %s220
      %s222 = smul.addr %s221, 4
      %s223 = scalar_lea.vmem %s2, %s222
      %s224 = smul.u32 32, %s20
      %p225 = scmp.lt.s32.totalorder %s19, 1
      %s226 = scalar_select %p225, %s19, 1
      %p227 = scmp.lt.s32.totalorder %s20, 0
      %s228 = scalar_select %p227, %s20, 0
      %s229 = sadd.s32 %s228, %s226
      %s230 = smul.addr %s229, 2
      %s231 = scalar_lea.vmem %s3, %s230
      %v233 = vld [vmem:[%s213] sm:$0xff]
      %v234 = vld [vmem:[%s213 + $0x8] sm:$0xf]
      %v235 = vld [vmem:[%s213 + $0xc] sm:$0xff]
      %v236 = vld [vmem:[%s213 + $0x14] sm:$0xf]
      %v237 = vld [vmem:[%s213 + $0x18] sm:$0xff]
      %v238 = vld [vmem:[%s213 + $0x20] sm:$0xf]
      %v239 = vld [vmem:[%s213 + $0x24] sm:$0xff]
      %v240 = vld [vmem:[%s213 + $0x2c] sm:$0xf]
      %v241 = vld [vmem:[%s213 + $0x30] sm:$0xff]
      %v242 = vld [vmem:[%s213 + $0x38] sm:$0xf]
      %v243 = vld [vmem:[%s213 + $0x3c] sm:$0xff]
      %v244 = vld [vmem:[%s213 + $0x44] sm:$0xf]
      %v245 = vld [vmem:[%s213 + $0x48] sm:$0xff]
      %v246 = vld [vmem:[%s213 + $0x50] sm:$0xf]
      %v247 = vld [vmem:[%s213 + $0x54] sm:$0xff]
      %v248 = vld [vmem:[%s213 + $0x5c] sm:$0xf]
      %v249 = vld [vmem:[%s213 + $0x60] sm:$0xff]
      %v250 = vld [vmem:[%s213 + $0x68] sm:$0xf]
      %v251 = vld [vmem:[%s213 + $0x6c] sm:$0xff]
      %v252 = vld [vmem:[%s213 + $0x74] sm:$0xf]
      %v253 = vld [vmem:[%s213 + $0x78] sm:$0xff]
      %v254 = vld [vmem:[%s213 + $0x80] sm:$0xf]
      %v255 = vld [vmem:[%s213 + $0x84] sm:$0xff]
      %v256 = vld [vmem:[%s213 + $0x8c] sm:$0xf]
      %v257 = vld [vmem:[%s213 + $0x90] sm:$0xff]
      %v258 = vld [vmem:[%s213 + $0x98] sm:$0xf]
      %v259 = vld [vmem:[%s213 + $0x9c] sm:$0xff]
      %v260 = vld [vmem:[%s213 + $0xa4] sm:$0xf]
      %v261 = vld [vmem:[%s213 + $0xa8] sm:$0xff]
      %v262 = vld [vmem:[%s213 + $0xb0] sm:$0xf]
      %v263 = vld [vmem:[%s213 + $0xb4] sm:$0xff]
      %v264 = vld [vmem:[%s213 + $0xbc] sm:$0xf]
      %v265 = vld [vmem:[%s213 + $0xc0] sm:$0xff]
      %v266 = vld [vmem:[%s213 + $0xc8] sm:$0xf]
      %v267 = vld [vmem:[%s213 + $0xcc] sm:$0xff]
      %v268 = vld [vmem:[%s213 + $0xd4] sm:$0xf]
      %v269 = vld [vmem:[%s213 + $0xd8] sm:$0xff]
      %v270 = vld [vmem:[%s213 + $0xe0] sm:$0xf]
      %v271 = vld [vmem:[%s213 + $0xe4] sm:$0xff]
      %v272 = vld [vmem:[%s213 + $0xec] sm:$0xf]
      %v273 = vld [vmem:[%s213 + $0xf0] sm:$0xff]
      %v274 = vld [vmem:[%s213 + $0xf8] sm:$0xf]
      %v275 = vld [vmem:[%s213 + $0xfc] sm:$0xff]
      %v276 = vld [vmem:[%s213 + $0x104] sm:$0xf]
      %v277 = vld [vmem:[%s213 + $0x108] sm:$0xff]
      %v278 = vld [vmem:[%s213 + $0x110] sm:$0xf]
      %v279 = vld [vmem:[%s213 + $0x114] sm:$0xff]
      %v280 = vld [vmem:[%s213 + $0x11c] sm:$0xf]
      %v281 = vld [vmem:[%s213 + $0x120] sm:$0xff]
      %v282 = vld [vmem:[%s213 + $0x128] sm:$0xf]
      %v283 = vld [vmem:[%s213 + $0x12c] sm:$0xff]
      %v284 = vld [vmem:[%s213 + $0x134] sm:$0xf]
      %v285 = vld [vmem:[%s213 + $0x138] sm:$0xff]
      %v286 = vld [vmem:[%s213 + $0x140] sm:$0xf]
      %v287 = vld [vmem:[%s213 + $0x144] sm:$0xff]
      %v288 = vld [vmem:[%s213 + $0x14c] sm:$0xf]
      %v289 = vld [vmem:[%s213 + $0x150] sm:$0xff]
      %v290 = vld [vmem:[%s213 + $0x158] sm:$0xf]
      %v291 = vld [vmem:[%s213 + $0x15c] sm:$0xff]
      %v292 = vld [vmem:[%s213 + $0x164] sm:$0xf]
      %v293 = vld [vmem:[%s213 + $0x168] sm:$0xff]
      %v294 = vld [vmem:[%s213 + $0x170] sm:$0xf]
      %v295 = vld [vmem:[%s213 + $0x174] sm:$0xff]
      %v296 = vld [vmem:[%s213 + $0x17c] sm:$0xf]
      %v297 = vld [vmem:[%s1] sm:$0xf]
      %v298 = vld [vmem:[%s1 + $0x4] sm:$0xf]
      %v299 = vld [vmem:[%s1 + $0x8] sm:$0xf]
      %v300 = vld [vmem:[%s1 + $0xc] sm:$0xf]
      %v301 = vld [vmem:[%s1 + $0x10] sm:$0xf]
      %v302 = vld [vmem:[%s1 + $0x14] sm:$0xf]
      %v303 = vld [vmem:[%s1 + $0x18] sm:$0xf]
      %v304 = vld [vmem:[%s1 + $0x1c] sm:$0xf]
      %v305 = vld [vmem:[%s1 + $0x20] sm:$0xf]
      %v306 = vld [vmem:[%s1 + $0x24] sm:$0xf]
      %v307 = vld [vmem:[%s1 + $0x28] sm:$0xf]
      %v308 = vld [vmem:[%s1 + $0x2c] sm:$0xf]
      %v309 = vld [vmem:[%s1 + $0x30] sm:$0xf]
      %v310 = vld [vmem:[%s1 + $0x34] sm:$0xf]
      %v311 = vld [vmem:[%s1 + $0x38] sm:$0xf]
      %v312 = vld [vmem:[%s1 + $0x3c] sm:$0xf]
      %v313 = vld [vmem:[%s1 + $0x40] sm:$0xf]
      %v314 = vld [vmem:[%s1 + $0x44] sm:$0xf]
      %v315 = vld [vmem:[%s1 + $0x48] sm:$0xf]
      %v316 = vld [vmem:[%s1 + $0x4c] sm:$0xf]
      %v317 = vld [vmem:[%s1 + $0x50] sm:$0xf]
      %v318 = vld [vmem:[%s1 + $0x54] sm:$0xf]
      %v319 = vld [vmem:[%s1 + $0x58] sm:$0xf]
      %v320 = vld [vmem:[%s1 + $0x5c] sm:$0xf]
      %v321 = vld [vmem:[%s1 + $0x60] sm:$0xf]
      %v322 = vld [vmem:[%s1 + $0x64] sm:$0xf]
      %v323 = vld [vmem:[%s1 + $0x68] sm:$0xf]
      %v324 = vld [vmem:[%s1 + $0x6c] sm:$0xf]
      %v325 = vld [vmem:[%s1 + $0x70] sm:$0xf]
      %v326 = vld [vmem:[%s1 + $0x74] sm:$0xf]
      %v327 = vld [vmem:[%s1 + $0x78] sm:$0xf]
      %v328 = vld [vmem:[%s1 + $0x7c] sm:$0xf]
      %v329 = vld [vmem:[%s1 + $0x80] sm:$0xf]
      %v330 = vld [vmem:[%s1 + $0x84] sm:$0xf]
      %v331 = vld [vmem:[%s1 + $0x88] sm:$0xf]
      %v332 = vld [vmem:[%s1 + $0x8c] sm:$0xf]
      %v397 = vunpack.c.l.b16 %v233
      %v398 = vunpack.c.h.b16 %v233
      %v399 = vunpack.c.l.b16 %v234
      %v400 = vunpack.c.l.b16 %v235
      %v401 = vunpack.c.h.b16 %v235
      %v402 = vunpack.c.l.b16 %v236
      %v403 = vunpack.c.l.b16 %v237
      %v404 = vunpack.c.h.b16 %v237
      %v405 = vunpack.c.l.b16 %v238
      %v406 = vunpack.c.l.b16 %v239
      %v407 = vunpack.c.h.b16 %v239
      %v408 = vunpack.c.l.b16 %v240
      %v409 = vunpack.c.l.b16 %v241
      %v410 = vunpack.c.h.b16 %v241
      %v411 = vunpack.c.l.b16 %v242
      %v412 = vunpack.c.l.b16 %v243
      %v413 = vunpack.c.h.b16 %v243
      %v414 = vunpack.c.l.b16 %v244
      %v415 = vunpack.c.l.b16 %v245
      %v416 = vunpack.c.h.b16 %v245
      %v417 = vunpack.c.l.b16 %v246
      %v418 = vunpack.c.l.b16 %v247
      %v419 = vunpack.c.h.b16 %v247
      %v420 = vunpack.c.l.b16 %v248
      %v421 = vunpack.c.l.b16 %v249
      %v422 = vunpack.c.h.b16 %v249
      %v423 = vunpack.c.l.b16 %v250
      %v424 = vunpack.c.l.b16 %v251
      %v425 = vunpack.c.h.b16 %v251
      %v426 = vunpack.c.l.b16 %v252
      %v427 = vunpack.c.l.b16 %v253
      %v428 = vunpack.c.h.b16 %v253
      %v429 = vunpack.c.l.b16 %v254
      %v430 = vunpack.c.l.b16 %v255
      %v431 = vunpack.c.h.b16 %v255
      %v432 = vunpack.c.l.b16 %v256
      %v433 = vunpack.c.l.b16 %v257
      %v434 = vunpack.c.h.b16 %v257
      %v435 = vunpack.c.l.b16 %v258
      %v436 = vunpack.c.l.b16 %v259
      %v437 = vunpack.c.h.b16 %v259
      %v438 = vunpack.c.l.b16 %v260
      %v439 = vunpack.c.l.b16 %v261
      %v440 = vunpack.c.h.b16 %v261
      %v441 = vunpack.c.l.b16 %v262
      %v442 = vunpack.c.l.b16 %v263
      %v443 = vunpack.c.h.b16 %v263
      %v444 = vunpack.c.l.b16 %v264
      %v445 = vunpack.c.l.b16 %v265
      %v446 = vunpack.c.h.b16 %v265
      %v447 = vunpack.c.l.b16 %v266
      %v448 = vunpack.c.l.b16 %v267
      %v449 = vunpack.c.h.b16 %v267
      %v450 = vunpack.c.l.b16 %v268
      %v451 = vunpack.c.l.b16 %v269
      %v452 = vunpack.c.h.b16 %v269
      %v453 = vunpack.c.l.b16 %v270
      %v454 = vunpack.c.l.b16 %v271
      %v455 = vunpack.c.h.b16 %v271
      %v456 = vunpack.c.l.b16 %v272
      %v457 = vunpack.c.l.b16 %v273
      %v458 = vunpack.c.h.b16 %v273
      %v459 = vunpack.c.l.b16 %v274
      %v460 = vunpack.c.l.b16 %v275
      %v461 = vunpack.c.h.b16 %v275
      %v462 = vunpack.c.l.b16 %v276
      %v463 = vunpack.c.l.b16 %v277
      %v464 = vunpack.c.h.b16 %v277
      %v465 = vunpack.c.l.b16 %v278
      %v466 = vunpack.c.l.b16 %v279
      %v467 = vunpack.c.h.b16 %v279
      %v468 = vunpack.c.l.b16 %v280
      %v469 = vunpack.c.l.b16 %v281
      %v470 = vunpack.c.h.b16 %v281
      %v471 = vunpack.c.l.b16 %v282
      %v472 = vunpack.c.l.b16 %v283
      %v473 = vunpack.c.h.b16 %v283
      %v474 = vunpack.c.l.b16 %v284
      %v475 = vunpack.c.l.b16 %v285
      %v476 = vunpack.c.h.b16 %v285
      %v477 = vunpack.c.l.b16 %v286
      %v478 = vunpack.c.l.b16 %v287
      %v479 = vunpack.c.h.b16 %v287
      %v480 = vunpack.c.l.b16 %v288
      %v481 = vunpack.c.l.b16 %v289
      %v482 = vunpack.c.h.b16 %v289
      %v483 = vunpack.c.l.b16 %v290
      %v484 = vunpack.c.l.b16 %v291
      %v485 = vunpack.c.h.b16 %v291
      %v486 = vunpack.c.l.b16 %v292
      %v487 = vunpack.c.l.b16 %v293
      %v488 = vunpack.c.h.b16 %v293
      %v489 = vunpack.c.l.b16 %v294
      %v490 = vunpack.c.l.b16 %v295
      %v491 = vunpack.c.h.b16 %v295
      %v492 = vunpack.c.l.b16 %v296
      %v493 = vpack.c.b16 %v400, %v397
      %v494 = vpack.c.b16 %v401, %v398
      %v495 = vpack.c.b16 %v402, %v399
      %v496 = vpack.c.b16 %v406, %v403
      %v497 = vpack.c.b16 %v407, %v404
      %v498 = vpack.c.b16 %v408, %v405
      %v499 = vpack.c.b16 %v412, %v409
      %v500 = vpack.c.b16 %v413, %v410
      %v501 = vpack.c.b16 %v414, %v411
      %v502 = vpack.c.b16 %v418, %v415
      %v503 = vpack.c.b16 %v419, %v416
      %v504 = vpack.c.b16 %v420, %v417
      %v505 = vpack.c.b16 %v424, %v421
      %v506 = vpack.c.b16 %v425, %v422
      %v507 = vpack.c.b16 %v426, %v423
      %v508 = vpack.c.b16 %v430, %v427
      %v509 = vpack.c.b16 %v431, %v428
      %v510 = vpack.c.b16 %v432, %v429
      %v511 = vpack.c.b16 %v436, %v433
      %v512 = vpack.c.b16 %v437, %v434
      %v513 = vpack.c.b16 %v438, %v435
      %v514 = vpack.c.b16 %v442, %v439
      %v515 = vpack.c.b16 %v443, %v440
      %v516 = vpack.c.b16 %v444, %v441
      %v517 = vpack.c.b16 %v448, %v445
      %v518 = vpack.c.b16 %v449, %v446
      %v519 = vpack.c.b16 %v450, %v447
      %v520 = vpack.c.b16 %v454, %v451
      %v521 = vpack.c.b16 %v455, %v452
      %v522 = vpack.c.b16 %v456, %v453
      %v523 = vpack.c.b16 %v460, %v457
      %v524 = vpack.c.b16 %v461, %v458
      %v525 = vpack.c.b16 %v462, %v459
      %v526 = vpack.c.b16 %v466, %v463
      %v527 = vpack.c.b16 %v467, %v464
      %v528 = vpack.c.b16 %v468, %v465
      %v529 = vpack.c.b16 %v472, %v469
      %v530 = vpack.c.b16 %v473, %v470
      %v531 = vpack.c.b16 %v474, %v471
      %v532 = vpack.c.b16 %v478, %v475
      %v533 = vpack.c.b16 %v479, %v476
      %v534 = vpack.c.b16 %v480, %v477
      %v535 = vpack.c.b16 %v484, %v481
      %v536 = vpack.c.b16 %v485, %v482
      %v537 = vpack.c.b16 %v486, %v483
      %v538 = vpack.c.b16 %v490, %v487
      %v539 = vpack.c.b16 %v491, %v488
      %v540 = vpack.c.b16 %v492, %v489
      %v609 = vunpack.c.l.b16 %v297
      %v610 = vunpack.c.l.b16 %v298
      %v611 = vunpack.c.l.b16 %v299
      %v612 = vunpack.c.l.b16 %v300
      %v613 = vunpack.c.l.b16 %v301
      %v614 = vunpack.c.l.b16 %v302
      %v615 = vunpack.c.l.b16 %v303
      %v616 = vunpack.c.l.b16 %v304
      %v617 = vunpack.c.l.b16 %v305
      %v618 = vunpack.c.l.b16 %v306
      %v619 = vunpack.c.l.b16 %v307
      %v620 = vunpack.c.l.b16 %v308
      %v621 = vunpack.c.l.b16 %v309
      %v622 = vunpack.c.l.b16 %v310
      %v623 = vunpack.c.l.b16 %v311
      %v624 = vunpack.c.l.b16 %v312
      %v625 = vunpack.c.l.b16 %v313
      %v626 = vunpack.c.l.b16 %v314
      %v627 = vunpack.c.l.b16 %v315
      %v628 = vunpack.c.l.b16 %v316
      %v629 = vunpack.c.l.b16 %v317
      %v630 = vunpack.c.l.b16 %v318
      %v631 = vunpack.c.l.b16 %v319
      %v632 = vunpack.c.l.b16 %v320
      %v633 = vunpack.c.l.b16 %v321
      %v634 = vunpack.c.l.b16 %v322
      %v635 = vunpack.c.l.b16 %v323
      %v636 = vunpack.c.l.b16 %v324
      %v637 = vunpack.c.l.b16 %v325
      %v638 = vunpack.c.l.b16 %v326
      %v639 = vunpack.c.l.b16 %v327
      %v640 = vunpack.c.l.b16 %v328
      %v641 = vunpack.c.l.b16 %v329
      %v642 = vunpack.c.l.b16 %v330
      %v643 = vunpack.c.l.b16 %v331
      %v644 = vunpack.c.l.b16 %v332
      %v645 = vpack.c.b16 %v610, %v609
      %v646 = vpack.c.b16 %v612, %v611
      %v647 = vpack.c.b16 %v614, %v613
      %v648 = vpack.c.b16 %v616, %v615
      %v649 = vpack.c.b16 %v618, %v617
      %v650 = vpack.c.b16 %v620, %v619
      %v651 = vpack.c.b16 %v622, %v621
      %v652 = vpack.c.b16 %v624, %v623
      %v653 = vpack.c.b16 %v626, %v625
      %v654 = vpack.c.b16 %v628, %v627
      %v655 = vpack.c.b16 %v630, %v629
      %v656 = vpack.c.b16 %v632, %v631
      %v657 = vpack.c.b16 %v634, %v633
      %v658 = vpack.c.b16 %v636, %v635
      %v659 = vpack.c.b16 %v638, %v637
      %v660 = vpack.c.b16 %v640, %v639
      %v661 = vpack.c.b16 %v642, %v641
      %v662 = vpack.c.b16 %v644, %v643
      %vm681 = vcmask 261120
      %v683 = vsel %vm681, %v495, 0
      %v686 = vsel %vm681, %v498, 0
      %v689 = vsel %vm681, %v501, 0
      %v692 = vsel %vm681, %v504, 0
      %v695 = vsel %vm681, %v507, 0
      %v698 = vsel %vm681, %v510, 0
      %v701 = vsel %vm681, %v513, 0
      %v704 = vsel %vm681, %v516, 0
      %v707 = vsel %vm681, %v519, 0
      %v710 = vsel %vm681, %v522, 0
      %v713 = vsel %vm681, %v525, 0
      %v716 = vsel %vm681, %v528, 0
      %v719 = vsel %vm681, %v531, 0
      %v722 = vsel %vm681, %v534, 0
      %v725 = vsel %vm681, %v537, 0
      %v728 = vsel %vm681, %v540, 0
      %730 = vmatpush.bf16.msra.mxu0 %v652
      %731 = vmatpush.bf16.msra.mxu0 %v651
      %732 = vmatpush.bf16.msra.mxu0 %v650
      %733 = vmatpush.bf16.msra.mxu0 %v649
      %734 = vmatpush.bf16.msra.mxu0 %v648
      %735 = vmatpush.bf16.msra.mxu0 %v647
      %736 = vmatpush.bf16.msra.mxu0 %v646
      %737 = vmatpush.bf16.msra.mxu0 %v645
      %738 = vmatmul.bf16.gmra.mxu0 %v493
      %v739 = vpop.f32.mrf.mxu0
      %v740 = vadd.f32 0.0, %v739
      %v741 = vpop.f32.mrf.mxu0
      %v742 = vadd.f32 0.0, %v741
      %743 = vmatmul.bf16.gmra.mxu0 %v496
      %v744 = vpop.f32.mrf.mxu0
      %v745 = vadd.f32 0.0, %v744
      %v746 = vpop.f32.mrf.mxu0
      %v747 = vadd.f32 0.0, %v746
      %748 = vmatmul.bf16.gmra.mxu0 %v499
      %v749 = vpop.f32.mrf.mxu0
      %v750 = vadd.f32 0.0, %v749
      %v751 = vpop.f32.mrf.mxu0
      %v752 = vadd.f32 0.0, %v751
      %753 = vmatmul.bf16.gmra.mxu0 %v502
      %v754 = vpop.f32.mrf.mxu0
      %v755 = vadd.f32 0.0, %v754
      %v756 = vpop.f32.mrf.mxu0
      %v757 = vadd.f32 0.0, %v756
      %758 = vmatmul.bf16.gmra.mxu0 %v505
      %v759 = vpop.f32.mrf.mxu0
      %v760 = vadd.f32 0.0, %v759
      %v761 = vpop.f32.mrf.mxu0
      %v762 = vadd.f32 0.0, %v761
      %763 = vmatmul.bf16.gmra.mxu0 %v508
      %v764 = vpop.f32.mrf.mxu0
      %v765 = vadd.f32 0.0, %v764
      %v766 = vpop.f32.mrf.mxu0
      %v767 = vadd.f32 0.0, %v766
      %768 = vmatmul.bf16.gmra.mxu0 %v511
      %v769 = vpop.f32.mrf.mxu0
      %v770 = vadd.f32 0.0, %v769
      %v771 = vpop.f32.mrf.mxu0
      %v772 = vadd.f32 0.0, %v771
      %773 = vmatmul.bf16.gmra.mxu0 %v514
      %v774 = vpop.f32.mrf.mxu0
      %v775 = vadd.f32 0.0, %v774
      %v776 = vpop.f32.mrf.mxu0
      %v777 = vadd.f32 0.0, %v776
      %778 = vmatmul.bf16.gmra.mxu0 %v517
      %v779 = vpop.f32.mrf.mxu0
      %v780 = vadd.f32 0.0, %v779
      %v781 = vpop.f32.mrf.mxu0
      %v782 = vadd.f32 0.0, %v781
      %783 = vmatmul.bf16.gmra.mxu0 %v520
      %v784 = vpop.f32.mrf.mxu0
      %v785 = vadd.f32 0.0, %v784
      %v786 = vpop.f32.mrf.mxu0
      %v787 = vadd.f32 0.0, %v786
      %788 = vmatmul.bf16.gmra.mxu0 %v523
      %v789 = vpop.f32.mrf.mxu0
      %v790 = vadd.f32 0.0, %v789
      %v791 = vpop.f32.mrf.mxu0
      %v792 = vadd.f32 0.0, %v791
      %793 = vmatmul.bf16.gmra.mxu0 %v526
      %v794 = vpop.f32.mrf.mxu0
      %v795 = vadd.f32 0.0, %v794
      %v796 = vpop.f32.mrf.mxu0
      %v797 = vadd.f32 0.0, %v796
      %798 = vmatmul.bf16.gmra.mxu0 %v529
      %v799 = vpop.f32.mrf.mxu0
      %v800 = vadd.f32 0.0, %v799
      %v801 = vpop.f32.mrf.mxu0
      %v802 = vadd.f32 0.0, %v801
      %803 = vmatmul.bf16.gmra.mxu0 %v532
      %v804 = vpop.f32.mrf.mxu0
      %v805 = vadd.f32 0.0, %v804
      %v806 = vpop.f32.mrf.mxu0
      %v807 = vadd.f32 0.0, %v806
      %808 = vmatmul.bf16.gmra.mxu0 %v535
      %v809 = vpop.f32.mrf.mxu0
      %v810 = vadd.f32 0.0, %v809
      %v811 = vpop.f32.mrf.mxu0
      %v812 = vadd.f32 0.0, %v811
      %813 = vmatmul.bf16.gmra.mxu0 %v538
      %v814 = vpop.f32.mrf.mxu0
      %v815 = vadd.f32 0.0, %v814
      %v816 = vpop.f32.mrf.mxu0
      %v817 = vadd.f32 0.0, %v816
      %818 = vdwg.mxu0
      %819 = vmatpush.bf16.msra.mxu0 %v660
      %820 = vmatpush.bf16.msra.mxu0 %v659
      %821 = vmatpush.bf16.msra.mxu0 %v658
      %822 = vmatpush.bf16.msra.mxu0 %v657
      %823 = vmatpush.bf16.msra.mxu0 %v656
      %824 = vmatpush.bf16.msra.mxu0 %v655
      %825 = vmatpush.bf16.msra.mxu0 %v654
      %826 = vmatpush.bf16.msra.mxu0 %v653
      %827 = vmatmul.bf16.gmra.mxu0 %v494
      %v828 = vpop.f32.mrf.mxu0
      %v829 = vadd.f32 %v740, %v828
      %v830 = vpop.f32.mrf.mxu0
      %v831 = vadd.f32 %v742, %v830
      %832 = vmatmul.bf16.gmra.mxu0 %v497
      %v833 = vpop.f32.mrf.mxu0
      %v834 = vadd.f32 %v745, %v833
      %v835 = vpop.f32.mrf.mxu0
      %v836 = vadd.f32 %v747, %v835
      %837 = vmatmul.bf16.gmra.mxu0 %v500
      %v838 = vpop.f32.mrf.mxu0
      %v839 = vadd.f32 %v750, %v838
      %v840 = vpop.f32.mrf.mxu0
      %v841 = vadd.f32 %v752, %v840
      %842 = vmatmul.bf16.gmra.mxu0 %v503
      %v843 = vpop.f32.mrf.mxu0
      %v844 = vadd.f32 %v755, %v843
      %v845 = vpop.f32.mrf.mxu0
      %v846 = vadd.f32 %v757, %v845
      %847 = vmatmul.bf16.gmra.mxu0 %v506
      %v848 = vpop.f32.mrf.mxu0
      %v849 = vadd.f32 %v760, %v848
      %v850 = vpop.f32.mrf.mxu0
      %v851 = vadd.f32 %v762, %v850
      %852 = vmatmul.bf16.gmra.mxu0 %v509
      %v853 = vpop.f32.mrf.mxu0
      %v854 = vadd.f32 %v765, %v853
      %v855 = vpop.f32.mrf.mxu0
      %v856 = vadd.f32 %v767, %v855
      %857 = vmatmul.bf16.gmra.mxu0 %v512
      %v858 = vpop.f32.mrf.mxu0
      %v859 = vadd.f32 %v770, %v858
      %v860 = vpop.f32.mrf.mxu0
      %v861 = vadd.f32 %v772, %v860
      %862 = vmatmul.bf16.gmra.mxu0 %v515
      %v863 = vpop.f32.mrf.mxu0
      %v864 = vadd.f32 %v775, %v863
      %v865 = vpop.f32.mrf.mxu0
      %v866 = vadd.f32 %v777, %v865
      %867 = vmatmul.bf16.gmra.mxu0 %v518
      %v868 = vpop.f32.mrf.mxu0
      %v869 = vadd.f32 %v780, %v868
      %v870 = vpop.f32.mrf.mxu0
      %v871 = vadd.f32 %v782, %v870
      %872 = vmatmul.bf16.gmra.mxu0 %v521
      %v873 = vpop.f32.mrf.mxu0
      %v874 = vadd.f32 %v785, %v873
      %v875 = vpop.f32.mrf.mxu0
      %v876 = vadd.f32 %v787, %v875
      %877 = vmatmul.bf16.gmra.mxu0 %v524
      %v878 = vpop.f32.mrf.mxu0
      %v879 = vadd.f32 %v790, %v878
      %v880 = vpop.f32.mrf.mxu0
      %v881 = vadd.f32 %v792, %v880
      %882 = vmatmul.bf16.gmra.mxu0 %v527
      %v883 = vpop.f32.mrf.mxu0
      %v884 = vadd.f32 %v795, %v883
      %v885 = vpop.f32.mrf.mxu0
      %v886 = vadd.f32 %v797, %v885
      %887 = vmatmul.bf16.gmra.mxu0 %v530
      %v888 = vpop.f32.mrf.mxu0
      %v889 = vadd.f32 %v800, %v888
      %v890 = vpop.f32.mrf.mxu0
      %v891 = vadd.f32 %v802, %v890
      %892 = vmatmul.bf16.gmra.mxu0 %v533
      %v893 = vpop.f32.mrf.mxu0
      %v894 = vadd.f32 %v805, %v893
      %v895 = vpop.f32.mrf.mxu0
      %v896 = vadd.f32 %v807, %v895
      %897 = vmatmul.bf16.gmra.mxu0 %v536
      %v898 = vpop.f32.mrf.mxu0
      %v899 = vadd.f32 %v810, %v898
      %v900 = vpop.f32.mrf.mxu0
      %v901 = vadd.f32 %v812, %v900
      %902 = vmatmul.bf16.gmra.mxu0 %v539
      %v903 = vpop.f32.mrf.mxu0
      %v904 = vadd.f32 %v815, %v903
      %v905 = vpop.f32.mrf.mxu0
      %v906 = vadd.f32 %v817, %v905
      %907 = vdwg.mxu0
      %908 = vmatpush.bf16.msra.mxu0 0
      %909 = vmatpush.bf16.msra.mxu0 0
      %910 = vmatpush.bf16.msra.mxu0 0
      %911 = vmatpush.bf16.msra.mxu0 0
      %912 = vmatpush.bf16.msra.mxu0 0
      %913 = vmatpush.bf16.msra.mxu0 0
      %914 = vmatpush.bf16.msra.mxu0 %v662
      %915 = vmatpush.bf16.msra.mxu0 %v661
      %916 = vmatmul.bf16.gmra.mxu0 %v683
      %v917 = vpop.f32.mrf.mxu0
      %v918 = vadd.f32 %v829, %v917
      %v919 = vpop.f32.mrf.mxu0
      %v920 = vadd.f32 %v831, %v919
      %921 = vmatmul.bf16.gmra.mxu0 %v686
      %v922 = vpop.f32.mrf.mxu0
      %v923 = vadd.f32 %v834, %v922
      %v924 = vpop.f32.mrf.mxu0
      %v925 = vadd.f32 %v836, %v924
      %926 = vmatmul.bf16.gmra.mxu0 %v689
      %v927 = vpop.f32.mrf.mxu0
      %v928 = vadd.f32 %v839, %v927
      %v929 = vpop.f32.mrf.mxu0
      %v930 = vadd.f32 %v841, %v929
      %931 = vmatmul.bf16.gmra.mxu0 %v692
      %v932 = vpop.f32.mrf.mxu0
      %v933 = vadd.f32 %v844, %v932
      %v934 = vpop.f32.mrf.mxu0
      %v935 = vadd.f32 %v846, %v934
      %936 = vmatmul.bf16.gmra.mxu0 %v695
      %v937 = vpop.f32.mrf.mxu0
      %v938 = vadd.f32 %v849, %v937
      %v939 = vpop.f32.mrf.mxu0
      %v940 = vadd.f32 %v851, %v939
      %941 = vmatmul.bf16.gmra.mxu0 %v698
      %v942 = vpop.f32.mrf.mxu0
      %v943 = vadd.f32 %v854, %v942
      %v944 = vpop.f32.mrf.mxu0
      %v945 = vadd.f32 %v856, %v944
      %946 = vmatmul.bf16.gmra.mxu0 %v701
      %v947 = vpop.f32.mrf.mxu0
      %v948 = vadd.f32 %v859, %v947
      %v949 = vpop.f32.mrf.mxu0
      %v950 = vadd.f32 %v861, %v949
      %951 = vmatmul.bf16.gmra.mxu0 %v704
      %v952 = vpop.f32.mrf.mxu0
      %v953 = vadd.f32 %v864, %v952
      %v954 = vpop.f32.mrf.mxu0
      %v955 = vadd.f32 %v866, %v954
      %956 = vmatmul.bf16.gmra.mxu0 %v707
      %v957 = vpop.f32.mrf.mxu0
      %v958 = vadd.f32 %v869, %v957
      %v959 = vpop.f32.mrf.mxu0
      %v960 = vadd.f32 %v871, %v959
      %961 = vmatmul.bf16.gmra.mxu0 %v710
      %v962 = vpop.f32.mrf.mxu0
      %v963 = vadd.f32 %v874, %v962
      %v964 = vpop.f32.mrf.mxu0
      %v965 = vadd.f32 %v876, %v964
      %966 = vmatmul.bf16.gmra.mxu0 %v713
      %v967 = vpop.f32.mrf.mxu0
      %v968 = vadd.f32 %v879, %v967
      %v969 = vpop.f32.mrf.mxu0
      %v970 = vadd.f32 %v881, %v969
      %971 = vmatmul.bf16.gmra.mxu0 %v716
      %v972 = vpop.f32.mrf.mxu0
      %v973 = vadd.f32 %v884, %v972
      %v974 = vpop.f32.mrf.mxu0
      %v975 = vadd.f32 %v886, %v974
      %976 = vmatmul.bf16.gmra.mxu0 %v719
      %v977 = vpop.f32.mrf.mxu0
      %v978 = vadd.f32 %v889, %v977
      %v979 = vpop.f32.mrf.mxu0
      %v980 = vadd.f32 %v891, %v979
      %981 = vmatmul.bf16.gmra.mxu0 %v722
      %v982 = vpop.f32.mrf.mxu0
      %v983 = vadd.f32 %v894, %v982
      %v984 = vpop.f32.mrf.mxu0
      %v985 = vadd.f32 %v896, %v984
      %986 = vmatmul.bf16.gmra.mxu0 %v725
      %v987 = vpop.f32.mrf.mxu0
      %v988 = vadd.f32 %v899, %v987
      %v989 = vpop.f32.mrf.mxu0
      %v990 = vadd.f32 %v901, %v989
      %991 = vmatmul.bf16.gmra.mxu0 %v728
      %v992 = vpop.f32.mrf.mxu0
      %v993 = vadd.f32 %v904, %v992
      %v994 = vpop.f32.mrf.mxu0
      %v995 = vadd.f32 %v906, %v994
      %996 = vdwg.mxu0
      %v997 = vpack.c.bf16 %v918, %v918
      %v998 = vpack.c.bf16 %v920, %v920
      %v999 = vpack.c.bf16 %v923, %v923
      %v1000 = vpack.c.bf16 %v925, %v925
      %v1001 = vpack.c.bf16 %v928, %v928
      %v1002 = vpack.c.bf16 %v930, %v930
      %v1003 = vpack.c.bf16 %v933, %v933
      %v1004 = vpack.c.bf16 %v935, %v935
      %v1005 = vpack.c.bf16 %v938, %v938
      %v1006 = vpack.c.bf16 %v940, %v940
      %v1007 = vpack.c.bf16 %v943, %v943
      %v1008 = vpack.c.bf16 %v945, %v945
      %v1009 = vpack.c.bf16 %v948, %v948
      %v1010 = vpack.c.bf16 %v950, %v950
      %v1011 = vpack.c.bf16 %v953, %v953
      %v1012 = vpack.c.bf16 %v955, %v955
      %v1013 = vpack.c.bf16 %v958, %v958
      %v1014 = vpack.c.bf16 %v960, %v960
      %v1015 = vpack.c.bf16 %v963, %v963
      %v1016 = vpack.c.bf16 %v965, %v965
      %v1017 = vpack.c.bf16 %v968, %v968
      %v1018 = vpack.c.bf16 %v970, %v970
      %v1019 = vpack.c.bf16 %v973, %v973
      %v1020 = vpack.c.bf16 %v975, %v975
      %v1021 = vpack.c.bf16 %v978, %v978
      %v1022 = vpack.c.bf16 %v980, %v980
      %v1023 = vpack.c.bf16 %v983, %v983
      %v1024 = vpack.c.bf16 %v985, %v985
      %v1025 = vpack.c.bf16 %v988, %v988
      %v1026 = vpack.c.bf16 %v990, %v990
      %v1027 = vpack.c.bf16 %v993, %v993
      %v1028 = vpack.c.bf16 %v995, %v995
      %1029 = vst [vmem:[%s223] sm:$0xf] %v997
      %1030 = vst [vmem:[%s223 + $0x4] sm:$0xf] %v998
      %1031 = vst [vmem:[%s223 + $0x8] sm:$0xf] %v999
      %1032 = vst [vmem:[%s223 + $0xc] sm:$0xf] %v1000
      %1033 = vst [vmem:[%s223 + $0x10] sm:$0xf] %v1001
      %1034 = vst [vmem:[%s223 + $0x14] sm:$0xf] %v1002
      %1035 = vst [vmem:[%s223 + $0x18] sm:$0xf] %v1003
      %1036 = vst [vmem:[%s223 + $0x1c] sm:$0xf] %v1004
      %1037 = vst [vmem:[%s223 + $0x20] sm:$0xf] %v1005
      %1038 = vst [vmem:[%s223 + $0x24] sm:$0xf] %v1006
      %1039 = vst [vmem:[%s223 + $0x28] sm:$0xf] %v1007
      %1040 = vst [vmem:[%s223 + $0x2c] sm:$0xf] %v1008
      %1041 = vst [vmem:[%s223 + $0x30] sm:$0xf] %v1009
      %1042 = vst [vmem:[%s223 + $0x34] sm:$0xf] %v1010
      %1043 = vst [vmem:[%s223 + $0x38] sm:$0xf] %v1011
      %1044 = vst [vmem:[%s223 + $0x3c] sm:$0xf] %v1012
      %1045 = vst [vmem:[%s223 + $0x40] sm:$0xf] %v1013
      %1046 = vst [vmem:[%s223 + $0x44] sm:$0xf] %v1014
      %1047 = vst [vmem:[%s223 + $0x48] sm:$0xf] %v1015
      %1048 = vst [vmem:[%s223 + $0x4c] sm:$0xf] %v1016
      %1049 = vst [vmem:[%s223 + $0x50] sm:$0xf] %v1017
      %1050 = vst [vmem:[%s223 + $0x54] sm:$0xf] %v1018
      %1051 = vst [vmem:[%s223 + $0x58] sm:$0xf] %v1019
      %1052 = vst [vmem:[%s223 + $0x5c] sm:$0xf] %v1020
      %1053 = vst [vmem:[%s223 + $0x60] sm:$0xf] %v1021
      %1054 = vst [vmem:[%s223 + $0x64] sm:$0xf] %v1022
      %1055 = vst [vmem:[%s223 + $0x68] sm:$0xf] %v1023
      %1056 = vst [vmem:[%s223 + $0x6c] sm:$0xf] %v1024
      %1057 = vst [vmem:[%s223 + $0x70] sm:$0xf] %v1025
      %1058 = vst [vmem:[%s223 + $0x74] sm:$0xf] %v1026
      %1059 = vst [vmem:[%s223 + $0x78] sm:$0xf] %v1027
      %1060 = vst [vmem:[%s223 + $0x7c] sm:$0xf] %v1028
      %v1061 = vadd.f32 %v918, %v920
      %v1062 = vadd.f32 %v1061, %v923
      %v1063 = vadd.f32 %v1062, %v925
      %v1064 = vadd.f32 %v1063, %v928
      %v1065 = vadd.f32 %v1064, %v930
      %v1066 = vadd.f32 %v1065, %v933
      %v1067 = vadd.f32 %v1066, %v935
      %v1068 = vadd.f32 %v1067, %v938
      %v1069 = vadd.f32 %v1068, %v940
      %v1070 = vadd.f32 %v1069, %v943
      %v1071 = vadd.f32 %v1070, %v945
      %v1072 = vadd.f32 %v1071, %v948
      %v1073 = vadd.f32 %v1072, %v950
      %v1074 = vadd.f32 %v1073, %v953
      %v1075 = vadd.f32 %v1074, %v955
      %v1076 = vadd.f32 %v1075, %v958
      %v1077 = vadd.f32 %v1076, %v960
      %v1078 = vadd.f32 %v1077, %v963
      %v1079 = vadd.f32 %v1078, %v965
      %v1080 = vadd.f32 %v1079, %v968
      %v1081 = vadd.f32 %v1080, %v970
      %v1082 = vadd.f32 %v1081, %v973
      %v1083 = vadd.f32 %v1082, %v975
      %v1084 = vadd.f32 %v1083, %v978
      %v1085 = vadd.f32 %v1084, %v980
      %v1086 = vadd.f32 %v1085, %v983
      %v1087 = vadd.f32 %v1086, %v985
      %v1088 = vadd.f32 %v1087, %v988
      %v1089 = vadd.f32 %v1088, %v990
      %v1090 = vadd.f32 %v1089, %v993
      %v1091 = vadd.f32 %v1090, %v995
      %v1092 = vrot.slane %v1091, 4
      %v1093 = vadd.f32 %v1091, %v1092
      %v1094 = vrot.slane %v1093, 2
      %v1095 = vadd.f32 %v1093, %v1094
      %v1096 = vrot.slane %v1095, 1
      %v1097 = vadd.f32 %v1095, %v1096
      %v1098 = vmul.f32 %v918, %v918
      %v1099 = vmul.f32 %v920, %v920
      %v1100 = vmul.f32 %v923, %v923
      %v1101 = vmul.f32 %v925, %v925
      %v1102 = vmul.f32 %v928, %v928
      %v1103 = vmul.f32 %v930, %v930
      %v1104 = vmul.f32 %v933, %v933
      %v1105 = vmul.f32 %v935, %v935
      %v1106 = vmul.f32 %v938, %v938
      %v1107 = vmul.f32 %v940, %v940
      %v1108 = vmul.f32 %v943, %v943
      %v1109 = vmul.f32 %v945, %v945
      %v1110 = vmul.f32 %v948, %v948
      %v1111 = vmul.f32 %v950, %v950
      %v1112 = vmul.f32 %v953, %v953
      %v1113 = vmul.f32 %v955, %v955
      %v1114 = vmul.f32 %v958, %v958
      %v1115 = vmul.f32 %v960, %v960
      %v1116 = vmul.f32 %v963, %v963
      %v1117 = vmul.f32 %v965, %v965
      %v1118 = vmul.f32 %v968, %v968
      %v1119 = vmul.f32 %v970, %v970
      %v1120 = vmul.f32 %v973, %v973
      %v1121 = vmul.f32 %v975, %v975
      %v1122 = vmul.f32 %v978, %v978
      %v1123 = vmul.f32 %v980, %v980
      %v1124 = vmul.f32 %v983, %v983
      %v1125 = vmul.f32 %v985, %v985
      %v1126 = vmul.f32 %v988, %v988
      %v1127 = vmul.f32 %v990, %v990
      %v1128 = vmul.f32 %v993, %v993
      %v1129 = vmul.f32 %v995, %v995
      %v1130 = vadd.f32 %v1098, %v1099
      %v1131 = vadd.f32 %v1130, %v1100
      %v1132 = vadd.f32 %v1131, %v1101
      %v1133 = vadd.f32 %v1132, %v1102
      %v1134 = vadd.f32 %v1133, %v1103
      %v1135 = vadd.f32 %v1134, %v1104
      %v1136 = vadd.f32 %v1135, %v1105
      %v1137 = vadd.f32 %v1136, %v1106
      %v1138 = vadd.f32 %v1137, %v1107
      %v1139 = vadd.f32 %v1138, %v1108
      %v1140 = vadd.f32 %v1139, %v1109
      %v1141 = vadd.f32 %v1140, %v1110
      %v1142 = vadd.f32 %v1141, %v1111
      %v1143 = vadd.f32 %v1142, %v1112
      %v1144 = vadd.f32 %v1143, %v1113
      %v1145 = vadd.f32 %v1144, %v1114
      %v1146 = vadd.f32 %v1145, %v1115
      %v1147 = vadd.f32 %v1146, %v1116
      %v1148 = vadd.f32 %v1147, %v1117
      %v1149 = vadd.f32 %v1148, %v1118
      %v1150 = vadd.f32 %v1149, %v1119
      %v1151 = vadd.f32 %v1150, %v1120
      %v1152 = vadd.f32 %v1151, %v1121
      %v1153 = vadd.f32 %v1152, %v1122
      %v1154 = vadd.f32 %v1153, %v1123
      %v1155 = vadd.f32 %v1154, %v1124
      %v1156 = vadd.f32 %v1155, %v1125
      %v1157 = vadd.f32 %v1156, %v1126
      %v1158 = vadd.f32 %v1157, %v1127
      %v1159 = vadd.f32 %v1158, %v1128
      %v1160 = vadd.f32 %v1159, %v1129
      %v1161 = vrot.slane %v1160, 4
      %v1162 = vadd.f32 %v1160, %v1161
      %v1163 = vrot.slane %v1162, 2
      %v1164 = vadd.f32 %v1162, %v1163
      %v1165 = vrot.slane %v1164, 1
      %v1166 = vadd.f32 %v1164, %v1165
      %vm1167 = vcmask 1040384
      %v1168 = vsel %vm1167, %v1097, %v1166
      %1169 = vst [vmem:[%s231] sm:$0x3] %v1168
      %s1170 = smul.u32 32, %s20
      %p1171 = scmp.lt.s32.totalorder %s19, 1
      %s1172 = scalar_select %p1171, %s19, 1
      %p1173 = scmp.lt.s32.totalorder %s1170, 31
      %s1174 = scalar_select %p1173, %s1170, 31
      %s1175 = smul.addr %s1172, 32
      %s1176 = sadd.s32 %s1174, %s1175
      %s1177 = smul.addr %s1176, 4
      %s1178 = scalar_lea.vmem %s2, %s1177
      %p1179 = scmp.lt.s32.totalorder %s19, 1
      %s1180 = scalar_select %p1179, %s19, 1
      %p1181 = scmp.lt.s32.totalorder %s20, 0
      %s1182 = scalar_select %p1181, %s20, 0
      %s1183 = sadd.s32 %s1182, %s1180
      %s1184 = smul.addr %s1183, 2
      %s1185 = scalar_lea.vmem %s3, %s1184
      // Predicated region
      $region29: #{g_forward.10} parent=27 // pred_check
        %p1186 = pneg %p96
      $region30: #{g_forward.10} parent=27 // pred_check_branch
        %1188 = sbr.rel (%p1186) target = $region32
      $region31: #{g_forward.10} parent=27 // pred_region
        %s1189 = smul.u32 32, %s20
      $region32: #{g_forward.10} parent=27 // pred_fallthru
        _
      // Predicated region
      $region33: #{g_forward.10} parent=27 // pred_check
        %p1190 = pneg %p124
      $region34: #{g_forward.10} parent=27 // pred_check_branch
        %1192 = sbr.rel (%p1190) target = $region36
      $region35: #{g_forward.10} parent=27 // pred_region
        _
      $region36: #{g_forward.10} parent=27 // pred_fallthru
        _
    $region28: #{g_forward.10} parent=5 // pred_fallthru
      _
    %p1193 = scmp.le.s32.totalorder 2, %s10
    // Predicated region
    $region37: #{g_forward.10} parent=5 // pred_check
      %p1194 = pneg %p1193
    $region38: #{g_forward.10} parent=5 // pred_check_branch
      %1196 = sbr.rel (%p1194) target = $region40
    $region39: #{g_forward.10} parent=5 // pred_region
      %s1197 = ssub.s32 %s10, 2
      // Predicated region
      $region41: #{g_forward.10} parent=39 // pred_check
        %p1198 = pneg %p102
      $region42: #{g_forward.10} parent=39 // pred_check_branch
        %1200 = sbr.rel (%p1198) target = $region44
      $region43: #{g_forward.10} parent=39 // pred_region
        %s1201 = smul.u32 32, %s22
        %p1202 = scmp.lt.s32.totalorder %s21, 1
        %s1203 = scalar_select %p1202, %s21, 1
        %p1204 = scmp.lt.s32.totalorder %s1201, 31
        %s1205 = scalar_select %p1204, %s1201, 31
        %s1206 = smul.addr %s1203, 32
        %s1207 = sadd.s32 %s1205, %s1206
        %s1208 = smul.addr %s1207, 4
        %s1209 = scalar_lea.vmem %s2, %s1208
      $region44: #{g_forward.10} parent=39 // pred_fallthru
        _
      // Predicated region
      $region45: #{g_forward.10} parent=39 // pred_check
        %p1210 = pneg %p130
      $region46: #{g_forward.10} parent=39 // pred_check_branch
        %1212 = sbr.rel (%p1210) target = $region48
      $region47: #{g_forward.10} parent=39 // pred_region
        %p1213 = scmp.lt.s32.totalorder %s21, 1
        %s1214 = scalar_select %p1213, %s21, 1
        %p1215 = scmp.lt.s32.totalorder %s22, 0
        %s1216 = scalar_select %p1215, %s22, 0
        %s1217 = sadd.s32 %s1216, %s1214
        %s1218 = smul.addr %s1217, 2
        %s1219 = scalar_lea.vmem %s3, %s1218
      $region48: #{g_forward.10} parent=39 // pred_fallthru
        _
    $region40: #{g_forward.10} parent=5 // pred_fallthru
      _
  $region6: #{g_forward.10} parent=0 // loop_footer
    %s14 = sadd.s32 1, %s10
  $region7: #{g_forward.10} parent=0 // loop_footer_branch
    %9 = sbr.rel target = $region3
  $region8: #{g_forward.10} parent=0 // loop_exit
    _

// kernel: g_forward.11
$region0: #{g_forward.11}
  #allocation0 [shape = 'u32[]', space=smem, size = 0x4, offset = 0x4, fixed_abs, tag = 'smem constant byte address 0x4 - core index']
  #allocation1 [shape = 'u32[72,128]{1,0:T(1,128)}', space=vmem, size = 0x9000, scoped, tag = 'internal scratch']
  %s0 = inlined_call_operand.vmem [shape: bf16[2,1024,288], index: 0, kind: input, shape index: {}]
  %s1 = inlined_call_operand.vmem [shape: bf16[288,128], index: 1, kind: input, shape index: {}]
  %s2 = inlined_call_operand.vmem [shape: bf16[2,1024,128], index: 2, kind: output, shape index: {0}]
  %s3 = inlined_call_operand.vmem [shape: f32[2,2,2,128], index: 3, kind: output, shape index: {1}]
  %4 = xla_tuple %s2, %s3
  %s5 = sld [smem:[#allocation0]]
  $region49: #{g_forward.11} parent=0
    _
  %s7 = ssub.s32 1, %s5
  %s8 = scalar_select 0, %s7, %s5
  loop: start=0, step=1, limit=6
  $region2: #{g_forward.11} parent=0 // loop_pre_header
    _
  $region3: #{g_forward.11} parent=0 // loop_header
    %s10 = sphi 0, %s14
    %p11 = scmp.ge.s32.totalorder %s10, 6
    %s17 = sphi 0, %s29
    %s18 = sphi 0, %s25
    %s19 = sphi 0, %s17
    %s20 = sphi 0, %s18
    %s21 = sphi 0, %s19
    %s22 = sphi 0, %s20
    %s34 = sphi 0, %s36
    %s37 = sphi 0, %s34
    %s38 = sphi 0, %s37
    %s54 = sphi 0, %s38
    %s58 = sphi 0, %s58
    %s60 = sphi 0, %s58
    %s61 = sphi 0, %s60
    %s75 = sphi 0, %s61
    %s83 = sphi 0, %s85
    %s86 = sphi 0, %s83
    %s87 = sphi 0, %s86
    %s103 = sphi 0, %s87
    %s111 = sphi 0, %s113
    %s114 = sphi 0, %s111
    %s115 = sphi 0, %s114
    %s131 = sphi 0, %s115
  $region4: #{g_forward.11} parent=0 // loop_header_branch
    %13 = sbr.rel (%p11) target = $region8
  $region5: #{g_forward.11} parent=0 // loop_body
    %s15 = ssub.s32 %s10, 1
    %s16 = ssub.s32 %s10, 2
    %s23 = sadd.s32 1, %s18
    %p24 = scmp.ge.s32.totalorder %s23, 2
    %s25 = scalar_select %p24, 0, %s23
    %s26 = sadd.s32 1, %s17
    %s27 = scalar_select %p24, %s26, %s17
    %p28 = scmp.ge.s32.totalorder %s27, 2
    %s29 = scalar_select %p28, 0, %s27
    %s30 = ssub.s32 %s17, %s29
    %s31 = ssub.s32 %s18, %s25
    %s32 = sor.u32 %s30, %s31
    %p33 = scmp.eq.s32.totalorder %s32, 0
    %s35 = sadd.s32 %s34, 1
    %s36 = scalar_select %p33, %s34, %s35
    %p39 = pneg %p33
    %p40 = scmp.eq.s32.totalorder %s10, 3
    %p41 = por %p39, %p40
    %p42 = scmp.ne.s32.totalorder %s34, %s37
    %p43 = scmp.eq.s32.totalorder %s10, 0
    %p44 = por %p42, %p43
    %p45 = scmp.ne.s32.totalorder %s34, %s37
    %p46 = scmp.eq.s32.totalorder %s15, 3
    %p47 = por %p45, %p46
    %p48 = scmp.ne.s32.totalorder %s37, %s38
    %p49 = scmp.eq.s32.totalorder %s15, 0
    %p50 = por %p48, %p49
    %p51 = scmp.ne.s32.totalorder %s37, %s38
    %p52 = scmp.eq.s32.totalorder %s16, 3
    %p53 = por %p51, %p52
    %p55 = scmp.ne.s32.totalorder %s38, %s54
    %p56 = scmp.eq.s32.totalorder %s16, 0
    %p57 = por %p55, %p56
    %s59 = sadd.s32 %s58, 1
    %p62 = scmp.eq.s32.totalorder %s10, 3
    %p63 = scmp.ne.s32.totalorder %s58, %s60
    %p64 = scmp.eq.s32.totalorder %s10, 0
    %p65 = por %p63, %p64
    %p66 = scmp.ne.s32.totalorder %s58, %s60
    %p67 = scmp.eq.s32.totalorder %s15, 3
    %p68 = por %p66, %p67
    %p69 = scmp.ne.s32.totalorder %s60, %s61
    %p70 = scmp.eq.s32.totalorder %s15, 0
    %p71 = por %p69, %p70
    %p72 = scmp.ne.s32.totalorder %s60, %s61
    %p73 = scmp.eq.s32.totalorder %s16, 3
    %p74 = por %p72, %p73
    %p76 = scmp.ne.s32.totalorder %s61, %s75
    %p77 = scmp.eq.s32.totalorder %s16, 0
    %p78 = por %p76, %p77
    %s79 = ssub.s32 %s17, %s29
    %s80 = ssub.s32 %s18, %s25
    %s81 = sor.u32 %s79, %s80
    %p82 = scmp.eq.s32.totalorder %s81, 0
    %s84 = sadd.s32 %s83, 1
    %s85 = scalar_select %p82, %s83, %s84
    %p88 = pneg %p82
    %p89 = scmp.eq.s32.totalorder %s10, 3
    %p90 = por %p88, %p89
    %p91 = scmp.ne.s32.totalorder %s83, %s86
    %p92 = scmp.eq.s32.totalorder %s10, 0
    %p93 = por %p91, %p92
    %p94 = scmp.ne.s32.totalorder %s83, %s86
    %p95 = scmp.eq.s32.totalorder %s15, 3
    %p96 = por %p94, %p95
    %p97 = scmp.ne.s32.totalorder %s86, %s87
    %p98 = scmp.eq.s32.totalorder %s15, 0
    %p99 = por %p97, %p98
    %p100 = scmp.ne.s32.totalorder %s86, %s87
    %p101 = scmp.eq.s32.totalorder %s16, 3
    %p102 = por %p100, %p101
    %p104 = scmp.ne.s32.totalorder %s87, %s103
    %p105 = scmp.eq.s32.totalorder %s16, 0
    %p106 = por %p104, %p105
    %s107 = ssub.s32 %s17, %s29
    %s108 = ssub.s32 %s18, %s25
    %s109 = sor.u32 %s107, %s108
    %p110 = scmp.eq.s32.totalorder %s109, 0
    %s112 = sadd.s32 %s111, 1
    %s113 = scalar_select %p110, %s111, %s112
    %p116 = pneg %p110
    %p117 = scmp.eq.s32.totalorder %s10, 3
    %p118 = por %p116, %p117
    %p119 = scmp.ne.s32.totalorder %s111, %s114
    %p120 = scmp.eq.s32.totalorder %s10, 0
    %p121 = por %p119, %p120
    %p122 = scmp.ne.s32.totalorder %s111, %s114
    %p123 = scmp.eq.s32.totalorder %s15, 3
    %p124 = por %p122, %p123
    %p125 = scmp.ne.s32.totalorder %s114, %s115
    %p126 = scmp.eq.s32.totalorder %s15, 0
    %p127 = por %p125, %p126
    %p128 = scmp.ne.s32.totalorder %s114, %s115
    %p129 = scmp.eq.s32.totalorder %s16, 3
    %p130 = por %p128, %p129
    %p132 = scmp.ne.s32.totalorder %s115, %s131
    %p133 = scmp.eq.s32.totalorder %s16, 0
    %p134 = por %p132, %p133
    %p135 = scmp.le.s32.totalorder 1, %s10
    %p136 = scmp.lt.s32.totalorder %s10, 5
    %p137 = pnand %p135, %p136
    %p138 = pneg %p137
    // Predicated region
    $region9: #{g_forward.11} parent=5 // pred_check
      _
    $region10: #{g_forward.11} parent=5 // pred_check_branch
      %140 = sbr.rel (%p137) target = $region12
    $region11: #{g_forward.11} parent=5 // pred_region
      %s141 = ssub.s32 %s10, 1
      // Predicated region
      $region13: #{g_forward.11} parent=11 // pred_check
        %p142 = pneg %p71
      $region14: #{g_forward.11} parent=11 // pred_check_branch
        %144 = sbr.rel (%p142) target = $region16
      $region15: #{g_forward.11} parent=11 // pred_region
        _
      $region16: #{g_forward.11} parent=11 // pred_fallthru
        _
    $region12: #{g_forward.11} parent=5 // pred_fallthru
      _
    %p145 = scmp.lt.s32.totalorder %s10, 4
    // Predicated region
    $region17: #{g_forward.11} parent=5 // pred_check
      %p146 = pneg %p145
    $region18: #{g_forward.11} parent=5 // pred_check_branch
      %148 = sbr.rel (%p146) target = $region20
    $region19: #{g_forward.11} parent=5 // pred_region
      // Predicated region
      $region21: #{g_forward.11} parent=19 // pred_check
        %p149 = pneg %p44
      $region22: #{g_forward.11} parent=19 // pred_check_branch
        %151 = sbr.rel (%p149) target = $region24
      $region23: #{g_forward.11} parent=19 // pred_region
        %s152 = smul.u32 64, %s18
        %p153 = scmp.lt.s32.totalorder %s17, 1
        %s154 = scalar_select %p153, %s17, 1
        %p155 = scmp.lt.s32.totalorder %s152, 127
        %s156 = scalar_select %p155, %s152, 127
        %s157 = smul.addr %s156, 3
        %s158 = smul.addr %s154, 384
        %s159 = sadd.s32 %s157, %s158
        %s160 = smul.addr %s159, 4
        %s161 = scalar_lea.vmem %s0, %s160
        %s162 = smul.u32 64, %s18
      $region24: #{g_forward.11} parent=19 // pred_fallthru
        _
    $region20: #{g_forward.11} parent=5 // pred_fallthru
      _
    %p163 = scmp.le.s32.totalorder 1, %s10
    %p164 = scmp.lt.s32.totalorder %s10, 5
    %p165 = pnand %p163, %p164
    %p166 = pneg %p165
    // Predicated region
    $region25: #{g_forward.11} parent=5 // pred_check
      _
    $region26: #{g_forward.11} parent=5 // pred_check_branch
      %168 = sbr.rel (%p165) target = $region28
    $region27: #{g_forward.11} parent=5 // pred_region
      %s169 = ssub.s32 %s10, 1
      %s170 = smul.u32 64, %s20
      %p171 = scmp.lt.s32.totalorder %s19, 1
      %s172 = scalar_select %p171, %s19, 1
      %p173 = scmp.lt.s32.totalorder %s170, 127
      %s174 = scalar_select %p173, %s170, 127
      %s175 = smul.addr %s174, 3
      %s176 = smul.addr %s172, 384
      %s177 = sadd.s32 %s175, %s176
      %s178 = smul.addr %s177, 4
      %s179 = scalar_lea.vmem %s0, %s178
      %p180 = pneg %p50
      %p181 = pneg %p47
      %p182 = pneg %p71
      %p183 = pneg %p68
      %p184 = pneg %p99
      %p185 = pneg %p96
      %s186 = smul.u32 64, %s20
      %p187 = scmp.lt.s32.totalorder %s19, 1
      %s188 = scalar_select %p187, %s19, 1
      %p189 = scmp.lt.s32.totalorder %s186, 127
      %s190 = scalar_select %p189, %s186, 127
      %s191 = smul.addr %s188, 128
      %s192 = sadd.s32 %s190, %s191
      %s193 = smul.addr %s192, 4
      %s194 = scalar_lea.vmem %s2, %s193
      %p195 = pneg %p127
      %p196 = pneg %p124
      %p197 = scmp.lt.s32.totalorder %s19, 1
      %s198 = scalar_select %p197, %s19, 1
      %p199 = scmp.lt.s32.totalorder %s20, 1
      %s200 = scalar_select %p199, %s20, 1
      %s201 = smul.addr %s198, 2
      %s202 = sadd.s32 %s200, %s201
      %s203 = smul.addr %s202, 2
      %s204 = scalar_lea.vmem %s3, %s203
      %s205 = smul.u32 64, %s20
      %p206 = scmp.lt.s32.totalorder %s19, 1
      %s207 = scalar_select %p206, %s19, 1
      %p208 = scmp.lt.s32.totalorder %s205, 127
      %s209 = scalar_select %p208, %s205, 127
      %s210 = smul.addr %s209, 3
      %s211 = smul.addr %s207, 384
      %s212 = sadd.s32 %s210, %s211
      %s213 = smul.addr %s212, 4
      %s214 = scalar_lea.vmem %s0, %s213
      %s215 = smul.u32 64, %s20
      %s216 = smul.u32 64, %s20
      %p217 = scmp.lt.s32.totalorder %s19, 1
      %s218 = scalar_select %p217, %s19, 1
      %p219 = scmp.lt.s32.totalorder %s216, 127
      %s220 = scalar_select %p219, %s216, 127
      %s221 = smul.addr %s218, 128
      %s222 = sadd.s32 %s220, %s221
      %s223 = smul.addr %s222, 4
      %s224 = scalar_lea.vmem %s2, %s223
      %s225 = smul.u32 64, %s20
      %p226 = scmp.lt.s32.totalorder %s19, 1
      %s227 = scalar_select %p226, %s19, 1
      %p228 = scmp.lt.s32.totalorder %s20, 1
      %s229 = scalar_select %p228, %s20, 1
      %s230 = smul.addr %s227, 2
      %s231 = sadd.s32 %s229, %s230
      %s232 = smul.addr %s231, 2
      %s233 = scalar_lea.vmem %s3, %s232
      %v235 = vld [vmem:[%s214] sm:$0xff]
      %v236 = vld [vmem:[%s214 + $0x8] sm:$0xf]
      %v237 = vld [vmem:[%s214 + $0xc] sm:$0xff]
      %v238 = vld [vmem:[%s214 + $0x14] sm:$0xf]
      %v239 = vld [vmem:[%s214 + $0x18] sm:$0xff]
      %v240 = vld [vmem:[%s214 + $0x20] sm:$0xf]
      %v241 = vld [vmem:[%s214 + $0x24] sm:$0xff]
      %v242 = vld [vmem:[%s214 + $0x2c] sm:$0xf]
      %v243 = vld [vmem:[%s214 + $0x30] sm:$0xff]
      %v244 = vld [vmem:[%s214 + $0x38] sm:$0xf]
      %v245 = vld [vmem:[%s214 + $0x3c] sm:$0xff]
      %v246 = vld [vmem:[%s214 + $0x44] sm:$0xf]
      %v247 = vld [vmem:[%s214 + $0x48] sm:$0xff]
      %v248 = vld [vmem:[%s214 + $0x50] sm:$0xf]
      %v249 = vld [vmem:[%s214 + $0x54] sm:$0xff]
      %v250 = vld [vmem:[%s214 + $0x5c] sm:$0xf]
      %v251 = vld [vmem:[%s214 + $0x60] sm:$0xff]
      %v252 = vld [vmem:[%s214 + $0x68] sm:$0xf]
      %v253 = vld [vmem:[%s214 + $0x6c] sm:$0xff]
      %v254 = vld [vmem:[%s214 + $0x74] sm:$0xf]
      %v255 = vld [vmem:[%s214 + $0x78] sm:$0xff]
      %v256 = vld [vmem:[%s214 + $0x80] sm:$0xf]
      %v257 = vld [vmem:[%s214 + $0x84] sm:$0xff]
      %v258 = vld [vmem:[%s214 + $0x8c] sm:$0xf]
      %v259 = vld [vmem:[%s214 + $0x90] sm:$0xff]
      %v260 = vld [vmem:[%s214 + $0x98] sm:$0xf]
      %v261 = vld [vmem:[%s214 + $0x9c] sm:$0xff]
      %v262 = vld [vmem:[%s214 + $0xa4] sm:$0xf]
      %v263 = vld [vmem:[%s214 + $0xa8] sm:$0xff]
      %v264 = vld [vmem:[%s214 + $0xb0] sm:$0xf]
      %v265 = vld [vmem:[%s214 + $0xb4] sm:$0xff]
      %v266 = vld [vmem:[%s214 + $0xbc] sm:$0xf]
      %v267 = vld [vmem:[%s214 + $0xc0] sm:$0xff]
      %v268 = vld [vmem:[%s214 + $0xc8] sm:$0xf]
      %v269 = vld [vmem:[%s214 + $0xcc] sm:$0xff]
      %v270 = vld [vmem:[%s214 + $0xd4] sm:$0xf]
      %v271 = vld [vmem:[%s214 + $0xd8] sm:$0xff]
      %v272 = vld [vmem:[%s214 + $0xe0] sm:$0xf]
      %v273 = vld [vmem:[%s214 + $0xe4] sm:$0xff]
      %v274 = vld [vmem:[%s214 + $0xec] sm:$0xf]
      %v275 = vld [vmem:[%s214 + $0xf0] sm:$0xff]
      %v276 = vld [vmem:[%s214 + $0xf8] sm:$0xf]
      %v277 = vld [vmem:[%s214 + $0xfc] sm:$0xff]
      %v278 = vld [vmem:[%s214 + $0x104] sm:$0xf]
      %v279 = vld [vmem:[%s214 + $0x108] sm:$0xff]
      %v280 = vld [vmem:[%s214 + $0x110] sm:$0xf]
      %v281 = vld [vmem:[%s214 + $0x114] sm:$0xff]
      %v282 = vld [vmem:[%s214 + $0x11c] sm:$0xf]
      %v283 = vld [vmem:[%s214 + $0x120] sm:$0xff]
      %v284 = vld [vmem:[%s214 + $0x128] sm:$0xf]
      %v285 = vld [vmem:[%s214 + $0x12c] sm:$0xff]
      %v286 = vld [vmem:[%s214 + $0x134] sm:$0xf]
      %v287 = vld [vmem:[%s214 + $0x138] sm:$0xff]
      %v288 = vld [vmem:[%s214 + $0x140] sm:$0xf]
      %v289 = vld [vmem:[%s214 + $0x144] sm:$0xff]
      %v290 = vld [vmem:[%s214 + $0x14c] sm:$0xf]
      %v291 = vld [vmem:[%s214 + $0x150] sm:$0xff]
      %v292 = vld [vmem:[%s214 + $0x158] sm:$0xf]
      %v293 = vld [vmem:[%s214 + $0x15c] sm:$0xff]
      %v294 = vld [vmem:[%s214 + $0x164] sm:$0xf]
      %v295 = vld [vmem:[%s214 + $0x168] sm:$0xff]
      %v296 = vld [vmem:[%s214 + $0x170] sm:$0xf]
      %v297 = vld [vmem:[%s214 + $0x174] sm:$0xff]
      %v298 = vld [vmem:[%s214 + $0x17c] sm:$0xf]
      %v299 = vld [vmem:[%s214 + $0x180] sm:$0xff]
      %v300 = vld [vmem:[%s214 + $0x188] sm:$0xf]
      %v301 = vld [vmem:[%s214 + $0x18c] sm:$0xff]
      %v302 = vld [vmem:[%s214 + $0x194] sm:$0xf]
      %v303 = vld [vmem:[%s214 + $0x198] sm:$0xff]
      %v304 = vld [vmem:[%s214 + $0x1a0] sm:$0xf]
      %v305 = vld [vmem:[%s214 + $0x1a4] sm:$0xff]
      %v306 = vld [vmem:[%s214 + $0x1ac] sm:$0xf]
      %v307 = vld [vmem:[%s214 + $0x1b0] sm:$0xff]
      %v308 = vld [vmem:[%s214 + $0x1b8] sm:$0xf]
      %v309 = vld [vmem:[%s214 + $0x1bc] sm:$0xff]
      %v310 = vld [vmem:[%s214 + $0x1c4] sm:$0xf]
      %v311 = vld [vmem:[%s214 + $0x1c8] sm:$0xff]
      %v312 = vld [vmem:[%s214 + $0x1d0] sm:$0xf]
      %v313 = vld [vmem:[%s214 + $0x1d4] sm:$0xff]
      %v314 = vld [vmem:[%s214 + $0x1dc] sm:$0xf]
      %v315 = vld [vmem:[%s214 + $0x1e0] sm:$0xff]
      %v316 = vld [vmem:[%s214 + $0x1e8] sm:$0xf]
      %v317 = vld [vmem:[%s214 + $0x1ec] sm:$0xff]
      %v318 = vld [vmem:[%s214 + $0x1f4] sm:$0xf]
      %v319 = vld [vmem:[%s214 + $0x1f8] sm:$0xff]
      %v320 = vld [vmem:[%s214 + $0x200] sm:$0xf]
      %v321 = vld [vmem:[%s214 + $0x204] sm:$0xff]
      %v322 = vld [vmem:[%s214 + $0x20c] sm:$0xf]
      %v323 = vld [vmem:[%s214 + $0x210] sm:$0xff]
      %v324 = vld [vmem:[%s214 + $0x218] sm:$0xf]
      %v325 = vld [vmem:[%s214 + $0x21c] sm:$0xff]
      %v326 = vld [vmem:[%s214 + $0x224] sm:$0xf]
      %v327 = vld [vmem:[%s214 + $0x228] sm:$0xff]
      %v328 = vld [vmem:[%s214 + $0x230] sm:$0xf]
      %v329 = vld [vmem:[%s214 + $0x234] sm:$0xff]
      %v330 = vld [vmem:[%s214 + $0x23c] sm:$0xf]
      %v331 = vld [vmem:[%s214 + $0x240] sm:$0xff]
      %v332 = vld [vmem:[%s214 + $0x248] sm:$0xf]
      %v333 = vld [vmem:[%s214 + $0x24c] sm:$0xff]
      %v334 = vld [vmem:[%s214 + $0x254] sm:$0xf]
      %v335 = vld [vmem:[%s214 + $0x258] sm:$0xff]
      %v336 = vld [vmem:[%s214 + $0x260] sm:$0xf]
      %v337 = vld [vmem:[%s214 + $0x264] sm:$0xff]
      %v338 = vld [vmem:[%s214 + $0x26c] sm:$0xf]
      %v339 = vld [vmem:[%s214 + $0x270] sm:$0xff]
      %v340 = vld [vmem:[%s214 + $0x278] sm:$0xf]
      %v341 = vld [vmem:[%s214 + $0x27c] sm:$0xff]
      %v342 = vld [vmem:[%s214 + $0x284] sm:$0xf]
      %v343 = vld [vmem:[%s214 + $0x288] sm:$0xff]
      %v344 = vld [vmem:[%s214 + $0x290] sm:$0xf]
      %v345 = vld [vmem:[%s214 + $0x294] sm:$0xff]
      %v346 = vld [vmem:[%s214 + $0x29c] sm:$0xf]
      %v347 = vld [vmem:[%s214 + $0x2a0] sm:$0xff]
      %v348 = vld [vmem:[%s214 + $0x2a8] sm:$0xf]
      %v349 = vld [vmem:[%s214 + $0x2ac] sm:$0xff]
      %v350 = vld [vmem:[%s214 + $0x2b4] sm:$0xf]
      %v351 = vld [vmem:[%s214 + $0x2b8] sm:$0xff]
      %v352 = vld [vmem:[%s214 + $0x2c0] sm:$0xf]
      %v353 = vld [vmem:[%s214 + $0x2c4] sm:$0xff]
      %v354 = vld [vmem:[%s214 + $0x2cc] sm:$0xf]
      %v355 = vld [vmem:[%s214 + $0x2d0] sm:$0xff]
      %v356 = vld [vmem:[%s214 + $0x2d8] sm:$0xf]
      %v357 = vld [vmem:[%s214 + $0x2dc] sm:$0xff]
      %v358 = vld [vmem:[%s214 + $0x2e4] sm:$0xf]
      %v359 = vld [vmem:[%s214 + $0x2e8] sm:$0xff]
      %v360 = vld [vmem:[%s214 + $0x2f0] sm:$0xf]
      %v361 = vld [vmem:[%s214 + $0x2f4] sm:$0xff]
      %v362 = vld [vmem:[%s214 + $0x2fc] sm:$0xf]
      %v363 = vld [vmem:[%s1] sm:$0xf]
      %v364 = vld [vmem:[%s1 + $0x4] sm:$0xf]
      %v365 = vld [vmem:[%s1 + $0x8] sm:$0xf]
      %v366 = vld [vmem:[%s1 + $0xc] sm:$0xf]
      %v367 = vld [vmem:[%s1 + $0x10] sm:$0xf]
      %v368 = vld [vmem:[%s1 + $0x14] sm:$0xf]
      %v369 = vld [vmem:[%s1 + $0x18] sm:$0xf]
      %v370 = vld [vmem:[%s1 + $0x1c] sm:$0xf]
      %v371 = vld [vmem:[%s1 + $0x20] sm:$0xf]
      %v372 = vld [vmem:[%s1 + $0x24] sm:$0xf]
      %v373 = vld [vmem:[%s1 + $0x28] sm:$0xf]
      %v374 = vld [vmem:[%s1 + $0x2c] sm:$0xf]
      %v375 = vld [vmem:[%s1 + $0x30] sm:$0xf]
      %v376 = vld [vmem:[%s1 + $0x34] sm:$0xf]
      %v377 = vld [vmem:[%s1 + $0x38] sm:$0xf]
      %v378 = vld [vmem:[%s1 + $0x3c] sm:$0xf]
      %v379 = vld [vmem:[%s1 + $0x40] sm:$0xf]
      %v380 = vld [vmem:[%s1 + $0x44] sm:$0xf]
      %v381 = vld [vmem:[%s1 + $0x48] sm:$0xf]
      %v382 = vld [vmem:[%s1 + $0x4c] sm:$0xf]
      %v383 = vld [vmem:[%s1 + $0x50] sm:$0xf]
      %v384 = vld [vmem:[%s1 + $0x54] sm:$0xf]
      %v385 = vld [vmem:[%s1 + $0x58] sm:$0xf]
      %v386 = vld [vmem:[%s1 + $0x5c] sm:$0xf]
      %v387 = vld [vmem:[%s1 + $0x60] sm:$0xf]
      %v388 = vld [vmem:[%s1 + $0x64] sm:$0xf]
      %v389 = vld [vmem:[%s1 + $0x68] sm:$0xf]
      %v390 = vld [vmem:[%s1 + $0x6c] sm:$0xf]
      %v391 = vld [vmem:[%s1 + $0x70] sm:$0xf]
      %v392 = vld [vmem:[%s1 + $0x74] sm:$0xf]
      %v393 = vld [vmem:[%s1 + $0x78] sm:$0xf]
      %v394 = vld [vmem:[%s1 + $0x7c] sm:$0xf]
      %v395 = vld [vmem:[%s1 + $0x80] sm:$0xf]
      %v396 = vld [vmem:[%s1 + $0x84] sm:$0xf]
      %v397 = vld [vmem:[%s1 + $0x88] sm:$0xf]
      %v398 = vld [vmem:[%s1 + $0x8c] sm:$0xf]
      %v527 = vunpack.c.l.b16 %v235
      %v528 = vunpack.c.h.b16 %v235
      %v529 = vunpack.c.l.b16 %v236
      %v530 = vunpack.c.l.b16 %v237
      %v531 = vunpack.c.h.b16 %v237
      %v532 = vunpack.c.l.b16 %v238
      %v533 = vunpack.c.l.b16 %v239
      %v534 = vunpack.c.h.b16 %v239
      %v535 = vunpack.c.l.b16 %v240
      %v536 = vunpack.c.l.b16 %v241
      %v537 = vunpack.c.h.b16 %v241
      %v538 = vunpack.c.l.b16 %v242
      %v539 = vunpack.c.l.b16 %v243
      %v540 = vunpack.c.h.b16 %v243
      %v541 = vunpack.c.l.b16 %v244
      %v542 = vunpack.c.l.b16 %v245
      %v543 = vunpack.c.h.b16 %v245
      %v544 = vunpack.c.l.b16 %v246
      %v545 = vunpack.c.l.b16 %v247
      %v546 = vunpack.c.h.b16 %v247
      %v547 = vunpack.c.l.b16 %v248
      %v548 = vunpack.c.l.b16 %v249
      %v549 = vunpack.c.h.b16 %v249
      %v550 = vunpack.c.l.b16 %v250
      %v551 = vunpack.c.l.b16 %v251
      %v552 = vunpack.c.h.b16 %v251
      %v553 = vunpack.c.l.b16 %v252
      %v554 = vunpack.c.l.b16 %v253
      %v555 = vunpack.c.h.b16 %v253
      %v556 = vunpack.c.l.b16 %v254
      %v557 = vunpack.c.l.b16 %v255
      %v558 = vunpack.c.h.b16 %v255
      %v559 = vunpack.c.l.b16 %v256
      %v560 = vunpack.c.l.b16 %v257
      %v561 = vunpack.c.h.b16 %v257
      %v562 = vunpack.c.l.b16 %v258
      %v563 = vunpack.c.l.b16 %v259
      %v564 = vunpack.c.h.b16 %v259
      %v565 = vunpack.c.l.b16 %v260
      %v566 = vunpack.c.l.b16 %v261
      %v567 = vunpack.c.h.b16 %v261
      %v568 = vunpack.c.l.b16 %v262
      %v569 = vunpack.c.l.b16 %v263
      %v570 = vunpack.c.h.b16 %v263
      %v571 = vunpack.c.l.b16 %v264
      %v572 = vunpack.c.l.b16 %v265
      %v573 = vunpack.c.h.b16 %v265
      %v574 = vunpack.c.l.b16 %v266
      %v575 = vunpack.c.l.b16 %v267
      %v576 = vunpack.c.h.b16 %v267
      %v577 = vunpack.c.l.b16 %v268
      %v578 = vunpack.c.l.b16 %v269
      %v579 = vunpack.c.h.b16 %v269
      %v580 = vunpack.c.l.b16 %v270
      %v581 = vunpack.c.l.b16 %v271
      %v582 = vunpack.c.h.b16 %v271
      %v583 = vunpack.c.l.b16 %v272
      %v584 = vunpack.c.l.b16 %v273
      %v585 = vunpack.c.h.b16 %v273
      %v586 = vunpack.c.l.b16 %v274
      %v587 = vunpack.c.l.b16 %v275
      %v588 = vunpack.c.h.b16 %v275
      %v589 = vunpack.c.l.b16 %v276
      %v590 = vunpack.c.l.b16 %v277
      %v591 = vunpack.c.h.b16 %v277
      %v592 = vunpack.c.l.b16 %v278
      %v593 = vunpack.c.l.b16 %v279
      %v594 = vunpack.c.h.b16 %v279
      %v595 = vunpack.c.l.b16 %v280
      %v596 = vunpack.c.l.b16 %v281
      %v597 = vunpack.c.h.b16 %v281
      %v598 = vunpack.c.l.b16 %v282
      %v599 = vunpack.c.l.b16 %v283
      %v600 = vunpack.c.h.b16 %v283
      %v601 = vunpack.c.l.b16 %v284
      %v602 = vunpack.c.l.b16 %v285
      %v603 = vunpack.c.h.b16 %v285
      %v604 = vunpack.c.l.b16 %v286
      %v605 = vunpack.c.l.b16 %v287
      %v606 = vunpack.c.h.b16 %v287
      %v607 = vunpack.c.l.b16 %v288
      %v608 = vunpack.c.l.b16 %v289
      %v609 = vunpack.c.h.b16 %v289
      %v610 = vunpack.c.l.b16 %v290
      %v611 = vunpack.c.l.b16 %v291
      %v612 = vunpack.c.h.b16 %v291
      %v613 = vunpack.c.l.b16 %v292
      %v614 = vunpack.c.l.b16 %v293
      %v615 = vunpack.c.h.b16 %v293
      %v616 = vunpack.c.l.b16 %v294
      %v617 = vunpack.c.l.b16 %v295
      %v618 = vunpack.c.h.b16 %v295
      %v619 = vunpack.c.l.b16 %v296
      %v620 = vunpack.c.l.b16 %v297
      %v621 = vunpack.c.h.b16 %v297
      %v622 = vunpack.c.l.b16 %v298
      %v623 = vunpack.c.l.b16 %v299
      %v624 = vunpack.c.h.b16 %v299
      %v625 = vunpack.c.l.b16 %v300
      %v626 = vunpack.c.l.b16 %v301
      %v627 = vunpack.c.h.b16 %v301
      %v628 = vunpack.c.l.b16 %v302
      %v629 = vunpack.c.l.b16 %v303
      %v630 = vunpack.c.h.b16 %v303
      %v631 = vunpack.c.l.b16 %v304
      %v632 = vunpack.c.l.b16 %v305
      %v633 = vunpack.c.h.b16 %v305
      %v634 = vunpack.c.l.b16 %v306
      %v635 = vunpack.c.l.b16 %v307
      %v636 = vunpack.c.h.b16 %v307
      %v637 = vunpack.c.l.b16 %v308
      %v638 = vunpack.c.l.b16 %v309
      %v639 = vunpack.c.h.b16 %v309
      %v640 = vunpack.c.l.b16 %v310
      %v641 = vunpack.c.l.b16 %v311
      %v642 = vunpack.c.h.b16 %v311
      %v643 = vunpack.c.l.b16 %v312
      %v644 = vunpack.c.l.b16 %v313
      %v645 = vunpack.c.h.b16 %v313
      %v646 = vunpack.c.l.b16 %v314
      %v647 = vunpack.c.l.b16 %v315
      %v648 = vunpack.c.h.b16 %v315
      %v649 = vunpack.c.l.b16 %v316
      %v650 = vunpack.c.l.b16 %v317
      %v651 = vunpack.c.h.b16 %v317
      %v652 = vunpack.c.l.b16 %v318
      %v653 = vunpack.c.l.b16 %v319
      %v654 = vunpack.c.h.b16 %v319
      %v655 = vunpack.c.l.b16 %v320
      %v656 = vunpack.c.l.b16 %v321
      %v657 = vunpack.c.h.b16 %v321
      %v658 = vunpack.c.l.b16 %v322
      %v659 = vunpack.c.l.b16 %v323
      %v660 = vunpack.c.h.b16 %v323
      %v661 = vunpack.c.l.b16 %v324
      %v662 = vunpack.c.l.b16 %v325
      %v663 = vunpack.c.h.b16 %v325
      %v664 = vunpack.c.l.b16 %v326
      %v665 = vunpack.c.l.b16 %v327
      %v666 = vunpack.c.h.b16 %v327
      %v667 = vunpack.c.l.b16 %v328
      %v668 = vunpack.c.l.b16 %v329
      %v669 = vunpack.c.h.b16 %v329
      %v670 = vunpack.c.l.b16 %v330
      %v671 = vunpack.c.l.b16 %v331
      %v672 = vunpack.c.h.b16 %v331
      %v673 = vunpack.c.l.b16 %v332
      %v674 = vunpack.c.l.b16 %v333
      %v675 = vunpack.c.h.b16 %v333
      %v676 = vunpack.c.l.b16 %v334
      %v677 = vunpack.c.l.b16 %v335
      %v678 = vunpack.c.h.b16 %v335
      %v679 = vunpack.c.l.b16 %v336
      %v680 = vunpack.c.l.b16 %v337
      %v681 = vunpack.c.h.b16 %v337
      %v682 = vunpack.c.l.b16 %v338
      %v683 = vunpack.c.l.b16 %v339
      %v684 = vunpack.c.h.b16 %v339
      %v685 = vunpack.c.l.b16 %v340
      %v686 = vunpack.c.l.b16 %v341
      %v687 = vunpack.c.h.b16 %v341
      %v688 = vunpack.c.l.b16 %v342
      %v689 = vunpack.c.l.b16 %v343
      %v690 = vunpack.c.h.b16 %v343
      %v691 = vunpack.c.l.b16 %v344
      %v692 = vunpack.c.l.b16 %v345
      %v693 = vunpack.c.h.b16 %v345
      %v694 = vunpack.c.l.b16 %v346
      %v695 = vunpack.c.l.b16 %v347
      %v696 = vunpack.c.h.b16 %v347
      %v697 = vunpack.c.l.b16 %v348
      %v698 = vunpack.c.l.b16 %v349
      %v699 = vunpack.c.h.b16 %v349
      %v700 = vunpack.c.l.b16 %v350
      %v701 = vunpack.c.l.b16 %v351
      %v702 = vunpack.c.h.b16 %v351
      %v703 = vunpack.c.l.b16 %v352
      %v704 = vunpack.c.l.b16 %v353
      %v705 = vunpack.c.h.b16 %v353
      %v706 = vunpack.c.l.b16 %v354
      %v707 = vunpack.c.l.b16 %v355
      %v708 = vunpack.c.h.b16 %v355
      %v709 = vunpack.c.l.b16 %v356
      %v710 = vunpack.c.l.b16 %v357
      %v711 = vunpack.c.h.b16 %v357
      %v712 = vunpack.c.l.b16 %v358
      %v713 = vunpack.c.l.b16 %v359
      %v714 = vunpack.c.h.b16 %v359
      %v715 = vunpack.c.l.b16 %v360
      %v716 = vunpack.c.l.b16 %v361
      %v717 = vunpack.c.h.b16 %v361
      %v718 = vunpack.c.l.b16 %v362
      %v719 = vpack.c.b16 %v530, %v527
      %v720 = vpack.c.b16 %v531, %v528
      %v721 = vpack.c.b16 %v532, %v529
      %v722 = vpack.c.b16 %v536, %v533
      %v723 = vpack.c.b16 %v537, %v534
      %v724 = vpack.c.b16 %v538, %v535
      %v725 = vpack.c.b16 %v542, %v539
      %v726 = vpack.c.b16 %v543, %v540
      %v727 = vpack.c.b16 %v544, %v541
      %v728 = vpack.c.b16 %v548, %v545
      %v729 = vpack.c.b16 %v549, %v546
      %v730 = vpack.c.b16 %v550, %v547
      %v731 = vpack.c.b16 %v554, %v551
      %v732 = vpack.c.b16 %v555, %v552
      %v733 = vpack.c.b16 %v556, %v553
      %v734 = vpack.c.b16 %v560, %v557
      %v735 = vpack.c.b16 %v561, %v558
      %v736 = vpack.c.b16 %v562, %v559
      %v737 = vpack.c.b16 %v566, %v563
      %v738 = vpack.c.b16 %v567, %v564
      %v739 = vpack.c.b16 %v568, %v565
      %v740 = vpack.c.b16 %v572, %v569
      %v741 = vpack.c.b16 %v573, %v570
      %v742 = vpack.c.b16 %v574, %v571
      %v743 = vpack.c.b16 %v578, %v575
      %v744 = vpack.c.b16 %v579, %v576
      %v745 = vpack.c.b16 %v580, %v577
      %v746 = vpack.c.b16 %v584, %v581
      %v747 = vpack.c.b16 %v585, %v582
      %v748 = vpack.c.b16 %v586, %v583
      %v749 = vpack.c.b16 %v590, %v587
      %v750 = vpack.c.b16 %v591, %v588
      %v751 = vpack.c.b16 %v592, %v589
      %v752 = vpack.c.b16 %v596, %v593
      %v753 = vpack.c.b16 %v597, %v594
      %v754 = vpack.c.b16 %v598, %v595
      %v755 = vpack.c.b16 %v602, %v599
      %v756 = vpack.c.b16 %v603, %v600
      %v757 = vpack.c.b16 %v604, %v601
      %v758 = vpack.c.b16 %v608, %v605
      %v759 = vpack.c.b16 %v609, %v606
      %v760 = vpack.c.b16 %v610, %v607
      %v761 = vpack.c.b16 %v614, %v611
      %v762 = vpack.c.b16 %v615, %v612
      %v763 = vpack.c.b16 %v616, %v613
      %v764 = vpack.c.b16 %v620, %v617
      %v765 = vpack.c.b16 %v621, %v618
      %v766 = vpack.c.b16 %v622, %v619
      %v767 = vpack.c.b16 %v626, %v623
      %v768 = vpack.c.b16 %v627, %v624
      %v769 = vpack.c.b16 %v628, %v625
      %v770 = vpack.c.b16 %v632, %v629
      %v771 = vpack.c.b16 %v633, %v630
      %v772 = vpack.c.b16 %v634, %v631
      %v773 = vpack.c.b16 %v638, %v635
      %v774 = vpack.c.b16 %v639, %v636
      %v775 = vpack.c.b16 %v640, %v637
      %v776 = vpack.c.b16 %v644, %v641
      %v777 = vpack.c.b16 %v645, %v642
      %v778 = vpack.c.b16 %v646, %v643
      %v779 = vpack.c.b16 %v650, %v647
      %v780 = vpack.c.b16 %v651, %v648
      %v781 = vpack.c.b16 %v652, %v649
      %v782 = vpack.c.b16 %v656, %v653
      %v783 = vpack.c.b16 %v657, %v654
      %v784 = vpack.c.b16 %v658, %v655
      %v785 = vpack.c.b16 %v662, %v659
      %v786 = vpack.c.b16 %v663, %v660
      %v787 = vpack.c.b16 %v664, %v661
      %v788 = vpack.c.b16 %v668, %v665
      %v789 = vpack.c.b16 %v669, %v666
      %v790 = vpack.c.b16 %v670, %v667
      %v791 = vpack.c.b16 %v674, %v671
      %v792 = vpack.c.b16 %v675, %v672
      %v793 = vpack.c.b16 %v676, %v673
      %v794 = vpack.c.b16 %v680, %v677
      %v795 = vpack.c.b16 %v681, %v678
      %v796 = vpack.c.b16 %v682, %v679
      %v797 = vpack.c.b16 %v686, %v683
      %v798 = vpack.c.b16 %v687, %v684
      %v799 = vpack.c.b16 %v688, %v685
      %v800 = vpack.c.b16 %v692, %v689
      %v801 = vpack.c.b16 %v693, %v690
      %v802 = vpack.c.b16 %v694, %v691
      %v803 = vpack.c.b16 %v698, %v695
      %v804 = vpack.c.b16 %v699, %v696
      %v805 = vpack.c.b16 %v700, %v697
      %v806 = vpack.c.b16 %v704, %v701
      %v807 = vpack.c.b16 %v705, %v702
      %v808 = vpack.c.b16 %v706, %v703
      %v809 = vpack.c.b16 %v710, %v707
      %v810 = vpack.c.b16 %v711, %v708
      %v811 = vpack.c.b16 %v712, %v709
      %v812 = vpack.c.b16 %v716, %v713
      %v813 = vpack.c.b16 %v717, %v714
      %v814 = vpack.c.b16 %v718, %v715
      %v915 = vunpack.c.l.b16 %v363
      %v916 = vunpack.c.l.b16 %v364
      %v917 = vunpack.c.l.b16 %v365
      %v918 = vunpack.c.l.b16 %v366
      %v919 = vunpack.c.l.b16 %v367
      %v920 = vunpack.c.l.b16 %v368
      %v921 = vunpack.c.l.b16 %v369
      %v922 = vunpack.c.l.b16 %v370
      %v923 = vunpack.c.l.b16 %v371
      %v924 = vunpack.c.l.b16 %v372
      %v925 = vunpack.c.l.b16 %v373
      %v926 = vunpack.c.l.b16 %v374
      %v927 = vunpack.c.l.b16 %v375
      %v928 = vunpack.c.l.b16 %v376
      %v929 = vunpack.c.l.b16 %v377
      %v930 = vunpack.c.l.b16 %v378
      %v931 = vunpack.c.l.b16 %v379
      %v932 = vunpack.c.l.b16 %v380
      %v933 = vunpack.c.l.b16 %v381
      %v934 = vunpack.c.l.b16 %v382
      %v935 = vunpack.c.l.b16 %v383
      %v936 = vunpack.c.l.b16 %v384
      %v937 = vunpack.c.l.b16 %v385
      %v938 = vunpack.c.l.b16 %v386
      %v939 = vunpack.c.l.b16 %v387
      %v940 = vunpack.c.l.b16 %v388
      %v941 = vunpack.c.l.b16 %v389
      %v942 = vunpack.c.l.b16 %v390
      %v943 = vunpack.c.l.b16 %v391
      %v944 = vunpack.c.l.b16 %v392
      %v945 = vunpack.c.l.b16 %v393
      %v946 = vunpack.c.l.b16 %v394
      %v947 = vunpack.c.l.b16 %v395
      %v948 = vunpack.c.l.b16 %v396
      %v949 = vunpack.c.l.b16 %v397
      %v950 = vunpack.c.l.b16 %v398
      %v951 = vpack.c.b16 %v916, %v915
      %v952 = vpack.c.b16 %v918, %v917
      %v953 = vpack.c.b16 %v920, %v919
      %v954 = vpack.c.b16 %v922, %v921
      %v955 = vpack.c.b16 %v924, %v923
      %v956 = vpack.c.b16 %v926, %v925
      %v957 = vpack.c.b16 %v928, %v927
      %v958 = vpack.c.b16 %v930, %v929
      %v959 = vpack.c.b16 %v932, %v931
      %v960 = vpack.c.b16 %v934, %v933
      %v961 = vpack.c.b16 %v936, %v935
      %v962 = vpack.c.b16 %v938, %v937
      %v963 = vpack.c.b16 %v940, %v939
      %v964 = vpack.c.b16 %v942, %v941
      %v965 = vpack.c.b16 %v944, %v943
      %v966 = vpack.c.b16 %v946, %v945
      %v967 = vpack.c.b16 %v948, %v947
      %v968 = vpack.c.b16 %v950, %v949
      %vm987 = vcmask 261120
      %v989 = vsel %vm987, %v721, 0
      %v992 = vsel %vm987, %v724, 0
      %v995 = vsel %vm987, %v727, 0
      %v998 = vsel %vm987, %v730, 0
      %v1001 = vsel %vm987, %v733, 0
      %v1004 = vsel %vm987, %v736, 0
      %v1007 = vsel %vm987, %v739, 0
      %v1010 = vsel %vm987, %v742, 0
      %v1013 = vsel %vm987, %v745, 0
      %v1016 = vsel %vm987, %v748, 0
      %v1019 = vsel %vm987, %v751, 0
      %v1022 = vsel %vm987, %v754, 0
      %v1025 = vsel %vm987, %v757, 0
      %v1028 = vsel %vm987, %v760, 0
      %v1031 = vsel %vm987, %v763, 0
      %v1034 = vsel %vm987, %v766, 0
      %v1037 = vsel %vm987, %v769, 0
      %v1040 = vsel %vm987, %v772, 0
      %v1043 = vsel %vm987, %v775, 0
      %v1046 = vsel %vm987, %v778, 0
      %v1049 = vsel %vm987, %v781, 0
      %v1052 = vsel %vm987, %v784, 0
      %v1055 = vsel %vm987, %v787, 0
      %v1058 = vsel %vm987, %v790, 0
      %v1061 = vsel %vm987, %v793, 0
      %v1064 = vsel %vm987, %v796, 0
      %v1067 = vsel %vm987, %v799, 0
      %v1070 = vsel %vm987, %v802, 0
      %v1073 = vsel %vm987, %v805, 0
      %v1076 = vsel %vm987, %v808, 0
      %v1079 = vsel %vm987, %v811, 0
      %v1082 = vsel %vm987, %v814, 0
      %1084 = vmatpush.bf16.msra.mxu0 %v958
      %1085 = vmatpush.bf16.msra.mxu0 %v957
      %1086 = vmatpush.bf16.msra.mxu0 %v956
      %1087 = vmatpush.bf16.msra.mxu0 %v955
      %1088 = vmatpush.bf16.msra.mxu0 %v954
      %1089 = vmatpush.bf16.msra.mxu0 %v953
      %1090 = vmatpush.bf16.msra.mxu0 %v952
      %1091 = vmatpush.bf16.msra.mxu0 %v951
      %1092 = vmatmul.bf16.gmra.mxu0 %v719
      %v1093 = vpop.f32.mrf.mxu0
      %v1094 = vadd.f32 0.0, %v1093
      %v1095 = vpop.f32.mrf.mxu0
      %v1096 = vadd.f32 0.0, %v1095
      %1097 = vmatmul.bf16.gmra.mxu0 %v722
      %v1098 = vpop.f32.mrf.mxu0
      %v1099 = vadd.f32 0.0, %v1098
      %v1100 = vpop.f32.mrf.mxu0
      %v1101 = vadd.f32 0.0, %v1100
      %1102 = vmatmul.bf16.gmra.mxu0 %v725
      %v1103 = vpop.f32.mrf.mxu0
      %v1104 = vadd.f32 0.0, %v1103
      %v1105 = vpop.f32.mrf.mxu0
      %v1106 = vadd.f32 0.0, %v1105
      %1107 = vmatmul.bf16.gmra.mxu0 %v728
      %v1108 = vpop.f32.mrf.mxu0
      %v1109 = vadd.f32 0.0, %v1108
      %v1110 = vpop.f32.mrf.mxu0
      %v1111 = vadd.f32 0.0, %v1110
      %1112 = vmatmul.bf16.gmra.mxu0 %v731
      %v1113 = vpop.f32.mrf.mxu0
      %v1114 = vadd.f32 0.0, %v1113
      %v1115 = vpop.f32.mrf.mxu0
      %v1116 = vadd.f32 0.0, %v1115
      %1117 = vmatmul.bf16.gmra.mxu0 %v734
      %v1118 = vpop.f32.mrf.mxu0
      %v1119 = vadd.f32 0.0, %v1118
      %v1120 = vpop.f32.mrf.mxu0
      %v1121 = vadd.f32 0.0, %v1120
      %1122 = vmatmul.bf16.gmra.mxu0 %v737
      %v1123 = vpop.f32.mrf.mxu0
      %v1124 = vadd.f32 0.0, %v1123
      %v1125 = vpop.f32.mrf.mxu0
      %v1126 = vadd.f32 0.0, %v1125
      %1127 = vmatmul.bf16.gmra.mxu0 %v740
      %v1128 = vpop.f32.mrf.mxu0
      %v1129 = vadd.f32 0.0, %v1128
      %v1130 = vpop.f32.mrf.mxu0
      %v1131 = vadd.f32 0.0, %v1130
      %1132 = vmatmul.bf16.gmra.mxu0 %v743
      %v1133 = vpop.f32.mrf.mxu0
      %v1134 = vadd.f32 0.0, %v1133
      %v1135 = vpop.f32.mrf.mxu0
      %v1136 = vadd.f32 0.0, %v1135
      %1137 = vmatmul.bf16.gmra.mxu0 %v746
      %v1138 = vpop.f32.mrf.mxu0
      %v1139 = vadd.f32 0.0, %v1138
      %v1140 = vpop.f32.mrf.mxu0
      %v1141 = vadd.f32 0.0, %v1140
      %1142 = vmatmul.bf16.gmra.mxu0 %v749
      %v1143 = vpop.f32.mrf.mxu0
      %v1144 = vadd.f32 0.0, %v1143
      %v1145 = vpop.f32.mrf.mxu0
      %v1146 = vadd.f32 0.0, %v1145
      %1147 = vmatmul.bf16.gmra.mxu0 %v752
      %v1148 = vpop.f32.mrf.mxu0
      %v1149 = vadd.f32 0.0, %v1148
      %v1150 = vpop.f32.mrf.mxu0
      %v1151 = vadd.f32 0.0, %v1150
      %1152 = vmatmul.bf16.gmra.mxu0 %v755
      %v1153 = vpop.f32.mrf.mxu0
      %v1154 = vadd.f32 0.0, %v1153
      %v1155 = vpop.f32.mrf.mxu0
      %v1156 = vadd.f32 0.0, %v1155
      %1157 = vmatmul.bf16.gmra.mxu0 %v758
      %v1158 = vpop.f32.mrf.mxu0
      %v1159 = vadd.f32 0.0, %v1158
      %v1160 = vpop.f32.mrf.mxu0
      %v1161 = vadd.f32 0.0, %v1160
      %1162 = vmatmul.bf16.gmra.mxu0 %v761
      %v1163 = vpop.f32.mrf.mxu0
      %v1164 = vadd.f32 0.0, %v1163
      %v1165 = vpop.f32.mrf.mxu0
      %v1166 = vadd.f32 0.0, %v1165
      %1167 = vmatmul.bf16.gmra.mxu0 %v764
      %v1168 = vpop.f32.mrf.mxu0
      %v1169 = vadd.f32 0.0, %v1168
      %v1170 = vpop.f32.mrf.mxu0
      %v1171 = vadd.f32 0.0, %v1170
      %1172 = vmatmul.bf16.gmra.mxu0 %v767
      %v1173 = vpop.f32.mrf.mxu0
      %v1174 = vadd.f32 0.0, %v1173
      %v1175 = vpop.f32.mrf.mxu0
      %v1176 = vadd.f32 0.0, %v1175
      %1177 = vmatmul.bf16.gmra.mxu0 %v770
      %v1178 = vpop.f32.mrf.mxu0
      %v1179 = vadd.f32 0.0, %v1178
      %v1180 = vpop.f32.mrf.mxu0
      %v1181 = vadd.f32 0.0, %v1180
      %1182 = vmatmul.bf16.gmra.mxu0 %v773
      %v1183 = vpop.f32.mrf.mxu0
      %v1184 = vadd.f32 0.0, %v1183
      %v1185 = vpop.f32.mrf.mxu0
      %v1186 = vadd.f32 0.0, %v1185
      %1187 = vmatmul.bf16.gmra.mxu0 %v776
      %v1188 = vpop.f32.mrf.mxu0
      %v1189 = vadd.f32 0.0, %v1188
      %v1190 = vpop.f32.mrf.mxu0
      %v1191 = vadd.f32 0.0, %v1190
      %1192 = vmatmul.bf16.gmra.mxu0 %v779
      %v1193 = vpop.f32.mrf.mxu0
      %v1194 = vadd.f32 0.0, %v1193
      %v1195 = vpop.f32.mrf.mxu0
      %v1196 = vadd.f32 0.0, %v1195
      %1197 = vmatmul.bf16.gmra.mxu0 %v782
      %v1198 = vpop.f32.mrf.mxu0
      %v1199 = vadd.f32 0.0, %v1198
      %v1200 = vpop.f32.mrf.mxu0
      %v1201 = vadd.f32 0.0, %v1200
      %1202 = vmatmul.bf16.gmra.mxu0 %v785
      %v1203 = vpop.f32.mrf.mxu0
      %v1204 = vadd.f32 0.0, %v1203
      %v1205 = vpop.f32.mrf.mxu0
      %v1206 = vadd.f32 0.0, %v1205
      %1207 = vmatmul.bf16.gmra.mxu0 %v788
      %v1208 = vpop.f32.mrf.mxu0
      %v1209 = vadd.f32 0.0, %v1208
      %v1210 = vpop.f32.mrf.mxu0
      %v1211 = vadd.f32 0.0, %v1210
      %1212 = vmatmul.bf16.gmra.mxu0 %v791
      %v1213 = vpop.f32.mrf.mxu0
      %v1214 = vadd.f32 0.0, %v1213
      %v1215 = vpop.f32.mrf.mxu0
      %v1216 = vadd.f32 0.0, %v1215
      %1217 = vmatmul.bf16.gmra.mxu0 %v794
      %v1218 = vpop.f32.mrf.mxu0
      %v1219 = vadd.f32 0.0, %v1218
      %v1220 = vpop.f32.mrf.mxu0
      %v1221 = vadd.f32 0.0, %v1220
      %1222 = vmatmul.bf16.gmra.mxu0 %v797
      %v1223 = vpop.f32.mrf.mxu0
      %v1224 = vadd.f32 0.0, %v1223
      %v1225 = vpop.f32.mrf.mxu0
      %v1226 = vadd.f32 0.0, %v1225
      %1227 = vmatmul.bf16.gmra.mxu0 %v800
      %v1228 = vpop.f32.mrf.mxu0
      %v1229 = vadd.f32 0.0, %v1228
      %v1230 = vpop.f32.mrf.mxu0
      %v1231 = vadd.f32 0.0, %v1230
      %1232 = vmatmul.bf16.gmra.mxu0 %v803
      %v1233 = vpop.f32.mrf.mxu0
      %v1234 = vadd.f32 0.0, %v1233
      %v1235 = vpop.f32.mrf.mxu0
      %v1236 = vadd.f32 0.0, %v1235
      %1237 = vmatmul.bf16.gmra.mxu0 %v806
      %v1238 = vpop.f32.mrf.mxu0
      %v1239 = vadd.f32 0.0, %v1238
      %v1240 = vpop.f32.mrf.mxu0
      %v1241 = vadd.f32 0.0, %v1240
      %1242 = vmatmul.bf16.gmra.mxu0 %v809
      %v1243 = vpop.f32.mrf.mxu0
      %v1244 = vadd.f32 0.0, %v1243
      %v1245 = vpop.f32.mrf.mxu0
      %v1246 = vadd.f32 0.0, %v1245
      %1247 = vmatmul.bf16.gmra.mxu0 %v812
      %v1248 = vpop.f32.mrf.mxu0
      %v1249 = vadd.f32 0.0, %v1248
      %v1250 = vpop.f32.mrf.mxu0
      %v1251 = vadd.f32 0.0, %v1250
      %1252 = vdwg.mxu0
      %1253 = vmatpush.bf16.msra.mxu0 %v966
      %1254 = vmatpush.bf16.msra.mxu0 %v965
      %1255 = vmatpush.bf16.msra.mxu0 %v964
      %1256 = vmatpush.bf16.msra.mxu0 %v963
      %1257 = vmatpush.bf16.msra.mxu0 %v962
      %1258 = vmatpush.bf16.msra.mxu0 %v961
      %1259 = vmatpush.bf16.msra.mxu0 %v960
      %1260 = vmatpush.bf16.msra.mxu0 %v959
      %1261 = vmatmul.bf16.gmra.mxu0 %v720
      %v1262 = vpop.f32.mrf.mxu0
      %v1263 = vadd.f32 %v1094, %v1262
      %v1264 = vpop.f32.mrf.mxu0
      %v1265 = vadd.f32 %v1096, %v1264
      %1266 = vmatmul.bf16.gmra.mxu0 %v723
      %v1267 = vpop.f32.mrf.mxu0
      %v1268 = vadd.f32 %v1099, %v1267
      %v1269 = vpop.f32.mrf.mxu0
      %v1270 = vadd.f32 %v1101, %v1269
      %1271 = vmatmul.bf16.gmra.mxu0 %v726
      %v1272 = vpop.f32.mrf.mxu0
      %v1273 = vadd.f32 %v1104, %v1272
      %v1274 = vpop.f32.mrf.mxu0
      %v1275 = vadd.f32 %v1106, %v1274
      %1276 = vmatmul.bf16.gmra.mxu0 %v729
      %v1277 = vpop.f32.mrf.mxu0
      %v1278 = vadd.f32 %v1109, %v1277
      %v1279 = vpop.f32.mrf.mxu0
      %v1280 = vadd.f32 %v1111, %v1279
      %1281 = vmatmul.bf16.gmra.mxu0 %v732
      %v1282 = vpop.f32.mrf.mxu0
      %v1283 = vadd.f32 %v1114, %v1282
      %v1284 = vpop.f32.mrf.mxu0
      %v1285 = vadd.f32 %v1116, %v1284
      %1286 = vmatmul.bf16.gmra.mxu0 %v735
      %v1287 = vpop.f32.mrf.mxu0
      %v1288 = vadd.f32 %v1119, %v1287
      %v1289 = vpop.f32.mrf.mxu0
      %v1290 = vadd.f32 %v1121, %v1289
      %1291 = vmatmul.bf16.gmra.mxu0 %v738
      %v1292 = vpop.f32.mrf.mxu0
      %v1293 = vadd.f32 %v1124, %v1292
      %v1294 = vpop.f32.mrf.mxu0
      %v1295 = vadd.f32 %v1126, %v1294
      %1296 = vmatmul.bf16.gmra.mxu0 %v741
      %v1297 = vpop.f32.mrf.mxu0
      %v1298 = vadd.f32 %v1129, %v1297
      %v1299 = vpop.f32.mrf.mxu0
      %v1300 = vadd.f32 %v1131, %v1299
      %1301 = vmatmul.bf16.gmra.mxu0 %v744
      %v1302 = vpop.f32.mrf.mxu0
      %v1303 = vadd.f32 %v1134, %v1302
      %v1304 = vpop.f32.mrf.mxu0
      %v1305 = vadd.f32 %v1136, %v1304
      %1306 = vmatmul.bf16.gmra.mxu0 %v747
      %v1307 = vpop.f32.mrf.mxu0
      %v1308 = vadd.f32 %v1139, %v1307
      %v1309 = vpop.f32.mrf.mxu0
      %v1310 = vadd.f32 %v1141, %v1309
      %1311 = vmatmul.bf16.gmra.mxu0 %v750
      %v1312 = vpop.f32.mrf.mxu0
      %v1313 = vadd.f32 %v1144, %v1312
      %v1314 = vpop.f32.mrf.mxu0
      %v1315 = vadd.f32 %v1146, %v1314
      %1316 = vmatmul.bf16.gmra.mxu0 %v753
      %v1317 = vpop.f32.mrf.mxu0
      %v1318 = vadd.f32 %v1149, %v1317
      %v1319 = vpop.f32.mrf.mxu0
      %v1320 = vadd.f32 %v1151, %v1319
      %1321 = vmatmul.bf16.gmra.mxu0 %v756
      %v1322 = vpop.f32.mrf.mxu0
      %v1323 = vadd.f32 %v1154, %v1322
      %v1324 = vpop.f32.mrf.mxu0
      %v1325 = vadd.f32 %v1156, %v1324
      %1326 = vmatmul.bf16.gmra.mxu0 %v759
      %v1327 = vpop.f32.mrf.mxu0
      %v1328 = vadd.f32 %v1159, %v1327
      %v1329 = vpop.f32.mrf.mxu0
      %v1330 = vadd.f32 %v1161, %v1329
      %1331 = vmatmul.bf16.gmra.mxu0 %v762
      %v1332 = vpop.f32.mrf.mxu0
      %v1333 = vadd.f32 %v1164, %v1332
      %v1334 = vpop.f32.mrf.mxu0
      %v1335 = vadd.f32 %v1166, %v1334
      %1336 = vmatmul.bf16.gmra.mxu0 %v765
      %v1337 = vpop.f32.mrf.mxu0
      %v1338 = vadd.f32 %v1169, %v1337
      %v1339 = vpop.f32.mrf.mxu0
      %v1340 = vadd.f32 %v1171, %v1339
      %1341 = vmatmul.bf16.gmra.mxu0 %v768
      %v1342 = vpop.f32.mrf.mxu0
      %v1343 = vadd.f32 %v1174, %v1342
      %v1344 = vpop.f32.mrf.mxu0
      %v1345 = vadd.f32 %v1176, %v1344
      %1346 = vmatmul.bf16.gmra.mxu0 %v771
      %v1347 = vpop.f32.mrf.mxu0
      %v1348 = vadd.f32 %v1179, %v1347
      %v1349 = vpop.f32.mrf.mxu0
      %v1350 = vadd.f32 %v1181, %v1349
      %1351 = vmatmul.bf16.gmra.mxu0 %v774
      %v1352 = vpop.f32.mrf.mxu0
      %v1353 = vadd.f32 %v1184, %v1352
      %v1354 = vpop.f32.mrf.mxu0
      %v1355 = vadd.f32 %v1186, %v1354
      %1356 = vmatmul.bf16.gmra.mxu0 %v777
      %v1357 = vpop.f32.mrf.mxu0
      %v1358 = vadd.f32 %v1189, %v1357
      %v1359 = vpop.f32.mrf.mxu0
      %v1360 = vadd.f32 %v1191, %v1359
      %1361 = vmatmul.bf16.gmra.mxu0 %v780
      %v1362 = vpop.f32.mrf.mxu0
      %v1363 = vadd.f32 %v1194, %v1362
      %v1364 = vpop.f32.mrf.mxu0
      %v1365 = vadd.f32 %v1196, %v1364
      %1366 = vmatmul.bf16.gmra.mxu0 %v783
      %v1367 = vpop.f32.mrf.mxu0
      %v1368 = vadd.f32 %v1199, %v1367
      %v1369 = vpop.f32.mrf.mxu0
      %v1370 = vadd.f32 %v1201, %v1369
      %1371 = vmatmul.bf16.gmra.mxu0 %v786
      %v1372 = vpop.f32.mrf.mxu0
      %v1373 = vadd.f32 %v1204, %v1372
      %v1374 = vpop.f32.mrf.mxu0
      %v1375 = vadd.f32 %v1206, %v1374
      %1376 = vmatmul.bf16.gmra.mxu0 %v789
      %v1377 = vpop.f32.mrf.mxu0
      %v1378 = vadd.f32 %v1209, %v1377
      %v1379 = vpop.f32.mrf.mxu0
      %v1380 = vadd.f32 %v1211, %v1379
      %1381 = vmatmul.bf16.gmra.mxu0 %v792
      %v1382 = vpop.f32.mrf.mxu0
      %v1383 = vadd.f32 %v1214, %v1382
      %v1384 = vpop.f32.mrf.mxu0
      %v1385 = vadd.f32 %v1216, %v1384
      %1386 = vmatmul.bf16.gmra.mxu0 %v795
      %v1387 = vpop.f32.mrf.mxu0
      %v1388 = vadd.f32 %v1219, %v1387
      %v1389 = vpop.f32.mrf.mxu0
      %v1390 = vadd.f32 %v1221, %v1389
      %1391 = vmatmul.bf16.gmra.mxu0 %v798
      %v1392 = vpop.f32.mrf.mxu0
      %v1393 = vadd.f32 %v1224, %v1392
      %v1394 = vpop.f32.mrf.mxu0
      %v1395 = vadd.f32 %v1226, %v1394
      %1396 = vmatmul.bf16.gmra.mxu0 %v801
      %v1397 = vpop.f32.mrf.mxu0
      %v1398 = vadd.f32 %v1229, %v1397
      %v1399 = vpop.f32.mrf.mxu0
      %v1400 = vadd.f32 %v1231, %v1399
      %1401 = vmatmul.bf16.gmra.mxu0 %v804
      %v1402 = vpop.f32.mrf.mxu0
      %v1403 = vadd.f32 %v1234, %v1402
      %v1404 = vpop.f32.mrf.mxu0
      %v1405 = vadd.f32 %v1236, %v1404
      %1406 = vmatmul.bf16.gmra.mxu0 %v807
      %v1407 = vpop.f32.mrf.mxu0
      %v1408 = vadd.f32 %v1239, %v1407
      %v1409 = vpop.f32.mrf.mxu0
      %v1410 = vadd.f32 %v1241, %v1409
      %1411 = vmatmul.bf16.gmra.mxu0 %v810
      %v1412 = vpop.f32.mrf.mxu0
      %v1413 = vadd.f32 %v1244, %v1412
      %v1414 = vpop.f32.mrf.mxu0
      %v1415 = vadd.f32 %v1246, %v1414
      %1416 = vmatmul.bf16.gmra.mxu0 %v813
      %v1417 = vpop.f32.mrf.mxu0
      %v1418 = vadd.f32 %v1249, %v1417
      %v1419 = vpop.f32.mrf.mxu0
      %v1420 = vadd.f32 %v1251, %v1419
      %1421 = vdwg.mxu0
      %1422 = vmatpush.bf16.msra.mxu0 0
      %1423 = vmatpush.bf16.msra.mxu0 0
      %1424 = vmatpush.bf16.msra.mxu0 0
      %1425 = vmatpush.bf16.msra.mxu0 0
      %1426 = vmatpush.bf16.msra.mxu0 0
      %1427 = vmatpush.bf16.msra.mxu0 0
      %1428 = vmatpush.bf16.msra.mxu0 %v968
      %1429 = vmatpush.bf16.msra.mxu0 %v967
      %1430 = vmatmul.bf16.gmra.mxu0 %v989
      %v1431 = vpop.f32.mrf.mxu0
      %v1432 = vadd.f32 %v1263, %v1431
      %v1433 = vpop.f32.mrf.mxu0
      %v1434 = vadd.f32 %v1265, %v1433
      %1435 = vmatmul.bf16.gmra.mxu0 %v992
      %v1436 = vpop.f32.mrf.mxu0
      %v1437 = vadd.f32 %v1268, %v1436
      %v1438 = vpop.f32.mrf.mxu0
      %v1439 = vadd.f32 %v1270, %v1438
      %1440 = vmatmul.bf16.gmra.mxu0 %v995
      %v1441 = vpop.f32.mrf.mxu0
      %v1442 = vadd.f32 %v1273, %v1441
      %v1443 = vpop.f32.mrf.mxu0
      %v1444 = vadd.f32 %v1275, %v1443
      %1445 = vmatmul.bf16.gmra.mxu0 %v998
      %v1446 = vpop.f32.mrf.mxu0
      %v1447 = vadd.f32 %v1278, %v1446
      %v1448 = vpop.f32.mrf.mxu0
      %v1449 = vadd.f32 %v1280, %v1448
      %1450 = vmatmul.bf16.gmra.mxu0 %v1001
      %v1451 = vpop.f32.mrf.mxu0
      %v1452 = vadd.f32 %v1283, %v1451
      %v1453 = vpop.f32.mrf.mxu0
      %v1454 = vadd.f32 %v1285, %v1453
      %1455 = vmatmul.bf16.gmra.mxu0 %v1004
      %v1456 = vpop.f32.mrf.mxu0
      %v1457 = vadd.f32 %v1288, %v1456
      %v1458 = vpop.f32.mrf.mxu0
      %v1459 = vadd.f32 %v1290, %v1458
      %1460 = vmatmul.bf16.gmra.mxu0 %v1007
      %v1461 = vpop.f32.mrf.mxu0
      %v1462 = vadd.f32 %v1293, %v1461
      %v1463 = vpop.f32.mrf.mxu0
      %v1464 = vadd.f32 %v1295, %v1463
      %1465 = vmatmul.bf16.gmra.mxu0 %v1010
      %v1466 = vpop.f32.mrf.mxu0
      %v1467 = vadd.f32 %v1298, %v1466
      %v1468 = vpop.f32.mrf.mxu0
      %v1469 = vadd.f32 %v1300, %v1468
      %1470 = vmatmul.bf16.gmra.mxu0 %v1013
      %v1471 = vpop.f32.mrf.mxu0
      %v1472 = vadd.f32 %v1303, %v1471
      %v1473 = vpop.f32.mrf.mxu0
      %v1474 = vadd.f32 %v1305, %v1473
      %1475 = vmatmul.bf16.gmra.mxu0 %v1016
      %v1476 = vpop.f32.mrf.mxu0
      %v1477 = vadd.f32 %v1308, %v1476
      %v1478 = vpop.f32.mrf.mxu0
      %v1479 = vadd.f32 %v1310, %v1478
      %1480 = vmatmul.bf16.gmra.mxu0 %v1019
      %v1481 = vpop.f32.mrf.mxu0
      %v1482 = vadd.f32 %v1313, %v1481
      %v1483 = vpop.f32.mrf.mxu0
      %v1484 = vadd.f32 %v1315, %v1483
      %1485 = vmatmul.bf16.gmra.mxu0 %v1022
      %v1486 = vpop.f32.mrf.mxu0
      %v1487 = vadd.f32 %v1318, %v1486
      %v1488 = vpop.f32.mrf.mxu0
      %v1489 = vadd.f32 %v1320, %v1488
      %1490 = vmatmul.bf16.gmra.mxu0 %v1025
      %v1491 = vpop.f32.mrf.mxu0
      %v1492 = vadd.f32 %v1323, %v1491
      %v1493 = vpop.f32.mrf.mxu0
      %v1494 = vadd.f32 %v1325, %v1493
      %1495 = vmatmul.bf16.gmra.mxu0 %v1028
      %v1496 = vpop.f32.mrf.mxu0
      %v1497 = vadd.f32 %v1328, %v1496
      %v1498 = vpop.f32.mrf.mxu0
      %v1499 = vadd.f32 %v1330, %v1498
      %1500 = vmatmul.bf16.gmra.mxu0 %v1031
      %v1501 = vpop.f32.mrf.mxu0
      %v1502 = vadd.f32 %v1333, %v1501
      %v1503 = vpop.f32.mrf.mxu0
      %v1504 = vadd.f32 %v1335, %v1503
      %1505 = vmatmul.bf16.gmra.mxu0 %v1034
      %v1506 = vpop.f32.mrf.mxu0
      %v1507 = vadd.f32 %v1338, %v1506
      %v1508 = vpop.f32.mrf.mxu0
      %v1509 = vadd.f32 %v1340, %v1508
      %1510 = vmatmul.bf16.gmra.mxu0 %v1037
      %v1511 = vpop.f32.mrf.mxu0
      %v1512 = vadd.f32 %v1343, %v1511
      %v1513 = vpop.f32.mrf.mxu0
      %v1514 = vadd.f32 %v1345, %v1513
      %1515 = vmatmul.bf16.gmra.mxu0 %v1040
      %v1516 = vpop.f32.mrf.mxu0
      %v1517 = vadd.f32 %v1348, %v1516
      %v1518 = vpop.f32.mrf.mxu0
      %v1519 = vadd.f32 %v1350, %v1518
      %1520 = vmatmul.bf16.gmra.mxu0 %v1043
      %v1521 = vpop.f32.mrf.mxu0
      %v1522 = vadd.f32 %v1353, %v1521
      %v1523 = vpop.f32.mrf.mxu0
      %v1524 = vadd.f32 %v1355, %v1523
      %1525 = vmatmul.bf16.gmra.mxu0 %v1046
      %v1526 = vpop.f32.mrf.mxu0
      %v1527 = vadd.f32 %v1358, %v1526
      %v1528 = vpop.f32.mrf.mxu0
      %v1529 = vadd.f32 %v1360, %v1528
      %1530 = vmatmul.bf16.gmra.mxu0 %v1049
      %v1531 = vpop.f32.mrf.mxu0
      %v1532 = vadd.f32 %v1363, %v1531
      %v1533 = vpop.f32.mrf.mxu0
      %v1534 = vadd.f32 %v1365, %v1533
      %1535 = vmatmul.bf16.gmra.mxu0 %v1052
      %v1536 = vpop.f32.mrf.mxu0
      %v1537 = vadd.f32 %v1368, %v1536
      %v1538 = vpop.f32.mrf.mxu0
      %v1539 = vadd.f32 %v1370, %v1538
      %1540 = vmatmul.bf16.gmra.mxu0 %v1055
      %v1541 = vpop.f32.mrf.mxu0
      %v1542 = vadd.f32 %v1373, %v1541
      %v1543 = vpop.f32.mrf.mxu0
      %v1544 = vadd.f32 %v1375, %v1543
      %1545 = vmatmul.bf16.gmra.mxu0 %v1058
      %v1546 = vpop.f32.mrf.mxu0
      %v1547 = vadd.f32 %v1378, %v1546
      %v1548 = vpop.f32.mrf.mxu0
      %v1549 = vadd.f32 %v1380, %v1548
      %1550 = vmatmul.bf16.gmra.mxu0 %v1061
      %v1551 = vpop.f32.mrf.mxu0
      %v1552 = vadd.f32 %v1383, %v1551
      %v1553 = vpop.f32.mrf.mxu0
      %v1554 = vadd.f32 %v1385, %v1553
      %1555 = vmatmul.bf16.gmra.mxu0 %v1064
      %v1556 = vpop.f32.mrf.mxu0
      %v1557 = vadd.f32 %v1388, %v1556
      %v1558 = vpop.f32.mrf.mxu0
      %v1559 = vadd.f32 %v1390, %v1558
      %1560 = vmatmul.bf16.gmra.mxu0 %v1067
      %v1561 = vpop.f32.mrf.mxu0
      %v1562 = vadd.f32 %v1393, %v1561
      %v1563 = vpop.f32.mrf.mxu0
      %v1564 = vadd.f32 %v1395, %v1563
      %1565 = vmatmul.bf16.gmra.mxu0 %v1070
      %v1566 = vpop.f32.mrf.mxu0
      %v1567 = vadd.f32 %v1398, %v1566
      %v1568 = vpop.f32.mrf.mxu0
      %v1569 = vadd.f32 %v1400, %v1568
      %1570 = vmatmul.bf16.gmra.mxu0 %v1073
      %v1571 = vpop.f32.mrf.mxu0
      %v1572 = vadd.f32 %v1403, %v1571
      %v1573 = vpop.f32.mrf.mxu0
      %v1574 = vadd.f32 %v1405, %v1573
      %1575 = vmatmul.bf16.gmra.mxu0 %v1076
      %v1576 = vpop.f32.mrf.mxu0
      %v1577 = vadd.f32 %v1408, %v1576
      %v1578 = vpop.f32.mrf.mxu0
      %v1579 = vadd.f32 %v1410, %v1578
      %1580 = vmatmul.bf16.gmra.mxu0 %v1079
      %v1581 = vpop.f32.mrf.mxu0
      %v1582 = vadd.f32 %v1413, %v1581
      %v1583 = vpop.f32.mrf.mxu0
      %v1584 = vadd.f32 %v1415, %v1583
      %1585 = vmatmul.bf16.gmra.mxu0 %v1082
      %v1586 = vpop.f32.mrf.mxu0
      %v1587 = vadd.f32 %v1418, %v1586
      %v1588 = vpop.f32.mrf.mxu0
      %v1589 = vadd.f32 %v1420, %v1588
      %1590 = vdwg.mxu0
      %v1591 = vpack.c.bf16 %v1432, %v1432
      %v1592 = vpack.c.bf16 %v1434, %v1434
      %v1593 = vpack.c.bf16 %v1437, %v1437
      %v1594 = vpack.c.bf16 %v1439, %v1439
      %v1595 = vpack.c.bf16 %v1442, %v1442
      %v1596 = vpack.c.bf16 %v1444, %v1444
      %v1597 = vpack.c.bf16 %v1447, %v1447
      %v1598 = vpack.c.bf16 %v1449, %v1449
      %v1599 = vpack.c.bf16 %v1452, %v1452
      %v1600 = vpack.c.bf16 %v1454, %v1454
      %v1601 = vpack.c.bf16 %v1457, %v1457
      %v1602 = vpack.c.bf16 %v1459, %v1459
      %v1603 = vpack.c.bf16 %v1462, %v1462
      %v1604 = vpack.c.bf16 %v1464, %v1464
      %v1605 = vpack.c.bf16 %v1467, %v1467
      %v1606 = vpack.c.bf16 %v1469, %v1469
      %v1607 = vpack.c.bf16 %v1472, %v1472
      %v1608 = vpack.c.bf16 %v1474, %v1474
      %v1609 = vpack.c.bf16 %v1477, %v1477
      %v1610 = vpack.c.bf16 %v1479, %v1479
      %v1611 = vpack.c.bf16 %v1482, %v1482
      %v1612 = vpack.c.bf16 %v1484, %v1484
      %v1613 = vpack.c.bf16 %v1487, %v1487
      %v1614 = vpack.c.bf16 %v1489, %v1489
      %v1615 = vpack.c.bf16 %v1492, %v1492
      %v1616 = vpack.c.bf16 %v1494, %v1494
      %v1617 = vpack.c.bf16 %v1497, %v1497
      %v1618 = vpack.c.bf16 %v1499, %v1499
      %v1619 = vpack.c.bf16 %v1502, %v1502
      %v1620 = vpack.c.bf16 %v1504, %v1504
      %v1621 = vpack.c.bf16 %v1507, %v1507
      %v1622 = vpack.c.bf16 %v1509, %v1509
      %v1623 = vpack.c.bf16 %v1512, %v1512
      %v1624 = vpack.c.bf16 %v1514, %v1514
      %v1625 = vpack.c.bf16 %v1517, %v1517
      %v1626 = vpack.c.bf16 %v1519, %v1519
      %v1627 = vpack.c.bf16 %v1522, %v1522
      %v1628 = vpack.c.bf16 %v1524, %v1524
      %v1629 = vpack.c.bf16 %v1527, %v1527
      %v1630 = vpack.c.bf16 %v1529, %v1529
      %v1631 = vpack.c.bf16 %v1532, %v1532
      %v1632 = vpack.c.bf16 %v1534, %v1534
      %v1633 = vpack.c.bf16 %v1537, %v1537
      %v1634 = vpack.c.bf16 %v1539, %v1539
      %v1635 = vpack.c.bf16 %v1542, %v1542
      %v1636 = vpack.c.bf16 %v1544, %v1544
      %v1637 = vpack.c.bf16 %v1547, %v1547
      %v1638 = vpack.c.bf16 %v1549, %v1549
      %v1639 = vpack.c.bf16 %v1552, %v1552
      %v1640 = vpack.c.bf16 %v1554, %v1554
      %v1641 = vpack.c.bf16 %v1557, %v1557
      %v1642 = vpack.c.bf16 %v1559, %v1559
      %v1643 = vpack.c.bf16 %v1562, %v1562
      %v1644 = vpack.c.bf16 %v1564, %v1564
      %v1645 = vpack.c.bf16 %v1567, %v1567
      %v1646 = vpack.c.bf16 %v1569, %v1569
      %v1647 = vpack.c.bf16 %v1572, %v1572
      %v1648 = vpack.c.bf16 %v1574, %v1574
      %v1649 = vpack.c.bf16 %v1577, %v1577
      %v1650 = vpack.c.bf16 %v1579, %v1579
      %v1651 = vpack.c.bf16 %v1582, %v1582
      %v1652 = vpack.c.bf16 %v1584, %v1584
      %v1653 = vpack.c.bf16 %v1587, %v1587
      %v1654 = vpack.c.bf16 %v1589, %v1589
      %1655 = vst [vmem:[%s224] sm:$0xf] %v1591
      %1656 = vst [vmem:[%s224 + $0x4] sm:$0xf] %v1592
      %1657 = vst [vmem:[%s224 + $0x8] sm:$0xf] %v1593
      %1658 = vst [vmem:[%s224 + $0xc] sm:$0xf] %v1594
      %1659 = vst [vmem:[%s224 + $0x10] sm:$0xf] %v1595
      %1660 = vst [vmem:[%s224 + $0x14] sm:$0xf] %v1596
      %1661 = vst [vmem:[%s224 + $0x18] sm:$0xf] %v1597
      %1662 = vst [vmem:[%s224 + $0x1c] sm:$0xf] %v1598
      %1663 = vst [vmem:[%s224 + $0x20] sm:$0xf] %v1599
      %1664 = vst [vmem:[%s224 + $0x24] sm:$0xf] %v1600
      %1665 = vst [vmem:[%s224 + $0x28] sm:$0xf] %v1601
      %1666 = vst [vmem:[%s224 + $0x2c] sm:$0xf] %v1602
      %1667 = vst [vmem:[%s224 + $0x30] sm:$0xf] %v1603
      %1668 = vst [vmem:[%s224 + $0x34] sm:$0xf] %v1604
      %1669 = vst [vmem:[%s224 + $0x38] sm:$0xf] %v1605
      %1670 = vst [vmem:[%s224 + $0x3c] sm:$0xf] %v1606
      %1671 = vst [vmem:[%s224 + $0x40] sm:$0xf] %v1607
      %1672 = vst [vmem:[%s224 + $0x44] sm:$0xf] %v1608
      %1673 = vst [vmem:[%s224 + $0x48] sm:$0xf] %v1609
      %1674 = vst [vmem:[%s224 + $0x4c] sm:$0xf] %v1610
      %1675 = vst [vmem:[%s224 + $0x50] sm:$0xf] %v1611
      %1676 = vst [vmem:[%s224 + $0x54] sm:$0xf] %v1612
      %1677 = vst [vmem:[%s224 + $0x58] sm:$0xf] %v1613
      %1678 = vst [vmem:[%s224 + $0x5c] sm:$0xf] %v1614
      %1679 = vst [vmem:[%s224 + $0x60] sm:$0xf] %v1615
      %1680 = vst [vmem:[%s224 + $0x64] sm:$0xf] %v1616
      %1681 = vst [vmem:[%s224 + $0x68] sm:$0xf] %v1617
      %1682 = vst [vmem:[%s224 + $0x6c] sm:$0xf] %v1618
      %1683 = vst [vmem:[%s224 + $0x70] sm:$0xf] %v1619
      %1684 = vst [vmem:[%s224 + $0x74] sm:$0xf] %v1620
      %1685 = vst [vmem:[%s224 + $0x78] sm:$0xf] %v1621
      %1686 = vst [vmem:[%s224 + $0x7c] sm:$0xf] %v1622
      %1687 = vst [vmem:[%s224 + $0x80] sm:$0xf] %v1623
      %1688 = vst [vmem:[%s224 + $0x84] sm:$0xf] %v1624
      %1689 = vst [vmem:[%s224 + $0x88] sm:$0xf] %v1625
      %1690 = vst [vmem:[%s224 + $0x8c] sm:$0xf] %v1626
      %1691 = vst [vmem:[%s224 + $0x90] sm:$0xf] %v1627
      %1692 = vst [vmem:[%s224 + $0x94] sm:$0xf] %v1628
      %1693 = vst [vmem:[%s224 + $0x98] sm:$0xf] %v1629
      %1694 = vst [vmem:[%s224 + $0x9c] sm:$0xf] %v1630
      %1695 = vst [vmem:[%s224 + $0xa0] sm:$0xf] %v1631
      %1696 = vst [vmem:[%s224 + $0xa4] sm:$0xf] %v1632
      %1697 = vst [vmem:[%s224 + $0xa8] sm:$0xf] %v1633
      %1698 = vst [vmem:[%s224 + $0xac] sm:$0xf] %v1634
      %1699 = vst [vmem:[%s224 + $0xb0] sm:$0xf] %v1635
      %1700 = vst [vmem:[%s224 + $0xb4] sm:$0xf] %v1636
      %1701 = vst [vmem:[%s224 + $0xb8] sm:$0xf] %v1637
      %1702 = vst [vmem:[%s224 + $0xbc] sm:$0xf] %v1638
      %1703 = vst [vmem:[%s224 + $0xc0] sm:$0xf] %v1639
      %1704 = vst [vmem:[%s224 + $0xc4] sm:$0xf] %v1640
      %1705 = vst [vmem:[%s224 + $0xc8] sm:$0xf] %v1641
      %1706 = vst [vmem:[%s224 + $0xcc] sm:$0xf] %v1642
      %1707 = vst [vmem:[%s224 + $0xd0] sm:$0xf] %v1643
      %1708 = vst [vmem:[%s224 + $0xd4] sm:$0xf] %v1644
      %1709 = vst [vmem:[%s224 + $0xd8] sm:$0xf] %v1645
      %1710 = vst [vmem:[%s224 + $0xdc] sm:$0xf] %v1646
      %1711 = vst [vmem:[%s224 + $0xe0] sm:$0xf] %v1647
      %1712 = vst [vmem:[%s224 + $0xe4] sm:$0xf] %v1648
      %1713 = vst [vmem:[%s224 + $0xe8] sm:$0xf] %v1649
      %1714 = vst [vmem:[%s224 + $0xec] sm:$0xf] %v1650
      %1715 = vst [vmem:[%s224 + $0xf0] sm:$0xf] %v1651
      %1716 = vst [vmem:[%s224 + $0xf4] sm:$0xf] %v1652
      %1717 = vst [vmem:[%s224 + $0xf8] sm:$0xf] %v1653
      %1718 = vst [vmem:[%s224 + $0xfc] sm:$0xf] %v1654
      %v1719 = vadd.f32 %v1432, %v1434
      %v1720 = vadd.f32 %v1719, %v1437
      %v1721 = vadd.f32 %v1720, %v1439
      %v1722 = vadd.f32 %v1721, %v1442
      %v1723 = vadd.f32 %v1722, %v1444
      %v1724 = vadd.f32 %v1723, %v1447
      %v1725 = vadd.f32 %v1724, %v1449
      %v1726 = vadd.f32 %v1725, %v1452
      %v1727 = vadd.f32 %v1726, %v1454
      %v1728 = vadd.f32 %v1727, %v1457
      %v1729 = vadd.f32 %v1728, %v1459
      %v1730 = vadd.f32 %v1729, %v1462
      %v1731 = vadd.f32 %v1730, %v1464
      %v1732 = vadd.f32 %v1731, %v1467
      %v1733 = vadd.f32 %v1732, %v1469
      %v1734 = vadd.f32 %v1733, %v1472
      %v1735 = vadd.f32 %v1734, %v1474
      %v1736 = vadd.f32 %v1735, %v1477
      %v1737 = vadd.f32 %v1736, %v1479
      %v1738 = vadd.f32 %v1737, %v1482
      %v1739 = vadd.f32 %v1738, %v1484
      %v1740 = vadd.f32 %v1739, %v1487
      %v1741 = vadd.f32 %v1740, %v1489
      %v1742 = vadd.f32 %v1741, %v1492
      %v1743 = vadd.f32 %v1742, %v1494
      %v1744 = vadd.f32 %v1743, %v1497
      %v1745 = vadd.f32 %v1744, %v1499
      %v1746 = vadd.f32 %v1745, %v1502
      %v1747 = vadd.f32 %v1746, %v1504
      %v1748 = vadd.f32 %v1747, %v1507
      %v1749 = vadd.f32 %v1748, %v1509
      %v1750 = vadd.f32 %v1749, %v1512
      %v1751 = vadd.f32 %v1750, %v1514
      %v1752 = vadd.f32 %v1751, %v1517
      %v1753 = vadd.f32 %v1752, %v1519
      %v1754 = vadd.f32 %v1753, %v1522
      %v1755 = vadd.f32 %v1754, %v1524
      %v1756 = vadd.f32 %v1755, %v1527
      %v1757 = vadd.f32 %v1756, %v1529
      %v1758 = vadd.f32 %v1757, %v1532
      %v1759 = vadd.f32 %v1758, %v1534
      %v1760 = vadd.f32 %v1759, %v1537
      %v1761 = vadd.f32 %v1760, %v1539
      %v1762 = vadd.f32 %v1761, %v1542
      %v1763 = vadd.f32 %v1762, %v1544
      %v1764 = vadd.f32 %v1763, %v1547
      %v1765 = vadd.f32 %v1764, %v1549
      %v1766 = vadd.f32 %v1765, %v1552
      %v1767 = vadd.f32 %v1766, %v1554
      %v1768 = vadd.f32 %v1767, %v1557
      %v1769 = vadd.f32 %v1768, %v1559
      %v1770 = vadd.f32 %v1769, %v1562
      %v1771 = vadd.f32 %v1770, %v1564
      %v1772 = vadd.f32 %v1771, %v1567
      %v1773 = vadd.f32 %v1772, %v1569
      %v1774 = vadd.f32 %v1773, %v1572
      %v1775 = vadd.f32 %v1774, %v1574
      %v1776 = vadd.f32 %v1775, %v1577
      %v1777 = vadd.f32 %v1776, %v1579
      %v1778 = vadd.f32 %v1777, %v1582
      %v1779 = vadd.f32 %v1778, %v1584
      %v1780 = vadd.f32 %v1779, %v1587
      %v1781 = vadd.f32 %v1780, %v1589
      %v1782 = vrot.slane %v1781, 4
      %v1783 = vadd.f32 %v1781, %v1782
      %v1784 = vrot.slane %v1783, 2
      %v1785 = vadd.f32 %v1783, %v1784
      %v1786 = vrot.slane %v1785, 1
      %v1787 = vadd.f32 %v1785, %v1786
      %v1788 = vmul.f32 %v1432, %v1432
      %v1789 = vmul.f32 %v1434, %v1434
      %v1790 = vmul.f32 %v1437, %v1437
      %v1791 = vmul.f32 %v1439, %v1439
      %v1792 = vmul.f32 %v1442, %v1442
      %v1793 = vmul.f32 %v1444, %v1444
      %v1794 = vmul.f32 %v1447, %v1447
      %v1795 = vmul.f32 %v1449, %v1449
      %v1796 = vmul.f32 %v1452, %v1452
      %v1797 = vmul.f32 %v1454, %v1454
      %v1798 = vmul.f32 %v1457, %v1457
      %v1799 = vmul.f32 %v1459, %v1459
      %v1800 = vmul.f32 %v1462, %v1462
      %v1801 = vmul.f32 %v1464, %v1464
      %v1802 = vmul.f32 %v1467, %v1467
      %v1803 = vmul.f32 %v1469, %v1469
      %v1804 = vmul.f32 %v1472, %v1472
      %v1805 = vmul.f32 %v1474, %v1474
      %v1806 = vmul.f32 %v1477, %v1477
      %v1807 = vmul.f32 %v1479, %v1479
      %v1808 = vmul.f32 %v1482, %v1482
      %v1809 = vmul.f32 %v1484, %v1484
      %v1810 = vmul.f32 %v1487, %v1487
      %v1811 = vmul.f32 %v1489, %v1489
      %v1812 = vmul.f32 %v1492, %v1492
      %v1813 = vmul.f32 %v1494, %v1494
      %v1814 = vmul.f32 %v1497, %v1497
      %v1815 = vmul.f32 %v1499, %v1499
      %v1816 = vmul.f32 %v1502, %v1502
      %v1817 = vmul.f32 %v1504, %v1504
      %v1818 = vmul.f32 %v1507, %v1507
      %v1819 = vmul.f32 %v1509, %v1509
      %v1820 = vmul.f32 %v1512, %v1512
      %v1821 = vmul.f32 %v1514, %v1514
      %v1822 = vmul.f32 %v1517, %v1517
      %v1823 = vmul.f32 %v1519, %v1519
      %v1824 = vmul.f32 %v1522, %v1522
      %v1825 = vmul.f32 %v1524, %v1524
      %v1826 = vmul.f32 %v1527, %v1527
      %v1827 = vmul.f32 %v1529, %v1529
      %v1828 = vmul.f32 %v1532, %v1532
      %v1829 = vmul.f32 %v1534, %v1534
      %v1830 = vmul.f32 %v1537, %v1537
      %v1831 = vmul.f32 %v1539, %v1539
      %v1832 = vmul.f32 %v1542, %v1542
      %v1833 = vmul.f32 %v1544, %v1544
      %v1834 = vmul.f32 %v1547, %v1547
      %v1835 = vmul.f32 %v1549, %v1549
      %v1836 = vmul.f32 %v1552, %v1552
      %v1837 = vmul.f32 %v1554, %v1554
      %v1838 = vmul.f32 %v1557, %v1557
      %v1839 = vmul.f32 %v1559, %v1559
      %v1840 = vmul.f32 %v1562, %v1562
      %v1841 = vmul.f32 %v1564, %v1564
      %v1842 = vmul.f32 %v1567, %v1567
      %v1843 = vmul.f32 %v1569, %v1569
      %v1844 = vmul.f32 %v1572, %v1572
      %v1845 = vmul.f32 %v1574, %v1574
      %v1846 = vmul.f32 %v1577, %v1577
      %v1847 = vmul.f32 %v1579, %v1579
      %v1848 = vmul.f32 %v1582, %v1582
      %v1849 = vmul.f32 %v1584, %v1584
      %v1850 = vmul.f32 %v1587, %v1587
      %v1851 = vmul.f32 %v1589, %v1589
      %v1852 = vadd.f32 %v1788, %v1789
      %v1853 = vadd.f32 %v1852, %v1790
      %v1854 = vadd.f32 %v1853, %v1791
      %v1855 = vadd.f32 %v1854, %v1792
      %v1856 = vadd.f32 %v1855, %v1793
      %v1857 = vadd.f32 %v1856, %v1794
      %v1858 = vadd.f32 %v1857, %v1795
      %v1859 = vadd.f32 %v1858, %v1796
      %v1860 = vadd.f32 %v1859, %v1797
      %v1861 = vadd.f32 %v1860, %v1798
      %v1862 = vadd.f32 %v1861, %v1799
      %v1863 = vadd.f32 %v1862, %v1800
      %v1864 = vadd.f32 %v1863, %v1801
      %v1865 = vadd.f32 %v1864, %v1802
      %v1866 = vadd.f32 %v1865, %v1803
      %v1867 = vadd.f32 %v1866, %v1804
      %v1868 = vadd.f32 %v1867, %v1805
      %v1869 = vadd.f32 %v1868, %v1806
      %v1870 = vadd.f32 %v1869, %v1807
      %v1871 = vadd.f32 %v1870, %v1808
      %v1872 = vadd.f32 %v1871, %v1809
      %v1873 = vadd.f32 %v1872, %v1810
      %v1874 = vadd.f32 %v1873, %v1811
      %v1875 = vadd.f32 %v1874, %v1812
      %v1876 = vadd.f32 %v1875, %v1813
      %v1877 = vadd.f32 %v1876, %v1814
      %v1878 = vadd.f32 %v1877, %v1815
      %v1879 = vadd.f32 %v1878, %v1816
      %v1880 = vadd.f32 %v1879, %v1817
      %v1881 = vadd.f32 %v1880, %v1818
      %v1882 = vadd.f32 %v1881, %v1819
      %v1883 = vadd.f32 %v1882, %v1820
      %v1884 = vadd.f32 %v1883, %v1821
      %v1885 = vadd.f32 %v1884, %v1822
      %v1886 = vadd.f32 %v1885, %v1823
      %v1887 = vadd.f32 %v1886, %v1824
      %v1888 = vadd.f32 %v1887, %v1825
      %v1889 = vadd.f32 %v1888, %v1826
      %v1890 = vadd.f32 %v1889, %v1827
      %v1891 = vadd.f32 %v1890, %v1828
      %v1892 = vadd.f32 %v1891, %v1829
      %v1893 = vadd.f32 %v1892, %v1830
      %v1894 = vadd.f32 %v1893, %v1831
      %v1895 = vadd.f32 %v1894, %v1832
      %v1896 = vadd.f32 %v1895, %v1833
      %v1897 = vadd.f32 %v1896, %v1834
      %v1898 = vadd.f32 %v1897, %v1835
      %v1899 = vadd.f32 %v1898, %v1836
      %v1900 = vadd.f32 %v1899, %v1837
      %v1901 = vadd.f32 %v1900, %v1838
      %v1902 = vadd.f32 %v1901, %v1839
      %v1903 = vadd.f32 %v1902, %v1840
      %v1904 = vadd.f32 %v1903, %v1841
      %v1905 = vadd.f32 %v1904, %v1842
      %v1906 = vadd.f32 %v1905, %v1843
      %v1907 = vadd.f32 %v1906, %v1844
      %v1908 = vadd.f32 %v1907, %v1845
      %v1909 = vadd.f32 %v1908, %v1846
      %v1910 = vadd.f32 %v1909, %v1847
      %v1911 = vadd.f32 %v1910, %v1848
      %v1912 = vadd.f32 %v1911, %v1849
      %v1913 = vadd.f32 %v1912, %v1850
      %v1914 = vadd.f32 %v1913, %v1851
      %v1915 = vrot.slane %v1914, 4
      %v1916 = vadd.f32 %v1914, %v1915
      %v1917 = vrot.slane %v1916, 2
      %v1918 = vadd.f32 %v1916, %v1917
      %v1919 = vrot.slane %v1918, 1
      %v1920 = vadd.f32 %v1918, %v1919
      %vm1921 = vcmask 1040384
      %v1922 = vsel %vm1921, %v1787, %v1920
      %1923 = vst [vmem:[%s233] sm:$0x3] %v1922
      %s1924 = smul.u32 64, %s20
      %p1925 = scmp.lt.s32.totalorder %s19, 1
      %s1926 = scalar_select %p1925, %s19, 1
      %p1927 = scmp.lt.s32.totalorder %s1924, 127
      %s1928 = scalar_select %p1927, %s1924, 127
      %s1929 = smul.addr %s1926, 128
      %s1930 = sadd.s32 %s1928, %s1929
      %s1931 = smul.addr %s1930, 4
      %s1932 = scalar_lea.vmem %s2, %s1931
      %p1933 = scmp.lt.s32.totalorder %s19, 1
      %s1934 = scalar_select %p1933, %s19, 1
      %p1935 = scmp.lt.s32.totalorder %s20, 1
      %s1936 = scalar_select %p1935, %s20, 1
      %s1937 = smul.addr %s1934, 2
      %s1938 = sadd.s32 %s1936, %s1937
      %s1939 = smul.addr %s1938, 2
      %s1940 = scalar_lea.vmem %s3, %s1939
      // Predicated region
      $region29: #{g_forward.11} parent=27 // pred_check
        %p1941 = pneg %p96
      $region30: #{g_forward.11} parent=27 // pred_check_branch
        %1943 = sbr.rel (%p1941) target = $region32
      $region31: #{g_forward.11} parent=27 // pred_region
        %s1944 = smul.u32 64, %s20
      $region32: #{g_forward.11} parent=27 // pred_fallthru
        _
      // Predicated region
      $region33: #{g_forward.11} parent=27 // pred_check
        %p1945 = pneg %p124
      $region34: #{g_forward.11} parent=27 // pred_check_branch
        %1947 = sbr.rel (%p1945) target = $region36
      $region35: #{g_forward.11} parent=27 // pred_region
        _
      $region36: #{g_forward.11} parent=27 // pred_fallthru
        _
    $region28: #{g_forward.11} parent=5 // pred_fallthru
      _
    %p1948 = scmp.le.s32.totalorder 2, %s10
    // Predicated region
    $region37: #{g_forward.11} parent=5 // pred_check
      %p1949 = pneg %p1948
    $region38: #{g_forward.11} parent=5 // pred_check_branch
      %1951 = sbr.rel (%p1949) target = $region40
    $region39: #{g_forward.11} parent=5 // pred_region
      %s1952 = ssub.s32 %s10, 2
      // Predicated region
      $region41: #{g_forward.11} parent=39 // pred_check
        %p1953 = pneg %p102
      $region42: #{g_forward.11} parent=39 // pred_check_branch
        %1955 = sbr.rel (%p1953) target = $region44
      $region43: #{g_forward.11} parent=39 // pred_region
        %s1956 = smul.u32 64, %s22
        %p1957 = scmp.lt.s32.totalorder %s21, 1
        %s1958 = scalar_select %p1957, %s21, 1
        %p1959 = scmp.lt.s32.totalorder %s1956, 127
        %s1960 = scalar_select %p1959, %s1956, 127
        %s1961 = smul.addr %s1958, 128
        %s1962 = sadd.s32 %s1960, %s1961
        %s1963 = smul.addr %s1962, 4
        %s1964 = scalar_lea.vmem %s2, %s1963
      $region44: #{g_forward.11} parent=39 // pred_fallthru
        _
      // Predicated region
      $region45: #{g_forward.11} parent=39 // pred_check
        %p1965 = pneg %p130
      $region46: #{g_forward.11} parent=39 // pred_check_branch
        %1967 = sbr.rel (%p1965) target = $region48
      $region47: #{g_forward.11} parent=39 // pred_region
        %p1968 = scmp.lt.s32.totalorder %s21, 1
        %s1969 = scalar_select %p1968, %s21, 1
        %p1970 = scmp.lt.s32.totalorder %s22, 1
        %s1971 = scalar_select %p1970, %s22, 1
        %s1972 = smul.addr %s1969, 2
        %s1973 = sadd.s32 %s1971, %s1972
        %s1974 = smul.addr %s1973, 2
        %s1975 = scalar_lea.vmem %s3, %s1974
      $region48: #{g_forward.11} parent=39 // pred_fallthru
        _
    $region40: #{g_forward.11} parent=5 // pred_fallthru
      _
  $region6: #{g_forward.11} parent=0 // loop_footer
    %s14 = sadd.s32 1, %s10
  $region7: #{g_forward.11} parent=0 // loop_footer_branch
    %9 = sbr.rel target = $region3
  $region8: #{g_forward.11} parent=0 // loop_exit
    _

// kernel: g_forward.12
$region0: #{g_forward.12}
  #allocation0 [shape = 'u32[]', space=smem, size = 0x4, offset = 0x4, fixed_abs, tag = 'smem constant byte address 0x4 - core index']
  #allocation1 [shape = 'u32[72,128]{1,0:T(1,128)}', space=vmem, size = 0x9000, scoped, tag = 'internal scratch']
  %s0 = inlined_call_operand.vmem [shape: bf16[2,4096,288], index: 0, kind: input, shape index: {}]
  %s1 = inlined_call_operand.vmem [shape: bf16[288,128], index: 1, kind: input, shape index: {}]
  %s2 = inlined_call_operand.vmem [shape: bf16[2,4096,128], index: 2, kind: output, shape index: {0}]
  %s3 = inlined_call_operand.vmem [shape: f32[2,8,2,128], index: 3, kind: output, shape index: {1}]
  %4 = xla_tuple %s2, %s3
  %s5 = sld [smem:[#allocation0]]
  $region49: #{g_forward.12} parent=0
    _
  %s7 = ssub.s32 1, %s5
  %s8 = scalar_select 0, %s7, %s5
  loop: start=0, step=1, limit=18
  $region2: #{g_forward.12} parent=0 // loop_pre_header
    _
  $region3: #{g_forward.12} parent=0 // loop_header
    %s10 = sphi 0, %s14
    %p11 = scmp.ge.s32.totalorder %s10, 18
    %s17 = sphi 0, %s29
    %s18 = sphi 0, %s25
    %s19 = sphi 0, %s17
    %s20 = sphi 0, %s18
    %s21 = sphi 0, %s19
    %s22 = sphi 0, %s20
    %s34 = sphi 0, %s36
    %s37 = sphi 0, %s34
    %s38 = sphi 0, %s37
    %s54 = sphi 0, %s38
    %s58 = sphi 0, %s58
    %s60 = sphi 0, %s58
    %s61 = sphi 0, %s60
    %s75 = sphi 0, %s61
    %s83 = sphi 0, %s85
    %s86 = sphi 0, %s83
    %s87 = sphi 0, %s86
    %s103 = sphi 0, %s87
    %s111 = sphi 0, %s113
    %s114 = sphi 0, %s111
    %s115 = sphi 0, %s114
    %s131 = sphi 0, %s115
  $region4: #{g_forward.12} parent=0 // loop_header_branch
    %13 = sbr.rel (%p11) target = $region8
  $region5: #{g_forward.12} parent=0 // loop_body
    %s15 = ssub.s32 %s10, 1
    %s16 = ssub.s32 %s10, 2
    %s23 = sadd.s32 1, %s18
    %p24 = scmp.ge.s32.totalorder %s23, 8
    %s25 = scalar_select %p24, 0, %s23
    %s26 = sadd.s32 1, %s17
    %s27 = scalar_select %p24, %s26, %s17
    %p28 = scmp.ge.s32.totalorder %s27, 2
    %s29 = scalar_select %p28, 0, %s27
    %s30 = ssub.s32 %s17, %s29
    %s31 = ssub.s32 %s18, %s25
    %s32 = sor.u32 %s30, %s31
    %p33 = scmp.eq.s32.totalorder %s32, 0
    %s35 = sadd.s32 %s34, 1
    %s36 = scalar_select %p33, %s34, %s35
    %p39 = pneg %p33
    %p40 = scmp.eq.s32.totalorder %s10, 15
    %p41 = por %p39, %p40
    %p42 = scmp.ne.s32.totalorder %s34, %s37
    %p43 = scmp.eq.s32.totalorder %s10, 0
    %p44 = por %p42, %p43
    %p45 = scmp.ne.s32.totalorder %s34, %s37
    %p46 = scmp.eq.s32.totalorder %s15, 15
    %p47 = por %p45, %p46
    %p48 = scmp.ne.s32.totalorder %s37, %s38
    %p49 = scmp.eq.s32.totalorder %s15, 0
    %p50 = por %p48, %p49
    %p51 = scmp.ne.s32.totalorder %s37, %s38
    %p52 = scmp.eq.s32.totalorder %s16, 15
    %p53 = por %p51, %p52
    %p55 = scmp.ne.s32.totalorder %s38, %s54
    %p56 = scmp.eq.s32.totalorder %s16, 0
    %p57 = por %p55, %p56
    %s59 = sadd.s32 %s58, 1
    %p62 = scmp.eq.s32.totalorder %s10, 15
    %p63 = scmp.ne.s32.totalorder %s58, %s60
    %p64 = scmp.eq.s32.totalorder %s10, 0
    %p65 = por %p63, %p64
    %p66 = scmp.ne.s32.totalorder %s58, %s60
    %p67 = scmp.eq.s32.totalorder %s15, 15
    %p68 = por %p66, %p67
    %p69 = scmp.ne.s32.totalorder %s60, %s61
    %p70 = scmp.eq.s32.totalorder %s15, 0
    %p71 = por %p69, %p70
    %p72 = scmp.ne.s32.totalorder %s60, %s61
    %p73 = scmp.eq.s32.totalorder %s16, 15
    %p74 = por %p72, %p73
    %p76 = scmp.ne.s32.totalorder %s61, %s75
    %p77 = scmp.eq.s32.totalorder %s16, 0
    %p78 = por %p76, %p77
    %s79 = ssub.s32 %s17, %s29
    %s80 = ssub.s32 %s18, %s25
    %s81 = sor.u32 %s79, %s80
    %p82 = scmp.eq.s32.totalorder %s81, 0
    %s84 = sadd.s32 %s83, 1
    %s85 = scalar_select %p82, %s83, %s84
    %p88 = pneg %p82
    %p89 = scmp.eq.s32.totalorder %s10, 15
    %p90 = por %p88, %p89
    %p91 = scmp.ne.s32.totalorder %s83, %s86
    %p92 = scmp.eq.s32.totalorder %s10, 0
    %p93 = por %p91, %p92
    %p94 = scmp.ne.s32.totalorder %s83, %s86
    %p95 = scmp.eq.s32.totalorder %s15, 15
    %p96 = por %p94, %p95
    %p97 = scmp.ne.s32.totalorder %s86, %s87
    %p98 = scmp.eq.s32.totalorder %s15, 0
    %p99 = por %p97, %p98
    %p100 = scmp.ne.s32.totalorder %s86, %s87
    %p101 = scmp.eq.s32.totalorder %s16, 15
    %p102 = por %p100, %p101
    %p104 = scmp.ne.s32.totalorder %s87, %s103
    %p105 = scmp.eq.s32.totalorder %s16, 0
    %p106 = por %p104, %p105
    %s107 = ssub.s32 %s17, %s29
    %s108 = ssub.s32 %s18, %s25
    %s109 = sor.u32 %s107, %s108
    %p110 = scmp.eq.s32.totalorder %s109, 0
    %s112 = sadd.s32 %s111, 1
    %s113 = scalar_select %p110, %s111, %s112
    %p116 = pneg %p110
    %p117 = scmp.eq.s32.totalorder %s10, 15
    %p118 = por %p116, %p117
    %p119 = scmp.ne.s32.totalorder %s111, %s114
    %p120 = scmp.eq.s32.totalorder %s10, 0
    %p121 = por %p119, %p120
    %p122 = scmp.ne.s32.totalorder %s111, %s114
    %p123 = scmp.eq.s32.totalorder %s15, 15
    %p124 = por %p122, %p123
    %p125 = scmp.ne.s32.totalorder %s114, %s115
    %p126 = scmp.eq.s32.totalorder %s15, 0
    %p127 = por %p125, %p126
    %p128 = scmp.ne.s32.totalorder %s114, %s115
    %p129 = scmp.eq.s32.totalorder %s16, 15
    %p130 = por %p128, %p129
    %p132 = scmp.ne.s32.totalorder %s115, %s131
    %p133 = scmp.eq.s32.totalorder %s16, 0
    %p134 = por %p132, %p133
    %p135 = scmp.le.s32.totalorder 1, %s10
    %p136 = scmp.lt.s32.totalorder %s10, 17
    %p137 = pnand %p135, %p136
    %p138 = pneg %p137
    // Predicated region
    $region9: #{g_forward.12} parent=5 // pred_check
      _
    $region10: #{g_forward.12} parent=5 // pred_check_branch
      %140 = sbr.rel (%p137) target = $region12
    $region11: #{g_forward.12} parent=5 // pred_region
      %s141 = ssub.s32 %s10, 1
      // Predicated region
      $region13: #{g_forward.12} parent=11 // pred_check
        %p142 = pneg %p71
      $region14: #{g_forward.12} parent=11 // pred_check_branch
        %144 = sbr.rel (%p142) target = $region16
      $region15: #{g_forward.12} parent=11 // pred_region
        _
      $region16: #{g_forward.12} parent=11 // pred_fallthru
        _
    $region12: #{g_forward.12} parent=5 // pred_fallthru
      _
    %p145 = scmp.lt.s32.totalorder %s10, 16
    // Predicated region
    $region17: #{g_forward.12} parent=5 // pred_check
      %p146 = pneg %p145
    $region18: #{g_forward.12} parent=5 // pred_check_branch
      %148 = sbr.rel (%p146) target = $region20
    $region19: #{g_forward.12} parent=5 // pred_region
      // Predicated region
      $region21: #{g_forward.12} parent=19 // pred_check
        %p149 = pneg %p44
      $region22: #{g_forward.12} parent=19 // pred_check_branch
        %151 = sbr.rel (%p149) target = $region24
      $region23: #{g_forward.12} parent=19 // pred_region
        %s152 = smul.u32 64, %s18
        %p153 = scmp.lt.s32.totalorder %s17, 1
        %s154 = scalar_select %p153, %s17, 1
        %p155 = scmp.lt.s32.totalorder %s152, 511
        %s156 = scalar_select %p155, %s152, 511
        %s157 = smul.addr %s156, 3
        %s158 = smul.addr %s154, 1536
        %s159 = sadd.s32 %s157, %s158
        %s160 = smul.addr %s159, 4
        %s161 = scalar_lea.vmem %s0, %s160
        %s162 = smul.u32 64, %s18
      $region24: #{g_forward.12} parent=19 // pred_fallthru
        _
    $region20: #{g_forward.12} parent=5 // pred_fallthru
      _
    %p163 = scmp.le.s32.totalorder 1, %s10
    %p164 = scmp.lt.s32.totalorder %s10, 17
    %p165 = pnand %p163, %p164
    %p166 = pneg %p165
    // Predicated region
    $region25: #{g_forward.12} parent=5 // pred_check
      _
    $region26: #{g_forward.12} parent=5 // pred_check_branch
      %168 = sbr.rel (%p165) target = $region28
    $region27: #{g_forward.12} parent=5 // pred_region
      %s169 = ssub.s32 %s10, 1
      %s170 = smul.u32 64, %s20
      %p171 = scmp.lt.s32.totalorder %s19, 1
      %s172 = scalar_select %p171, %s19, 1
      %p173 = scmp.lt.s32.totalorder %s170, 511
      %s174 = scalar_select %p173, %s170, 511
      %s175 = smul.addr %s174, 3
      %s176 = smul.addr %s172, 1536
      %s177 = sadd.s32 %s175, %s176
      %s178 = smul.addr %s177, 4
      %s179 = scalar_lea.vmem %s0, %s178
      %p180 = pneg %p50
      %p181 = pneg %p47
      %p182 = pneg %p71
      %p183 = pneg %p68
      %p184 = pneg %p99
      %p185 = pneg %p96
      %s186 = smul.u32 64, %s20
      %p187 = scmp.lt.s32.totalorder %s19, 1
      %s188 = scalar_select %p187, %s19, 1
      %p189 = scmp.lt.s32.totalorder %s186, 511
      %s190 = scalar_select %p189, %s186, 511
      %s191 = smul.addr %s188, 512
      %s192 = sadd.s32 %s190, %s191
      %s193 = smul.addr %s192, 4
      %s194 = scalar_lea.vmem %s2, %s193
      %p195 = pneg %p127
      %p196 = pneg %p124
      %p197 = scmp.lt.s32.totalorder %s19, 1
      %s198 = scalar_select %p197, %s19, 1
      %p199 = scmp.lt.s32.totalorder %s20, 7
      %s200 = scalar_select %p199, %s20, 7
      %s201 = smul.addr %s198, 8
      %s202 = sadd.s32 %s200, %s201
      %s203 = smul.addr %s202, 2
      %s204 = scalar_lea.vmem %s3, %s203
      %s205 = smul.u32 64, %s20
      %p206 = scmp.lt.s32.totalorder %s19, 1
      %s207 = scalar_select %p206, %s19, 1
      %p208 = scmp.lt.s32.totalorder %s205, 511
      %s209 = scalar_select %p208, %s205, 511
      %s210 = smul.addr %s209, 3
      %s211 = smul.addr %s207, 1536
      %s212 = sadd.s32 %s210, %s211
      %s213 = smul.addr %s212, 4
      %s214 = scalar_lea.vmem %s0, %s213
      %s215 = smul.u32 64, %s20
      %s216 = smul.u32 64, %s20
      %p217 = scmp.lt.s32.totalorder %s19, 1
      %s218 = scalar_select %p217, %s19, 1
      %p219 = scmp.lt.s32.totalorder %s216, 511
      %s220 = scalar_select %p219, %s216, 511
      %s221 = smul.addr %s218, 512
      %s222 = sadd.s32 %s220, %s221
      %s223 = smul.addr %s222, 4
      %s224 = scalar_lea.vmem %s2, %s223
      %s225 = smul.u32 64, %s20
      %p226 = scmp.lt.s32.totalorder %s19, 1
      %s227 = scalar_select %p226, %s19, 1
      %p228 = scmp.lt.s32.totalorder %s20, 7
      %s229 = scalar_select %p228, %s20, 7
      %s230 = smul.addr %s227, 8
      %s231 = sadd.s32 %s229, %s230
      %s232 = smul.addr %s231, 2
      %s233 = scalar_lea.vmem %s3, %s232
      %v235 = vld [vmem:[%s214] sm:$0xff]
      %v236 = vld [vmem:[%s214 + $0x8] sm:$0xf]
      %v237 = vld [vmem:[%s214 + $0xc] sm:$0xff]
      %v238 = vld [vmem:[%s214 + $0x14] sm:$0xf]
      %v239 = vld [vmem:[%s214 + $0x18] sm:$0xff]
      %v240 = vld [vmem:[%s214 + $0x20] sm:$0xf]
      %v241 = vld [vmem:[%s214 + $0x24] sm:$0xff]
      %v242 = vld [vmem:[%s214 + $0x2c] sm:$0xf]
      %v243 = vld [vmem:[%s214 + $0x30] sm:$0xff]
      %v244 = vld [vmem:[%s214 + $0x38] sm:$0xf]
      %v245 = vld [vmem:[%s214 + $0x3c] sm:$0xff]
      %v246 = vld [vmem:[%s214 + $0x44] sm:$0xf]
      %v247 = vld [vmem:[%s214 + $0x48] sm:$0xff]
      %v248 = vld [vmem:[%s214 + $0x50] sm:$0xf]
      %v249 = vld [vmem:[%s214 + $0x54] sm:$0xff]
      %v250 = vld [vmem:[%s214 + $0x5c] sm:$0xf]
      %v251 = vld [vmem:[%s214 + $0x60] sm:$0xff]
      %v252 = vld [vmem:[%s214 + $0x68] sm:$0xf]
      %v253 = vld [vmem:[%s214 + $0x6c] sm:$0xff]
      %v254 = vld [vmem:[%s214 + $0x74] sm:$0xf]
      %v255 = vld [vmem:[%s214 + $0x78] sm:$0xff]
      %v256 = vld [vmem:[%s214 + $0x80] sm:$0xf]
      %v257 = vld [vmem:[%s214 + $0x84] sm:$0xff]
      %v258 = vld [vmem:[%s214 + $0x8c] sm:$0xf]
      %v259 = vld [vmem:[%s214 + $0x90] sm:$0xff]
      %v260 = vld [vmem:[%s214 + $0x98] sm:$0xf]
      %v261 = vld [vmem:[%s214 + $0x9c] sm:$0xff]
      %v262 = vld [vmem:[%s214 + $0xa4] sm:$0xf]
      %v263 = vld [vmem:[%s214 + $0xa8] sm:$0xff]
      %v264 = vld [vmem:[%s214 + $0xb0] sm:$0xf]
      %v265 = vld [vmem:[%s214 + $0xb4] sm:$0xff]
      %v266 = vld [vmem:[%s214 + $0xbc] sm:$0xf]
      %v267 = vld [vmem:[%s214 + $0xc0] sm:$0xff]
      %v268 = vld [vmem:[%s214 + $0xc8] sm:$0xf]
      %v269 = vld [vmem:[%s214 + $0xcc] sm:$0xff]
      %v270 = vld [vmem:[%s214 + $0xd4] sm:$0xf]
      %v271 = vld [vmem:[%s214 + $0xd8] sm:$0xff]
      %v272 = vld [vmem:[%s214 + $0xe0] sm:$0xf]
      %v273 = vld [vmem:[%s214 + $0xe4] sm:$0xff]
      %v274 = vld [vmem:[%s214 + $0xec] sm:$0xf]
      %v275 = vld [vmem:[%s214 + $0xf0] sm:$0xff]
      %v276 = vld [vmem:[%s214 + $0xf8] sm:$0xf]
      %v277 = vld [vmem:[%s214 + $0xfc] sm:$0xff]
      %v278 = vld [vmem:[%s214 + $0x104] sm:$0xf]
      %v279 = vld [vmem:[%s214 + $0x108] sm:$0xff]
      %v280 = vld [vmem:[%s214 + $0x110] sm:$0xf]
      %v281 = vld [vmem:[%s214 + $0x114] sm:$0xff]
      %v282 = vld [vmem:[%s214 + $0x11c] sm:$0xf]
      %v283 = vld [vmem:[%s214 + $0x120] sm:$0xff]
      %v284 = vld [vmem:[%s214 + $0x128] sm:$0xf]
      %v285 = vld [vmem:[%s214 + $0x12c] sm:$0xff]
      %v286 = vld [vmem:[%s214 + $0x134] sm:$0xf]
      %v287 = vld [vmem:[%s214 + $0x138] sm:$0xff]
      %v288 = vld [vmem:[%s214 + $0x140] sm:$0xf]
      %v289 = vld [vmem:[%s214 + $0x144] sm:$0xff]
      %v290 = vld [vmem:[%s214 + $0x14c] sm:$0xf]
      %v291 = vld [vmem:[%s214 + $0x150] sm:$0xff]
      %v292 = vld [vmem:[%s214 + $0x158] sm:$0xf]
      %v293 = vld [vmem:[%s214 + $0x15c] sm:$0xff]
      %v294 = vld [vmem:[%s214 + $0x164] sm:$0xf]
      %v295 = vld [vmem:[%s214 + $0x168] sm:$0xff]
      %v296 = vld [vmem:[%s214 + $0x170] sm:$0xf]
      %v297 = vld [vmem:[%s214 + $0x174] sm:$0xff]
      %v298 = vld [vmem:[%s214 + $0x17c] sm:$0xf]
      %v299 = vld [vmem:[%s214 + $0x180] sm:$0xff]
      %v300 = vld [vmem:[%s214 + $0x188] sm:$0xf]
      %v301 = vld [vmem:[%s214 + $0x18c] sm:$0xff]
      %v302 = vld [vmem:[%s214 + $0x194] sm:$0xf]
      %v303 = vld [vmem:[%s214 + $0x198] sm:$0xff]
      %v304 = vld [vmem:[%s214 + $0x1a0] sm:$0xf]
      %v305 = vld [vmem:[%s214 + $0x1a4] sm:$0xff]
      %v306 = vld [vmem:[%s214 + $0x1ac] sm:$0xf]
      %v307 = vld [vmem:[%s214 + $0x1b0] sm:$0xff]
      %v308 = vld [vmem:[%s214 + $0x1b8] sm:$0xf]
      %v309 = vld [vmem:[%s214 + $0x1bc] sm:$0xff]
      %v310 = vld [vmem:[%s214 + $0x1c4] sm:$0xf]
      %v311 = vld [vmem:[%s214 + $0x1c8] sm:$0xff]
      %v312 = vld [vmem:[%s214 + $0x1d0] sm:$0xf]
      %v313 = vld [vmem:[%s214 + $0x1d4] sm:$0xff]
      %v314 = vld [vmem:[%s214 + $0x1dc] sm:$0xf]
      %v315 = vld [vmem:[%s214 + $0x1e0] sm:$0xff]
      %v316 = vld [vmem:[%s214 + $0x1e8] sm:$0xf]
      %v317 = vld [vmem:[%s214 + $0x1ec] sm:$0xff]
      %v318 = vld [vmem:[%s214 + $0x1f4] sm:$0xf]
      %v319 = vld [vmem:[%s214 + $0x1f8] sm:$0xff]
      %v320 = vld [vmem:[%s214 + $0x200] sm:$0xf]
      %v321 = vld [vmem:[%s214 + $0x204] sm:$0xff]
      %v322 = vld [vmem:[%s214 + $0x20c] sm:$0xf]
      %v323 = vld [vmem:[%s214 + $0x210] sm:$0xff]
      %v324 = vld [vmem:[%s214 + $0x218] sm:$0xf]
      %v325 = vld [vmem:[%s214 + $0x21c] sm:$0xff]
      %v326 = vld [vmem:[%s214 + $0x224] sm:$0xf]
      %v327 = vld [vmem:[%s214 + $0x228] sm:$0xff]
      %v328 = vld [vmem:[%s214 + $0x230] sm:$0xf]
      %v329 = vld [vmem:[%s214 + $0x234] sm:$0xff]
      %v330 = vld [vmem:[%s214 + $0x23c] sm:$0xf]
      %v331 = vld [vmem:[%s214 + $0x240] sm:$0xff]
      %v332 = vld [vmem:[%s214 + $0x248] sm:$0xf]
      %v333 = vld [vmem:[%s214 + $0x24c] sm:$0xff]
      %v334 = vld [vmem:[%s214 + $0x254] sm:$0xf]
      %v335 = vld [vmem:[%s214 + $0x258] sm:$0xff]
      %v336 = vld [vmem:[%s214 + $0x260] sm:$0xf]
      %v337 = vld [vmem:[%s214 + $0x264] sm:$0xff]
      %v338 = vld [vmem:[%s214 + $0x26c] sm:$0xf]
      %v339 = vld [vmem:[%s214 + $0x270] sm:$0xff]
      %v340 = vld [vmem:[%s214 + $0x278] sm:$0xf]
      %v341 = vld [vmem:[%s214 + $0x27c] sm:$0xff]
      %v342 = vld [vmem:[%s214 + $0x284] sm:$0xf]
      %v343 = vld [vmem:[%s214 + $0x288] sm:$0xff]
      %v344 = vld [vmem:[%s214 + $0x290] sm:$0xf]
      %v345 = vld [vmem:[%s214 + $0x294] sm:$0xff]
      %v346 = vld [vmem:[%s214 + $0x29c] sm:$0xf]
      %v347 = vld [vmem:[%s214 + $0x2a0] sm:$0xff]
      %v348 = vld [vmem:[%s214 + $0x2a8] sm:$0xf]
      %v349 = vld [vmem:[%s214 + $0x2ac] sm:$0xff]
      %v350 = vld [vmem:[%s214 + $0x2b4] sm:$0xf]
      %v351 = vld [vmem:[%s214 + $0x2b8] sm:$0xff]
      %v352 = vld [vmem:[%s214 + $0x2c0] sm:$0xf]
      %v353 = vld [vmem:[%s214 + $0x2c4] sm:$0xff]
      %v354 = vld [vmem:[%s214 + $0x2cc] sm:$0xf]
      %v355 = vld [vmem:[%s214 + $0x2d0] sm:$0xff]
      %v356 = vld [vmem:[%s214 + $0x2d8] sm:$0xf]
      %v357 = vld [vmem:[%s214 + $0x2dc] sm:$0xff]
      %v358 = vld [vmem:[%s214 + $0x2e4] sm:$0xf]
      %v359 = vld [vmem:[%s214 + $0x2e8] sm:$0xff]
      %v360 = vld [vmem:[%s214 + $0x2f0] sm:$0xf]
      %v361 = vld [vmem:[%s214 + $0x2f4] sm:$0xff]
      %v362 = vld [vmem:[%s214 + $0x2fc] sm:$0xf]
      %v363 = vld [vmem:[%s1] sm:$0xf]
      %v364 = vld [vmem:[%s1 + $0x4] sm:$0xf]
      %v365 = vld [vmem:[%s1 + $0x8] sm:$0xf]
      %v366 = vld [vmem:[%s1 + $0xc] sm:$0xf]
      %v367 = vld [vmem:[%s1 + $0x10] sm:$0xf]
      %v368 = vld [vmem:[%s1 + $0x14] sm:$0xf]
      %v369 = vld [vmem:[%s1 + $0x18] sm:$0xf]
      %v370 = vld [vmem:[%s1 + $0x1c] sm:$0xf]
      %v371 = vld [vmem:[%s1 + $0x20] sm:$0xf]
      %v372 = vld [vmem:[%s1 + $0x24] sm:$0xf]
      %v373 = vld [vmem:[%s1 + $0x28] sm:$0xf]
      %v374 = vld [vmem:[%s1 + $0x2c] sm:$0xf]
      %v375 = vld [vmem:[%s1 + $0x30] sm:$0xf]
      %v376 = vld [vmem:[%s1 + $0x34] sm:$0xf]
      %v377 = vld [vmem:[%s1 + $0x38] sm:$0xf]
      %v378 = vld [vmem:[%s1 + $0x3c] sm:$0xf]
      %v379 = vld [vmem:[%s1 + $0x40] sm:$0xf]
      %v380 = vld [vmem:[%s1 + $0x44] sm:$0xf]
      %v381 = vld [vmem:[%s1 + $0x48] sm:$0xf]
      %v382 = vld [vmem:[%s1 + $0x4c] sm:$0xf]
      %v383 = vld [vmem:[%s1 + $0x50] sm:$0xf]
      %v384 = vld [vmem:[%s1 + $0x54] sm:$0xf]
      %v385 = vld [vmem:[%s1 + $0x58] sm:$0xf]
      %v386 = vld [vmem:[%s1 + $0x5c] sm:$0xf]
      %v387 = vld [vmem:[%s1 + $0x60] sm:$0xf]
      %v388 = vld [vmem:[%s1 + $0x64] sm:$0xf]
      %v389 = vld [vmem:[%s1 + $0x68] sm:$0xf]
      %v390 = vld [vmem:[%s1 + $0x6c] sm:$0xf]
      %v391 = vld [vmem:[%s1 + $0x70] sm:$0xf]
      %v392 = vld [vmem:[%s1 + $0x74] sm:$0xf]
      %v393 = vld [vmem:[%s1 + $0x78] sm:$0xf]
      %v394 = vld [vmem:[%s1 + $0x7c] sm:$0xf]
      %v395 = vld [vmem:[%s1 + $0x80] sm:$0xf]
      %v396 = vld [vmem:[%s1 + $0x84] sm:$0xf]
      %v397 = vld [vmem:[%s1 + $0x88] sm:$0xf]
      %v398 = vld [vmem:[%s1 + $0x8c] sm:$0xf]
      %v527 = vunpack.c.l.b16 %v235
      %v528 = vunpack.c.h.b16 %v235
      %v529 = vunpack.c.l.b16 %v236
      %v530 = vunpack.c.l.b16 %v237
      %v531 = vunpack.c.h.b16 %v237
      %v532 = vunpack.c.l.b16 %v238
      %v533 = vunpack.c.l.b16 %v239
      %v534 = vunpack.c.h.b16 %v239
      %v535 = vunpack.c.l.b16 %v240
      %v536 = vunpack.c.l.b16 %v241
      %v537 = vunpack.c.h.b16 %v241
      %v538 = vunpack.c.l.b16 %v242
      %v539 = vunpack.c.l.b16 %v243
      %v540 = vunpack.c.h.b16 %v243
      %v541 = vunpack.c.l.b16 %v244
      %v542 = vunpack.c.l.b16 %v245
      %v543 = vunpack.c.h.b16 %v245
      %v544 = vunpack.c.l.b16 %v246
      %v545 = vunpack.c.l.b16 %v247
      %v546 = vunpack.c.h.b16 %v247
      %v547 = vunpack.c.l.b16 %v248
      %v548 = vunpack.c.l.b16 %v249
      %v549 = vunpack.c.h.b16 %v249
      %v550 = vunpack.c.l.b16 %v250
      %v551 = vunpack.c.l.b16 %v251
      %v552 = vunpack.c.h.b16 %v251
      %v553 = vunpack.c.l.b16 %v252
      %v554 = vunpack.c.l.b16 %v253
      %v555 = vunpack.c.h.b16 %v253
      %v556 = vunpack.c.l.b16 %v254
      %v557 = vunpack.c.l.b16 %v255
      %v558 = vunpack.c.h.b16 %v255
      %v559 = vunpack.c.l.b16 %v256
      %v560 = vunpack.c.l.b16 %v257
      %v561 = vunpack.c.h.b16 %v257
      %v562 = vunpack.c.l.b16 %v258
      %v563 = vunpack.c.l.b16 %v259
      %v564 = vunpack.c.h.b16 %v259
      %v565 = vunpack.c.l.b16 %v260
      %v566 = vunpack.c.l.b16 %v261
      %v567 = vunpack.c.h.b16 %v261
      %v568 = vunpack.c.l.b16 %v262
      %v569 = vunpack.c.l.b16 %v263
      %v570 = vunpack.c.h.b16 %v263
      %v571 = vunpack.c.l.b16 %v264
      %v572 = vunpack.c.l.b16 %v265
      %v573 = vunpack.c.h.b16 %v265
      %v574 = vunpack.c.l.b16 %v266
      %v575 = vunpack.c.l.b16 %v267
      %v576 = vunpack.c.h.b16 %v267
      %v577 = vunpack.c.l.b16 %v268
      %v578 = vunpack.c.l.b16 %v269
      %v579 = vunpack.c.h.b16 %v269
      %v580 = vunpack.c.l.b16 %v270
      %v581 = vunpack.c.l.b16 %v271
      %v582 = vunpack.c.h.b16 %v271
      %v583 = vunpack.c.l.b16 %v272
      %v584 = vunpack.c.l.b16 %v273
      %v585 = vunpack.c.h.b16 %v273
      %v586 = vunpack.c.l.b16 %v274
      %v587 = vunpack.c.l.b16 %v275
      %v588 = vunpack.c.h.b16 %v275
      %v589 = vunpack.c.l.b16 %v276
      %v590 = vunpack.c.l.b16 %v277
      %v591 = vunpack.c.h.b16 %v277
      %v592 = vunpack.c.l.b16 %v278
      %v593 = vunpack.c.l.b16 %v279
      %v594 = vunpack.c.h.b16 %v279
      %v595 = vunpack.c.l.b16 %v280
      %v596 = vunpack.c.l.b16 %v281
      %v597 = vunpack.c.h.b16 %v281
      %v598 = vunpack.c.l.b16 %v282
      %v599 = vunpack.c.l.b16 %v283
      %v600 = vunpack.c.h.b16 %v283
      %v601 = vunpack.c.l.b16 %v284
      %v602 = vunpack.c.l.b16 %v285
      %v603 = vunpack.c.h.b16 %v285
      %v604 = vunpack.c.l.b16 %v286
      %v605 = vunpack.c.l.b16 %v287
      %v606 = vunpack.c.h.b16 %v287
      %v607 = vunpack.c.l.b16 %v288
      %v608 = vunpack.c.l.b16 %v289
      %v609 = vunpack.c.h.b16 %v289
      %v610 = vunpack.c.l.b16 %v290
      %v611 = vunpack.c.l.b16 %v291
      %v612 = vunpack.c.h.b16 %v291
      %v613 = vunpack.c.l.b16 %v292
      %v614 = vunpack.c.l.b16 %v293
      %v615 = vunpack.c.h.b16 %v293
      %v616 = vunpack.c.l.b16 %v294
      %v617 = vunpack.c.l.b16 %v295
      %v618 = vunpack.c.h.b16 %v295
      %v619 = vunpack.c.l.b16 %v296
      %v620 = vunpack.c.l.b16 %v297
      %v621 = vunpack.c.h.b16 %v297
      %v622 = vunpack.c.l.b16 %v298
      %v623 = vunpack.c.l.b16 %v299
      %v624 = vunpack.c.h.b16 %v299
      %v625 = vunpack.c.l.b16 %v300
      %v626 = vunpack.c.l.b16 %v301
      %v627 = vunpack.c.h.b16 %v301
      %v628 = vunpack.c.l.b16 %v302
      %v629 = vunpack.c.l.b16 %v303
      %v630 = vunpack.c.h.b16 %v303
      %v631 = vunpack.c.l.b16 %v304
      %v632 = vunpack.c.l.b16 %v305
      %v633 = vunpack.c.h.b16 %v305
      %v634 = vunpack.c.l.b16 %v306
      %v635 = vunpack.c.l.b16 %v307
      %v636 = vunpack.c.h.b16 %v307
      %v637 = vunpack.c.l.b16 %v308
      %v638 = vunpack.c.l.b16 %v309
      %v639 = vunpack.c.h.b16 %v309
      %v640 = vunpack.c.l.b16 %v310
      %v641 = vunpack.c.l.b16 %v311
      %v642 = vunpack.c.h.b16 %v311
      %v643 = vunpack.c.l.b16 %v312
      %v644 = vunpack.c.l.b16 %v313
      %v645 = vunpack.c.h.b16 %v313
      %v646 = vunpack.c.l.b16 %v314
      %v647 = vunpack.c.l.b16 %v315
      %v648 = vunpack.c.h.b16 %v315
      %v649 = vunpack.c.l.b16 %v316
      %v650 = vunpack.c.l.b16 %v317
      %v651 = vunpack.c.h.b16 %v317
      %v652 = vunpack.c.l.b16 %v318
      %v653 = vunpack.c.l.b16 %v319
      %v654 = vunpack.c.h.b16 %v319
      %v655 = vunpack.c.l.b16 %v320
      %v656 = vunpack.c.l.b16 %v321
      %v657 = vunpack.c.h.b16 %v321
      %v658 = vunpack.c.l.b16 %v322
      %v659 = vunpack.c.l.b16 %v323
      %v660 = vunpack.c.h.b16 %v323
      %v661 = vunpack.c.l.b16 %v324
      %v662 = vunpack.c.l.b16 %v325
      %v663 = vunpack.c.h.b16 %v325
      %v664 = vunpack.c.l.b16 %v326
      %v665 = vunpack.c.l.b16 %v327
      %v666 = vunpack.c.h.b16 %v327
      %v667 = vunpack.c.l.b16 %v328
      %v668 = vunpack.c.l.b16 %v329
      %v669 = vunpack.c.h.b16 %v329
      %v670 = vunpack.c.l.b16 %v330
      %v671 = vunpack.c.l.b16 %v331
      %v672 = vunpack.c.h.b16 %v331
      %v673 = vunpack.c.l.b16 %v332
      %v674 = vunpack.c.l.b16 %v333
      %v675 = vunpack.c.h.b16 %v333
      %v676 = vunpack.c.l.b16 %v334
      %v677 = vunpack.c.l.b16 %v335
      %v678 = vunpack.c.h.b16 %v335
      %v679 = vunpack.c.l.b16 %v336
      %v680 = vunpack.c.l.b16 %v337
      %v681 = vunpack.c.h.b16 %v337
      %v682 = vunpack.c.l.b16 %v338
      %v683 = vunpack.c.l.b16 %v339
      %v684 = vunpack.c.h.b16 %v339
      %v685 = vunpack.c.l.b16 %v340
      %v686 = vunpack.c.l.b16 %v341
      %v687 = vunpack.c.h.b16 %v341
      %v688 = vunpack.c.l.b16 %v342
      %v689 = vunpack.c.l.b16 %v343
      %v690 = vunpack.c.h.b16 %v343
      %v691 = vunpack.c.l.b16 %v344
      %v692 = vunpack.c.l.b16 %v345
      %v693 = vunpack.c.h.b16 %v345
      %v694 = vunpack.c.l.b16 %v346
      %v695 = vunpack.c.l.b16 %v347
      %v696 = vunpack.c.h.b16 %v347
      %v697 = vunpack.c.l.b16 %v348
      %v698 = vunpack.c.l.b16 %v349
      %v699 = vunpack.c.h.b16 %v349
      %v700 = vunpack.c.l.b16 %v350
      %v701 = vunpack.c.l.b16 %v351
      %v702 = vunpack.c.h.b16 %v351
      %v703 = vunpack.c.l.b16 %v352
      %v704 = vunpack.c.l.b16 %v353
      %v705 = vunpack.c.h.b16 %v353
      %v706 = vunpack.c.l.b16 %v354
      %v707 = vunpack.c.l.b16 %v355
      %v708 = vunpack.c.h.b16 %v355
      %v709 = vunpack.c.l.b16 %v356
      %v710 = vunpack.c.l.b16 %v357
      %v711 = vunpack.c.h.b16 %v357
      %v712 = vunpack.c.l.b16 %v358
      %v713 = vunpack.c.l.b16 %v359
      %v714 = vunpack.c.h.b16 %v359
      %v715 = vunpack.c.l.b16 %v360
      %v716 = vunpack.c.l.b16 %v361
      %v717 = vunpack.c.h.b16 %v361
      %v718 = vunpack.c.l.b16 %v362
      %v719 = vpack.c.b16 %v530, %v527
      %v720 = vpack.c.b16 %v531, %v528
      %v721 = vpack.c.b16 %v532, %v529
      %v722 = vpack.c.b16 %v536, %v533
      %v723 = vpack.c.b16 %v537, %v534
      %v724 = vpack.c.b16 %v538, %v535
      %v725 = vpack.c.b16 %v542, %v539
      %v726 = vpack.c.b16 %v543, %v540
      %v727 = vpack.c.b16 %v544, %v541
      %v728 = vpack.c.b16 %v548, %v545
      %v729 = vpack.c.b16 %v549, %v546
      %v730 = vpack.c.b16 %v550, %v547
      %v731 = vpack.c.b16 %v554, %v551
      %v732 = vpack.c.b16 %v555, %v552
      %v733 = vpack.c.b16 %v556, %v553
      %v734 = vpack.c.b16 %v560, %v557
      %v735 = vpack.c.b16 %v561, %v558
      %v736 = vpack.c.b16 %v562, %v559
      %v737 = vpack.c.b16 %v566, %v563
      %v738 = vpack.c.b16 %v567, %v564
      %v739 = vpack.c.b16 %v568, %v565
      %v740 = vpack.c.b16 %v572, %v569
      %v741 = vpack.c.b16 %v573, %v570
      %v742 = vpack.c.b16 %v574, %v571
      %v743 = vpack.c.b16 %v578, %v575
      %v744 = vpack.c.b16 %v579, %v576
      %v745 = vpack.c.b16 %v580, %v577
      %v746 = vpack.c.b16 %v584, %v581
      %v747 = vpack.c.b16 %v585, %v582
      %v748 = vpack.c.b16 %v586, %v583
      %v749 = vpack.c.b16 %v590, %v587
      %v750 = vpack.c.b16 %v591, %v588
      %v751 = vpack.c.b16 %v592, %v589
      %v752 = vpack.c.b16 %v596, %v593
      %v753 = vpack.c.b16 %v597, %v594
      %v754 = vpack.c.b16 %v598, %v595
      %v755 = vpack.c.b16 %v602, %v599
      %v756 = vpack.c.b16 %v603, %v600
      %v757 = vpack.c.b16 %v604, %v601
      %v758 = vpack.c.b16 %v608, %v605
      %v759 = vpack.c.b16 %v609, %v606
      %v760 = vpack.c.b16 %v610, %v607
      %v761 = vpack.c.b16 %v614, %v611
      %v762 = vpack.c.b16 %v615, %v612
      %v763 = vpack.c.b16 %v616, %v613
      %v764 = vpack.c.b16 %v620, %v617
      %v765 = vpack.c.b16 %v621, %v618
      %v766 = vpack.c.b16 %v622, %v619
      %v767 = vpack.c.b16 %v626, %v623
      %v768 = vpack.c.b16 %v627, %v624
      %v769 = vpack.c.b16 %v628, %v625
      %v770 = vpack.c.b16 %v632, %v629
      %v771 = vpack.c.b16 %v633, %v630
      %v772 = vpack.c.b16 %v634, %v631
      %v773 = vpack.c.b16 %v638, %v635
      %v774 = vpack.c.b16 %v639, %v636
      %v775 = vpack.c.b16 %v640, %v637
      %v776 = vpack.c.b16 %v644, %v641
      %v777 = vpack.c.b16 %v645, %v642
      %v778 = vpack.c.b16 %v646, %v643
      %v779 = vpack.c.b16 %v650, %v647
      %v780 = vpack.c.b16 %v651, %v648
      %v781 = vpack.c.b16 %v652, %v649
      %v782 = vpack.c.b16 %v656, %v653
      %v783 = vpack.c.b16 %v657, %v654
      %v784 = vpack.c.b16 %v658, %v655
      %v785 = vpack.c.b16 %v662, %v659
      %v786 = vpack.c.b16 %v663, %v660
      %v787 = vpack.c.b16 %v664, %v661
      %v788 = vpack.c.b16 %v668, %v665
      %v789 = vpack.c.b16 %v669, %v666
      %v790 = vpack.c.b16 %v670, %v667
      %v791 = vpack.c.b16 %v674, %v671
      %v792 = vpack.c.b16 %v675, %v672
      %v793 = vpack.c.b16 %v676, %v673
      %v794 = vpack.c.b16 %v680, %v677
      %v795 = vpack.c.b16 %v681, %v678
      %v796 = vpack.c.b16 %v682, %v679
      %v797 = vpack.c.b16 %v686, %v683
      %v798 = vpack.c.b16 %v687, %v684
      %v799 = vpack.c.b16 %v688, %v685
      %v800 = vpack.c.b16 %v692, %v689
      %v801 = vpack.c.b16 %v693, %v690
      %v802 = vpack.c.b16 %v694, %v691
      %v803 = vpack.c.b16 %v698, %v695
      %v804 = vpack.c.b16 %v699, %v696
      %v805 = vpack.c.b16 %v700, %v697
      %v806 = vpack.c.b16 %v704, %v701
      %v807 = vpack.c.b16 %v705, %v702
      %v808 = vpack.c.b16 %v706, %v703
      %v809 = vpack.c.b16 %v710, %v707
      %v810 = vpack.c.b16 %v711, %v708
      %v811 = vpack.c.b16 %v712, %v709
      %v812 = vpack.c.b16 %v716, %v713
      %v813 = vpack.c.b16 %v717, %v714
      %v814 = vpack.c.b16 %v718, %v715
      %v915 = vunpack.c.l.b16 %v363
      %v916 = vunpack.c.l.b16 %v364
      %v917 = vunpack.c.l.b16 %v365
      %v918 = vunpack.c.l.b16 %v366
      %v919 = vunpack.c.l.b16 %v367
      %v920 = vunpack.c.l.b16 %v368
      %v921 = vunpack.c.l.b16 %v369
      %v922 = vunpack.c.l.b16 %v370
      %v923 = vunpack.c.l.b16 %v371
      %v924 = vunpack.c.l.b16 %v372
      %v925 = vunpack.c.l.b16 %v373
      %v926 = vunpack.c.l.b16 %v374
      %v927 = vunpack.c.l.b16 %v375
      %v928 = vunpack.c.l.b16 %v376
      %v929 = vunpack.c.l.b16 %v377
      %v930 = vunpack.c.l.b16 %v378
      %v931 = vunpack.c.l.b16 %v379
      %v932 = vunpack.c.l.b16 %v380
      %v933 = vunpack.c.l.b16 %v381
      %v934 = vunpack.c.l.b16 %v382
      %v935 = vunpack.c.l.b16 %v383
      %v936 = vunpack.c.l.b16 %v384
      %v937 = vunpack.c.l.b16 %v385
      %v938 = vunpack.c.l.b16 %v386
      %v939 = vunpack.c.l.b16 %v387
      %v940 = vunpack.c.l.b16 %v388
      %v941 = vunpack.c.l.b16 %v389
      %v942 = vunpack.c.l.b16 %v390
      %v943 = vunpack.c.l.b16 %v391
      %v944 = vunpack.c.l.b16 %v392
      %v945 = vunpack.c.l.b16 %v393
      %v946 = vunpack.c.l.b16 %v394
      %v947 = vunpack.c.l.b16 %v395
      %v948 = vunpack.c.l.b16 %v396
      %v949 = vunpack.c.l.b16 %v397
      %v950 = vunpack.c.l.b16 %v398
      %v951 = vpack.c.b16 %v916, %v915
      %v952 = vpack.c.b16 %v918, %v917
      %v953 = vpack.c.b16 %v920, %v919
      %v954 = vpack.c.b16 %v922, %v921
      %v955 = vpack.c.b16 %v924, %v923
      %v956 = vpack.c.b16 %v926, %v925
      %v957 = vpack.c.b16 %v928, %v927
      %v958 = vpack.c.b16 %v930, %v929
      %v959 = vpack.c.b16 %v932, %v931
      %v960 = vpack.c.b16 %v934, %v933
      %v961 = vpack.c.b16 %v936, %v935
      %v962 = vpack.c.b16 %v938, %v937
      %v963 = vpack.c.b16 %v940, %v939
      %v964 = vpack.c.b16 %v942, %v941
      %v965 = vpack.c.b16 %v944, %v943
      %v966 = vpack.c.b16 %v946, %v945
      %v967 = vpack.c.b16 %v948, %v947
      %v968 = vpack.c.b16 %v950, %v949
      %vm987 = vcmask 261120
      %v989 = vsel %vm987, %v721, 0
      %v992 = vsel %vm987, %v724, 0
      %v995 = vsel %vm987, %v727, 0
      %v998 = vsel %vm987, %v730, 0
      %v1001 = vsel %vm987, %v733, 0
      %v1004 = vsel %vm987, %v736, 0
      %v1007 = vsel %vm987, %v739, 0
      %v1010 = vsel %vm987, %v742, 0
      %v1013 = vsel %vm987, %v745, 0
      %v1016 = vsel %vm987, %v748, 0
      %v1019 = vsel %vm987, %v751, 0
      %v1022 = vsel %vm987, %v754, 0
      %v1025 = vsel %vm987, %v757, 0
      %v1028 = vsel %vm987, %v760, 0
      %v1031 = vsel %vm987, %v763, 0
      %v1034 = vsel %vm987, %v766, 0
      %v1037 = vsel %vm987, %v769, 0
      %v1040 = vsel %vm987, %v772, 0
      %v1043 = vsel %vm987, %v775, 0
      %v1046 = vsel %vm987, %v778, 0
      %v1049 = vsel %vm987, %v781, 0
      %v1052 = vsel %vm987, %v784, 0
      %v1055 = vsel %vm987, %v787, 0
      %v1058 = vsel %vm987, %v790, 0
      %v1061 = vsel %vm987, %v793, 0
      %v1064 = vsel %vm987, %v796, 0
      %v1067 = vsel %vm987, %v799, 0
      %v1070 = vsel %vm987, %v802, 0
      %v1073 = vsel %vm987, %v805, 0
      %v1076 = vsel %vm987, %v808, 0
      %v1079 = vsel %vm987, %v811, 0
      %v1082 = vsel %vm987, %v814, 0
      %1084 = vmatpush.bf16.msra.mxu0 %v958
      %1085 = vmatpush.bf16.msra.mxu0 %v957
      %1086 = vmatpush.bf16.msra.mxu0 %v956
      %1087 = vmatpush.bf16.msra.mxu0 %v955
      %1088 = vmatpush.bf16.msra.mxu0 %v954
      %1089 = vmatpush.bf16.msra.mxu0 %v953
      %1090 = vmatpush.bf16.msra.mxu0 %v952
      %1091 = vmatpush.bf16.msra.mxu0 %v951
      %1092 = vmatmul.bf16.gmra.mxu0 %v719
      %v1093 = vpop.f32.mrf.mxu0
      %v1094 = vadd.f32 0.0, %v1093
      %v1095 = vpop.f32.mrf.mxu0
      %v1096 = vadd.f32 0.0, %v1095
      %1097 = vmatmul.bf16.gmra.mxu0 %v722
      %v1098 = vpop.f32.mrf.mxu0
      %v1099 = vadd.f32 0.0, %v1098
      %v1100 = vpop.f32.mrf.mxu0
      %v1101 = vadd.f32 0.0, %v1100
      %1102 = vmatmul.bf16.gmra.mxu0 %v725
      %v1103 = vpop.f32.mrf.mxu0
      %v1104 = vadd.f32 0.0, %v1103
      %v1105 = vpop.f32.mrf.mxu0
      %v1106 = vadd.f32 0.0, %v1105
      %1107 = vmatmul.bf16.gmra.mxu0 %v728
      %v1108 = vpop.f32.mrf.mxu0
      %v1109 = vadd.f32 0.0, %v1108
      %v1110 = vpop.f32.mrf.mxu0
      %v1111 = vadd.f32 0.0, %v1110
      %1112 = vmatmul.bf16.gmra.mxu0 %v731
      %v1113 = vpop.f32.mrf.mxu0
      %v1114 = vadd.f32 0.0, %v1113
      %v1115 = vpop.f32.mrf.mxu0
      %v1116 = vadd.f32 0.0, %v1115
      %1117 = vmatmul.bf16.gmra.mxu0 %v734
      %v1118 = vpop.f32.mrf.mxu0
      %v1119 = vadd.f32 0.0, %v1118
      %v1120 = vpop.f32.mrf.mxu0
      %v1121 = vadd.f32 0.0, %v1120
      %1122 = vmatmul.bf16.gmra.mxu0 %v737
      %v1123 = vpop.f32.mrf.mxu0
      %v1124 = vadd.f32 0.0, %v1123
      %v1125 = vpop.f32.mrf.mxu0
      %v1126 = vadd.f32 0.0, %v1125
      %1127 = vmatmul.bf16.gmra.mxu0 %v740
      %v1128 = vpop.f32.mrf.mxu0
      %v1129 = vadd.f32 0.0, %v1128
      %v1130 = vpop.f32.mrf.mxu0
      %v1131 = vadd.f32 0.0, %v1130
      %1132 = vmatmul.bf16.gmra.mxu0 %v743
      %v1133 = vpop.f32.mrf.mxu0
      %v1134 = vadd.f32 0.0, %v1133
      %v1135 = vpop.f32.mrf.mxu0
      %v1136 = vadd.f32 0.0, %v1135
      %1137 = vmatmul.bf16.gmra.mxu0 %v746
      %v1138 = vpop.f32.mrf.mxu0
      %v1139 = vadd.f32 0.0, %v1138
      %v1140 = vpop.f32.mrf.mxu0
      %v1141 = vadd.f32 0.0, %v1140
      %1142 = vmatmul.bf16.gmra.mxu0 %v749
      %v1143 = vpop.f32.mrf.mxu0
      %v1144 = vadd.f32 0.0, %v1143
      %v1145 = vpop.f32.mrf.mxu0
      %v1146 = vadd.f32 0.0, %v1145
      %1147 = vmatmul.bf16.gmra.mxu0 %v752
      %v1148 = vpop.f32.mrf.mxu0
      %v1149 = vadd.f32 0.0, %v1148
      %v1150 = vpop.f32.mrf.mxu0
      %v1151 = vadd.f32 0.0, %v1150
      %1152 = vmatmul.bf16.gmra.mxu0 %v755
      %v1153 = vpop.f32.mrf.mxu0
      %v1154 = vadd.f32 0.0, %v1153
      %v1155 = vpop.f32.mrf.mxu0
      %v1156 = vadd.f32 0.0, %v1155
      %1157 = vmatmul.bf16.gmra.mxu0 %v758
      %v1158 = vpop.f32.mrf.mxu0
      %v1159 = vadd.f32 0.0, %v1158
      %v1160 = vpop.f32.mrf.mxu0
      %v1161 = vadd.f32 0.0, %v1160
      %1162 = vmatmul.bf16.gmra.mxu0 %v761
      %v1163 = vpop.f32.mrf.mxu0
      %v1164 = vadd.f32 0.0, %v1163
      %v1165 = vpop.f32.mrf.mxu0
      %v1166 = vadd.f32 0.0, %v1165
      %1167 = vmatmul.bf16.gmra.mxu0 %v764
      %v1168 = vpop.f32.mrf.mxu0
      %v1169 = vadd.f32 0.0, %v1168
      %v1170 = vpop.f32.mrf.mxu0
      %v1171 = vadd.f32 0.0, %v1170
      %1172 = vmatmul.bf16.gmra.mxu0 %v767
      %v1173 = vpop.f32.mrf.mxu0
      %v1174 = vadd.f32 0.0, %v1173
      %v1175 = vpop.f32.mrf.mxu0
      %v1176 = vadd.f32 0.0, %v1175
      %1177 = vmatmul.bf16.gmra.mxu0 %v770
      %v1178 = vpop.f32.mrf.mxu0
      %v1179 = vadd.f32 0.0, %v1178
      %v1180 = vpop.f32.mrf.mxu0
      %v1181 = vadd.f32 0.0, %v1180
      %1182 = vmatmul.bf16.gmra.mxu0 %v773
      %v1183 = vpop.f32.mrf.mxu0
      %v1184 = vadd.f32 0.0, %v1183
      %v1185 = vpop.f32.mrf.mxu0
      %v1186 = vadd.f32 0.0, %v1185
      %1187 = vmatmul.bf16.gmra.mxu0 %v776
      %v1188 = vpop.f32.mrf.mxu0
      %v1189 = vadd.f32 0.0, %v1188
      %v1190 = vpop.f32.mrf.mxu0
      %v1191 = vadd.f32 0.0, %v1190
      %1192 = vmatmul.bf16.gmra.mxu0 %v779
      %v1193 = vpop.f32.mrf.mxu0
      %v1194 = vadd.f32 0.0, %v1193
      %v1195 = vpop.f32.mrf.mxu0
      %v1196 = vadd.f32 0.0, %v1195
      %1197 = vmatmul.bf16.gmra.mxu0 %v782
      %v1198 = vpop.f32.mrf.mxu0
      %v1199 = vadd.f32 0.0, %v1198
      %v1200 = vpop.f32.mrf.mxu0
      %v1201 = vadd.f32 0.0, %v1200
      %1202 = vmatmul.bf16.gmra.mxu0 %v785
      %v1203 = vpop.f32.mrf.mxu0
      %v1204 = vadd.f32 0.0, %v1203
      %v1205 = vpop.f32.mrf.mxu0
      %v1206 = vadd.f32 0.0, %v1205
      %1207 = vmatmul.bf16.gmra.mxu0 %v788
      %v1208 = vpop.f32.mrf.mxu0
      %v1209 = vadd.f32 0.0, %v1208
      %v1210 = vpop.f32.mrf.mxu0
      %v1211 = vadd.f32 0.0, %v1210
      %1212 = vmatmul.bf16.gmra.mxu0 %v791
      %v1213 = vpop.f32.mrf.mxu0
      %v1214 = vadd.f32 0.0, %v1213
      %v1215 = vpop.f32.mrf.mxu0
      %v1216 = vadd.f32 0.0, %v1215
      %1217 = vmatmul.bf16.gmra.mxu0 %v794
      %v1218 = vpop.f32.mrf.mxu0
      %v1219 = vadd.f32 0.0, %v1218
      %v1220 = vpop.f32.mrf.mxu0
      %v1221 = vadd.f32 0.0, %v1220
      %1222 = vmatmul.bf16.gmra.mxu0 %v797
      %v1223 = vpop.f32.mrf.mxu0
      %v1224 = vadd.f32 0.0, %v1223
      %v1225 = vpop.f32.mrf.mxu0
      %v1226 = vadd.f32 0.0, %v1225
      %1227 = vmatmul.bf16.gmra.mxu0 %v800
      %v1228 = vpop.f32.mrf.mxu0
      %v1229 = vadd.f32 0.0, %v1228
      %v1230 = vpop.f32.mrf.mxu0
      %v1231 = vadd.f32 0.0, %v1230
      %1232 = vmatmul.bf16.gmra.mxu0 %v803
      %v1233 = vpop.f32.mrf.mxu0
      %v1234 = vadd.f32 0.0, %v1233
      %v1235 = vpop.f32.mrf.mxu0
      %v1236 = vadd.f32 0.0, %v1235
      %1237 = vmatmul.bf16.gmra.mxu0 %v806
      %v1238 = vpop.f32.mrf.mxu0
      %v1239 = vadd.f32 0.0, %v1238
      %v1240 = vpop.f32.mrf.mxu0
      %v1241 = vadd.f32 0.0, %v1240
      %1242 = vmatmul.bf16.gmra.mxu0 %v809
      %v1243 = vpop.f32.mrf.mxu0
      %v1244 = vadd.f32 0.0, %v1243
      %v1245 = vpop.f32.mrf.mxu0
      %v1246 = vadd.f32 0.0, %v1245
      %1247 = vmatmul.bf16.gmra.mxu0 %v812
      %v1248 = vpop.f32.mrf.mxu0
      %v1249 = vadd.f32 0.0, %v1248
      %v1250 = vpop.f32.mrf.mxu0
      %v1251 = vadd.f32 0.0, %v1250
      %1252 = vdwg.mxu0
      %1253 = vmatpush.bf16.msra.mxu0 %v966
      %1254 = vmatpush.bf16.msra.mxu0 %v965
      %1255 = vmatpush.bf16.msra.mxu0 %v964
      %1256 = vmatpush.bf16.msra.mxu0 %v963
      %1257 = vmatpush.bf16.msra.mxu0 %v962
      %1258 = vmatpush.bf16.msra.mxu0 %v961
      %1259 = vmatpush.bf16.msra.mxu0 %v960
      %1260 = vmatpush.bf16.msra.mxu0 %v959
      %1261 = vmatmul.bf16.gmra.mxu0 %v720
      %v1262 = vpop.f32.mrf.mxu0
      %v1263 = vadd.f32 %v1094, %v1262
      %v1264 = vpop.f32.mrf.mxu0
      %v1265 = vadd.f32 %v1096, %v1264
      %1266 = vmatmul.bf16.gmra.mxu0 %v723
      %v1267 = vpop.f32.mrf.mxu0
      %v1268 = vadd.f32 %v1099, %v1267
      %v1269 = vpop.f32.mrf.mxu0
      %v1270 = vadd.f32 %v1101, %v1269
      %1271 = vmatmul.bf16.gmra.mxu0 %v726
      %v1272 = vpop.f32.mrf.mxu0
      %v1273 = vadd.f32 %v1104, %v1272
      %v1274 = vpop.f32.mrf.mxu0
      %v1275 = vadd.f32 %v1106, %v1274
      %1276 = vmatmul.bf16.gmra.mxu0 %v729
      %v1277 = vpop.f32.mrf.mxu0
      %v1278 = vadd.f32 %v1109, %v1277
      %v1279 = vpop.f32.mrf.mxu0
      %v1280 = vadd.f32 %v1111, %v1279
      %1281 = vmatmul.bf16.gmra.mxu0 %v732
      %v1282 = vpop.f32.mrf.mxu0
      %v1283 = vadd.f32 %v1114, %v1282
      %v1284 = vpop.f32.mrf.mxu0
      %v1285 = vadd.f32 %v1116, %v1284
      %1286 = vmatmul.bf16.gmra.mxu0 %v735
      %v1287 = vpop.f32.mrf.mxu0
      %v1288 = vadd.f32 %v1119, %v1287
      %v1289 = vpop.f32.mrf.mxu0
      %v1290 = vadd.f32 %v1121, %v1289
      %1291 = vmatmul.bf16.gmra.mxu0 %v738
      %v1292 = vpop.f32.mrf.mxu0
      %v1293 = vadd.f32 %v1124, %v1292
      %v1294 = vpop.f32.mrf.mxu0
      %v1295 = vadd.f32 %v1126, %v1294
      %1296 = vmatmul.bf16.gmra.mxu0 %v741
      %v1297 = vpop.f32.mrf.mxu0
      %v1298 = vadd.f32 %v1129, %v1297
      %v1299 = vpop.f32.mrf.mxu0
      %v1300 = vadd.f32 %v1131, %v1299
      %1301 = vmatmul.bf16.gmra.mxu0 %v744
      %v1302 = vpop.f32.mrf.mxu0
      %v1303 = vadd.f32 %v1134, %v1302
      %v1304 = vpop.f32.mrf.mxu0
      %v1305 = vadd.f32 %v1136, %v1304
      %1306 = vmatmul.bf16.gmra.mxu0 %v747
      %v1307 = vpop.f32.mrf.mxu0
      %v1308 = vadd.f32 %v1139, %v1307
      %v1309 = vpop.f32.mrf.mxu0
      %v1310 = vadd.f32 %v1141, %v1309
      %1311 = vmatmul.bf16.gmra.mxu0 %v750
      %v1312 = vpop.f32.mrf.mxu0
      %v1313 = vadd.f32 %v1144, %v1312
      %v1314 = vpop.f32.mrf.mxu0
      %v1315 = vadd.f32 %v1146, %v1314
      %1316 = vmatmul.bf16.gmra.mxu0 %v753
      %v1317 = vpop.f32.mrf.mxu0
      %v1318 = vadd.f32 %v1149, %v1317
      %v1319 = vpop.f32.mrf.mxu0
      %v1320 = vadd.f32 %v1151, %v1319
      %1321 = vmatmul.bf16.gmra.mxu0 %v756
      %v1322 = vpop.f32.mrf.mxu0
      %v1323 = vadd.f32 %v1154, %v1322
      %v1324 = vpop.f32.mrf.mxu0
      %v1325 = vadd.f32 %v1156, %v1324
      %1326 = vmatmul.bf16.gmra.mxu0 %v759
      %v1327 = vpop.f32.mrf.mxu0
      %v1328 = vadd.f32 %v1159, %v1327
      %v1329 = vpop.f32.mrf.mxu0
      %v1330 = vadd.f32 %v1161, %v1329
      %1331 = vmatmul.bf16.gmra.mxu0 %v762
      %v1332 = vpop.f32.mrf.mxu0
      %v1333 = vadd.f32 %v1164, %v1332
      %v1334 = vpop.f32.mrf.mxu0
      %v1335 = vadd.f32 %v1166, %v1334
      %1336 = vmatmul.bf16.gmra.mxu0 %v765
      %v1337 = vpop.f32.mrf.mxu0
      %v1338 = vadd.f32 %v1169, %v1337
      %v1339 = vpop.f32.mrf.mxu0
      %v1340 = vadd.f32 %v1171, %v1339
      %1341 = vmatmul.bf16.gmra.mxu0 %v768
      %v1342 = vpop.f32.mrf.mxu0
      %v1343 = vadd.f32 %v1174, %v1342
      %v1344 = vpop.f32.mrf.mxu0
      %v1345 = vadd.f32 %v1176, %v1344
      %1346 = vmatmul.bf16.gmra.mxu0 %v771
      %v1347 = vpop.f32.mrf.mxu0
      %v1348 = vadd.f32 %v1179, %v1347
      %v1349 = vpop.f32.mrf.mxu0
      %v1350 = vadd.f32 %v1181, %v1349
      %1351 = vmatmul.bf16.gmra.mxu0 %v774
      %v1352 = vpop.f32.mrf.mxu0
      %v1353 = vadd.f32 %v1184, %v1352
      %v1354 = vpop.f32.mrf.mxu0
      %v1355 = vadd.f32 %v1186, %v1354
      %1356 = vmatmul.bf16.gmra.mxu0 %v777
      %v1357 = vpop.f32.mrf.mxu0
      %v1358 = vadd.f32 %v1189, %v1357
      %v1359 = vpop.f32.mrf.mxu0
      %v1360 = vadd.f32 %v1191, %v1359
      %1361 = vmatmul.bf16.gmra.mxu0 %v780
      %v1362 = vpop.f32.mrf.mxu0
      %v1363 = vadd.f32 %v1194, %v1362
      %v1364 = vpop.f32.mrf.mxu0
      %v1365 = vadd.f32 %v1196, %v1364
      %1366 = vmatmul.bf16.gmra.mxu0 %v783
      %v1367 = vpop.f32.mrf.mxu0
      %v1368 = vadd.f32 %v1199, %v1367
      %v1369 = vpop.f32.mrf.mxu0
      %v1370 = vadd.f32 %v1201, %v1369
      %1371 = vmatmul.bf16.gmra.mxu0 %v786
      %v1372 = vpop.f32.mrf.mxu0
      %v1373 = vadd.f32 %v1204, %v1372
      %v1374 = vpop.f32.mrf.mxu0
      %v1375 = vadd.f32 %v1206, %v1374
      %1376 = vmatmul.bf16.gmra.mxu0 %v789
      %v1377 = vpop.f32.mrf.mxu0
      %v1378 = vadd.f32 %v1209, %v1377
      %v1379 = vpop.f32.mrf.mxu0
      %v1380 = vadd.f32 %v1211, %v1379
      %1381 = vmatmul.bf16.gmra.mxu0 %v792
      %v1382 = vpop.f32.mrf.mxu0
      %v1383 = vadd.f32 %v1214, %v1382
      %v1384 = vpop.f32.mrf.mxu0
      %v1385 = vadd.f32 %v1216, %v1384
      %1386 = vmatmul.bf16.gmra.mxu0 %v795
      %v1387 = vpop.f32.mrf.mxu0
      %v1388 = vadd.f32 %v1219, %v1387
      %v1389 = vpop.f32.mrf.mxu0
      %v1390 = vadd.f32 %v1221, %v1389
      %1391 = vmatmul.bf16.gmra.mxu0 %v798
      %v1392 = vpop.f32.mrf.mxu0
      %v1393 = vadd.f32 %v1224, %v1392
      %v1394 = vpop.f32.mrf.mxu0
      %v1395 = vadd.f32 %v1226, %v1394
      %1396 = vmatmul.bf16.gmra.mxu0 %v801
      %v1397 = vpop.f32.mrf.mxu0
      %v1398 = vadd.f32 %v1229, %v1397
      %v1399 = vpop.f32.mrf.mxu0
      %v1400 = vadd.f32 %v1231, %v1399
      %1401 = vmatmul.bf16.gmra.mxu0 %v804
      %v1402 = vpop.f32.mrf.mxu0
      %v1403 = vadd.f32 %v1234, %v1402
      %v1404 = vpop.f32.mrf.mxu0
      %v1405 = vadd.f32 %v1236, %v1404
      %1406 = vmatmul.bf16.gmra.mxu0 %v807
      %v1407 = vpop.f32.mrf.mxu0
      %v1408 = vadd.f32 %v1239, %v1407
      %v1409 = vpop.f32.mrf.mxu0
      %v1410 = vadd.f32 %v1241, %v1409
      %1411 = vmatmul.bf16.gmra.mxu0 %v810
      %v1412 = vpop.f32.mrf.mxu0
      %v1413 = vadd.f32 %v1244, %v1412
      %v1414 = vpop.f32.mrf.mxu0
      %v1415 = vadd.f32 %v1246, %v1414
      %1416 = vmatmul.bf16.gmra.mxu0 %v813
      %v1417 = vpop.f32.mrf.mxu0
      %v1418 = vadd.f32 %v1249, %v1417
      %v1419 = vpop.f32.mrf.mxu0
      %v1420 = vadd.f32 %v1251, %v1419
      %1421 = vdwg.mxu0
      %1422 = vmatpush.bf16.msra.mxu0 0
      %1423 = vmatpush.bf16.msra.mxu0 0
      %1424 = vmatpush.bf16.msra.mxu0 0
      %1425 = vmatpush.bf16.msra.mxu0 0
      %1426 = vmatpush.bf16.msra.mxu0 0
      %1427 = vmatpush.bf16.msra.mxu0 0
      %1428 = vmatpush.bf16.msra.mxu0 %v968
      %1429 = vmatpush.bf16.msra.mxu0 %v967
      %1430 = vmatmul.bf16.gmra.mxu0 %v989
      %v1431 = vpop.f32.mrf.mxu0
      %v1432 = vadd.f32 %v1263, %v1431
      %v1433 = vpop.f32.mrf.mxu0
      %v1434 = vadd.f32 %v1265, %v1433
      %1435 = vmatmul.bf16.gmra.mxu0 %v992
      %v1436 = vpop.f32.mrf.mxu0
      %v1437 = vadd.f32 %v1268, %v1436
      %v1438 = vpop.f32.mrf.mxu0
      %v1439 = vadd.f32 %v1270, %v1438
      %1440 = vmatmul.bf16.gmra.mxu0 %v995
      %v1441 = vpop.f32.mrf.mxu0
      %v1442 = vadd.f32 %v1273, %v1441
      %v1443 = vpop.f32.mrf.mxu0
      %v1444 = vadd.f32 %v1275, %v1443
      %1445 = vmatmul.bf16.gmra.mxu0 %v998
      %v1446 = vpop.f32.mrf.mxu0
      %v1447 = vadd.f32 %v1278, %v1446
      %v1448 = vpop.f32.mrf.mxu0
      %v1449 = vadd.f32 %v1280, %v1448
      %1450 = vmatmul.bf16.gmra.mxu0 %v1001
      %v1451 = vpop.f32.mrf.mxu0
      %v1452 = vadd.f32 %v1283, %v1451
      %v1453 = vpop.f32.mrf.mxu0
      %v1454 = vadd.f32 %v1285, %v1453
      %1455 = vmatmul.bf16.gmra.mxu0 %v1004
      %v1456 = vpop.f32.mrf.mxu0
      %v1457 = vadd.f32 %v1288, %v1456
      %v1458 = vpop.f32.mrf.mxu0
      %v1459 = vadd.f32 %v1290, %v1458
      %1460 = vmatmul.bf16.gmra.mxu0 %v1007
      %v1461 = vpop.f32.mrf.mxu0
      %v1462 = vadd.f32 %v1293, %v1461
      %v1463 = vpop.f32.mrf.mxu0
      %v1464 = vadd.f32 %v1295, %v1463
      %1465 = vmatmul.bf16.gmra.mxu0 %v1010
      %v1466 = vpop.f32.mrf.mxu0
      %v1467 = vadd.f32 %v1298, %v1466
      %v1468 = vpop.f32.mrf.mxu0
      %v1469 = vadd.f32 %v1300, %v1468
      %1470 = vmatmul.bf16.gmra.mxu0 %v1013
      %v1471 = vpop.f32.mrf.mxu0
      %v1472 = vadd.f32 %v1303, %v1471
      %v1473 = vpop.f32.mrf.mxu0
      %v1474 = vadd.f32 %v1305, %v1473
      %1475 = vmatmul.bf16.gmra.mxu0 %v1016
      %v1476 = vpop.f32.mrf.mxu0
      %v1477 = vadd.f32 %v1308, %v1476
      %v1478 = vpop.f32.mrf.mxu0
      %v1479 = vadd.f32 %v1310, %v1478
      %1480 = vmatmul.bf16.gmra.mxu0 %v1019
      %v1481 = vpop.f32.mrf.mxu0
      %v1482 = vadd.f32 %v1313, %v1481
      %v1483 = vpop.f32.mrf.mxu0
      %v1484 = vadd.f32 %v1315, %v1483
      %1485 = vmatmul.bf16.gmra.mxu0 %v1022
      %v1486 = vpop.f32.mrf.mxu0
      %v1487 = vadd.f32 %v1318, %v1486
      %v1488 = vpop.f32.mrf.mxu0
      %v1489 = vadd.f32 %v1320, %v1488
      %1490 = vmatmul.bf16.gmra.mxu0 %v1025
      %v1491 = vpop.f32.mrf.mxu0
      %v1492 = vadd.f32 %v1323, %v1491
      %v1493 = vpop.f32.mrf.mxu0
      %v1494 = vadd.f32 %v1325, %v1493
      %1495 = vmatmul.bf16.gmra.mxu0 %v1028
      %v1496 = vpop.f32.mrf.mxu0
      %v1497 = vadd.f32 %v1328, %v1496
      %v1498 = vpop.f32.mrf.mxu0
      %v1499 = vadd.f32 %v1330, %v1498
      %1500 = vmatmul.bf16.gmra.mxu0 %v1031
      %v1501 = vpop.f32.mrf.mxu0
      %v1502 = vadd.f32 %v1333, %v1501
      %v1503 = vpop.f32.mrf.mxu0
      %v1504 = vadd.f32 %v1335, %v1503
      %1505 = vmatmul.bf16.gmra.mxu0 %v1034
      %v1506 = vpop.f32.mrf.mxu0
      %v1507 = vadd.f32 %v1338, %v1506
      %v1508 = vpop.f32.mrf.mxu0
      %v1509 = vadd.f32 %v1340, %v1508
      %1510 = vmatmul.bf16.gmra.mxu0 %v1037
      %v1511 = vpop.f32.mrf.mxu0
      %v1512 = vadd.f32 %v1343, %v1511
      %v1513 = vpop.f32.mrf.mxu0
      %v1514 = vadd.f32 %v1345, %v1513
      %1515 = vmatmul.bf16.gmra.mxu0 %v1040
      %v1516 = vpop.f32.mrf.mxu0
      %v1517 = vadd.f32 %v1348, %v1516
      %v1518 = vpop.f32.mrf.mxu0
      %v1519 = vadd.f32 %v1350, %v1518
      %1520 = vmatmul.bf16.gmra.mxu0 %v1043
      %v1521 = vpop.f32.mrf.mxu0
      %v1522 = vadd.f32 %v1353, %v1521
      %v1523 = vpop.f32.mrf.mxu0
      %v1524 = vadd.f32 %v1355, %v1523
      %1525 = vmatmul.bf16.gmra.mxu0 %v1046
      %v1526 = vpop.f32.mrf.mxu0
      %v1527 = vadd.f32 %v1358, %v1526
      %v1528 = vpop.f32.mrf.mxu0
      %v1529 = vadd.f32 %v1360, %v1528
      %1530 = vmatmul.bf16.gmra.mxu0 %v1049
      %v1531 = vpop.f32.mrf.mxu0
      %v1532 = vadd.f32 %v1363, %v1531
      %v1533 = vpop.f32.mrf.mxu0
      %v1534 = vadd.f32 %v1365, %v1533
      %1535 = vmatmul.bf16.gmra.mxu0 %v1052
      %v1536 = vpop.f32.mrf.mxu0
      %v1537 = vadd.f32 %v1368, %v1536
      %v1538 = vpop.f32.mrf.mxu0
      %v1539 = vadd.f32 %v1370, %v1538
      %1540 = vmatmul.bf16.gmra.mxu0 %v1055
      %v1541 = vpop.f32.mrf.mxu0
      %v1542 = vadd.f32 %v1373, %v1541
      %v1543 = vpop.f32.mrf.mxu0
      %v1544 = vadd.f32 %v1375, %v1543
      %1545 = vmatmul.bf16.gmra.mxu0 %v1058
      %v1546 = vpop.f32.mrf.mxu0
      %v1547 = vadd.f32 %v1378, %v1546
      %v1548 = vpop.f32.mrf.mxu0
      %v1549 = vadd.f32 %v1380, %v1548
      %1550 = vmatmul.bf16.gmra.mxu0 %v1061
      %v1551 = vpop.f32.mrf.mxu0
      %v1552 = vadd.f32 %v1383, %v1551
      %v1553 = vpop.f32.mrf.mxu0
      %v1554 = vadd.f32 %v1385, %v1553
      %1555 = vmatmul.bf16.gmra.mxu0 %v1064
      %v1556 = vpop.f32.mrf.mxu0
      %v1557 = vadd.f32 %v1388, %v1556
      %v1558 = vpop.f32.mrf.mxu0
      %v1559 = vadd.f32 %v1390, %v1558
      %1560 = vmatmul.bf16.gmra.mxu0 %v1067
      %v1561 = vpop.f32.mrf.mxu0
      %v1562 = vadd.f32 %v1393, %v1561
      %v1563 = vpop.f32.mrf.mxu0
      %v1564 = vadd.f32 %v1395, %v1563
      %1565 = vmatmul.bf16.gmra.mxu0 %v1070
      %v1566 = vpop.f32.mrf.mxu0
      %v1567 = vadd.f32 %v1398, %v1566
      %v1568 = vpop.f32.mrf.mxu0
      %v1569 = vadd.f32 %v1400, %v1568
      %1570 = vmatmul.bf16.gmra.mxu0 %v1073
      %v1571 = vpop.f32.mrf.mxu0
      %v1572 = vadd.f32 %v1403, %v1571
      %v1573 = vpop.f32.mrf.mxu0
      %v1574 = vadd.f32 %v1405, %v1573
      %1575 = vmatmul.bf16.gmra.mxu0 %v1076
      %v1576 = vpop.f32.mrf.mxu0
      %v1577 = vadd.f32 %v1408, %v1576
      %v1578 = vpop.f32.mrf.mxu0
      %v1579 = vadd.f32 %v1410, %v1578
      %1580 = vmatmul.bf16.gmra.mxu0 %v1079
      %v1581 = vpop.f32.mrf.mxu0
      %v1582 = vadd.f32 %v1413, %v1581
      %v1583 = vpop.f32.mrf.mxu0
      %v1584 = vadd.f32 %v1415, %v1583
      %1585 = vmatmul.bf16.gmra.mxu0 %v1082
      %v1586 = vpop.f32.mrf.mxu0
      %v1587 = vadd.f32 %v1418, %v1586
      %v1588 = vpop.f32.mrf.mxu0
      %v1589 = vadd.f32 %v1420, %v1588
      %1590 = vdwg.mxu0
      %v1591 = vpack.c.bf16 %v1432, %v1432
      %v1592 = vpack.c.bf16 %v1434, %v1434
      %v1593 = vpack.c.bf16 %v1437, %v1437
      %v1594 = vpack.c.bf16 %v1439, %v1439
      %v1595 = vpack.c.bf16 %v1442, %v1442
      %v1596 = vpack.c.bf16 %v1444, %v1444
      %v1597 = vpack.c.bf16 %v1447, %v1447
      %v1598 = vpack.c.bf16 %v1449, %v1449
      %v1599 = vpack.c.bf16 %v1452, %v1452
      %v1600 = vpack.c.bf16 %v1454, %v1454
      %v1601 = vpack.c.bf16 %v1457, %v1457
      %v1602 = vpack.c.bf16 %v1459, %v1459
      %v1603 = vpack.c.bf16 %v1462, %v1462
      %v1604 = vpack.c.bf16 %v1464, %v1464
      %v1605 = vpack.c.bf16 %v1467, %v1467
      %v1606 = vpack.c.bf16 %v1469, %v1469
      %v1607 = vpack.c.bf16 %v1472, %v1472
      %v1608 = vpack.c.bf16 %v1474, %v1474
      %v1609 = vpack.c.bf16 %v1477, %v1477
      %v1610 = vpack.c.bf16 %v1479, %v1479
      %v1611 = vpack.c.bf16 %v1482, %v1482
      %v1612 = vpack.c.bf16 %v1484, %v1484
      %v1613 = vpack.c.bf16 %v1487, %v1487
      %v1614 = vpack.c.bf16 %v1489, %v1489
      %v1615 = vpack.c.bf16 %v1492, %v1492
      %v1616 = vpack.c.bf16 %v1494, %v1494
      %v1617 = vpack.c.bf16 %v1497, %v1497
      %v1618 = vpack.c.bf16 %v1499, %v1499
      %v1619 = vpack.c.bf16 %v1502, %v1502
      %v1620 = vpack.c.bf16 %v1504, %v1504
      %v1621 = vpack.c.bf16 %v1507, %v1507
      %v1622 = vpack.c.bf16 %v1509, %v1509
      %v1623 = vpack.c.bf16 %v1512, %v1512
      %v1624 = vpack.c.bf16 %v1514, %v1514
      %v1625 = vpack.c.bf16 %v1517, %v1517
      %v1626 = vpack.c.bf16 %v1519, %v1519
      %v1627 = vpack.c.bf16 %v1522, %v1522
      %v1628 = vpack.c.bf16 %v1524, %v1524
      %v1629 = vpack.c.bf16 %v1527, %v1527
      %v1630 = vpack.c.bf16 %v1529, %v1529
      %v1631 = vpack.c.bf16 %v1532, %v1532
      %v1632 = vpack.c.bf16 %v1534, %v1534
      %v1633 = vpack.c.bf16 %v1537, %v1537
      %v1634 = vpack.c.bf16 %v1539, %v1539
      %v1635 = vpack.c.bf16 %v1542, %v1542
      %v1636 = vpack.c.bf16 %v1544, %v1544
      %v1637 = vpack.c.bf16 %v1547, %v1547
      %v1638 = vpack.c.bf16 %v1549, %v1549
      %v1639 = vpack.c.bf16 %v1552, %v1552
      %v1640 = vpack.c.bf16 %v1554, %v1554
      %v1641 = vpack.c.bf16 %v1557, %v1557
      %v1642 = vpack.c.bf16 %v1559, %v1559
      %v1643 = vpack.c.bf16 %v1562, %v1562
      %v1644 = vpack.c.bf16 %v1564, %v1564
      %v1645 = vpack.c.bf16 %v1567, %v1567
      %v1646 = vpack.c.bf16 %v1569, %v1569
      %v1647 = vpack.c.bf16 %v1572, %v1572
      %v1648 = vpack.c.bf16 %v1574, %v1574
      %v1649 = vpack.c.bf16 %v1577, %v1577
      %v1650 = vpack.c.bf16 %v1579, %v1579
      %v1651 = vpack.c.bf16 %v1582, %v1582
      %v1652 = vpack.c.bf16 %v1584, %v1584
      %v1653 = vpack.c.bf16 %v1587, %v1587
      %v1654 = vpack.c.bf16 %v1589, %v1589
      %1655 = vst [vmem:[%s224] sm:$0xf] %v1591
      %1656 = vst [vmem:[%s224 + $0x4] sm:$0xf] %v1592
      %1657 = vst [vmem:[%s224 + $0x8] sm:$0xf] %v1593
      %1658 = vst [vmem:[%s224 + $0xc] sm:$0xf] %v1594
      %1659 = vst [vmem:[%s224 + $0x10] sm:$0xf] %v1595
      %1660 = vst [vmem:[%s224 + $0x14] sm:$0xf] %v1596
      %1661 = vst [vmem:[%s224 + $0x18] sm:$0xf] %v1597
      %1662 = vst [vmem:[%s224 + $0x1c] sm:$0xf] %v1598
      %1663 = vst [vmem:[%s224 + $0x20] sm:$0xf] %v1599
      %1664 = vst [vmem:[%s224 + $0x24] sm:$0xf] %v1600
      %1665 = vst [vmem:[%s224 + $0x28] sm:$0xf] %v1601
      %1666 = vst [vmem:[%s224 + $0x2c] sm:$0xf] %v1602
      %1667 = vst [vmem:[%s224 + $0x30] sm:$0xf] %v1603
      %1668 = vst [vmem:[%s224 + $0x34] sm:$0xf] %v1604
      %1669 = vst [vmem:[%s224 + $0x38] sm:$0xf] %v1605
      %1670 = vst [vmem:[%s224 + $0x3c] sm:$0xf] %v1606
      %1671 = vst [vmem:[%s224 + $0x40] sm:$0xf] %v1607
      %1672 = vst [vmem:[%s224 + $0x44] sm:$0xf] %v1608
      %1673 = vst [vmem:[%s224 + $0x48] sm:$0xf] %v1609
      %1674 = vst [vmem:[%s224 + $0x4c] sm:$0xf] %v1610
      %1675 = vst [vmem:[%s224 + $0x50] sm:$0xf] %v1611
      %1676 = vst [vmem:[%s224 + $0x54] sm:$0xf] %v1612
      %1677 = vst [vmem:[%s224 + $0x58] sm:$0xf] %v1613
      %1678 = vst [vmem:[%s224 + $0x5c] sm:$0xf] %v1614
      %1679 = vst [vmem:[%s224 + $0x60] sm:$0xf] %v1615
      %1680 = vst [vmem:[%s224 + $0x64] sm:$0xf] %v1616
      %1681 = vst [vmem:[%s224 + $0x68] sm:$0xf] %v1617
      %1682 = vst [vmem:[%s224 + $0x6c] sm:$0xf] %v1618
      %1683 = vst [vmem:[%s224 + $0x70] sm:$0xf] %v1619
      %1684 = vst [vmem:[%s224 + $0x74] sm:$0xf] %v1620
      %1685 = vst [vmem:[%s224 + $0x78] sm:$0xf] %v1621
      %1686 = vst [vmem:[%s224 + $0x7c] sm:$0xf] %v1622
      %1687 = vst [vmem:[%s224 + $0x80] sm:$0xf] %v1623
      %1688 = vst [vmem:[%s224 + $0x84] sm:$0xf] %v1624
      %1689 = vst [vmem:[%s224 + $0x88] sm:$0xf] %v1625
      %1690 = vst [vmem:[%s224 + $0x8c] sm:$0xf] %v1626
      %1691 = vst [vmem:[%s224 + $0x90] sm:$0xf] %v1627
      %1692 = vst [vmem:[%s224 + $0x94] sm:$0xf] %v1628
      %1693 = vst [vmem:[%s224 + $0x98] sm:$0xf] %v1629
      %1694 = vst [vmem:[%s224 + $0x9c] sm:$0xf] %v1630
      %1695 = vst [vmem:[%s224 + $0xa0] sm:$0xf] %v1631
      %1696 = vst [vmem:[%s224 + $0xa4] sm:$0xf] %v1632
      %1697 = vst [vmem:[%s224 + $0xa8] sm:$0xf] %v1633
      %1698 = vst [vmem:[%s224 + $0xac] sm:$0xf] %v1634
      %1699 = vst [vmem:[%s224 + $0xb0] sm:$0xf] %v1635
      %1700 = vst [vmem:[%s224 + $0xb4] sm:$0xf] %v1636
      %1701 = vst [vmem:[%s224 + $0xb8] sm:$0xf] %v1637
      %1702 = vst [vmem:[%s224 + $0xbc] sm:$0xf] %v1638
      %1703 = vst [vmem:[%s224 + $0xc0] sm:$0xf] %v1639
      %1704 = vst [vmem:[%s224 + $0xc4] sm:$0xf] %v1640
      %1705 = vst [vmem:[%s224 + $0xc8] sm:$0xf] %v1641
      %1706 = vst [vmem:[%s224 + $0xcc] sm:$0xf] %v1642
      %1707 = vst [vmem:[%s224 + $0xd0] sm:$0xf] %v1643
      %1708 = vst [vmem:[%s224 + $0xd4] sm:$0xf] %v1644
      %1709 = vst [vmem:[%s224 + $0xd8] sm:$0xf] %v1645
      %1710 = vst [vmem:[%s224 + $0xdc] sm:$0xf] %v1646
      %1711 = vst [vmem:[%s224 + $0xe0] sm:$0xf] %v1647
      %1712 = vst [vmem:[%s224 + $0xe4] sm:$0xf] %v1648
      %1713 = vst [vmem:[%s224 + $0xe8] sm:$0xf] %v1649
      %1714 = vst [vmem:[%s224 + $0xec] sm:$0xf] %v1650
      %1715 = vst [vmem:[%s224 + $0xf0] sm:$0xf] %v1651
      %1716 = vst [vmem:[%s224 + $0xf4] sm:$0xf] %v1652
      %1717 = vst [vmem:[%s224 + $0xf8] sm:$0xf] %v1653
      %1718 = vst [vmem:[%s224 + $0xfc] sm:$0xf] %v1654
      %v1719 = vadd.f32 %v1432, %v1434
      %v1720 = vadd.f32 %v1719, %v1437
      %v1721 = vadd.f32 %v1720, %v1439
      %v1722 = vadd.f32 %v1721, %v1442
      %v1723 = vadd.f32 %v1722, %v1444
      %v1724 = vadd.f32 %v1723, %v1447
      %v1725 = vadd.f32 %v1724, %v1449
      %v1726 = vadd.f32 %v1725, %v1452
      %v1727 = vadd.f32 %v1726, %v1454
      %v1728 = vadd.f32 %v1727, %v1457
      %v1729 = vadd.f32 %v1728, %v1459
      %v1730 = vadd.f32 %v1729, %v1462
      %v1731 = vadd.f32 %v1730, %v1464
      %v1732 = vadd.f32 %v1731, %v1467
      %v1733 = vadd.f32 %v1732, %v1469
      %v1734 = vadd.f32 %v1733, %v1472
      %v1735 = vadd.f32 %v1734, %v1474
      %v1736 = vadd.f32 %v1735, %v1477
      %v1737 = vadd.f32 %v1736, %v1479
      %v1738 = vadd.f32 %v1737, %v1482
      %v1739 = vadd.f32 %v1738, %v1484
      %v1740 = vadd.f32 %v1739, %v1487
      %v1741 = vadd.f32 %v1740, %v1489
      %v1742 = vadd.f32 %v1741, %v1492
      %v1743 = vadd.f32 %v1742, %v1494
      %v1744 = vadd.f32 %v1743, %v1497
      %v1745 = vadd.f32 %v1744, %v1499
      %v1746 = vadd.f32 %v1745, %v1502
      %v1747 = vadd.f32 %v1746, %v1504
      %v1748 = vadd.f32 %v1747, %v1507
      %v1749 = vadd.f32 %v1748, %v1509
      %v1750 = vadd.f32 %v1749, %v1512
      %v1751 = vadd.f32 %v1750, %v1514
      %v1752 = vadd.f32 %v1751, %v1517
      %v1753 = vadd.f32 %v1752, %v1519
      %v1754 = vadd.f32 %v1753, %v1522
      %v1755 = vadd.f32 %v1754, %v1524
      %v1756 = vadd.f32 %v1755, %v1527
      %v1757 = vadd.f32 %v1756, %v1529
      %v1758 = vadd.f32 %v1757, %v1532
      %v1759 = vadd.f32 %v1758, %v1534
      %v1760 = vadd.f32 %v1759, %v1537
      %v1761 = vadd.f32 %v1760, %v1539
      %v1762 = vadd.f32 %v1761, %v1542
      %v1763 = vadd.f32 %v1762, %v1544
      %v1764 = vadd.f32 %v1763, %v1547
      %v1765 = vadd.f32 %v1764, %v1549
      %v1766 = vadd.f32 %v1765, %v1552
      %v1767 = vadd.f32 %v1766, %v1554
      %v1768 = vadd.f32 %v1767, %v1557
      %v1769 = vadd.f32 %v1768, %v1559
      %v1770 = vadd.f32 %v1769, %v1562
      %v1771 = vadd.f32 %v1770, %v1564
      %v1772 = vadd.f32 %v1771, %v1567
      %v1773 = vadd.f32 %v1772, %v1569
      %v1774 = vadd.f32 %v1773, %v1572
      %v1775 = vadd.f32 %v1774, %v1574
      %v1776 = vadd.f32 %v1775, %v1577
      %v1777 = vadd.f32 %v1776, %v1579
      %v1778 = vadd.f32 %v1777, %v1582
      %v1779 = vadd.f32 %v1778, %v1584
      %v1780 = vadd.f32 %v1779, %v1587
      %v1781 = vadd.f32 %v1780, %v1589
      %v1782 = vrot.slane %v1781, 4
      %v1783 = vadd.f32 %v1781, %v1782
      %v1784 = vrot.slane %v1783, 2
      %v1785 = vadd.f32 %v1783, %v1784
      %v1786 = vrot.slane %v1785, 1
      %v1787 = vadd.f32 %v1785, %v1786
      %v1788 = vmul.f32 %v1432, %v1432
      %v1789 = vmul.f32 %v1434, %v1434
      %v1790 = vmul.f32 %v1437, %v1437
      %v1791 = vmul.f32 %v1439, %v1439
      %v1792 = vmul.f32 %v1442, %v1442
      %v1793 = vmul.f32 %v1444, %v1444
      %v1794 = vmul.f32 %v1447, %v1447
      %v1795 = vmul.f32 %v1449, %v1449
      %v1796 = vmul.f32 %v1452, %v1452
      %v1797 = vmul.f32 %v1454, %v1454
      %v1798 = vmul.f32 %v1457, %v1457
      %v1799 = vmul.f32 %v1459, %v1459
      %v1800 = vmul.f32 %v1462, %v1462
      %v1801 = vmul.f32 %v1464, %v1464
      %v1802 = vmul.f32 %v1467, %v1467
      %v1803 = vmul.f32 %v1469, %v1469
      %v1804 = vmul.f32 %v1472, %v1472
      %v1805 = vmul.f32 %v1474, %v1474
      %v1806 = vmul.f32 %v1477, %v1477
      %v1807 = vmul.f32 %v1479, %v1479
      %v1808 = vmul.f32 %v1482, %v1482
      %v1809 = vmul.f32 %v1484, %v1484
      %v1810 = vmul.f32 %v1487, %v1487
      %v1811 = vmul.f32 %v1489, %v1489
      %v1812 = vmul.f32 %v1492, %v1492
      %v1813 = vmul.f32 %v1494, %v1494
      %v1814 = vmul.f32 %v1497, %v1497
      %v1815 = vmul.f32 %v1499, %v1499
      %v1816 = vmul.f32 %v1502, %v1502
      %v1817 = vmul.f32 %v1504, %v1504
      %v1818 = vmul.f32 %v1507, %v1507
      %v1819 = vmul.f32 %v1509, %v1509
      %v1820 = vmul.f32 %v1512, %v1512
      %v1821 = vmul.f32 %v1514, %v1514
      %v1822 = vmul.f32 %v1517, %v1517
      %v1823 = vmul.f32 %v1519, %v1519
      %v1824 = vmul.f32 %v1522, %v1522
      %v1825 = vmul.f32 %v1524, %v1524
      %v1826 = vmul.f32 %v1527, %v1527
      %v1827 = vmul.f32 %v1529, %v1529
      %v1828 = vmul.f32 %v1532, %v1532
      %v1829 = vmul.f32 %v1534, %v1534
      %v1830 = vmul.f32 %v1537, %v1537
      %v1831 = vmul.f32 %v1539, %v1539
      %v1832 = vmul.f32 %v1542, %v1542
      %v1833 = vmul.f32 %v1544, %v1544
      %v1834 = vmul.f32 %v1547, %v1547
      %v1835 = vmul.f32 %v1549, %v1549
      %v1836 = vmul.f32 %v1552, %v1552
      %v1837 = vmul.f32 %v1554, %v1554
      %v1838 = vmul.f32 %v1557, %v1557
      %v1839 = vmul.f32 %v1559, %v1559
      %v1840 = vmul.f32 %v1562, %v1562
      %v1841 = vmul.f32 %v1564, %v1564
      %v1842 = vmul.f32 %v1567, %v1567
      %v1843 = vmul.f32 %v1569, %v1569
      %v1844 = vmul.f32 %v1572, %v1572
      %v1845 = vmul.f32 %v1574, %v1574
      %v1846 = vmul.f32 %v1577, %v1577
      %v1847 = vmul.f32 %v1579, %v1579
      %v1848 = vmul.f32 %v1582, %v1582
      %v1849 = vmul.f32 %v1584, %v1584
      %v1850 = vmul.f32 %v1587, %v1587
      %v1851 = vmul.f32 %v1589, %v1589
      %v1852 = vadd.f32 %v1788, %v1789
      %v1853 = vadd.f32 %v1852, %v1790
      %v1854 = vadd.f32 %v1853, %v1791
      %v1855 = vadd.f32 %v1854, %v1792
      %v1856 = vadd.f32 %v1855, %v1793
      %v1857 = vadd.f32 %v1856, %v1794
      %v1858 = vadd.f32 %v1857, %v1795
      %v1859 = vadd.f32 %v1858, %v1796
      %v1860 = vadd.f32 %v1859, %v1797
      %v1861 = vadd.f32 %v1860, %v1798
      %v1862 = vadd.f32 %v1861, %v1799
      %v1863 = vadd.f32 %v1862, %v1800
      %v1864 = vadd.f32 %v1863, %v1801
      %v1865 = vadd.f32 %v1864, %v1802
      %v1866 = vadd.f32 %v1865, %v1803
      %v1867 = vadd.f32 %v1866, %v1804
      %v1868 = vadd.f32 %v1867, %v1805
      %v1869 = vadd.f32 %v1868, %v1806
      %v1870 = vadd.f32 %v1869, %v1807
      %v1871 = vadd.f32 %v1870, %v1808
      %v1872 = vadd.f32 %v1871, %v1809
      %v1873 = vadd.f32 %v1872, %v1810
      %v1874 = vadd.f32 %v1873, %v1811
      %v1875 = vadd.f32 %v1874, %v1812
      %v1876 = vadd.f32 %v1875, %v1813
      %v1877 = vadd.f32 %v1876, %v1814
      %v1878 = vadd.f32 %v1877, %v1815
      %v1879 = vadd.f32 %v1878, %v1816
      %v1880 = vadd.f32 %v1879, %v1817
      %v1881 = vadd.f32 %v1880, %v1818
      %v1882 = vadd.f32 %v1881, %v1819
      %v1883 = vadd.f32 %v1882, %v1820
      %v1884 = vadd.f32 %v1883, %v1821
      %v1885 = vadd.f32 %v1884, %v1822
      %v1886 = vadd.f32 %v1885, %v1823
      %v1887 = vadd.f32 %v1886, %v1824
      %v1888 = vadd.f32 %v1887, %v1825
      %v1889 = vadd.f32 %v1888, %v1826
      %v1890 = vadd.f32 %v1889, %v1827
      %v1891 = vadd.f32 %v1890, %v1828
      %v1892 = vadd.f32 %v1891, %v1829
      %v1893 = vadd.f32 %v1892, %v1830
      %v1894 = vadd.f32 %v1893, %v1831
      %v1895 = vadd.f32 %v1894, %v1832
      %v1896 = vadd.f32 %v1895, %v1833
      %v1897 = vadd.f32 %v1896, %v1834
      %v1898 = vadd.f32 %v1897, %v1835
      %v1899 = vadd.f32 %v1898, %v1836
      %v1900 = vadd.f32 %v1899, %v1837
      %v1901 = vadd.f32 %v1900, %v1838
      %v1902 = vadd.f32 %v1901, %v1839
      %v1903 = vadd.f32 %v1902, %v1840
      %v1904 = vadd.f32 %v1903, %v1841
      %v1905 = vadd.f32 %v1904, %v1842
      %v1906 = vadd.f32 %v1905, %v1843
      %v1907 = vadd.f32 %v1906, %v1844
      %v1908 = vadd.f32 %v1907, %v1845
      %v1909 = vadd.f32 %v1908, %v1846
      %v1910 = vadd.f32 %v1909, %v1847
      %v1911 = vadd.f32 %v1910, %v1848
      %v1912 = vadd.f32 %v1911, %v1849
      %v1913 = vadd.f32 %v1912, %v1850
      %v1914 = vadd.f32 %v1913, %v1851
      %v1915 = vrot.slane %v1914, 4
      %v1916 = vadd.f32 %v1914, %v1915
      %v1917 = vrot.slane %v1916, 2
      %v1918 = vadd.f32 %v1916, %v1917
      %v1919 = vrot.slane %v1918, 1
      %v1920 = vadd.f32 %v1918, %v1919
      %vm1921 = vcmask 1040384
      %v1922 = vsel %vm1921, %v1787, %v1920
      %1923 = vst [vmem:[%s233] sm:$0x3] %v1922
      %s1924 = smul.u32 64, %s20
      %p1925 = scmp.lt.s32.totalorder %s19, 1
      %s1926 = scalar_select %p1925, %s19, 1
      %p1927 = scmp.lt.s32.totalorder %s1924, 511
      %s1928 = scalar_select %p1927, %s1924, 511
      %s1929 = smul.addr %s1926, 512
      %s1930 = sadd.s32 %s1928, %s1929
      %s1931 = smul.addr %s1930, 4
      %s1932 = scalar_lea.vmem %s2, %s1931
      %p1933 = scmp.lt.s32.totalorder %s19, 1
      %s1934 = scalar_select %p1933, %s19, 1
      %p1935 = scmp.lt.s32.totalorder %s20, 7
      %s1936 = scalar_select %p1935, %s20, 7
      %s1937 = smul.addr %s1934, 8
      %s1938 = sadd.s32 %s1936, %s1937
      %s1939 = smul.addr %s1938, 2
      %s1940 = scalar_lea.vmem %s3, %s1939
      // Predicated region
      $region29: #{g_forward.12} parent=27 // pred_check
        %p1941 = pneg %p96
      $region30: #{g_forward.12} parent=27 // pred_check_branch
        %1943 = sbr.rel (%p1941) target = $region32
      $region31: #{g_forward.12} parent=27 // pred_region
        %s1944 = smul.u32 64, %s20
      $region32: #{g_forward.12} parent=27 // pred_fallthru
        _
      // Predicated region
      $region33: #{g_forward.12} parent=27 // pred_check
        %p1945 = pneg %p124
      $region34: #{g_forward.12} parent=27 // pred_check_branch
        %1947 = sbr.rel (%p1945) target = $region36
      $region35: #{g_forward.12} parent=27 // pred_region
        _
      $region36: #{g_forward.12} parent=27 // pred_fallthru
        _
    $region28: #{g_forward.12} parent=5 // pred_fallthru
      _
    %p1948 = scmp.le.s32.totalorder 2, %s10
    // Predicated region
    $region37: #{g_forward.12} parent=5 // pred_check
      %p1949 = pneg %p1948
    $region38: #{g_forward.12} parent=5 // pred_check_branch
      %1951 = sbr.rel (%p1949) target = $region40
    $region39: #{g_forward.12} parent=5 // pred_region
      %s1952 = ssub.s32 %s10, 2
      // Predicated region
      $region41: #{g_forward.12} parent=39 // pred_check
        %p1953 = pneg %p102
      $region42: #{g_forward.12} parent=39 // pred_check_branch
        %1955 = sbr.rel (%p1953) target = $region44
      $region43: #{g_forward.12} parent=39 // pred_region
        %s1956 = smul.u32 64, %s22
        %p1957 = scmp.lt.s32.totalorder %s21, 1
        %s1958 = scalar_select %p1957, %s21, 1
        %p1959 = scmp.lt.s32.totalorder %s1956, 511
        %s1960 = scalar_select %p1959, %s1956, 511
        %s1961 = smul.addr %s1958, 512
        %s1962 = sadd.s32 %s1960, %s1961
        %s1963 = smul.addr %s1962, 4
        %s1964 = scalar_lea.vmem %s2, %s1963
      $region44: #{g_forward.12} parent=39 // pred_fallthru
        _
      // Predicated region
      $region45: #{g_forward.12} parent=39 // pred_check
        %p1965 = pneg %p130
      $region46: #{g_forward.12} parent=39 // pred_check_branch
        %1967 = sbr.rel (%p1965) target = $region48
      $region47: #{g_forward.12} parent=39 // pred_region
        %p1968 = scmp.lt.s32.totalorder %s21, 1
        %s1969 = scalar_select %p1968, %s21, 1
        %p1970 = scmp.lt.s32.totalorder %s22, 7
        %s1971 = scalar_select %p1970, %s22, 7
        %s1972 = smul.addr %s1969, 8
        %s1973 = sadd.s32 %s1971, %s1972
        %s1974 = smul.addr %s1973, 2
        %s1975 = scalar_lea.vmem %s3, %s1974
      $region48: #{g_forward.12} parent=39 // pred_fallthru
        _
    $region40: #{g_forward.12} parent=5 // pred_fallthru
      _
  $region6: #{g_forward.12} parent=0 // loop_footer
    %s14 = sadd.s32 1, %s10
  $region7: #{g_forward.12} parent=0 // loop_footer_branch
    %9 = sbr.rel target = $region3
  $region8: #{g_forward.12} parent=0 // loop_exit
    _

// kernel: g_forward.13
$region0: #{g_forward.13}
  #allocation0 [shape = 'u32[]', space=smem, size = 0x4, offset = 0x4, fixed_abs, tag = 'smem constant byte address 0x4 - core index']
  #allocation1 [shape = 'u32[72,128]{1,0:T(1,128)}', space=vmem, size = 0x9000, scoped, tag = 'internal scratch']
  %s0 = inlined_call_operand.vmem [shape: bf16[2,16384,288], index: 0, kind: input, shape index: {}]
  %s1 = inlined_call_operand.vmem [shape: bf16[288,3], index: 1, kind: input, shape index: {}]
  %s2 = inlined_call_operand.vmem [shape: f32[2,16384,3], index: 2, kind: output, shape index: {}]
  %s3 = sld [smem:[#allocation0]]
  $region41: #{g_forward.13} parent=0
    _
  %s5 = ssub.s32 1, %s3
  %s6 = scalar_select 0, %s5, %s3
  loop: start=0, step=1, limit=18
  $region2: #{g_forward.13} parent=0 // loop_pre_header
    _
  $region3: #{g_forward.13} parent=0 // loop_header
    %s8 = sphi 0, %s12
    %p9 = scmp.ge.s32.totalorder %s8, 18
    %s15 = sphi 0, %s27
    %s16 = sphi 0, %s23
    %s17 = sphi 0, %s15
    %s18 = sphi 0, %s16
    %s19 = sphi 0, %s17
    %s20 = sphi 0, %s18
    %s32 = sphi 0, %s34
    %s35 = sphi 0, %s32
    %s36 = sphi 0, %s35
    %s52 = sphi 0, %s36
    %s56 = sphi 0, %s56
    %s58 = sphi 0, %s56
    %s59 = sphi 0, %s58
    %s73 = sphi 0, %s59
    %s81 = sphi 0, %s83
    %s84 = sphi 0, %s81
    %s85 = sphi 0, %s84
    %s101 = sphi 0, %s85
  $region4: #{g_forward.13} parent=0 // loop_header_branch
    %11 = sbr.rel (%p9) target = $region8
  $region5: #{g_forward.13} parent=0 // loop_body
    %s13 = ssub.s32 %s8, 1
    %s14 = ssub.s32 %s8, 2
    %s21 = sadd.s32 1, %s16
    %p22 = scmp.ge.s32.totalorder %s21, 8
    %s23 = scalar_select %p22, 0, %s21
    %s24 = sadd.s32 1, %s15
    %s25 = scalar_select %p22, %s24, %s15
    %p26 = scmp.ge.s32.totalorder %s25, 2
    %s27 = scalar_select %p26, 0, %s25
    %s28 = ssub.s32 %s15, %s27
    %s29 = ssub.s32 %s16, %s23
    %s30 = sor.u32 %s28, %s29
    %p31 = scmp.eq.s32.totalorder %s30, 0
    %s33 = sadd.s32 %s32, 1
    %s34 = scalar_select %p31, %s32, %s33
    %p37 = pneg %p31
    %p38 = scmp.eq.s32.totalorder %s8, 15
    %p39 = por %p37, %p38
    %p40 = scmp.ne.s32.totalorder %s32, %s35
    %p41 = scmp.eq.s32.totalorder %s8, 0
    %p42 = por %p40, %p41
    %p43 = scmp.ne.s32.totalorder %s32, %s35
    %p44 = scmp.eq.s32.totalorder %s13, 15
    %p45 = por %p43, %p44
    %p46 = scmp.ne.s32.totalorder %s35, %s36
    %p47 = scmp.eq.s32.totalorder %s13, 0
    %p48 = por %p46, %p47
    %p49 = scmp.ne.s32.totalorder %s35, %s36
    %p50 = scmp.eq.s32.totalorder %s14, 15
    %p51 = por %p49, %p50
    %p53 = scmp.ne.s32.totalorder %s36, %s52
    %p54 = scmp.eq.s32.totalorder %s14, 0
    %p55 = por %p53, %p54
    %s57 = sadd.s32 %s56, 1
    %p60 = scmp.eq.s32.totalorder %s8, 15
    %p61 = scmp.ne.s32.totalorder %s56, %s58
    %p62 = scmp.eq.s32.totalorder %s8, 0
    %p63 = por %p61, %p62
    %p64 = scmp.ne.s32.totalorder %s56, %s58
    %p65 = scmp.eq.s32.totalorder %s13, 15
    %p66 = por %p64, %p65
    %p67 = scmp.ne.s32.totalorder %s58, %s59
    %p68 = scmp.eq.s32.totalorder %s13, 0
    %p69 = por %p67, %p68
    %p70 = scmp.ne.s32.totalorder %s58, %s59
    %p71 = scmp.eq.s32.totalorder %s14, 15
    %p72 = por %p70, %p71
    %p74 = scmp.ne.s32.totalorder %s59, %s73
    %p75 = scmp.eq.s32.totalorder %s14, 0
    %p76 = por %p74, %p75
    %s77 = ssub.s32 %s15, %s27
    %s78 = ssub.s32 %s16, %s23
    %s79 = sor.u32 %s77, %s78
    %p80 = scmp.eq.s32.totalorder %s79, 0
    %s82 = sadd.s32 %s81, 1
    %s83 = scalar_select %p80, %s81, %s82
    %p86 = pneg %p80
    %p87 = scmp.eq.s32.totalorder %s8, 15
    %p88 = por %p86, %p87
    %p89 = scmp.ne.s32.totalorder %s81, %s84
    %p90 = scmp.eq.s32.totalorder %s8, 0
    %p91 = por %p89, %p90
    %p92 = scmp.ne.s32.totalorder %s81, %s84
    %p93 = scmp.eq.s32.totalorder %s13, 15
    %p94 = por %p92, %p93
    %p95 = scmp.ne.s32.totalorder %s84, %s85
    %p96 = scmp.eq.s32.totalorder %s13, 0
    %p97 = por %p95, %p96
    %p98 = scmp.ne.s32.totalorder %s84, %s85
    %p99 = scmp.eq.s32.totalorder %s14, 15
    %p100 = por %p98, %p99
    %p102 = scmp.ne.s32.totalorder %s85, %s101
    %p103 = scmp.eq.s32.totalorder %s14, 0
    %p104 = por %p102, %p103
    %p105 = scmp.le.s32.totalorder 1, %s8
    %p106 = scmp.lt.s32.totalorder %s8, 17
    %p107 = pnand %p105, %p106
    %p108 = pneg %p107
    // Predicated region
    $region9: #{g_forward.13} parent=5 // pred_check
      _
    $region10: #{g_forward.13} parent=5 // pred_check_branch
      %110 = sbr.rel (%p107) target = $region12
    $region11: #{g_forward.13} parent=5 // pred_region
      %s111 = ssub.s32 %s8, 1
      // Predicated region
      $region13: #{g_forward.13} parent=11 // pred_check
        %p112 = pneg %p69
      $region14: #{g_forward.13} parent=11 // pred_check_branch
        %114 = sbr.rel (%p112) target = $region16
      $region15: #{g_forward.13} parent=11 // pred_region
        _
      $region16: #{g_forward.13} parent=11 // pred_fallthru
        _
    $region12: #{g_forward.13} parent=5 // pred_fallthru
      _
    %p115 = scmp.lt.s32.totalorder %s8, 16
    // Predicated region
    $region17: #{g_forward.13} parent=5 // pred_check
      %p116 = pneg %p115
    $region18: #{g_forward.13} parent=5 // pred_check_branch
      %118 = sbr.rel (%p116) target = $region20
    $region19: #{g_forward.13} parent=5 // pred_region
      // Predicated region
      $region21: #{g_forward.13} parent=19 // pred_check
        %p119 = pneg %p42
      $region22: #{g_forward.13} parent=19 // pred_check_branch
        %121 = sbr.rel (%p119) target = $region24
      $region23: #{g_forward.13} parent=19 // pred_region
        %s122 = smul.u32 256, %s16
        %p123 = scmp.lt.s32.totalorder %s15, 1
        %s124 = scalar_select %p123, %s15, 1
        %p125 = scmp.lt.s32.totalorder %s122, 2047
        %s126 = scalar_select %p125, %s122, 2047
        %s127 = smul.addr %s126, 3
        %s128 = smul.addr %s124, 6144
        %s129 = sadd.s32 %s127, %s128
        %s130 = smul.addr %s129, 4
        %s131 = scalar_lea.vmem %s0, %s130
        %s132 = smul.u32 256, %s16
      $region24: #{g_forward.13} parent=19 // pred_fallthru
        _
    $region20: #{g_forward.13} parent=5 // pred_fallthru
      _
    %p133 = scmp.le.s32.totalorder 1, %s8
    %p134 = scmp.lt.s32.totalorder %s8, 17
    %p135 = pnand %p133, %p134
    %p136 = pneg %p135
    // Predicated region
    $region25: #{g_forward.13} parent=5 // pred_check
      _
    $region26: #{g_forward.13} parent=5 // pred_check_branch
      %138 = sbr.rel (%p135) target = $region28
    $region27: #{g_forward.13} parent=5 // pred_region
      %s139 = ssub.s32 %s8, 1
      %s140 = smul.u32 256, %s18
      %p141 = scmp.lt.s32.totalorder %s17, 1
      %s142 = scalar_select %p141, %s17, 1
      %p143 = scmp.lt.s32.totalorder %s140, 2047
      %s144 = scalar_select %p143, %s140, 2047
      %s145 = smul.addr %s144, 3
      %s146 = smul.addr %s142, 6144
      %s147 = sadd.s32 %s145, %s146
      %s148 = smul.addr %s147, 4
      %s149 = scalar_lea.vmem %s0, %s148
      %p150 = pneg %p48
      %p151 = pneg %p45
      %p152 = pneg %p69
      %p153 = pneg %p66
      %p154 = pneg %p97
      %p155 = pneg %p94
      %s156 = smul.u32 256, %s18
      %p157 = scmp.lt.s32.totalorder %s17, 1
      %s158 = scalar_select %p157, %s17, 1
      %p159 = scmp.lt.s32.totalorder %s156, 2047
      %s160 = scalar_select %p159, %s156, 2047
      %s161 = smul.addr %s158, 2048
      %s162 = sadd.s32 %s160, %s161
      %s163 = smul.addr %s162, 8
      %s164 = scalar_lea.vmem %s2, %s163
      %s165 = smul.u32 256, %s18
      %p166 = scmp.lt.s32.totalorder %s17, 1
      %s167 = scalar_select %p166, %s17, 1
      %p168 = scmp.lt.s32.totalorder %s165, 2047
      %s169 = scalar_select %p168, %s165, 2047
      %s170 = smul.addr %s169, 3
      %s171 = smul.addr %s167, 6144
      %s172 = sadd.s32 %s170, %s171
      %s173 = smul.addr %s172, 4
      %s174 = scalar_lea.vmem %s0, %s173
      %s175 = smul.u32 256, %s18
      %s176 = smul.u32 256, %s18
      %p177 = scmp.lt.s32.totalorder %s17, 1
      %s178 = scalar_select %p177, %s17, 1
      %p179 = scmp.lt.s32.totalorder %s176, 2047
      %s180 = scalar_select %p179, %s176, 2047
      %s181 = smul.addr %s178, 2048
      %s182 = sadd.s32 %s180, %s181
      %s183 = smul.addr %s182, 8
      %s184 = scalar_lea.vmem %s2, %s183
      %s185 = smul.u32 256, %s18
      %v187 = vld [vmem:[%s174] sm:$0xff]
      %v188 = vld [vmem:[%s174 + $0x8] sm:$0xf]
      %v189 = vld [vmem:[%s174 + $0xc] sm:$0xff]
      %v190 = vld [vmem:[%s174 + $0x14] sm:$0xf]
      %v191 = vld [vmem:[%s174 + $0x18] sm:$0xff]
      %v192 = vld [vmem:[%s174 + $0x20] sm:$0xf]
      %v193 = vld [vmem:[%s174 + $0x24] sm:$0xff]
      %v194 = vld [vmem:[%s174 + $0x2c] sm:$0xf]
      %v195 = vld [vmem:[%s174 + $0x30] sm:$0xff]
      %v196 = vld [vmem:[%s174 + $0x38] sm:$0xf]
      %v197 = vld [vmem:[%s174 + $0x3c] sm:$0xff]
      %v198 = vld [vmem:[%s174 + $0x44] sm:$0xf]
      %v199 = vld [vmem:[%s174 + $0x48] sm:$0xff]
      %v200 = vld [vmem:[%s174 + $0x50] sm:$0xf]
      %v201 = vld [vmem:[%s174 + $0x54] sm:$0xff]
      %v202 = vld [vmem:[%s174 + $0x5c] sm:$0xf]
      %v203 = vld [vmem:[%s174 + $0x60] sm:$0xff]
      %v204 = vld [vmem:[%s174 + $0x68] sm:$0xf]
      %v205 = vld [vmem:[%s174 + $0x6c] sm:$0xff]
      %v206 = vld [vmem:[%s174 + $0x74] sm:$0xf]
      %v207 = vld [vmem:[%s174 + $0x78] sm:$0xff]
      %v208 = vld [vmem:[%s174 + $0x80] sm:$0xf]
      %v209 = vld [vmem:[%s174 + $0x84] sm:$0xff]
      %v210 = vld [vmem:[%s174 + $0x8c] sm:$0xf]
      %v211 = vld [vmem:[%s174 + $0x90] sm:$0xff]
      %v212 = vld [vmem:[%s174 + $0x98] sm:$0xf]
      %v213 = vld [vmem:[%s174 + $0x9c] sm:$0xff]
      %v214 = vld [vmem:[%s174 + $0xa4] sm:$0xf]
      %v215 = vld [vmem:[%s174 + $0xa8] sm:$0xff]
      %v216 = vld [vmem:[%s174 + $0xb0] sm:$0xf]
      %v217 = vld [vmem:[%s174 + $0xb4] sm:$0xff]
      %v218 = vld [vmem:[%s174 + $0xbc] sm:$0xf]
      %v219 = vld [vmem:[%s174 + $0xc0] sm:$0xff]
      %v220 = vld [vmem:[%s174 + $0xc8] sm:$0xf]
      %v221 = vld [vmem:[%s174 + $0xcc] sm:$0xff]
      %v222 = vld [vmem:[%s174 + $0xd4] sm:$0xf]
      %v223 = vld [vmem:[%s174 + $0xd8] sm:$0xff]
      %v224 = vld [vmem:[%s174 + $0xe0] sm:$0xf]
      %v225 = vld [vmem:[%s174 + $0xe4] sm:$0xff]
      %v226 = vld [vmem:[%s174 + $0xec] sm:$0xf]
      %v227 = vld [vmem:[%s174 + $0xf0] sm:$0xff]
      %v228 = vld [vmem:[%s174 + $0xf8] sm:$0xf]
      %v229 = vld [vmem:[%s174 + $0xfc] sm:$0xff]
      %v230 = vld [vmem:[%s174 + $0x104] sm:$0xf]
      %v231 = vld [vmem:[%s174 + $0x108] sm:$0xff]
      %v232 = vld [vmem:[%s174 + $0x110] sm:$0xf]
      %v233 = vld [vmem:[%s174 + $0x114] sm:$0xff]
      %v234 = vld [vmem:[%s174 + $0x11c] sm:$0xf]
      %v235 = vld [vmem:[%s174 + $0x120] sm:$0xff]
      %v236 = vld [vmem:[%s174 + $0x128] sm:$0xf]
      %v237 = vld [vmem:[%s174 + $0x12c] sm:$0xff]
      %v238 = vld [vmem:[%s174 + $0x134] sm:$0xf]
      %v239 = vld [vmem:[%s174 + $0x138] sm:$0xff]
      %v240 = vld [vmem:[%s174 + $0x140] sm:$0xf]
      %v241 = vld [vmem:[%s174 + $0x144] sm:$0xff]
      %v242 = vld [vmem:[%s174 + $0x14c] sm:$0xf]
      %v243 = vld [vmem:[%s174 + $0x150] sm:$0xff]
      %v244 = vld [vmem:[%s174 + $0x158] sm:$0xf]
      %v245 = vld [vmem:[%s174 + $0x15c] sm:$0xff]
      %v246 = vld [vmem:[%s174 + $0x164] sm:$0xf]
      %v247 = vld [vmem:[%s174 + $0x168] sm:$0xff]
      %v248 = vld [vmem:[%s174 + $0x170] sm:$0xf]
      %v249 = vld [vmem:[%s174 + $0x174] sm:$0xff]
      %v250 = vld [vmem:[%s174 + $0x17c] sm:$0xf]
      %v251 = vld [vmem:[%s174 + $0x180] sm:$0xff]
      %v252 = vld [vmem:[%s174 + $0x188] sm:$0xf]
      %v253 = vld [vmem:[%s174 + $0x18c] sm:$0xff]
      %v254 = vld [vmem:[%s174 + $0x194] sm:$0xf]
      %v255 = vld [vmem:[%s174 + $0x198] sm:$0xff]
      %v256 = vld [vmem:[%s174 + $0x1a0] sm:$0xf]
      %v257 = vld [vmem:[%s174 + $0x1a4] sm:$0xff]
      %v258 = vld [vmem:[%s174 + $0x1ac] sm:$0xf]
      %v259 = vld [vmem:[%s174 + $0x1b0] sm:$0xff]
      %v260 = vld [vmem:[%s174 + $0x1b8] sm:$0xf]
      %v261 = vld [vmem:[%s174 + $0x1bc] sm:$0xff]
      %v262 = vld [vmem:[%s174 + $0x1c4] sm:$0xf]
      %v263 = vld [vmem:[%s174 + $0x1c8] sm:$0xff]
      %v264 = vld [vmem:[%s174 + $0x1d0] sm:$0xf]
      %v265 = vld [vmem:[%s174 + $0x1d4] sm:$0xff]
      %v266 = vld [vmem:[%s174 + $0x1dc] sm:$0xf]
      %v267 = vld [vmem:[%s174 + $0x1e0] sm:$0xff]
      %v268 = vld [vmem:[%s174 + $0x1e8] sm:$0xf]
      %v269 = vld [vmem:[%s174 + $0x1ec] sm:$0xff]
      %v270 = vld [vmem:[%s174 + $0x1f4] sm:$0xf]
      %v271 = vld [vmem:[%s174 + $0x1f8] sm:$0xff]
      %v272 = vld [vmem:[%s174 + $0x200] sm:$0xf]
      %v273 = vld [vmem:[%s174 + $0x204] sm:$0xff]
      %v274 = vld [vmem:[%s174 + $0x20c] sm:$0xf]
      %v275 = vld [vmem:[%s174 + $0x210] sm:$0xff]
      %v276 = vld [vmem:[%s174 + $0x218] sm:$0xf]
      %v277 = vld [vmem:[%s174 + $0x21c] sm:$0xff]
      %v278 = vld [vmem:[%s174 + $0x224] sm:$0xf]
      %v279 = vld [vmem:[%s174 + $0x228] sm:$0xff]
      %v280 = vld [vmem:[%s174 + $0x230] sm:$0xf]
      %v281 = vld [vmem:[%s174 + $0x234] sm:$0xff]
      %v282 = vld [vmem:[%s174 + $0x23c] sm:$0xf]
      %v283 = vld [vmem:[%s174 + $0x240] sm:$0xff]
      %v284 = vld [vmem:[%s174 + $0x248] sm:$0xf]
      %v285 = vld [vmem:[%s174 + $0x24c] sm:$0xff]
      %v286 = vld [vmem:[%s174 + $0x254] sm:$0xf]
      %v287 = vld [vmem:[%s174 + $0x258] sm:$0xff]
      %v288 = vld [vmem:[%s174 + $0x260] sm:$0xf]
      %v289 = vld [vmem:[%s174 + $0x264] sm:$0xff]
      %v290 = vld [vmem:[%s174 + $0x26c] sm:$0xf]
      %v291 = vld [vmem:[%s174 + $0x270] sm:$0xff]
      %v292 = vld [vmem:[%s174 + $0x278] sm:$0xf]
      %v293 = vld [vmem:[%s174 + $0x27c] sm:$0xff]
      %v294 = vld [vmem:[%s174 + $0x284] sm:$0xf]
      %v295 = vld [vmem:[%s174 + $0x288] sm:$0xff]
      %v296 = vld [vmem:[%s174 + $0x290] sm:$0xf]
      %v297 = vld [vmem:[%s174 + $0x294] sm:$0xff]
      %v298 = vld [vmem:[%s174 + $0x29c] sm:$0xf]
      %v299 = vld [vmem:[%s174 + $0x2a0] sm:$0xff]
      %v300 = vld [vmem:[%s174 + $0x2a8] sm:$0xf]
      %v301 = vld [vmem:[%s174 + $0x2ac] sm:$0xff]
      %v302 = vld [vmem:[%s174 + $0x2b4] sm:$0xf]
      %v303 = vld [vmem:[%s174 + $0x2b8] sm:$0xff]
      %v304 = vld [vmem:[%s174 + $0x2c0] sm:$0xf]
      %v305 = vld [vmem:[%s174 + $0x2c4] sm:$0xff]
      %v306 = vld [vmem:[%s174 + $0x2cc] sm:$0xf]
      %v307 = vld [vmem:[%s174 + $0x2d0] sm:$0xff]
      %v308 = vld [vmem:[%s174 + $0x2d8] sm:$0xf]
      %v309 = vld [vmem:[%s174 + $0x2dc] sm:$0xff]
      %v310 = vld [vmem:[%s174 + $0x2e4] sm:$0xf]
      %v311 = vld [vmem:[%s174 + $0x2e8] sm:$0xff]
      %v312 = vld [vmem:[%s174 + $0x2f0] sm:$0xf]
      %v313 = vld [vmem:[%s174 + $0x2f4] sm:$0xff]
      %v314 = vld [vmem:[%s174 + $0x2fc] sm:$0xf]
      %v315 = vld [vmem:[%s174 + $0x300] sm:$0xff]
      %v316 = vld [vmem:[%s174 + $0x308] sm:$0xf]
      %v317 = vld [vmem:[%s174 + $0x30c] sm:$0xff]
      %v318 = vld [vmem:[%s174 + $0x314] sm:$0xf]
      %v319 = vld [vmem:[%s174 + $0x318] sm:$0xff]
      %v320 = vld [vmem:[%s174 + $0x320] sm:$0xf]
      %v321 = vld [vmem:[%s174 + $0x324] sm:$0xff]
      %v322 = vld [vmem:[%s174 + $0x32c] sm:$0xf]
      %v323 = vld [vmem:[%s174 + $0x330] sm:$0xff]
      %v324 = vld [vmem:[%s174 + $0x338] sm:$0xf]
      %v325 = vld [vmem:[%s174 + $0x33c] sm:$0xff]
      %v326 = vld [vmem:[%s174 + $0x344] sm:$0xf]
      %v327 = vld [vmem:[%s174 + $0x348] sm:$0xff]
      %v328 = vld [vmem:[%s174 + $0x350] sm:$0xf]
      %v329 = vld [vmem:[%s174 + $0x354] sm:$0xff]
      %v330 = vld [vmem:[%s174 + $0x35c] sm:$0xf]
      %v331 = vld [vmem:[%s174 + $0x360] sm:$0xff]
      %v332 = vld [vmem:[%s174 + $0x368] sm:$0xf]
      %v333 = vld [vmem:[%s174 + $0x36c] sm:$0xff]
      %v334 = vld [vmem:[%s174 + $0x374] sm:$0xf]
      %v335 = vld [vmem:[%s174 + $0x378] sm:$0xff]
      %v336 = vld [vmem:[%s174 + $0x380] sm:$0xf]
      %v337 = vld [vmem:[%s174 + $0x384] sm:$0xff]
      %v338 = vld [vmem:[%s174 + $0x38c] sm:$0xf]
      %v339 = vld [vmem:[%s174 + $0x390] sm:$0xff]
      %v340 = vld [vmem:[%s174 + $0x398] sm:$0xf]
      %v341 = vld [vmem:[%s174 + $0x39c] sm:$0xff]
      %v342 = vld [vmem:[%s174 + $0x3a4] sm:$0xf]
      %v343 = vld [vmem:[%s174 + $0x3a8] sm:$0xff]
      %v344 = vld [vmem:[%s174 + $0x3b0] sm:$0xf]
      %v345 = vld [vmem:[%s174 + $0x3b4] sm:$0xff]
      %v346 = vld [vmem:[%s174 + $0x3bc] sm:$0xf]
      %v347 = vld [vmem:[%s174 + $0x3c0] sm:$0xff]
      %v348 = vld [vmem:[%s174 + $0x3c8] sm:$0xf]
      %v349 = vld [vmem:[%s174 + $0x3cc] sm:$0xff]
      %v350 = vld [vmem:[%s174 + $0x3d4] sm:$0xf]
      %v351 = vld [vmem:[%s174 + $0x3d8] sm:$0xff]
      %v352 = vld [vmem:[%s174 + $0x3e0] sm:$0xf]
      %v353 = vld [vmem:[%s174 + $0x3e4] sm:$0xff]
      %v354 = vld [vmem:[%s174 + $0x3ec] sm:$0xf]
      %v355 = vld [vmem:[%s174 + $0x3f0] sm:$0xff]
      %v356 = vld [vmem:[%s174 + $0x3f8] sm:$0xf]
      %v357 = vld [vmem:[%s174 + $0x3fc] sm:$0xff]
      %v358 = vld [vmem:[%s174 + $0x404] sm:$0xf]
      %v359 = vld [vmem:[%s174 + $0x408] sm:$0xff]
      %v360 = vld [vmem:[%s174 + $0x410] sm:$0xf]
      %v361 = vld [vmem:[%s174 + $0x414] sm:$0xff]
      %v362 = vld [vmem:[%s174 + $0x41c] sm:$0xf]
      %v363 = vld [vmem:[%s174 + $0x420] sm:$0xff]
      %v364 = vld [vmem:[%s174 + $0x428] sm:$0xf]
      %v365 = vld [vmem:[%s174 + $0x42c] sm:$0xff]
      %v366 = vld [vmem:[%s174 + $0x434] sm:$0xf]
      %v367 = vld [vmem:[%s174 + $0x438] sm:$0xff]
      %v368 = vld [vmem:[%s174 + $0x440] sm:$0xf]
      %v369 = vld [vmem:[%s174 + $0x444] sm:$0xff]
      %v370 = vld [vmem:[%s174 + $0x44c] sm:$0xf]
      %v371 = vld [vmem:[%s174 + $0x450] sm:$0xff]
      %v372 = vld [vmem:[%s174 + $0x458] sm:$0xf]
      %v373 = vld [vmem:[%s174 + $0x45c] sm:$0xff]
      %v374 = vld [vmem:[%s174 + $0x464] sm:$0xf]
      %v375 = vld [vmem:[%s174 + $0x468] sm:$0xff]
      %v376 = vld [vmem:[%s174 + $0x470] sm:$0xf]
      %v377 = vld [vmem:[%s174 + $0x474] sm:$0xff]
      %v378 = vld [vmem:[%s174 + $0x47c] sm:$0xf]
      %v379 = vld [vmem:[%s174 + $0x480] sm:$0xff]
      %v380 = vld [vmem:[%s174 + $0x488] sm:$0xf]
      %v381 = vld [vmem:[%s174 + $0x48c] sm:$0xff]
      %v382 = vld [vmem:[%s174 + $0x494] sm:$0xf]
      %v383 = vld [vmem:[%s174 + $0x498] sm:$0xff]
      %v384 = vld [vmem:[%s174 + $0x4a0] sm:$0xf]
      %v385 = vld [vmem:[%s174 + $0x4a4] sm:$0xff]
      %v386 = vld [vmem:[%s174 + $0x4ac] sm:$0xf]
      %v387 = vld [vmem:[%s174 + $0x4b0] sm:$0xff]
      %v388 = vld [vmem:[%s174 + $0x4b8] sm:$0xf]
      %v389 = vld [vmem:[%s174 + $0x4bc] sm:$0xff]
      %v390 = vld [vmem:[%s174 + $0x4c4] sm:$0xf]
      %v391 = vld [vmem:[%s174 + $0x4c8] sm:$0xff]
      %v392 = vld [vmem:[%s174 + $0x4d0] sm:$0xf]
      %v393 = vld [vmem:[%s174 + $0x4d4] sm:$0xff]
      %v394 = vld [vmem:[%s174 + $0x4dc] sm:$0xf]
      %v395 = vld [vmem:[%s174 + $0x4e0] sm:$0xff]
      %v396 = vld [vmem:[%s174 + $0x4e8] sm:$0xf]
      %v397 = vld [vmem:[%s174 + $0x4ec] sm:$0xff]
      %v398 = vld [vmem:[%s174 + $0x4f4] sm:$0xf]
      %v399 = vld [vmem:[%s174 + $0x4f8] sm:$0xff]
      %v400 = vld [vmem:[%s174 + $0x500] sm:$0xf]
      %v401 = vld [vmem:[%s174 + $0x504] sm:$0xff]
      %v402 = vld [vmem:[%s174 + $0x50c] sm:$0xf]
      %v403 = vld [vmem:[%s174 + $0x510] sm:$0xff]
      %v404 = vld [vmem:[%s174 + $0x518] sm:$0xf]
      %v405 = vld [vmem:[%s174 + $0x51c] sm:$0xff]
      %v406 = vld [vmem:[%s174 + $0x524] sm:$0xf]
      %v407 = vld [vmem:[%s174 + $0x528] sm:$0xff]
      %v408 = vld [vmem:[%s174 + $0x530] sm:$0xf]
      %v409 = vld [vmem:[%s174 + $0x534] sm:$0xff]
      %v410 = vld [vmem:[%s174 + $0x53c] sm:$0xf]
      %v411 = vld [vmem:[%s174 + $0x540] sm:$0xff]
      %v412 = vld [vmem:[%s174 + $0x548] sm:$0xf]
      %v413 = vld [vmem:[%s174 + $0x54c] sm:$0xff]
      %v414 = vld [vmem:[%s174 + $0x554] sm:$0xf]
      %v415 = vld [vmem:[%s174 + $0x558] sm:$0xff]
      %v416 = vld [vmem:[%s174 + $0x560] sm:$0xf]
      %v417 = vld [vmem:[%s174 + $0x564] sm:$0xff]
      %v418 = vld [vmem:[%s174 + $0x56c] sm:$0xf]
      %v419 = vld [vmem:[%s174 + $0x570] sm:$0xff]
      %v420 = vld [vmem:[%s174 + $0x578] sm:$0xf]
      %v421 = vld [vmem:[%s174 + $0x57c] sm:$0xff]
      %v422 = vld [vmem:[%s174 + $0x584] sm:$0xf]
      %v423 = vld [vmem:[%s174 + $0x588] sm:$0xff]
      %v424 = vld [vmem:[%s174 + $0x590] sm:$0xf]
      %v425 = vld [vmem:[%s174 + $0x594] sm:$0xff]
      %v426 = vld [vmem:[%s174 + $0x59c] sm:$0xf]
      %v427 = vld [vmem:[%s174 + $0x5a0] sm:$0xff]
      %v428 = vld [vmem:[%s174 + $0x5a8] sm:$0xf]
      %v429 = vld [vmem:[%s174 + $0x5ac] sm:$0xff]
      %v430 = vld [vmem:[%s174 + $0x5b4] sm:$0xf]
      %v431 = vld [vmem:[%s174 + $0x5b8] sm:$0xff]
      %v432 = vld [vmem:[%s174 + $0x5c0] sm:$0xf]
      %v433 = vld [vmem:[%s174 + $0x5c4] sm:$0xff]
      %v434 = vld [vmem:[%s174 + $0x5cc] sm:$0xf]
      %v435 = vld [vmem:[%s174 + $0x5d0] sm:$0xff]
      %v436 = vld [vmem:[%s174 + $0x5d8] sm:$0xf]
      %v437 = vld [vmem:[%s174 + $0x5dc] sm:$0xff]
      %v438 = vld [vmem:[%s174 + $0x5e4] sm:$0xf]
      %v439 = vld [vmem:[%s174 + $0x5e8] sm:$0xff]
      %v440 = vld [vmem:[%s174 + $0x5f0] sm:$0xf]
      %v441 = vld [vmem:[%s174 + $0x5f4] sm:$0xff]
      %v442 = vld [vmem:[%s174 + $0x5fc] sm:$0xf]
      %v443 = vld [vmem:[%s174 + $0x600] sm:$0xff]
      %v444 = vld [vmem:[%s174 + $0x608] sm:$0xf]
      %v445 = vld [vmem:[%s174 + $0x60c] sm:$0xff]
      %v446 = vld [vmem:[%s174 + $0x614] sm:$0xf]
      %v447 = vld [vmem:[%s174 + $0x618] sm:$0xff]
      %v448 = vld [vmem:[%s174 + $0x620] sm:$0xf]
      %v449 = vld [vmem:[%s174 + $0x624] sm:$0xff]
      %v450 = vld [vmem:[%s174 + $0x62c] sm:$0xf]
      %v451 = vld [vmem:[%s174 + $0x630] sm:$0xff]
      %v452 = vld [vmem:[%s174 + $0x638] sm:$0xf]
      %v453 = vld [vmem:[%s174 + $0x63c] sm:$0xff]
      %v454 = vld [vmem:[%s174 + $0x644] sm:$0xf]
      %v455 = vld [vmem:[%s174 + $0x648] sm:$0xff]
      %v456 = vld [vmem:[%s174 + $0x650] sm:$0xf]
      %v457 = vld [vmem:[%s174 + $0x654] sm:$0xff]
      %v458 = vld [vmem:[%s174 + $0x65c] sm:$0xf]
      %v459 = vld [vmem:[%s174 + $0x660] sm:$0xff]
      %v460 = vld [vmem:[%s174 + $0x668] sm:$0xf]
      %v461 = vld [vmem:[%s174 + $0x66c] sm:$0xff]
      %v462 = vld [vmem:[%s174 + $0x674] sm:$0xf]
      %v463 = vld [vmem:[%s174 + $0x678] sm:$0xff]
      %v464 = vld [vmem:[%s174 + $0x680] sm:$0xf]
      %v465 = vld [vmem:[%s174 + $0x684] sm:$0xff]
      %v466 = vld [vmem:[%s174 + $0x68c] sm:$0xf]
      %v467 = vld [vmem:[%s174 + $0x690] sm:$0xff]
      %v468 = vld [vmem:[%s174 + $0x698] sm:$0xf]
      %v469 = vld [vmem:[%s174 + $0x69c] sm:$0xff]
      %v470 = vld [vmem:[%s174 + $0x6a4] sm:$0xf]
      %v471 = vld [vmem:[%s174 + $0x6a8] sm:$0xff]
      %v472 = vld [vmem:[%s174 + $0x6b0] sm:$0xf]
      %v473 = vld [vmem:[%s174 + $0x6b4] sm:$0xff]
      %v474 = vld [vmem:[%s174 + $0x6bc] sm:$0xf]
      %v475 = vld [vmem:[%s174 + $0x6c0] sm:$0xff]
      %v476 = vld [vmem:[%s174 + $0x6c8] sm:$0xf]
      %v477 = vld [vmem:[%s174 + $0x6cc] sm:$0xff]
      %v478 = vld [vmem:[%s174 + $0x6d4] sm:$0xf]
      %v479 = vld [vmem:[%s174 + $0x6d8] sm:$0xff]
      %v480 = vld [vmem:[%s174 + $0x6e0] sm:$0xf]
      %v481 = vld [vmem:[%s174 + $0x6e4] sm:$0xff]
      %v482 = vld [vmem:[%s174 + $0x6ec] sm:$0xf]
      %v483 = vld [vmem:[%s174 + $0x6f0] sm:$0xff]
      %v484 = vld [vmem:[%s174 + $0x6f8] sm:$0xf]
      %v485 = vld [vmem:[%s174 + $0x6fc] sm:$0xff]
      %v486 = vld [vmem:[%s174 + $0x704] sm:$0xf]
      %v487 = vld [vmem:[%s174 + $0x708] sm:$0xff]
      %v488 = vld [vmem:[%s174 + $0x710] sm:$0xf]
      %v489 = vld [vmem:[%s174 + $0x714] sm:$0xff]
      %v490 = vld [vmem:[%s174 + $0x71c] sm:$0xf]
      %v491 = vld [vmem:[%s174 + $0x720] sm:$0xff]
      %v492 = vld [vmem:[%s174 + $0x728] sm:$0xf]
      %v493 = vld [vmem:[%s174 + $0x72c] sm:$0xff]
      %v494 = vld [vmem:[%s174 + $0x734] sm:$0xf]
      %v495 = vld [vmem:[%s174 + $0x738] sm:$0xff]
      %v496 = vld [vmem:[%s174 + $0x740] sm:$0xf]
      %v497 = vld [vmem:[%s174 + $0x744] sm:$0xff]
      %v498 = vld [vmem:[%s174 + $0x74c] sm:$0xf]
      %v499 = vld [vmem:[%s174 + $0x750] sm:$0xff]
      %v500 = vld [vmem:[%s174 + $0x758] sm:$0xf]
      %v501 = vld [vmem:[%s174 + $0x75c] sm:$0xff]
      %v502 = vld [vmem:[%s174 + $0x764] sm:$0xf]
      %v503 = vld [vmem:[%s174 + $0x768] sm:$0xff]
      %v504 = vld [vmem:[%s174 + $0x770] sm:$0xf]
      %v505 = vld [vmem:[%s174 + $0x774] sm:$0xff]
      %v506 = vld [vmem:[%s174 + $0x77c] sm:$0xf]
      %v507 = vld [vmem:[%s174 + $0x780] sm:$0xff]
      %v508 = vld [vmem:[%s174 + $0x788] sm:$0xf]
      %v509 = vld [vmem:[%s174 + $0x78c] sm:$0xff]
      %v510 = vld [vmem:[%s174 + $0x794] sm:$0xf]
      %v511 = vld [vmem:[%s174 + $0x798] sm:$0xff]
      %v512 = vld [vmem:[%s174 + $0x7a0] sm:$0xf]
      %v513 = vld [vmem:[%s174 + $0x7a4] sm:$0xff]
      %v514 = vld [vmem:[%s174 + $0x7ac] sm:$0xf]
      %v515 = vld [vmem:[%s174 + $0x7b0] sm:$0xff]
      %v516 = vld [vmem:[%s174 + $0x7b8] sm:$0xf]
      %v517 = vld [vmem:[%s174 + $0x7bc] sm:$0xff]
      %v518 = vld [vmem:[%s174 + $0x7c4] sm:$0xf]
      %v519 = vld [vmem:[%s174 + $0x7c8] sm:$0xff]
      %v520 = vld [vmem:[%s174 + $0x7d0] sm:$0xf]
      %v521 = vld [vmem:[%s174 + $0x7d4] sm:$0xff]
      %v522 = vld [vmem:[%s174 + $0x7dc] sm:$0xf]
      %v523 = vld [vmem:[%s174 + $0x7e0] sm:$0xff]
      %v524 = vld [vmem:[%s174 + $0x7e8] sm:$0xf]
      %v525 = vld [vmem:[%s174 + $0x7ec] sm:$0xff]
      %v526 = vld [vmem:[%s174 + $0x7f4] sm:$0xf]
      %v527 = vld [vmem:[%s174 + $0x7f8] sm:$0xff]
      %v528 = vld [vmem:[%s174 + $0x800] sm:$0xf]
      %v529 = vld [vmem:[%s174 + $0x804] sm:$0xff]
      %v530 = vld [vmem:[%s174 + $0x80c] sm:$0xf]
      %v531 = vld [vmem:[%s174 + $0x810] sm:$0xff]
      %v532 = vld [vmem:[%s174 + $0x818] sm:$0xf]
      %v533 = vld [vmem:[%s174 + $0x81c] sm:$0xff]
      %v534 = vld [vmem:[%s174 + $0x824] sm:$0xf]
      %v535 = vld [vmem:[%s174 + $0x828] sm:$0xff]
      %v536 = vld [vmem:[%s174 + $0x830] sm:$0xf]
      %v537 = vld [vmem:[%s174 + $0x834] sm:$0xff]
      %v538 = vld [vmem:[%s174 + $0x83c] sm:$0xf]
      %v539 = vld [vmem:[%s174 + $0x840] sm:$0xff]
      %v540 = vld [vmem:[%s174 + $0x848] sm:$0xf]
      %v541 = vld [vmem:[%s174 + $0x84c] sm:$0xff]
      %v542 = vld [vmem:[%s174 + $0x854] sm:$0xf]
      %v543 = vld [vmem:[%s174 + $0x858] sm:$0xff]
      %v544 = vld [vmem:[%s174 + $0x860] sm:$0xf]
      %v545 = vld [vmem:[%s174 + $0x864] sm:$0xff]
      %v546 = vld [vmem:[%s174 + $0x86c] sm:$0xf]
      %v547 = vld [vmem:[%s174 + $0x870] sm:$0xff]
      %v548 = vld [vmem:[%s174 + $0x878] sm:$0xf]
      %v549 = vld [vmem:[%s174 + $0x87c] sm:$0xff]
      %v550 = vld [vmem:[%s174 + $0x884] sm:$0xf]
      %v551 = vld [vmem:[%s174 + $0x888] sm:$0xff]
      %v552 = vld [vmem:[%s174 + $0x890] sm:$0xf]
      %v553 = vld [vmem:[%s174 + $0x894] sm:$0xff]
      %v554 = vld [vmem:[%s174 + $0x89c] sm:$0xf]
      %v555 = vld [vmem:[%s174 + $0x8a0] sm:$0xff]
      %v556 = vld [vmem:[%s174 + $0x8a8] sm:$0xf]
      %v557 = vld [vmem:[%s174 + $0x8ac] sm:$0xff]
      %v558 = vld [vmem:[%s174 + $0x8b4] sm:$0xf]
      %v559 = vld [vmem:[%s174 + $0x8b8] sm:$0xff]
      %v560 = vld [vmem:[%s174 + $0x8c0] sm:$0xf]
      %v561 = vld [vmem:[%s174 + $0x8c4] sm:$0xff]
      %v562 = vld [vmem:[%s174 + $0x8cc] sm:$0xf]
      %v563 = vld [vmem:[%s174 + $0x8d0] sm:$0xff]
      %v564 = vld [vmem:[%s174 + $0x8d8] sm:$0xf]
      %v565 = vld [vmem:[%s174 + $0x8dc] sm:$0xff]
      %v566 = vld [vmem:[%s174 + $0x8e4] sm:$0xf]
      %v567 = vld [vmem:[%s174 + $0x8e8] sm:$0xff]
      %v568 = vld [vmem:[%s174 + $0x8f0] sm:$0xf]
      %v569 = vld [vmem:[%s174 + $0x8f4] sm:$0xff]
      %v570 = vld [vmem:[%s174 + $0x8fc] sm:$0xf]
      %v571 = vld [vmem:[%s174 + $0x900] sm:$0xff]
      %v572 = vld [vmem:[%s174 + $0x908] sm:$0xf]
      %v573 = vld [vmem:[%s174 + $0x90c] sm:$0xff]
      %v574 = vld [vmem:[%s174 + $0x914] sm:$0xf]
      %v575 = vld [vmem:[%s174 + $0x918] sm:$0xff]
      %v576 = vld [vmem:[%s174 + $0x920] sm:$0xf]
      %v577 = vld [vmem:[%s174 + $0x924] sm:$0xff]
      %v578 = vld [vmem:[%s174 + $0x92c] sm:$0xf]
      %v579 = vld [vmem:[%s174 + $0x930] sm:$0xff]
      %v580 = vld [vmem:[%s174 + $0x938] sm:$0xf]
      %v581 = vld [vmem:[%s174 + $0x93c] sm:$0xff]
      %v582 = vld [vmem:[%s174 + $0x944] sm:$0xf]
      %v583 = vld [vmem:[%s174 + $0x948] sm:$0xff]
      %v584 = vld [vmem:[%s174 + $0x950] sm:$0xf]
      %v585 = vld [vmem:[%s174 + $0x954] sm:$0xff]
      %v586 = vld [vmem:[%s174 + $0x95c] sm:$0xf]
      %v587 = vld [vmem:[%s174 + $0x960] sm:$0xff]
      %v588 = vld [vmem:[%s174 + $0x968] sm:$0xf]
      %v589 = vld [vmem:[%s174 + $0x96c] sm:$0xff]
      %v590 = vld [vmem:[%s174 + $0x974] sm:$0xf]
      %v591 = vld [vmem:[%s174 + $0x978] sm:$0xff]
      %v592 = vld [vmem:[%s174 + $0x980] sm:$0xf]
      %v593 = vld [vmem:[%s174 + $0x984] sm:$0xff]
      %v594 = vld [vmem:[%s174 + $0x98c] sm:$0xf]
      %v595 = vld [vmem:[%s174 + $0x990] sm:$0xff]
      %v596 = vld [vmem:[%s174 + $0x998] sm:$0xf]
      %v597 = vld [vmem:[%s174 + $0x99c] sm:$0xff]
      %v598 = vld [vmem:[%s174 + $0x9a4] sm:$0xf]
      %v599 = vld [vmem:[%s174 + $0x9a8] sm:$0xff]
      %v600 = vld [vmem:[%s174 + $0x9b0] sm:$0xf]
      %v601 = vld [vmem:[%s174 + $0x9b4] sm:$0xff]
      %v602 = vld [vmem:[%s174 + $0x9bc] sm:$0xf]
      %v603 = vld [vmem:[%s174 + $0x9c0] sm:$0xff]
      %v604 = vld [vmem:[%s174 + $0x9c8] sm:$0xf]
      %v605 = vld [vmem:[%s174 + $0x9cc] sm:$0xff]
      %v606 = vld [vmem:[%s174 + $0x9d4] sm:$0xf]
      %v607 = vld [vmem:[%s174 + $0x9d8] sm:$0xff]
      %v608 = vld [vmem:[%s174 + $0x9e0] sm:$0xf]
      %v609 = vld [vmem:[%s174 + $0x9e4] sm:$0xff]
      %v610 = vld [vmem:[%s174 + $0x9ec] sm:$0xf]
      %v611 = vld [vmem:[%s174 + $0x9f0] sm:$0xff]
      %v612 = vld [vmem:[%s174 + $0x9f8] sm:$0xf]
      %v613 = vld [vmem:[%s174 + $0x9fc] sm:$0xff]
      %v614 = vld [vmem:[%s174 + $0xa04] sm:$0xf]
      %v615 = vld [vmem:[%s174 + $0xa08] sm:$0xff]
      %v616 = vld [vmem:[%s174 + $0xa10] sm:$0xf]
      %v617 = vld [vmem:[%s174 + $0xa14] sm:$0xff]
      %v618 = vld [vmem:[%s174 + $0xa1c] sm:$0xf]
      %v619 = vld [vmem:[%s174 + $0xa20] sm:$0xff]
      %v620 = vld [vmem:[%s174 + $0xa28] sm:$0xf]
      %v621 = vld [vmem:[%s174 + $0xa2c] sm:$0xff]
      %v622 = vld [vmem:[%s174 + $0xa34] sm:$0xf]
      %v623 = vld [vmem:[%s174 + $0xa38] sm:$0xff]
      %v624 = vld [vmem:[%s174 + $0xa40] sm:$0xf]
      %v625 = vld [vmem:[%s174 + $0xa44] sm:$0xff]
      %v626 = vld [vmem:[%s174 + $0xa4c] sm:$0xf]
      %v627 = vld [vmem:[%s174 + $0xa50] sm:$0xff]
      %v628 = vld [vmem:[%s174 + $0xa58] sm:$0xf]
      %v629 = vld [vmem:[%s174 + $0xa5c] sm:$0xff]
      %v630 = vld [vmem:[%s174 + $0xa64] sm:$0xf]
      %v631 = vld [vmem:[%s174 + $0xa68] sm:$0xff]
      %v632 = vld [vmem:[%s174 + $0xa70] sm:$0xf]
      %v633 = vld [vmem:[%s174 + $0xa74] sm:$0xff]
      %v634 = vld [vmem:[%s174 + $0xa7c] sm:$0xf]
      %v635 = vld [vmem:[%s174 + $0xa80] sm:$0xff]
      %v636 = vld [vmem:[%s174 + $0xa88] sm:$0xf]
      %v637 = vld [vmem:[%s174 + $0xa8c] sm:$0xff]
      %v638 = vld [vmem:[%s174 + $0xa94] sm:$0xf]
      %v639 = vld [vmem:[%s174 + $0xa98] sm:$0xff]
      %v640 = vld [vmem:[%s174 + $0xaa0] sm:$0xf]
      %v641 = vld [vmem:[%s174 + $0xaa4] sm:$0xff]
      %v642 = vld [vmem:[%s174 + $0xaac] sm:$0xf]
      %v643 = vld [vmem:[%s174 + $0xab0] sm:$0xff]
      %v644 = vld [vmem:[%s174 + $0xab8] sm:$0xf]
      %v645 = vld [vmem:[%s174 + $0xabc] sm:$0xff]
      %v646 = vld [vmem:[%s174 + $0xac4] sm:$0xf]
      %v647 = vld [vmem:[%s174 + $0xac8] sm:$0xff]
      %v648 = vld [vmem:[%s174 + $0xad0] sm:$0xf]
      %v649 = vld [vmem:[%s174 + $0xad4] sm:$0xff]
      %v650 = vld [vmem:[%s174 + $0xadc] sm:$0xf]
      %v651 = vld [vmem:[%s174 + $0xae0] sm:$0xff]
      %v652 = vld [vmem:[%s174 + $0xae8] sm:$0xf]
      %v653 = vld [vmem:[%s174 + $0xaec] sm:$0xff]
      %v654 = vld [vmem:[%s174 + $0xaf4] sm:$0xf]
      %v655 = vld [vmem:[%s174 + $0xaf8] sm:$0xff]
      %v656 = vld [vmem:[%s174 + $0xb00] sm:$0xf]
      %v657 = vld [vmem:[%s174 + $0xb04] sm:$0xff]
      %v658 = vld [vmem:[%s174 + $0xb0c] sm:$0xf]
      %v659 = vld [vmem:[%s174 + $0xb10] sm:$0xff]
      %v660 = vld [vmem:[%s174 + $0xb18] sm:$0xf]
      %v661 = vld [vmem:[%s174 + $0xb1c] sm:$0xff]
      %v662 = vld [vmem:[%s174 + $0xb24] sm:$0xf]
      %v663 = vld [vmem:[%s174 + $0xb28] sm:$0xff]
      %v664 = vld [vmem:[%s174 + $0xb30] sm:$0xf]
      %v665 = vld [vmem:[%s174 + $0xb34] sm:$0xff]
      %v666 = vld [vmem:[%s174 + $0xb3c] sm:$0xf]
      %v667 = vld [vmem:[%s174 + $0xb40] sm:$0xff]
      %v668 = vld [vmem:[%s174 + $0xb48] sm:$0xf]
      %v669 = vld [vmem:[%s174 + $0xb4c] sm:$0xff]
      %v670 = vld [vmem:[%s174 + $0xb54] sm:$0xf]
      %v671 = vld [vmem:[%s174 + $0xb58] sm:$0xff]
      %v672 = vld [vmem:[%s174 + $0xb60] sm:$0xf]
      %v673 = vld [vmem:[%s174 + $0xb64] sm:$0xff]
      %v674 = vld [vmem:[%s174 + $0xb6c] sm:$0xf]
      %v675 = vld [vmem:[%s174 + $0xb70] sm:$0xff]
      %v676 = vld [vmem:[%s174 + $0xb78] sm:$0xf]
      %v677 = vld [vmem:[%s174 + $0xb7c] sm:$0xff]
      %v678 = vld [vmem:[%s174 + $0xb84] sm:$0xf]
      %v679 = vld [vmem:[%s174 + $0xb88] sm:$0xff]
      %v680 = vld [vmem:[%s174 + $0xb90] sm:$0xf]
      %v681 = vld [vmem:[%s174 + $0xb94] sm:$0xff]
      %v682 = vld [vmem:[%s174 + $0xb9c] sm:$0xf]
      %v683 = vld [vmem:[%s174 + $0xba0] sm:$0xff]
      %v684 = vld [vmem:[%s174 + $0xba8] sm:$0xf]
      %v685 = vld [vmem:[%s174 + $0xbac] sm:$0xff]
      %v686 = vld [vmem:[%s174 + $0xbb4] sm:$0xf]
      %v687 = vld [vmem:[%s174 + $0xbb8] sm:$0xff]
      %v688 = vld [vmem:[%s174 + $0xbc0] sm:$0xf]
      %v689 = vld [vmem:[%s174 + $0xbc4] sm:$0xff]
      %v690 = vld [vmem:[%s174 + $0xbcc] sm:$0xf]
      %v691 = vld [vmem:[%s174 + $0xbd0] sm:$0xff]
      %v692 = vld [vmem:[%s174 + $0xbd8] sm:$0xf]
      %v693 = vld [vmem:[%s174 + $0xbdc] sm:$0xff]
      %v694 = vld [vmem:[%s174 + $0xbe4] sm:$0xf]
      %v695 = vld [vmem:[%s174 + $0xbe8] sm:$0xff]
      %v696 = vld [vmem:[%s174 + $0xbf0] sm:$0xf]
      %v697 = vld [vmem:[%s174 + $0xbf4] sm:$0xff]
      %v698 = vld [vmem:[%s174 + $0xbfc] sm:$0xf]
      %v699 = vld [vmem:[%s1] sm:$0xf]
      %v700 = vld [vmem:[%s1 + $0x4] sm:$0xf]
      %v701 = vld [vmem:[%s1 + $0x8] sm:$0xf]
      %v702 = vld [vmem:[%s1 + $0xc] sm:$0xf]
      %v703 = vld [vmem:[%s1 + $0x10] sm:$0xf]
      %v704 = vld [vmem:[%s1 + $0x14] sm:$0xf]
      %v705 = vld [vmem:[%s1 + $0x18] sm:$0xf]
      %v706 = vld [vmem:[%s1 + $0x1c] sm:$0xf]
      %v707 = vld [vmem:[%s1 + $0x20] sm:$0xf]
      %v708 = vld [vmem:[%s1 + $0x24] sm:$0xf]
      %v709 = vld [vmem:[%s1 + $0x28] sm:$0xf]
      %v710 = vld [vmem:[%s1 + $0x2c] sm:$0xf]
      %v711 = vld [vmem:[%s1 + $0x30] sm:$0xf]
      %v712 = vld [vmem:[%s1 + $0x34] sm:$0xf]
      %v713 = vld [vmem:[%s1 + $0x38] sm:$0xf]
      %v714 = vld [vmem:[%s1 + $0x3c] sm:$0xf]
      %v715 = vld [vmem:[%s1 + $0x40] sm:$0xf]
      %v716 = vld [vmem:[%s1 + $0x44] sm:$0xf]
      %v717 = vld [vmem:[%s1 + $0x48] sm:$0xf]
      %v718 = vld [vmem:[%s1 + $0x4c] sm:$0xf]
      %v719 = vld [vmem:[%s1 + $0x50] sm:$0xf]
      %v720 = vld [vmem:[%s1 + $0x54] sm:$0xf]
      %v721 = vld [vmem:[%s1 + $0x58] sm:$0xf]
      %v722 = vld [vmem:[%s1 + $0x5c] sm:$0xf]
      %v723 = vld [vmem:[%s1 + $0x60] sm:$0xf]
      %v724 = vld [vmem:[%s1 + $0x64] sm:$0xf]
      %v725 = vld [vmem:[%s1 + $0x68] sm:$0xf]
      %v726 = vld [vmem:[%s1 + $0x6c] sm:$0xf]
      %v727 = vld [vmem:[%s1 + $0x70] sm:$0xf]
      %v728 = vld [vmem:[%s1 + $0x74] sm:$0xf]
      %v729 = vld [vmem:[%s1 + $0x78] sm:$0xf]
      %v730 = vld [vmem:[%s1 + $0x7c] sm:$0xf]
      %v731 = vld [vmem:[%s1 + $0x80] sm:$0xf]
      %v732 = vld [vmem:[%s1 + $0x84] sm:$0xf]
      %v733 = vld [vmem:[%s1 + $0x88] sm:$0xf]
      %v734 = vld [vmem:[%s1 + $0x8c] sm:$0xf]
      %v1247 = vunpack.c.l.b16 %v187
      %v1248 = vunpack.c.h.b16 %v187
      %v1249 = vunpack.c.l.b16 %v188
      %v1250 = vunpack.c.l.b16 %v189
      %v1251 = vunpack.c.h.b16 %v189
      %v1252 = vunpack.c.l.b16 %v190
      %v1253 = vunpack.c.l.b16 %v191
      %v1254 = vunpack.c.h.b16 %v191
      %v1255 = vunpack.c.l.b16 %v192
      %v1256 = vunpack.c.l.b16 %v193
      %v1257 = vunpack.c.h.b16 %v193
      %v1258 = vunpack.c.l.b16 %v194
      %v1259 = vunpack.c.l.b16 %v195
      %v1260 = vunpack.c.h.b16 %v195
      %v1261 = vunpack.c.l.b16 %v196
      %v1262 = vunpack.c.l.b16 %v197
      %v1263 = vunpack.c.h.b16 %v197
      %v1264 = vunpack.c.l.b16 %v198
      %v1265 = vunpack.c.l.b16 %v199
      %v1266 = vunpack.c.h.b16 %v199
      %v1267 = vunpack.c.l.b16 %v200
      %v1268 = vunpack.c.l.b16 %v201
      %v1269 = vunpack.c.h.b16 %v201
      %v1270 = vunpack.c.l.b16 %v202
      %v1271 = vunpack.c.l.b16 %v203
      %v1272 = vunpack.c.h.b16 %v203
      %v1273 = vunpack.c.l.b16 %v204
      %v1274 = vunpack.c.l.b16 %v205
      %v1275 = vunpack.c.h.b16 %v205
      %v1276 = vunpack.c.l.b16 %v206
      %v1277 = vunpack.c.l.b16 %v207
      %v1278 = vunpack.c.h.b16 %v207
      %v1279 = vunpack.c.l.b16 %v208
      %v1280 = vunpack.c.l.b16 %v209
      %v1281 = vunpack.c.h.b16 %v209
      %v1282 = vunpack.c.l.b16 %v210
      %v1283 = vunpack.c.l.b16 %v211
      %v1284 = vunpack.c.h.b16 %v211
      %v1285 = vunpack.c.l.b16 %v212
      %v1286 = vunpack.c.l.b16 %v213
      %v1287 = vunpack.c.h.b16 %v213
      %v1288 = vunpack.c.l.b16 %v214
      %v1289 = vunpack.c.l.b16 %v215
      %v1290 = vunpack.c.h.b16 %v215
      %v1291 = vunpack.c.l.b16 %v216
      %v1292 = vunpack.c.l.b16 %v217
      %v1293 = vunpack.c.h.b16 %v217
      %v1294 = vunpack.c.l.b16 %v218
      %v1295 = vunpack.c.l.b16 %v219
      %v1296 = vunpack.c.h.b16 %v219
      %v1297 = vunpack.c.l.b16 %v220
      %v1298 = vunpack.c.l.b16 %v221
      %v1299 = vunpack.c.h.b16 %v221
      %v1300 = vunpack.c.l.b16 %v222
      %v1301 = vunpack.c.l.b16 %v223
      %v1302 = vunpack.c.h.b16 %v223
      %v1303 = vunpack.c.l.b16 %v224
      %v1304 = vunpack.c.l.b16 %v225
      %v1305 = vunpack.c.h.b16 %v225
      %v1306 = vunpack.c.l.b16 %v226
      %v1307 = vunpack.c.l.b16 %v227
      %v1308 = vunpack.c.h.b16 %v227
      %v1309 = vunpack.c.l.b16 %v228
      %v1310 = vunpack.c.l.b16 %v229
      %v1311 = vunpack.c.h.b16 %v229
      %v1312 = vunpack.c.l.b16 %v230
      %v1313 = vunpack.c.l.b16 %v231
      %v1314 = vunpack.c.h.b16 %v231
      %v1315 = vunpack.c.l.b16 %v232
      %v1316 = vunpack.c.l.b16 %v233
      %v1317 = vunpack.c.h.b16 %v233
      %v1318 = vunpack.c.l.b16 %v234
      %v1319 = vunpack.c.l.b16 %v235
      %v1320 = vunpack.c.h.b16 %v235
      %v1321 = vunpack.c.l.b16 %v236
      %v1322 = vunpack.c.l.b16 %v237
      %v1323 = vunpack.c.h.b16 %v237
      %v1324 = vunpack.c.l.b16 %v238
      %v1325 = vunpack.c.l.b16 %v239
      %v1326 = vunpack.c.h.b16 %v239
      %v1327 = vunpack.c.l.b16 %v240
      %v1328 = vunpack.c.l.b16 %v241
      %v1329 = vunpack.c.h.b16 %v241
      %v1330 = vunpack.c.l.b16 %v242
      %v1331 = vunpack.c.l.b16 %v243
      %v1332 = vunpack.c.h.b16 %v243
      %v1333 = vunpack.c.l.b16 %v244
      %v1334 = vunpack.c.l.b16 %v245
      %v1335 = vunpack.c.h.b16 %v245
      %v1336 = vunpack.c.l.b16 %v246
      %v1337 = vunpack.c.l.b16 %v247
      %v1338 = vunpack.c.h.b16 %v247
      %v1339 = vunpack.c.l.b16 %v248
      %v1340 = vunpack.c.l.b16 %v249
      %v1341 = vunpack.c.h.b16 %v249
      %v1342 = vunpack.c.l.b16 %v250
      %v1343 = vunpack.c.l.b16 %v251
      %v1344 = vunpack.c.h.b16 %v251
      %v1345 = vunpack.c.l.b16 %v252
      %v1346 = vunpack.c.l.b16 %v253
      %v1347 = vunpack.c.h.b16 %v253
      %v1348 = vunpack.c.l.b16 %v254
      %v1349 = vunpack.c.l.b16 %v255
      %v1350 = vunpack.c.h.b16 %v255
      %v1351 = vunpack.c.l.b16 %v256
      %v1352 = vunpack.c.l.b16 %v257
      %v1353 = vunpack.c.h.b16 %v257
      %v1354 = vunpack.c.l.b16 %v258
      %v1355 = vunpack.c.l.b16 %v259
      %v1356 = vunpack.c.h.b16 %v259
      %v1357 = vunpack.c.l.b16 %v260
      %v1358 = vunpack.c.l.b16 %v261
      %v1359 = vunpack.c.h.b16 %v261
      %v1360 = vunpack.c.l.b16 %v262
      %v1361 = vunpack.c.l.b16 %v263
      %v1362 = vunpack.c.h.b16 %v263
      %v1363 = vunpack.c.l.b16 %v264
      %v1364 = vunpack.c.l.b16 %v265
      %v1365 = vunpack.c.h.b16 %v265
      %v1366 = vunpack.c.l.b16 %v266
      %v1367 = vunpack.c.l.b16 %v267
      %v1368 = vunpack.c.h.b16 %v267
      %v1369 = vunpack.c.l.b16 %v268
      %v1370 = vunpack.c.l.b16 %v269
      %v1371 = vunpack.c.h.b16 %v269
      %v1372 = vunpack.c.l.b16 %v270
      %v1373 = vunpack.c.l.b16 %v271
      %v1374 = vunpack.c.h.b16 %v271
      %v1375 = vunpack.c.l.b16 %v272
      %v1376 = vunpack.c.l.b16 %v273
      %v1377 = vunpack.c.h.b16 %v273
      %v1378 = vunpack.c.l.b16 %v274
      %v1379 = vunpack.c.l.b16 %v275
      %v1380 = vunpack.c.h.b16 %v275
      %v1381 = vunpack.c.l.b16 %v276
      %v1382 = vunpack.c.l.b16 %v277
      %v1383 = vunpack.c.h.b16 %v277
      %v1384 = vunpack.c.l.b16 %v278
      %v1385 = vunpack.c.l.b16 %v279
      %v1386 = vunpack.c.h.b16 %v279
      %v1387 = vunpack.c.l.b16 %v280
      %v1388 = vunpack.c.l.b16 %v281
      %v1389 = vunpack.c.h.b16 %v281
      %v1390 = vunpack.c.l.b16 %v282
      %v1391 = vunpack.c.l.b16 %v283
      %v1392 = vunpack.c.h.b16 %v283
      %v1393 = vunpack.c.l.b16 %v284
      %v1394 = vunpack.c.l.b16 %v285
      %v1395 = vunpack.c.h.b16 %v285
      %v1396 = vunpack.c.l.b16 %v286
      %v1397 = vunpack.c.l.b16 %v287
      %v1398 = vunpack.c.h.b16 %v287
      %v1399 = vunpack.c.l.b16 %v288
      %v1400 = vunpack.c.l.b16 %v289
      %v1401 = vunpack.c.h.b16 %v289
      %v1402 = vunpack.c.l.b16 %v290
      %v1403 = vunpack.c.l.b16 %v291
      %v1404 = vunpack.c.h.b16 %v291
      %v1405 = vunpack.c.l.b16 %v292
      %v1406 = vunpack.c.l.b16 %v293
      %v1407 = vunpack.c.h.b16 %v293
      %v1408 = vunpack.c.l.b16 %v294
      %v1409 = vunpack.c.l.b16 %v295
      %v1410 = vunpack.c.h.b16 %v295
      %v1411 = vunpack.c.l.b16 %v296
      %v1412 = vunpack.c.l.b16 %v297
      %v1413 = vunpack.c.h.b16 %v297
      %v1414 = vunpack.c.l.b16 %v298
      %v1415 = vunpack.c.l.b16 %v299
      %v1416 = vunpack.c.h.b16 %v299
      %v1417 = vunpack.c.l.b16 %v300
      %v1418 = vunpack.c.l.b16 %v301
      %v1419 = vunpack.c.h.b16 %v301
      %v1420 = vunpack.c.l.b16 %v302
      %v1421 = vunpack.c.l.b16 %v303
      %v1422 = vunpack.c.h.b16 %v303
      %v1423 = vunpack.c.l.b16 %v304
      %v1424 = vunpack.c.l.b16 %v305
      %v1425 = vunpack.c.h.b16 %v305
      %v1426 = vunpack.c.l.b16 %v306
      %v1427 = vunpack.c.l.b16 %v307
      %v1428 = vunpack.c.h.b16 %v307
      %v1429 = vunpack.c.l.b16 %v308
      %v1430 = vunpack.c.l.b16 %v309
      %v1431 = vunpack.c.h.b16 %v309
      %v1432 = vunpack.c.l.b16 %v310
      %v1433 = vunpack.c.l.b16 %v311
      %v1434 = vunpack.c.h.b16 %v311
      %v1435 = vunpack.c.l.b16 %v312
      %v1436 = vunpack.c.l.b16 %v313
      %v1437 = vunpack.c.h.b16 %v313
      %v1438 = vunpack.c.l.b16 %v314
      %v1439 = vunpack.c.l.b16 %v315
      %v1440 = vunpack.c.h.b16 %v315
      %v1441 = vunpack.c.l.b16 %v316
      %v1442 = vunpack.c.l.b16 %v317
      %v1443 = vunpack.c.h.b16 %v317
      %v1444 = vunpack.c.l.b16 %v318
      %v1445 = vunpack.c.l.b16 %v319
      %v1446 = vunpack.c.h.b16 %v319
      %v1447 = vunpack.c.l.b16 %v320
      %v1448 = vunpack.c.l.b16 %v321
      %v1449 = vunpack.c.h.b16 %v321
      %v1450 = vunpack.c.l.b16 %v322
      %v1451 = vunpack.c.l.b16 %v323
      %v1452 = vunpack.c.h.b16 %v323
      %v1453 = vunpack.c.l.b16 %v324
      %v1454 = vunpack.c.l.b16 %v325
      %v1455 = vunpack.c.h.b16 %v325
      %v1456 = vunpack.c.l.b16 %v326
      %v1457 = vunpack.c.l.b16 %v327
      %v1458 = vunpack.c.h.b16 %v327
      %v1459 = vunpack.c.l.b16 %v328
      %v1460 = vunpack.c.l.b16 %v329
      %v1461 = vunpack.c.h.b16 %v329
      %v1462 = vunpack.c.l.b16 %v330
      %v1463 = vunpack.c.l.b16 %v331
      %v1464 = vunpack.c.h.b16 %v331
      %v1465 = vunpack.c.l.b16 %v332
      %v1466 = vunpack.c.l.b16 %v333
      %v1467 = vunpack.c.h.b16 %v333
      %v1468 = vunpack.c.l.b16 %v334
      %v1469 = vunpack.c.l.b16 %v335
      %v1470 = vunpack.c.h.b16 %v335
      %v1471 = vunpack.c.l.b16 %v336
      %v1472 = vunpack.c.l.b16 %v337
      %v1473 = vunpack.c.h.b16 %v337
      %v1474 = vunpack.c.l.b16 %v338
      %v1475 = vunpack.c.l.b16 %v339
      %v1476 = vunpack.c.h.b16 %v339
      %v1477 = vunpack.c.l.b16 %v340
      %v1478 = vunpack.c.l.b16 %v341
      %v1479 = vunpack.c.h.b16 %v341
      %v1480 = vunpack.c.l.b16 %v342
      %v1481 = vunpack.c.l.b16 %v343
      %v1482 = vunpack.c.h.b16 %v343
      %v1483 = vunpack.c.l.b16 %v344
      %v1484 = vunpack.c.l.b16 %v345
      %v1485 = vunpack.c.h.b16 %v345
      %v1486 = vunpack.c.l.b16 %v346
      %v1487 = vunpack.c.l.b16 %v347
      %v1488 = vunpack.c.h.b16 %v347
      %v1489 = vunpack.c.l.b16 %v348
      %v1490 = vunpack.c.l.b16 %v349
      %v1491 = vunpack.c.h.b16 %v349
      %v1492 = vunpack.c.l.b16 %v350
      %v1493 = vunpack.c.l.b16 %v351
      %v1494 = vunpack.c.h.b16 %v351
      %v1495 = vunpack.c.l.b16 %v352
      %v1496 = vunpack.c.l.b16 %v353
      %v1497 = vunpack.c.h.b16 %v353
      %v1498 = vunpack.c.l.b16 %v354
      %v1499 = vunpack.c.l.b16 %v355
      %v1500 = vunpack.c.h.b16 %v355
      %v1501 = vunpack.c.l.b16 %v356
      %v1502 = vunpack.c.l.b16 %v357
      %v1503 = vunpack.c.h.b16 %v357
      %v1504 = vunpack.c.l.b16 %v358
      %v1505 = vunpack.c.l.b16 %v359
      %v1506 = vunpack.c.h.b16 %v359
      %v1507 = vunpack.c.l.b16 %v360
      %v1508 = vunpack.c.l.b16 %v361
      %v1509 = vunpack.c.h.b16 %v361
      %v1510 = vunpack.c.l.b16 %v362
      %v1511 = vunpack.c.l.b16 %v363
      %v1512 = vunpack.c.h.b16 %v363
      %v1513 = vunpack.c.l.b16 %v364
      %v1514 = vunpack.c.l.b16 %v365
      %v1515 = vunpack.c.h.b16 %v365
      %v1516 = vunpack.c.l.b16 %v366
      %v1517 = vunpack.c.l.b16 %v367
      %v1518 = vunpack.c.h.b16 %v367
      %v1519 = vunpack.c.l.b16 %v368
      %v1520 = vunpack.c.l.b16 %v369
      %v1521 = vunpack.c.h.b16 %v369
      %v1522 = vunpack.c.l.b16 %v370
      %v1523 = vunpack.c.l.b16 %v371
      %v1524 = vunpack.c.h.b16 %v371
      %v1525 = vunpack.c.l.b16 %v372
      %v1526 = vunpack.c.l.b16 %v373
      %v1527 = vunpack.c.h.b16 %v373
      %v1528 = vunpack.c.l.b16 %v374
      %v1529 = vunpack.c.l.b16 %v375
      %v1530 = vunpack.c.h.b16 %v375
      %v1531 = vunpack.c.l.b16 %v376
      %v1532 = vunpack.c.l.b16 %v377
      %v1533 = vunpack.c.h.b16 %v377
      %v1534 = vunpack.c.l.b16 %v378
      %v1535 = vunpack.c.l.b16 %v379
      %v1536 = vunpack.c.h.b16 %v379
      %v1537 = vunpack.c.l.b16 %v380
      %v1538 = vunpack.c.l.b16 %v381
      %v1539 = vunpack.c.h.b16 %v381
      %v1540 = vunpack.c.l.b16 %v382
      %v1541 = vunpack.c.l.b16 %v383
      %v1542 = vunpack.c.h.b16 %v383
      %v1543 = vunpack.c.l.b16 %v384
      %v1544 = vunpack.c.l.b16 %v385
      %v1545 = vunpack.c.h.b16 %v385
      %v1546 = vunpack.c.l.b16 %v386
      %v1547 = vunpack.c.l.b16 %v387
      %v1548 = vunpack.c.h.b16 %v387
      %v1549 = vunpack.c.l.b16 %v388
      %v1550 = vunpack.c.l.b16 %v389
      %v1551 = vunpack.c.h.b16 %v389
      %v1552 = vunpack.c.l.b16 %v390
      %v1553 = vunpack.c.l.b16 %v391
      %v1554 = vunpack.c.h.b16 %v391
      %v1555 = vunpack.c.l.b16 %v392
      %v1556 = vunpack.c.l.b16 %v393
      %v1557 = vunpack.c.h.b16 %v393
      %v1558 = vunpack.c.l.b16 %v394
      %v1559 = vunpack.c.l.b16 %v395
      %v1560 = vunpack.c.h.b16 %v395
      %v1561 = vunpack.c.l.b16 %v396
      %v1562 = vunpack.c.l.b16 %v397
      %v1563 = vunpack.c.h.b16 %v397
      %v1564 = vunpack.c.l.b16 %v398
      %v1565 = vunpack.c.l.b16 %v399
      %v1566 = vunpack.c.h.b16 %v399
      %v1567 = vunpack.c.l.b16 %v400
      %v1568 = vunpack.c.l.b16 %v401
      %v1569 = vunpack.c.h.b16 %v401
      %v1570 = vunpack.c.l.b16 %v402
      %v1571 = vunpack.c.l.b16 %v403
      %v1572 = vunpack.c.h.b16 %v403
      %v1573 = vunpack.c.l.b16 %v404
      %v1574 = vunpack.c.l.b16 %v405
      %v1575 = vunpack.c.h.b16 %v405
      %v1576 = vunpack.c.l.b16 %v406
      %v1577 = vunpack.c.l.b16 %v407
      %v1578 = vunpack.c.h.b16 %v407
      %v1579 = vunpack.c.l.b16 %v408
      %v1580 = vunpack.c.l.b16 %v409
      %v1581 = vunpack.c.h.b16 %v409
      %v1582 = vunpack.c.l.b16 %v410
      %v1583 = vunpack.c.l.b16 %v411
      %v1584 = vunpack.c.h.b16 %v411
      %v1585 = vunpack.c.l.b16 %v412
      %v1586 = vunpack.c.l.b16 %v413
      %v1587 = vunpack.c.h.b16 %v413
      %v1588 = vunpack.c.l.b16 %v414
      %v1589 = vunpack.c.l.b16 %v415
      %v1590 = vunpack.c.h.b16 %v415
      %v1591 = vunpack.c.l.b16 %v416
      %v1592 = vunpack.c.l.b16 %v417
      %v1593 = vunpack.c.h.b16 %v417
      %v1594 = vunpack.c.l.b16 %v418
      %v1595 = vunpack.c.l.b16 %v419
      %v1596 = vunpack.c.h.b16 %v419
      %v1597 = vunpack.c.l.b16 %v420
      %v1598 = vunpack.c.l.b16 %v421
      %v1599 = vunpack.c.h.b16 %v421
      %v1600 = vunpack.c.l.b16 %v422
      %v1601 = vunpack.c.l.b16 %v423
      %v1602 = vunpack.c.h.b16 %v423
      %v1603 = vunpack.c.l.b16 %v424
      %v1604 = vunpack.c.l.b16 %v425
      %v1605 = vunpack.c.h.b16 %v425
      %v1606 = vunpack.c.l.b16 %v426
      %v1607 = vunpack.c.l.b16 %v427
      %v1608 = vunpack.c.h.b16 %v427
      %v1609 = vunpack.c.l.b16 %v428
      %v1610 = vunpack.c.l.b16 %v429
      %v1611 = vunpack.c.h.b16 %v429
      %v1612 = vunpack.c.l.b16 %v430
      %v1613 = vunpack.c.l.b16 %v431
      %v1614 = vunpack.c.h.b16 %v431
      %v1615 = vunpack.c.l.b16 %v432
      %v1616 = vunpack.c.l.b16 %v433
      %v1617 = vunpack.c.h.b16 %v433
      %v1618 = vunpack.c.l.b16 %v434
      %v1619 = vunpack.c.l.b16 %v435
      %v1620 = vunpack.c.h.b16 %v435
      %v1621 = vunpack.c.l.b16 %v436
      %v1622 = vunpack.c.l.b16 %v437
      %v1623 = vunpack.c.h.b16 %v437
      %v1624 = vunpack.c.l.b16 %v438
      %v1625 = vunpack.c.l.b16 %v439
      %v1626 = vunpack.c.h.b16 %v439
      %v1627 = vunpack.c.l.b16 %v440
      %v1628 = vunpack.c.l.b16 %v441
      %v1629 = vunpack.c.h.b16 %v441
      %v1630 = vunpack.c.l.b16 %v442
      %v1631 = vunpack.c.l.b16 %v443
      %v1632 = vunpack.c.h.b16 %v443
      %v1633 = vunpack.c.l.b16 %v444
      %v1634 = vunpack.c.l.b16 %v445
      %v1635 = vunpack.c.h.b16 %v445
      %v1636 = vunpack.c.l.b16 %v446
      %v1637 = vunpack.c.l.b16 %v447
      %v1638 = vunpack.c.h.b16 %v447
      %v1639 = vunpack.c.l.b16 %v448
      %v1640 = vunpack.c.l.b16 %v449
      %v1641 = vunpack.c.h.b16 %v449
      %v1642 = vunpack.c.l.b16 %v450
      %v1643 = vunpack.c.l.b16 %v451
      %v1644 = vunpack.c.h.b16 %v451
      %v1645 = vunpack.c.l.b16 %v452
      %v1646 = vunpack.c.l.b16 %v453
      %v1647 = vunpack.c.h.b16 %v453
      %v1648 = vunpack.c.l.b16 %v454
      %v1649 = vunpack.c.l.b16 %v455
      %v1650 = vunpack.c.h.b16 %v455
      %v1651 = vunpack.c.l.b16 %v456
      %v1652 = vunpack.c.l.b16 %v457
      %v1653 = vunpack.c.h.b16 %v457
      %v1654 = vunpack.c.l.b16 %v458
      %v1655 = vunpack.c.l.b16 %v459
      %v1656 = vunpack.c.h.b16 %v459
      %v1657 = vunpack.c.l.b16 %v460
      %v1658 = vunpack.c.l.b16 %v461
      %v1659 = vunpack.c.h.b16 %v461
      %v1660 = vunpack.c.l.b16 %v462
      %v1661 = vunpack.c.l.b16 %v463
      %v1662 = vunpack.c.h.b16 %v463
      %v1663 = vunpack.c.l.b16 %v464
      %v1664 = vunpack.c.l.b16 %v465
      %v1665 = vunpack.c.h.b16 %v465
      %v1666 = vunpack.c.l.b16 %v466
      %v1667 = vunpack.c.l.b16 %v467
      %v1668 = vunpack.c.h.b16 %v467
      %v1669 = vunpack.c.l.b16 %v468
      %v1670 = vunpack.c.l.b16 %v469
      %v1671 = vunpack.c.h.b16 %v469
      %v1672 = vunpack.c.l.b16 %v470
      %v1673 = vunpack.c.l.b16 %v471
      %v1674 = vunpack.c.h.b16 %v471
      %v1675 = vunpack.c.l.b16 %v472
      %v1676 = vunpack.c.l.b16 %v473
      %v1677 = vunpack.c.h.b16 %v473
      %v1678 = vunpack.c.l.b16 %v474
      %v1679 = vunpack.c.l.b16 %v475
      %v1680 = vunpack.c.h.b16 %v475
      %v1681 = vunpack.c.l.b16 %v476
      %v1682 = vunpack.c.l.b16 %v477
      %v1683 = vunpack.c.h.b16 %v477
      %v1684 = vunpack.c.l.b16 %v478
      %v1685 = vunpack.c.l.b16 %v479
      %v1686 = vunpack.c.h.b16 %v479
      %v1687 = vunpack.c.l.b16 %v480
      %v1688 = vunpack.c.l.b16 %v481
      %v1689 = vunpack.c.h.b16 %v481
      %v1690 = vunpack.c.l.b16 %v482
      %v1691 = vunpack.c.l.b16 %v483
      %v1692 = vunpack.c.h.b16 %v483
      %v1693 = vunpack.c.l.b16 %v484
      %v1694 = vunpack.c.l.b16 %v485
      %v1695 = vunpack.c.h.b16 %v485
      %v1696 = vunpack.c.l.b16 %v486
      %v1697 = vunpack.c.l.b16 %v487
      %v1698 = vunpack.c.h.b16 %v487
      %v1699 = vunpack.c.l.b16 %v488
      %v1700 = vunpack.c.l.b16 %v489
      %v1701 = vunpack.c.h.b16 %v489
      %v1702 = vunpack.c.l.b16 %v490
      %v1703 = vunpack.c.l.b16 %v491
      %v1704 = vunpack.c.h.b16 %v491
      %v1705 = vunpack.c.l.b16 %v492
      %v1706 = vunpack.c.l.b16 %v493
      %v1707 = vunpack.c.h.b16 %v493
      %v1708 = vunpack.c.l.b16 %v494
      %v1709 = vunpack.c.l.b16 %v495
      %v1710 = vunpack.c.h.b16 %v495
      %v1711 = vunpack.c.l.b16 %v496
      %v1712 = vunpack.c.l.b16 %v497
      %v1713 = vunpack.c.h.b16 %v497
      %v1714 = vunpack.c.l.b16 %v498
      %v1715 = vunpack.c.l.b16 %v499
      %v1716 = vunpack.c.h.b16 %v499
      %v1717 = vunpack.c.l.b16 %v500
      %v1718 = vunpack.c.l.b16 %v501
      %v1719 = vunpack.c.h.b16 %v501
      %v1720 = vunpack.c.l.b16 %v502
      %v1721 = vunpack.c.l.b16 %v503
      %v1722 = vunpack.c.h.b16 %v503
      %v1723 = vunpack.c.l.b16 %v504
      %v1724 = vunpack.c.l.b16 %v505
      %v1725 = vunpack.c.h.b16 %v505
      %v1726 = vunpack.c.l.b16 %v506
      %v1727 = vunpack.c.l.b16 %v507
      %v1728 = vunpack.c.h.b16 %v507
      %v1729 = vunpack.c.l.b16 %v508
      %v1730 = vunpack.c.l.b16 %v509
      %v1731 = vunpack.c.h.b16 %v509
      %v1732 = vunpack.c.l.b16 %v510
      %v1733 = vunpack.c.l.b16 %v511
      %v1734 = vunpack.c.h.b16 %v511
      %v1735 = vunpack.c.l.b16 %v512
      %v1736 = vunpack.c.l.b16 %v513
      %v1737 = vunpack.c.h.b16 %v513
      %v1738 = vunpack.c.l.b16 %v514
      %v1739 = vunpack.c.l.b16 %v515
      %v1740 = vunpack.c.h.b16 %v515
      %v1741 = vunpack.c.l.b16 %v516
      %v1742 = vunpack.c.l.b16 %v517
      %v1743 = vunpack.c.h.b16 %v517
      %v1744 = vunpack.c.l.b16 %v518
      %v1745 = vunpack.c.l.b16 %v519
      %v1746 = vunpack.c.h.b16 %v519
      %v1747 = vunpack.c.l.b16 %v520
      %v1748 = vunpack.c.l.b16 %v521
      %v1749 = vunpack.c.h.b16 %v521
      %v1750 = vunpack.c.l.b16 %v522
      %v1751 = vunpack.c.l.b16 %v523
      %v1752 = vunpack.c.h.b16 %v523
      %v1753 = vunpack.c.l.b16 %v524
      %v1754 = vunpack.c.l.b16 %v525
      %v1755 = vunpack.c.h.b16 %v525
      %v1756 = vunpack.c.l.b16 %v526
      %v1757 = vunpack.c.l.b16 %v527
      %v1758 = vunpack.c.h.b16 %v527
      %v1759 = vunpack.c.l.b16 %v528
      %v1760 = vunpack.c.l.b16 %v529
      %v1761 = vunpack.c.h.b16 %v529
      %v1762 = vunpack.c.l.b16 %v530
      %v1763 = vunpack.c.l.b16 %v531
      %v1764 = vunpack.c.h.b16 %v531
      %v1765 = vunpack.c.l.b16 %v532
      %v1766 = vunpack.c.l.b16 %v533
      %v1767 = vunpack.c.h.b16 %v533
      %v1768 = vunpack.c.l.b16 %v534
      %v1769 = vunpack.c.l.b16 %v535
      %v1770 = vunpack.c.h.b16 %v535
      %v1771 = vunpack.c.l.b16 %v536
      %v1772 = vunpack.c.l.b16 %v537
      %v1773 = vunpack.c.h.b16 %v537
      %v1774 = vunpack.c.l.b16 %v538
      %v1775 = vunpack.c.l.b16 %v539
      %v1776 = vunpack.c.h.b16 %v539
      %v1777 = vunpack.c.l.b16 %v540
      %v1778 = vunpack.c.l.b16 %v541
      %v1779 = vunpack.c.h.b16 %v541
      %v1780 = vunpack.c.l.b16 %v542
      %v1781 = vunpack.c.l.b16 %v543
      %v1782 = vunpack.c.h.b16 %v543
      %v1783 = vunpack.c.l.b16 %v544
      %v1784 = vunpack.c.l.b16 %v545
      %v1785 = vunpack.c.h.b16 %v545
      %v1786 = vunpack.c.l.b16 %v546
      %v1787 = vunpack.c.l.b16 %v547
      %v1788 = vunpack.c.h.b16 %v547
      %v1789 = vunpack.c.l.b16 %v548
      %v1790 = vunpack.c.l.b16 %v549
      %v1791 = vunpack.c.h.b16 %v549
      %v1792 = vunpack.c.l.b16 %v550
      %v1793 = vunpack.c.l.b16 %v551
      %v1794 = vunpack.c.h.b16 %v551
      %v1795 = vunpack.c.l.b16 %v552
      %v1796 = vunpack.c.l.b16 %v553
      %v1797 = vunpack.c.h.b16 %v553
      %v1798 = vunpack.c.l.b16 %v554
      %v1799 = vunpack.c.l.b16 %v555
      %v1800 = vunpack.c.h.b16 %v555
      %v1801 = vunpack.c.l.b16 %v556
      %v1802 = vunpack.c.l.b16 %v557
      %v1803 = vunpack.c.h.b16 %v557
      %v1804 = vunpack.c.l.b16 %v558
      %v1805 = vunpack.c.l.b16 %v559
      %v1806 = vunpack.c.h.b16 %v559
      %v1807 = vunpack.c.l.b16 %v560
      %v1808 = vunpack.c.l.b16 %v561
      %v1809 = vunpack.c.h.b16 %v561
      %v1810 = vunpack.c.l.b16 %v562
      %v1811 = vunpack.c.l.b16 %v563
      %v1812 = vunpack.c.h.b16 %v563
      %v1813 = vunpack.c.l.b16 %v564
      %v1814 = vunpack.c.l.b16 %v565
      %v1815 = vunpack.c.h.b16 %v565
      %v1816 = vunpack.c.l.b16 %v566
      %v1817 = vunpack.c.l.b16 %v567
      %v1818 = vunpack.c.h.b16 %v567
      %v1819 = vunpack.c.l.b16 %v568
      %v1820 = vunpack.c.l.b16 %v569
      %v1821 = vunpack.c.h.b16 %v569
      %v1822 = vunpack.c.l.b16 %v570
      %v1823 = vunpack.c.l.b16 %v571
      %v1824 = vunpack.c.h.b16 %v571
      %v1825 = vunpack.c.l.b16 %v572
      %v1826 = vunpack.c.l.b16 %v573
      %v1827 = vunpack.c.h.b16 %v573
      %v1828 = vunpack.c.l.b16 %v574
      %v1829 = vunpack.c.l.b16 %v575
      %v1830 = vunpack.c.h.b16 %v575
      %v1831 = vunpack.c.l.b16 %v576
      %v1832 = vunpack.c.l.b16 %v577
      %v1833 = vunpack.c.h.b16 %v577
      %v1834 = vunpack.c.l.b16 %v578
      %v1835 = vunpack.c.l.b16 %v579
      %v1836 = vunpack.c.h.b16 %v579
      %v1837 = vunpack.c.l.b16 %v580
      %v1838 = vunpack.c.l.b16 %v581
      %v1839 = vunpack.c.h.b16 %v581
      %v1840 = vunpack.c.l.b16 %v582
      %v1841 = vunpack.c.l.b16 %v583
      %v1842 = vunpack.c.h.b16 %v583
      %v1843 = vunpack.c.l.b16 %v584
      %v1844 = vunpack.c.l.b16 %v585
      %v1845 = vunpack.c.h.b16 %v585
      %v1846 = vunpack.c.l.b16 %v586
      %v1847 = vunpack.c.l.b16 %v587
      %v1848 = vunpack.c.h.b16 %v587
      %v1849 = vunpack.c.l.b16 %v588
      %v1850 = vunpack.c.l.b16 %v589
      %v1851 = vunpack.c.h.b16 %v589
      %v1852 = vunpack.c.l.b16 %v590
      %v1853 = vunpack.c.l.b16 %v591
      %v1854 = vunpack.c.h.b16 %v591
      %v1855 = vunpack.c.l.b16 %v592
      %v1856 = vunpack.c.l.b16 %v593
      %v1857 = vunpack.c.h.b16 %v593
      %v1858 = vunpack.c.l.b16 %v594
      %v1859 = vunpack.c.l.b16 %v595
      %v1860 = vunpack.c.h.b16 %v595
      %v1861 = vunpack.c.l.b16 %v596
      %v1862 = vunpack.c.l.b16 %v597
      %v1863 = vunpack.c.h.b16 %v597
      %v1864 = vunpack.c.l.b16 %v598
      %v1865 = vunpack.c.l.b16 %v599
      %v1866 = vunpack.c.h.b16 %v599
      %v1867 = vunpack.c.l.b16 %v600
      %v1868 = vunpack.c.l.b16 %v601
      %v1869 = vunpack.c.h.b16 %v601
      %v1870 = vunpack.c.l.b16 %v602
      %v1871 = vunpack.c.l.b16 %v603
      %v1872 = vunpack.c.h.b16 %v603
      %v1873 = vunpack.c.l.b16 %v604
      %v1874 = vunpack.c.l.b16 %v605
      %v1875 = vunpack.c.h.b16 %v605
      %v1876 = vunpack.c.l.b16 %v606
      %v1877 = vunpack.c.l.b16 %v607
      %v1878 = vunpack.c.h.b16 %v607
      %v1879 = vunpack.c.l.b16 %v608
      %v1880 = vunpack.c.l.b16 %v609
      %v1881 = vunpack.c.h.b16 %v609
      %v1882 = vunpack.c.l.b16 %v610
      %v1883 = vunpack.c.l.b16 %v611
      %v1884 = vunpack.c.h.b16 %v611
      %v1885 = vunpack.c.l.b16 %v612
      %v1886 = vunpack.c.l.b16 %v613
      %v1887 = vunpack.c.h.b16 %v613
      %v1888 = vunpack.c.l.b16 %v614
      %v1889 = vunpack.c.l.b16 %v615
      %v1890 = vunpack.c.h.b16 %v615
      %v1891 = vunpack.c.l.b16 %v616
      %v1892 = vunpack.c.l.b16 %v617
      %v1893 = vunpack.c.h.b16 %v617
      %v1894 = vunpack.c.l.b16 %v618
      %v1895 = vunpack.c.l.b16 %v619
      %v1896 = vunpack.c.h.b16 %v619
      %v1897 = vunpack.c.l.b16 %v620
      %v1898 = vunpack.c.l.b16 %v621
      %v1899 = vunpack.c.h.b16 %v621
      %v1900 = vunpack.c.l.b16 %v622
      %v1901 = vunpack.c.l.b16 %v623
      %v1902 = vunpack.c.h.b16 %v623
      %v1903 = vunpack.c.l.b16 %v624
      %v1904 = vunpack.c.l.b16 %v625
      %v1905 = vunpack.c.h.b16 %v625
      %v1906 = vunpack.c.l.b16 %v626
      %v1907 = vunpack.c.l.b16 %v627
      %v1908 = vunpack.c.h.b16 %v627
      %v1909 = vunpack.c.l.b16 %v628
      %v1910 = vunpack.c.l.b16 %v629
      %v1911 = vunpack.c.h.b16 %v629
      %v1912 = vunpack.c.l.b16 %v630
      %v1913 = vunpack.c.l.b16 %v631
      %v1914 = vunpack.c.h.b16 %v631
      %v1915 = vunpack.c.l.b16 %v632
      %v1916 = vunpack.c.l.b16 %v633
      %v1917 = vunpack.c.h.b16 %v633
      %v1918 = vunpack.c.l.b16 %v634
      %v1919 = vunpack.c.l.b16 %v635
      %v1920 = vunpack.c.h.b16 %v635
      %v1921 = vunpack.c.l.b16 %v636
      %v1922 = vunpack.c.l.b16 %v637
      %v1923 = vunpack.c.h.b16 %v637
      %v1924 = vunpack.c.l.b16 %v638
      %v1925 = vunpack.c.l.b16 %v639
      %v1926 = vunpack.c.h.b16 %v639
      %v1927 = vunpack.c.l.b16 %v640
      %v1928 = vunpack.c.l.b16 %v641
      %v1929 = vunpack.c.h.b16 %v641
      %v1930 = vunpack.c.l.b16 %v642
      %v1931 = vunpack.c.l.b16 %v643
      %v1932 = vunpack.c.h.b16 %v643
      %v1933 = vunpack.c.l.b16 %v644
      %v1934 = vunpack.c.l.b16 %v645
      %v1935 = vunpack.c.h.b16 %v645
      %v1936 = vunpack.c.l.b16 %v646
      %v1937 = vunpack.c.l.b16 %v647
      %v1938 = vunpack.c.h.b16 %v647
      %v1939 = vunpack.c.l.b16 %v648
      %v1940 = vunpack.c.l.b16 %v649
      %v1941 = vunpack.c.h.b16 %v649
      %v1942 = vunpack.c.l.b16 %v650
      %v1943 = vunpack.c.l.b16 %v651
      %v1944 = vunpack.c.h.b16 %v651
      %v1945 = vunpack.c.l.b16 %v652
      %v1946 = vunpack.c.l.b16 %v653
      %v1947 = vunpack.c.h.b16 %v653
      %v1948 = vunpack.c.l.b16 %v654
      %v1949 = vunpack.c.l.b16 %v655
      %v1950 = vunpack.c.h.b16 %v655
      %v1951 = vunpack.c.l.b16 %v656
      %v1952 = vunpack.c.l.b16 %v657
      %v1953 = vunpack.c.h.b16 %v657
      %v1954 = vunpack.c.l.b16 %v658
      %v1955 = vunpack.c.l.b16 %v659
      %v1956 = vunpack.c.h.b16 %v659
      %v1957 = vunpack.c.l.b16 %v660
      %v1958 = vunpack.c.l.b16 %v661
      %v1959 = vunpack.c.h.b16 %v661
      %v1960 = vunpack.c.l.b16 %v662
      %v1961 = vunpack.c.l.b16 %v663
      %v1962 = vunpack.c.h.b16 %v663
      %v1963 = vunpack.c.l.b16 %v664
      %v1964 = vunpack.c.l.b16 %v665
      %v1965 = vunpack.c.h.b16 %v665
      %v1966 = vunpack.c.l.b16 %v666
      %v1967 = vunpack.c.l.b16 %v667
      %v1968 = vunpack.c.h.b16 %v667
      %v1969 = vunpack.c.l.b16 %v668
      %v1970 = vunpack.c.l.b16 %v669
      %v1971 = vunpack.c.h.b16 %v669
      %v1972 = vunpack.c.l.b16 %v670
      %v1973 = vunpack.c.l.b16 %v671
      %v1974 = vunpack.c.h.b16 %v671
      %v1975 = vunpack.c.l.b16 %v672
      %v1976 = vunpack.c.l.b16 %v673
      %v1977 = vunpack.c.h.b16 %v673
      %v1978 = vunpack.c.l.b16 %v674
      %v1979 = vunpack.c.l.b16 %v675
      %v1980 = vunpack.c.h.b16 %v675
      %v1981 = vunpack.c.l.b16 %v676
      %v1982 = vunpack.c.l.b16 %v677
      %v1983 = vunpack.c.h.b16 %v677
      %v1984 = vunpack.c.l.b16 %v678
      %v1985 = vunpack.c.l.b16 %v679
      %v1986 = vunpack.c.h.b16 %v679
      %v1987 = vunpack.c.l.b16 %v680
      %v1988 = vunpack.c.l.b16 %v681
      %v1989 = vunpack.c.h.b16 %v681
      %v1990 = vunpack.c.l.b16 %v682
      %v1991 = vunpack.c.l.b16 %v683
      %v1992 = vunpack.c.h.b16 %v683
      %v1993 = vunpack.c.l.b16 %v684
      %v1994 = vunpack.c.l.b16 %v685
      %v1995 = vunpack.c.h.b16 %v685
      %v1996 = vunpack.c.l.b16 %v686
      %v1997 = vunpack.c.l.b16 %v687
      %v1998 = vunpack.c.h.b16 %v687
      %v1999 = vunpack.c.l.b16 %v688
      %v2000 = vunpack.c.l.b16 %v689
      %v2001 = vunpack.c.h.b16 %v689
      %v2002 = vunpack.c.l.b16 %v690
      %v2003 = vunpack.c.l.b16 %v691
      %v2004 = vunpack.c.h.b16 %v691
      %v2005 = vunpack.c.l.b16 %v692
      %v2006 = vunpack.c.l.b16 %v693
      %v2007 = vunpack.c.h.b16 %v693
      %v2008 = vunpack.c.l.b16 %v694
      %v2009 = vunpack.c.l.b16 %v695
      %v2010 = vunpack.c.h.b16 %v695
      %v2011 = vunpack.c.l.b16 %v696
      %v2012 = vunpack.c.l.b16 %v697
      %v2013 = vunpack.c.h.b16 %v697
      %v2014 = vunpack.c.l.b16 %v698
      %v2015 = vpack.c.b16 %v1250, %v1247
      %v2016 = vpack.c.b16 %v1251, %v1248
      %v2017 = vpack.c.b16 %v1252, %v1249
      %v2018 = vpack.c.b16 %v1256, %v1253
      %v2019 = vpack.c.b16 %v1257, %v1254
      %v2020 = vpack.c.b16 %v1258, %v1255
      %v2021 = vpack.c.b16 %v1262, %v1259
      %v2022 = vpack.c.b16 %v1263, %v1260
      %v2023 = vpack.c.b16 %v1264, %v1261
      %v2024 = vpack.c.b16 %v1268, %v1265
      %v2025 = vpack.c.b16 %v1269, %v1266
      %v2026 = vpack.c.b16 %v1270, %v1267
      %v2027 = vpack.c.b16 %v1274, %v1271
      %v2028 = vpack.c.b16 %v1275, %v1272
      %v2029 = vpack.c.b16 %v1276, %v1273
      %v2030 = vpack.c.b16 %v1280, %v1277
      %v2031 = vpack.c.b16 %v1281, %v1278
      %v2032 = vpack.c.b16 %v1282, %v1279
      %v2033 = vpack.c.b16 %v1286, %v1283
      %v2034 = vpack.c.b16 %v1287, %v1284
      %v2035 = vpack.c.b16 %v1288, %v1285
      %v2036 = vpack.c.b16 %v1292, %v1289
      %v2037 = vpack.c.b16 %v1293, %v1290
      %v2038 = vpack.c.b16 %v1294, %v1291
      %v2039 = vpack.c.b16 %v1298, %v1295
      %v2040 = vpack.c.b16 %v1299, %v1296
      %v2041 = vpack.c.b16 %v1300, %v1297
      %v2042 = vpack.c.b16 %v1304, %v1301
      %v2043 = vpack.c.b16 %v1305, %v1302
      %v2044 = vpack.c.b16 %v1306, %v1303
      %v2045 = vpack.c.b16 %v1310, %v1307
      %v2046 = vpack.c.b16 %v1311, %v1308
      %v2047 = vpack.c.b16 %v1312, %v1309
      %v2048 = vpack.c.b16 %v1316, %v1313
      %v2049 = vpack.c.b16 %v1317, %v1314
      %v2050 = vpack.c.b16 %v1318, %v1315
      %v2051 = vpack.c.b16 %v1322, %v1319
      %v2052 = vpack.c.b16 %v1323, %v1320
      %v2053 = vpack.c.b16 %v1324, %v1321
      %v2054 = vpack.c.b16 %v1328, %v1325
      %v2055 = vpack.c.b16 %v1329, %v1326
      %v2056 = vpack.c.b16 %v1330, %v1327
      %v2057 = vpack.c.b16 %v1334, %v1331
      %v2058 = vpack.c.b16 %v1335, %v1332
      %v2059 = vpack.c.b16 %v1336, %v1333
      %v2060 = vpack.c.b16 %v1340, %v1337
      %v2061 = vpack.c.b16 %v1341, %v1338
      %v2062 = vpack.c.b16 %v1342, %v1339
      %v2063 = vpack.c.b16 %v1346, %v1343
      %v2064 = vpack.c.b16 %v1347, %v1344
      %v2065 = vpack.c.b16 %v1348, %v1345
      %v2066 = vpack.c.b16 %v1352, %v1349
      %v2067 = vpack.c.b16 %v1353, %v1350
      %v2068 = vpack.c.b16 %v1354, %v1351
      %v2069 = vpack.c.b16 %v1358, %v1355
      %v2070 = vpack.c.b16 %v1359, %v1356
      %v2071 = vpack.c.b16 %v1360, %v1357
      %v2072 = vpack.c.b16 %v1364, %v1361
      %v2073 = vpack.c.b16 %v1365, %v1362
      %v2074 = vpack.c.b16 %v1366, %v1363
      %v2075 = vpack.c.b16 %v1370, %v1367
      %v2076 = vpack.c.b16 %v1371, %v1368
      %v2077 = vpack.c.b16 %v1372, %v1369
      %v2078 = vpack.c.b16 %v1376, %v1373
      %v2079 = vpack.c.b16 %v1377, %v1374
      %v2080 = vpack.c.b16 %v1378, %v1375
      %v2081 = vpack.c.b16 %v1382, %v1379
      %v2082 = vpack.c.b16 %v1383, %v1380
      %v2083 = vpack.c.b16 %v1384, %v1381
      %v2084 = vpack.c.b16 %v1388, %v1385
      %v2085 = vpack.c.b16 %v1389, %v1386
      %v2086 = vpack.c.b16 %v1390, %v1387
      %v2087 = vpack.c.b16 %v1394, %v1391
      %v2088 = vpack.c.b16 %v1395, %v1392
      %v2089 = vpack.c.b16 %v1396, %v1393
      %v2090 = vpack.c.b16 %v1400, %v1397
      %v2091 = vpack.c.b16 %v1401, %v1398
      %v2092 = vpack.c.b16 %v1402, %v1399
      %v2093 = vpack.c.b16 %v1406, %v1403
      %v2094 = vpack.c.b16 %v1407, %v1404
      %v2095 = vpack.c.b16 %v1408, %v1405
      %v2096 = vpack.c.b16 %v1412, %v1409
      %v2097 = vpack.c.b16 %v1413, %v1410
      %v2098 = vpack.c.b16 %v1414, %v1411
      %v2099 = vpack.c.b16 %v1418, %v1415
      %v2100 = vpack.c.b16 %v1419, %v1416
      %v2101 = vpack.c.b16 %v1420, %v1417
      %v2102 = vpack.c.b16 %v1424, %v1421
      %v2103 = vpack.c.b16 %v1425, %v1422
      %v2104 = vpack.c.b16 %v1426, %v1423
      %v2105 = vpack.c.b16 %v1430, %v1427
      %v2106 = vpack.c.b16 %v1431, %v1428
      %v2107 = vpack.c.b16 %v1432, %v1429
      %v2108 = vpack.c.b16 %v1436, %v1433
      %v2109 = vpack.c.b16 %v1437, %v1434
      %v2110 = vpack.c.b16 %v1438, %v1435
      %v2111 = vpack.c.b16 %v1442, %v1439
      %v2112 = vpack.c.b16 %v1443, %v1440
      %v2113 = vpack.c.b16 %v1444, %v1441
      %v2114 = vpack.c.b16 %v1448, %v1445
      %v2115 = vpack.c.b16 %v1449, %v1446
      %v2116 = vpack.c.b16 %v1450, %v1447
      %v2117 = vpack.c.b16 %v1454, %v1451
      %v2118 = vpack.c.b16 %v1455, %v1452
      %v2119 = vpack.c.b16 %v1456, %v1453
      %v2120 = vpack.c.b16 %v1460, %v1457
      %v2121 = vpack.c.b16 %v1461, %v1458
      %v2122 = vpack.c.b16 %v1462, %v1459
      %v2123 = vpack.c.b16 %v1466, %v1463
      %v2124 = vpack.c.b16 %v1467, %v1464
      %v2125 = vpack.c.b16 %v1468, %v1465
      %v2126 = vpack.c.b16 %v1472, %v1469
      %v2127 = vpack.c.b16 %v1473, %v1470
      %v2128 = vpack.c.b16 %v1474, %v1471
      %v2129 = vpack.c.b16 %v1478, %v1475
      %v2130 = vpack.c.b16 %v1479, %v1476
      %v2131 = vpack.c.b16 %v1480, %v1477
      %v2132 = vpack.c.b16 %v1484, %v1481
      %v2133 = vpack.c.b16 %v1485, %v1482
      %v2134 = vpack.c.b16 %v1486, %v1483
      %v2135 = vpack.c.b16 %v1490, %v1487
      %v2136 = vpack.c.b16 %v1491, %v1488
      %v2137 = vpack.c.b16 %v1492, %v1489
      %v2138 = vpack.c.b16 %v1496, %v1493
      %v2139 = vpack.c.b16 %v1497, %v1494
      %v2140 = vpack.c.b16 %v1498, %v1495
      %v2141 = vpack.c.b16 %v1502, %v1499
      %v2142 = vpack.c.b16 %v1503, %v1500
      %v2143 = vpack.c.b16 %v1504, %v1501
      %v2144 = vpack.c.b16 %v1508, %v1505
      %v2145 = vpack.c.b16 %v1509, %v1506
      %v2146 = vpack.c.b16 %v1510, %v1507
      %v2147 = vpack.c.b16 %v1514, %v1511
      %v2148 = vpack.c.b16 %v1515, %v1512
      %v2149 = vpack.c.b16 %v1516, %v1513
      %v2150 = vpack.c.b16 %v1520, %v1517
      %v2151 = vpack.c.b16 %v1521, %v1518
      %v2152 = vpack.c.b16 %v1522, %v1519
      %v2153 = vpack.c.b16 %v1526, %v1523
      %v2154 = vpack.c.b16 %v1527, %v1524
      %v2155 = vpack.c.b16 %v1528, %v1525
      %v2156 = vpack.c.b16 %v1532, %v1529
      %v2157 = vpack.c.b16 %v1533, %v1530
      %v2158 = vpack.c.b16 %v1534, %v1531
      %v2159 = vpack.c.b16 %v1538, %v1535
      %v2160 = vpack.c.b16 %v1539, %v1536
      %v2161 = vpack.c.b16 %v1540, %v1537
      %v2162 = vpack.c.b16 %v1544, %v1541
      %v2163 = vpack.c.b16 %v1545, %v1542
      %v2164 = vpack.c.b16 %v1546, %v1543
      %v2165 = vpack.c.b16 %v1550, %v1547
      %v2166 = vpack.c.b16 %v1551, %v1548
      %v2167 = vpack.c.b16 %v1552, %v1549
      %v2168 = vpack.c.b16 %v1556, %v1553
      %v2169 = vpack.c.b16 %v1557, %v1554
      %v2170 = vpack.c.b16 %v1558, %v1555
      %v2171 = vpack.c.b16 %v1562, %v1559
      %v2172 = vpack.c.b16 %v1563, %v1560
      %v2173 = vpack.c.b16 %v1564, %v1561
      %v2174 = vpack.c.b16 %v1568, %v1565
      %v2175 = vpack.c.b16 %v1569, %v1566
      %v2176 = vpack.c.b16 %v1570, %v1567
      %v2177 = vpack.c.b16 %v1574, %v1571
      %v2178 = vpack.c.b16 %v1575, %v1572
      %v2179 = vpack.c.b16 %v1576, %v1573
      %v2180 = vpack.c.b16 %v1580, %v1577
      %v2181 = vpack.c.b16 %v1581, %v1578
      %v2182 = vpack.c.b16 %v1582, %v1579
      %v2183 = vpack.c.b16 %v1586, %v1583
      %v2184 = vpack.c.b16 %v1587, %v1584
      %v2185 = vpack.c.b16 %v1588, %v1585
      %v2186 = vpack.c.b16 %v1592, %v1589
      %v2187 = vpack.c.b16 %v1593, %v1590
      %v2188 = vpack.c.b16 %v1594, %v1591
      %v2189 = vpack.c.b16 %v1598, %v1595
      %v2190 = vpack.c.b16 %v1599, %v1596
      %v2191 = vpack.c.b16 %v1600, %v1597
      %v2192 = vpack.c.b16 %v1604, %v1601
      %v2193 = vpack.c.b16 %v1605, %v1602
      %v2194 = vpack.c.b16 %v1606, %v1603
      %v2195 = vpack.c.b16 %v1610, %v1607
      %v2196 = vpack.c.b16 %v1611, %v1608
      %v2197 = vpack.c.b16 %v1612, %v1609
      %v2198 = vpack.c.b16 %v1616, %v1613
      %v2199 = vpack.c.b16 %v1617, %v1614
      %v2200 = vpack.c.b16 %v1618, %v1615
      %v2201 = vpack.c.b16 %v1622, %v1619
      %v2202 = vpack.c.b16 %v1623, %v1620
      %v2203 = vpack.c.b16 %v1624, %v1621
      %v2204 = vpack.c.b16 %v1628, %v1625
      %v2205 = vpack.c.b16 %v1629, %v1626
      %v2206 = vpack.c.b16 %v1630, %v1627
      %v2207 = vpack.c.b16 %v1634, %v1631
      %v2208 = vpack.c.b16 %v1635, %v1632
      %v2209 = vpack.c.b16 %v1636, %v1633
      %v2210 = vpack.c.b16 %v1640, %v1637
      %v2211 = vpack.c.b16 %v1641, %v1638
      %v2212 = vpack.c.b16 %v1642, %v1639
      %v2213 = vpack.c.b16 %v1646, %v1643
      %v2214 = vpack.c.b16 %v1647, %v1644
      %v2215 = vpack.c.b16 %v1648, %v1645
      %v2216 = vpack.c.b16 %v1652, %v1649
      %v2217 = vpack.c.b16 %v1653, %v1650
      %v2218 = vpack.c.b16 %v1654, %v1651
      %v2219 = vpack.c.b16 %v1658, %v1655
      %v2220 = vpack.c.b16 %v1659, %v1656
      %v2221 = vpack.c.b16 %v1660, %v1657
      %v2222 = vpack.c.b16 %v1664, %v1661
      %v2223 = vpack.c.b16 %v1665, %v1662
      %v2224 = vpack.c.b16 %v1666, %v1663
      %v2225 = vpack.c.b16 %v1670, %v1667
      %v2226 = vpack.c.b16 %v1671, %v1668
      %v2227 = vpack.c.b16 %v1672, %v1669
      %v2228 = vpack.c.b16 %v1676, %v1673
      %v2229 = vpack.c.b16 %v1677, %v1674
      %v2230 = vpack.c.b16 %v1678, %v1675
      %v2231 = vpack.c.b16 %v1682, %v1679
      %v2232 = vpack.c.b16 %v1683, %v1680
      %v2233 = vpack.c.b16 %v1684, %v1681
      %v2234 = vpack.c.b16 %v1688, %v1685
      %v2235 = vpack.c.b16 %v1689, %v1686
      %v2236 = vpack.c.b16 %v1690, %v1687
      %v2237 = vpack.c.b16 %v1694, %v1691
      %v2238 = vpack.c.b16 %v1695, %v1692
      %v2239 = vpack.c.b16 %v1696, %v1693
      %v2240 = vpack.c.b16 %v1700, %v1697
      %v2241 = vpack.c.b16 %v1701, %v1698
      %v2242 = vpack.c.b16 %v1702, %v1699
      %v2243 = vpack.c.b16 %v1706, %v1703
      %v2244 = vpack.c.b16 %v1707, %v1704
      %v2245 = vpack.c.b16 %v1708, %v1705
      %v2246 = vpack.c.b16 %v1712, %v1709
      %v2247 = vpack.c.b16 %v1713, %v1710
      %v2248 = vpack.c.b16 %v1714, %v1711
      %v2249 = vpack.c.b16 %v1718, %v1715
      %v2250 = vpack.c.b16 %v1719, %v1716
      %v2251 = vpack.c.b16 %v1720, %v1717
      %v2252 = vpack.c.b16 %v1724, %v1721
      %v2253 = vpack.c.b16 %v1725, %v1722
      %v2254 = vpack.c.b16 %v1726, %v1723
      %v2255 = vpack.c.b16 %v1730, %v1727
      %v2256 = vpack.c.b16 %v1731, %v1728
      %v2257 = vpack.c.b16 %v1732, %v1729
      %v2258 = vpack.c.b16 %v1736, %v1733
      %v2259 = vpack.c.b16 %v1737, %v1734
      %v2260 = vpack.c.b16 %v1738, %v1735
      %v2261 = vpack.c.b16 %v1742, %v1739
      %v2262 = vpack.c.b16 %v1743, %v1740
      %v2263 = vpack.c.b16 %v1744, %v1741
      %v2264 = vpack.c.b16 %v1748, %v1745
      %v2265 = vpack.c.b16 %v1749, %v1746
      %v2266 = vpack.c.b16 %v1750, %v1747
      %v2267 = vpack.c.b16 %v1754, %v1751
      %v2268 = vpack.c.b16 %v1755, %v1752
      %v2269 = vpack.c.b16 %v1756, %v1753
      %v2270 = vpack.c.b16 %v1760, %v1757
      %v2271 = vpack.c.b16 %v1761, %v1758
      %v2272 = vpack.c.b16 %v1762, %v1759
      %v2273 = vpack.c.b16 %v1766, %v1763
      %v2274 = vpack.c.b16 %v1767, %v1764
      %v2275 = vpack.c.b16 %v1768, %v1765
      %v2276 = vpack.c.b16 %v1772, %v1769
      %v2277 = vpack.c.b16 %v1773, %v1770
      %v2278 = vpack.c.b16 %v1774, %v1771
      %v2279 = vpack.c.b16 %v1778, %v1775
      %v2280 = vpack.c.b16 %v1779, %v1776
      %v2281 = vpack.c.b16 %v1780, %v1777
      %v2282 = vpack.c.b16 %v1784, %v1781
      %v2283 = vpack.c.b16 %v1785, %v1782
      %v2284 = vpack.c.b16 %v1786, %v1783
      %v2285 = vpack.c.b16 %v1790, %v1787
      %v2286 = vpack.c.b16 %v1791, %v1788
      %v2287 = vpack.c.b16 %v1792, %v1789
      %v2288 = vpack.c.b16 %v1796, %v1793
      %v2289 = vpack.c.b16 %v1797, %v1794
      %v2290 = vpack.c.b16 %v1798, %v1795
      %v2291 = vpack.c.b16 %v1802, %v1799
      %v2292 = vpack.c.b16 %v1803, %v1800
      %v2293 = vpack.c.b16 %v1804, %v1801
      %v2294 = vpack.c.b16 %v1808, %v1805
      %v2295 = vpack.c.b16 %v1809, %v1806
      %v2296 = vpack.c.b16 %v1810, %v1807
      %v2297 = vpack.c.b16 %v1814, %v1811
      %v2298 = vpack.c.b16 %v1815, %v1812
      %v2299 = vpack.c.b16 %v1816, %v1813
      %v2300 = vpack.c.b16 %v1820, %v1817
      %v2301 = vpack.c.b16 %v1821, %v1818
      %v2302 = vpack.c.b16 %v1822, %v1819
      %v2303 = vpack.c.b16 %v1826, %v1823
      %v2304 = vpack.c.b16 %v1827, %v1824
      %v2305 = vpack.c.b16 %v1828, %v1825
      %v2306 = vpack.c.b16 %v1832, %v1829
      %v2307 = vpack.c.b16 %v1833, %v1830
      %v2308 = vpack.c.b16 %v1834, %v1831
      %v2309 = vpack.c.b16 %v1838, %v1835
      %v2310 = vpack.c.b16 %v1839, %v1836
      %v2311 = vpack.c.b16 %v1840, %v1837
      %v2312 = vpack.c.b16 %v1844, %v1841
      %v2313 = vpack.c.b16 %v1845, %v1842
      %v2314 = vpack.c.b16 %v1846, %v1843
      %v2315 = vpack.c.b16 %v1850, %v1847
      %v2316 = vpack.c.b16 %v1851, %v1848
      %v2317 = vpack.c.b16 %v1852, %v1849
      %v2318 = vpack.c.b16 %v1856, %v1853
      %v2319 = vpack.c.b16 %v1857, %v1854
      %v2320 = vpack.c.b16 %v1858, %v1855
      %v2321 = vpack.c.b16 %v1862, %v1859
      %v2322 = vpack.c.b16 %v1863, %v1860
      %v2323 = vpack.c.b16 %v1864, %v1861
      %v2324 = vpack.c.b16 %v1868, %v1865
      %v2325 = vpack.c.b16 %v1869, %v1866
      %v2326 = vpack.c.b16 %v1870, %v1867
      %v2327 = vpack.c.b16 %v1874, %v1871
      %v2328 = vpack.c.b16 %v1875, %v1872
      %v2329 = vpack.c.b16 %v1876, %v1873
      %v2330 = vpack.c.b16 %v1880, %v1877
      %v2331 = vpack.c.b16 %v1881, %v1878
      %v2332 = vpack.c.b16 %v1882, %v1879
      %v2333 = vpack.c.b16 %v1886, %v1883
      %v2334 = vpack.c.b16 %v1887, %v1884
      %v2335 = vpack.c.b16 %v1888, %v1885
      %v2336 = vpack.c.b16 %v1892, %v1889
      %v2337 = vpack.c.b16 %v1893, %v1890
      %v2338 = vpack.c.b16 %v1894, %v1891
      %v2339 = vpack.c.b16 %v1898, %v1895
      %v2340 = vpack.c.b16 %v1899, %v1896
      %v2341 = vpack.c.b16 %v1900, %v1897
      %v2342 = vpack.c.b16 %v1904, %v1901
      %v2343 = vpack.c.b16 %v1905, %v1902
      %v2344 = vpack.c.b16 %v1906, %v1903
      %v2345 = vpack.c.b16 %v1910, %v1907
      %v2346 = vpack.c.b16 %v1911, %v1908
      %v2347 = vpack.c.b16 %v1912, %v1909
      %v2348 = vpack.c.b16 %v1916, %v1913
      %v2349 = vpack.c.b16 %v1917, %v1914
      %v2350 = vpack.c.b16 %v1918, %v1915
      %v2351 = vpack.c.b16 %v1922, %v1919
      %v2352 = vpack.c.b16 %v1923, %v1920
      %v2353 = vpack.c.b16 %v1924, %v1921
      %v2354 = vpack.c.b16 %v1928, %v1925
      %v2355 = vpack.c.b16 %v1929, %v1926
      %v2356 = vpack.c.b16 %v1930, %v1927
      %v2357 = vpack.c.b16 %v1934, %v1931
      %v2358 = vpack.c.b16 %v1935, %v1932
      %v2359 = vpack.c.b16 %v1936, %v1933
      %v2360 = vpack.c.b16 %v1940, %v1937
      %v2361 = vpack.c.b16 %v1941, %v1938
      %v2362 = vpack.c.b16 %v1942, %v1939
      %v2363 = vpack.c.b16 %v1946, %v1943
      %v2364 = vpack.c.b16 %v1947, %v1944
      %v2365 = vpack.c.b16 %v1948, %v1945
      %v2366 = vpack.c.b16 %v1952, %v1949
      %v2367 = vpack.c.b16 %v1953, %v1950
      %v2368 = vpack.c.b16 %v1954, %v1951
      %v2369 = vpack.c.b16 %v1958, %v1955
      %v2370 = vpack.c.b16 %v1959, %v1956
      %v2371 = vpack.c.b16 %v1960, %v1957
      %v2372 = vpack.c.b16 %v1964, %v1961
      %v2373 = vpack.c.b16 %v1965, %v1962
      %v2374 = vpack.c.b16 %v1966, %v1963
      %v2375 = vpack.c.b16 %v1970, %v1967
      %v2376 = vpack.c.b16 %v1971, %v1968
      %v2377 = vpack.c.b16 %v1972, %v1969
      %v2378 = vpack.c.b16 %v1976, %v1973
      %v2379 = vpack.c.b16 %v1977, %v1974
      %v2380 = vpack.c.b16 %v1978, %v1975
      %v2381 = vpack.c.b16 %v1982, %v1979
      %v2382 = vpack.c.b16 %v1983, %v1980
      %v2383 = vpack.c.b16 %v1984, %v1981
      %v2384 = vpack.c.b16 %v1988, %v1985
      %v2385 = vpack.c.b16 %v1989, %v1986
      %v2386 = vpack.c.b16 %v1990, %v1987
      %v2387 = vpack.c.b16 %v1994, %v1991
      %v2388 = vpack.c.b16 %v1995, %v1992
      %v2389 = vpack.c.b16 %v1996, %v1993
      %v2390 = vpack.c.b16 %v2000, %v1997
      %v2391 = vpack.c.b16 %v2001, %v1998
      %v2392 = vpack.c.b16 %v2002, %v1999
      %v2393 = vpack.c.b16 %v2006, %v2003
      %v2394 = vpack.c.b16 %v2007, %v2004
      %v2395 = vpack.c.b16 %v2008, %v2005
      %v2396 = vpack.c.b16 %v2012, %v2009
      %v2397 = vpack.c.b16 %v2013, %v2010
      %v2398 = vpack.c.b16 %v2014, %v2011
      %v2691 = vunpack.c.l.b16 %v699
      %v2692 = vunpack.c.l.b16 %v700
      %v2693 = vunpack.c.l.b16 %v701
      %v2694 = vunpack.c.l.b16 %v702
      %v2695 = vunpack.c.l.b16 %v703
      %v2696 = vunpack.c.l.b16 %v704
      %v2697 = vunpack.c.l.b16 %v705
      %v2698 = vunpack.c.l.b16 %v706
      %v2699 = vunpack.c.l.b16 %v707
      %v2700 = vunpack.c.l.b16 %v708
      %v2701 = vunpack.c.l.b16 %v709
      %v2702 = vunpack.c.l.b16 %v710
      %v2703 = vunpack.c.l.b16 %v711
      %v2704 = vunpack.c.l.b16 %v712
      %v2705 = vunpack.c.l.b16 %v713
      %v2706 = vunpack.c.l.b16 %v714
      %v2707 = vunpack.c.l.b16 %v715
      %v2708 = vunpack.c.l.b16 %v716
      %v2709 = vunpack.c.l.b16 %v717
      %v2710 = vunpack.c.l.b16 %v718
      %v2711 = vunpack.c.l.b16 %v719
      %v2712 = vunpack.c.l.b16 %v720
      %v2713 = vunpack.c.l.b16 %v721
      %v2714 = vunpack.c.l.b16 %v722
      %v2715 = vunpack.c.l.b16 %v723
      %v2716 = vunpack.c.l.b16 %v724
      %v2717 = vunpack.c.l.b16 %v725
      %v2718 = vunpack.c.l.b16 %v726
      %v2719 = vunpack.c.l.b16 %v727
      %v2720 = vunpack.c.l.b16 %v728
      %v2721 = vunpack.c.l.b16 %v729
      %v2722 = vunpack.c.l.b16 %v730
      %v2723 = vunpack.c.l.b16 %v731
      %v2724 = vunpack.c.l.b16 %v732
      %v2725 = vunpack.c.l.b16 %v733
      %v2726 = vunpack.c.l.b16 %v734
      %v2727 = vpack.c.b16 %v2692, %v2691
      %v2728 = vpack.c.b16 %v2694, %v2693
      %v2729 = vpack.c.b16 %v2696, %v2695
      %v2730 = vpack.c.b16 %v2698, %v2697
      %v2731 = vpack.c.b16 %v2700, %v2699
      %v2732 = vpack.c.b16 %v2702, %v2701
      %v2733 = vpack.c.b16 %v2704, %v2703
      %v2734 = vpack.c.b16 %v2706, %v2705
      %v2735 = vpack.c.b16 %v2708, %v2707
      %v2736 = vpack.c.b16 %v2710, %v2709
      %v2737 = vpack.c.b16 %v2712, %v2711
      %v2738 = vpack.c.b16 %v2714, %v2713
      %v2739 = vpack.c.b16 %v2716, %v2715
      %v2740 = vpack.c.b16 %v2718, %v2717
      %v2741 = vpack.c.b16 %v2720, %v2719
      %v2742 = vpack.c.b16 %v2722, %v2721
      %v2743 = vpack.c.b16 %v2724, %v2723
      %v2744 = vpack.c.b16 %v2726, %v2725
      %vm2763 = vcmask 261120
      %v2765 = vsel %vm2763, %v2017, 0
      %v2768 = vsel %vm2763, %v2020, 0
      %v2771 = vsel %vm2763, %v2023, 0
      %v2774 = vsel %vm2763, %v2026, 0
      %v2777 = vsel %vm2763, %v2029, 0
      %v2780 = vsel %vm2763, %v2032, 0
      %v2783 = vsel %vm2763, %v2035, 0
      %v2786 = vsel %vm2763, %v2038, 0
      %v2789 = vsel %vm2763, %v2041, 0
      %v2792 = vsel %vm2763, %v2044, 0
      %v2795 = vsel %vm2763, %v2047, 0
      %v2798 = vsel %vm2763, %v2050, 0
      %v2801 = vsel %vm2763, %v2053, 0
      %v2804 = vsel %vm2763, %v2056, 0
      %v2807 = vsel %vm2763, %v2059, 0
      %v2810 = vsel %vm2763, %v2062, 0
      %v2813 = vsel %vm2763, %v2065, 0
      %v2816 = vsel %vm2763, %v2068, 0
      %v2819 = vsel %vm2763, %v2071, 0
      %v2822 = vsel %vm2763, %v2074, 0
      %v2825 = vsel %vm2763, %v2077, 0
      %v2828 = vsel %vm2763, %v2080, 0
      %v2831 = vsel %vm2763, %v2083, 0
      %v2834 = vsel %vm2763, %v2086, 0
      %v2837 = vsel %vm2763, %v2089, 0
      %v2840 = vsel %vm2763, %v2092, 0
      %v2843 = vsel %vm2763, %v2095, 0
      %v2846 = vsel %vm2763, %v2098, 0
      %v2849 = vsel %vm2763, %v2101, 0
      %v2852 = vsel %vm2763, %v2104, 0
      %v2855 = vsel %vm2763, %v2107, 0
      %v2858 = vsel %vm2763, %v2110, 0
      %v2861 = vsel %vm2763, %v2113, 0
      %v2864 = vsel %vm2763, %v2116, 0
      %v2867 = vsel %vm2763, %v2119, 0
      %v2870 = vsel %vm2763, %v2122, 0
      %v2873 = vsel %vm2763, %v2125, 0
      %v2876 = vsel %vm2763, %v2128, 0
      %v2879 = vsel %vm2763, %v2131, 0
      %v2882 = vsel %vm2763, %v2134, 0
      %v2885 = vsel %vm2763, %v2137, 0
      %v2888 = vsel %vm2763, %v2140, 0
      %v2891 = vsel %vm2763, %v2143, 0
      %v2894 = vsel %vm2763, %v2146, 0
      %v2897 = vsel %vm2763, %v2149, 0
      %v2900 = vsel %vm2763, %v2152, 0
      %v2903 = vsel %vm2763, %v2155, 0
      %v2906 = vsel %vm2763, %v2158, 0
      %v2909 = vsel %vm2763, %v2161, 0
      %v2912 = vsel %vm2763, %v2164, 0
      %v2915 = vsel %vm2763, %v2167, 0
      %v2918 = vsel %vm2763, %v2170, 0
      %v2921 = vsel %vm2763, %v2173, 0
      %v2924 = vsel %vm2763, %v2176, 0
      %v2927 = vsel %vm2763, %v2179, 0
      %v2930 = vsel %vm2763, %v2182, 0
      %v2933 = vsel %vm2763, %v2185, 0
      %v2936 = vsel %vm2763, %v2188, 0
      %v2939 = vsel %vm2763, %v2191, 0
      %v2942 = vsel %vm2763, %v2194, 0
      %v2945 = vsel %vm2763, %v2197, 0
      %v2948 = vsel %vm2763, %v2200, 0
      %v2951 = vsel %vm2763, %v2203, 0
      %v2954 = vsel %vm2763, %v2206, 0
      %v2957 = vsel %vm2763, %v2209, 0
      %v2960 = vsel %vm2763, %v2212, 0
      %v2963 = vsel %vm2763, %v2215, 0
      %v2966 = vsel %vm2763, %v2218, 0
      %v2969 = vsel %vm2763, %v2221, 0
      %v2972 = vsel %vm2763, %v2224, 0
      %v2975 = vsel %vm2763, %v2227, 0
      %v2978 = vsel %vm2763, %v2230, 0
      %v2981 = vsel %vm2763, %v2233, 0
      %v2984 = vsel %vm2763, %v2236, 0
      %v2987 = vsel %vm2763, %v2239, 0
      %v2990 = vsel %vm2763, %v2242, 0
      %v2993 = vsel %vm2763, %v2245, 0
      %v2996 = vsel %vm2763, %v2248, 0
      %v2999 = vsel %vm2763, %v2251, 0
      %v3002 = vsel %vm2763, %v2254, 0
      %v3005 = vsel %vm2763, %v2257, 0
      %v3008 = vsel %vm2763, %v2260, 0
      %v3011 = vsel %vm2763, %v2263, 0
      %v3014 = vsel %vm2763, %v2266, 0
      %v3017 = vsel %vm2763, %v2269, 0
      %v3020 = vsel %vm2763, %v2272, 0
      %v3023 = vsel %vm2763, %v2275, 0
      %v3026 = vsel %vm2763, %v2278, 0
      %v3029 = vsel %vm2763, %v2281, 0
      %v3032 = vsel %vm2763, %v2284, 0
      %v3035 = vsel %vm2763, %v2287, 0
      %v3038 = vsel %vm2763, %v2290, 0
      %v3041 = vsel %vm2763, %v2293, 0
      %v3044 = vsel %vm2763, %v2296, 0
      %v3047 = vsel %vm2763, %v2299, 0
      %v3050 = vsel %vm2763, %v2302, 0
      %v3053 = vsel %vm2763, %v2305, 0
      %v3056 = vsel %vm2763, %v2308, 0
      %v3059 = vsel %vm2763, %v2311, 0
      %v3062 = vsel %vm2763, %v2314, 0
      %v3065 = vsel %vm2763, %v2317, 0
      %v3068 = vsel %vm2763, %v2320, 0
      %v3071 = vsel %vm2763, %v2323, 0
      %v3074 = vsel %vm2763, %v2326, 0
      %v3077 = vsel %vm2763, %v2329, 0
      %v3080 = vsel %vm2763, %v2332, 0
      %v3083 = vsel %vm2763, %v2335, 0
      %v3086 = vsel %vm2763, %v2338, 0
      %v3089 = vsel %vm2763, %v2341, 0
      %v3092 = vsel %vm2763, %v2344, 0
      %v3095 = vsel %vm2763, %v2347, 0
      %v3098 = vsel %vm2763, %v2350, 0
      %v3101 = vsel %vm2763, %v2353, 0
      %v3104 = vsel %vm2763, %v2356, 0
      %v3107 = vsel %vm2763, %v2359, 0
      %v3110 = vsel %vm2763, %v2362, 0
      %v3113 = vsel %vm2763, %v2365, 0
      %v3116 = vsel %vm2763, %v2368, 0
      %v3119 = vsel %vm2763, %v2371, 0
      %v3122 = vsel %vm2763, %v2374, 0
      %v3125 = vsel %vm2763, %v2377, 0
      %v3128 = vsel %vm2763, %v2380, 0
      %v3131 = vsel %vm2763, %v2383, 0
      %v3134 = vsel %vm2763, %v2386, 0
      %v3137 = vsel %vm2763, %v2389, 0
      %v3140 = vsel %vm2763, %v2392, 0
      %v3143 = vsel %vm2763, %v2395, 0
      %v3146 = vsel %vm2763, %v2398, 0
      %3148 = vmatpush.bf16.msra.mxu0 %v2734
      %3149 = vmatpush.bf16.msra.mxu0 %v2733
      %3150 = vmatpush.bf16.msra.mxu0 %v2732
      %3151 = vmatpush.bf16.msra.mxu0 %v2731
      %3152 = vmatpush.bf16.msra.mxu0 %v2730
      %3153 = vmatpush.bf16.msra.mxu0 %v2729
      %3154 = vmatpush.bf16.msra.mxu0 %v2728
      %3155 = vmatpush.bf16.msra.mxu0 %v2727
      %3156 = vmatmul.bf16.gmra.mxu0 %v2015
      %v3157 = vpop.f32.mrf.mxu0
      %v3158 = vadd.f32 0.0, %v3157
      %v3159 = vpop.f32.mrf.mxu0
      %v3160 = vadd.f32 0.0, %v3159
      %3161 = vmatmul.bf16.gmra.mxu0 %v2018
      %v3162 = vpop.f32.mrf.mxu0
      %v3163 = vadd.f32 0.0, %v3162
      %v3164 = vpop.f32.mrf.mxu0
      %v3165 = vadd.f32 0.0, %v3164
      %3166 = vmatmul.bf16.gmra.mxu0 %v2021
      %v3167 = vpop.f32.mrf.mxu0
      %v3168 = vadd.f32 0.0, %v3167
      %v3169 = vpop.f32.mrf.mxu0
      %v3170 = vadd.f32 0.0, %v3169
      %3171 = vmatmul.bf16.gmra.mxu0 %v2024
      %v3172 = vpop.f32.mrf.mxu0
      %v3173 = vadd.f32 0.0, %v3172
      %v3174 = vpop.f32.mrf.mxu0
      %v3175 = vadd.f32 0.0, %v3174
      %3176 = vmatmul.bf16.gmra.mxu0 %v2027
      %v3177 = vpop.f32.mrf.mxu0
      %v3178 = vadd.f32 0.0, %v3177
      %v3179 = vpop.f32.mrf.mxu0
      %v3180 = vadd.f32 0.0, %v3179
      %3181 = vmatmul.bf16.gmra.mxu0 %v2030
      %v3182 = vpop.f32.mrf.mxu0
      %v3183 = vadd.f32 0.0, %v3182
      %v3184 = vpop.f32.mrf.mxu0
      %v3185 = vadd.f32 0.0, %v3184
      %3186 = vmatmul.bf16.gmra.mxu0 %v2033
      %v3187 = vpop.f32.mrf.mxu0
      %v3188 = vadd.f32 0.0, %v3187
      %v3189 = vpop.f32.mrf.mxu0
      %v3190 = vadd.f32 0.0, %v3189
      %3191 = vmatmul.bf16.gmra.mxu0 %v2036
      %v3192 = vpop.f32.mrf.mxu0
      %v3193 = vadd.f32 0.0, %v3192
      %v3194 = vpop.f32.mrf.mxu0
      %v3195 = vadd.f32 0.0, %v3194
      %3196 = vmatmul.bf16.gmra.mxu0 %v2039
      %v3197 = vpop.f32.mrf.mxu0
      %v3198 = vadd.f32 0.0, %v3197
      %v3199 = vpop.f32.mrf.mxu0
      %v3200 = vadd.f32 0.0, %v3199
      %3201 = vmatmul.bf16.gmra.mxu0 %v2042
      %v3202 = vpop.f32.mrf.mxu0
      %v3203 = vadd.f32 0.0, %v3202
      %v3204 = vpop.f32.mrf.mxu0
      %v3205 = vadd.f32 0.0, %v3204
      %3206 = vmatmul.bf16.gmra.mxu0 %v2045
      %v3207 = vpop.f32.mrf.mxu0
      %v3208 = vadd.f32 0.0, %v3207
      %v3209 = vpop.f32.mrf.mxu0
      %v3210 = vadd.f32 0.0, %v3209
      %3211 = vmatmul.bf16.gmra.mxu0 %v2048
      %v3212 = vpop.f32.mrf.mxu0
      %v3213 = vadd.f32 0.0, %v3212
      %v3214 = vpop.f32.mrf.mxu0
      %v3215 = vadd.f32 0.0, %v3214
      %3216 = vmatmul.bf16.gmra.mxu0 %v2051
      %v3217 = vpop.f32.mrf.mxu0
      %v3218 = vadd.f32 0.0, %v3217
      %v3219 = vpop.f32.mrf.mxu0
      %v3220 = vadd.f32 0.0, %v3219
      %3221 = vmatmul.bf16.gmra.mxu0 %v2054
      %v3222 = vpop.f32.mrf.mxu0
      %v3223 = vadd.f32 0.0, %v3222
      %v3224 = vpop.f32.mrf.mxu0
      %v3225 = vadd.f32 0.0, %v3224
      %3226 = vmatmul.bf16.gmra.mxu0 %v2057
      %v3227 = vpop.f32.mrf.mxu0
      %v3228 = vadd.f32 0.0, %v3227
      %v3229 = vpop.f32.mrf.mxu0
      %v3230 = vadd.f32 0.0, %v3229
      %3231 = vmatmul.bf16.gmra.mxu0 %v2060
      %v3232 = vpop.f32.mrf.mxu0
      %v3233 = vadd.f32 0.0, %v3232
      %v3234 = vpop.f32.mrf.mxu0
      %v3235 = vadd.f32 0.0, %v3234
      %3236 = vmatmul.bf16.gmra.mxu0 %v2063
      %v3237 = vpop.f32.mrf.mxu0
      %v3238 = vadd.f32 0.0, %v3237
      %v3239 = vpop.f32.mrf.mxu0
      %v3240 = vadd.f32 0.0, %v3239
      %3241 = vmatmul.bf16.gmra.mxu0 %v2066
      %v3242 = vpop.f32.mrf.mxu0
      %v3243 = vadd.f32 0.0, %v3242
      %v3244 = vpop.f32.mrf.mxu0
      %v3245 = vadd.f32 0.0, %v3244
      %3246 = vmatmul.bf16.gmra.mxu0 %v2069
      %v3247 = vpop.f32.mrf.mxu0
      %v3248 = vadd.f32 0.0, %v3247
      %v3249 = vpop.f32.mrf.mxu0
      %v3250 = vadd.f32 0.0, %v3249
      %3251 = vmatmul.bf16.gmra.mxu0 %v2072
      %v3252 = vpop.f32.mrf.mxu0
      %v3253 = vadd.f32 0.0, %v3252
      %v3254 = vpop.f32.mrf.mxu0
      %v3255 = vadd.f32 0.0, %v3254
      %3256 = vmatmul.bf16.gmra.mxu0 %v2075
      %v3257 = vpop.f32.mrf.mxu0
      %v3258 = vadd.f32 0.0, %v3257
      %v3259 = vpop.f32.mrf.mxu0
      %v3260 = vadd.f32 0.0, %v3259
      %3261 = vmatmul.bf16.gmra.mxu0 %v2078
      %v3262 = vpop.f32.mrf.mxu0
      %v3263 = vadd.f32 0.0, %v3262
      %v3264 = vpop.f32.mrf.mxu0
      %v3265 = vadd.f32 0.0, %v3264
      %3266 = vmatmul.bf16.gmra.mxu0 %v2081
      %v3267 = vpop.f32.mrf.mxu0
      %v3268 = vadd.f32 0.0, %v3267
      %v3269 = vpop.f32.mrf.mxu0
      %v3270 = vadd.f32 0.0, %v3269
      %3271 = vmatmul.bf16.gmra.mxu0 %v2084
      %v3272 = vpop.f32.mrf.mxu0
      %v3273 = vadd.f32 0.0, %v3272
      %v3274 = vpop.f32.mrf.mxu0
      %v3275 = vadd.f32 0.0, %v3274
      %3276 = vmatmul.bf16.gmra.mxu0 %v2087
      %v3277 = vpop.f32.mrf.mxu0
      %v3278 = vadd.f32 0.0, %v3277
      %v3279 = vpop.f32.mrf.mxu0
      %v3280 = vadd.f32 0.0, %v3279
      %3281 = vmatmul.bf16.gmra.mxu0 %v2090
      %v3282 = vpop.f32.mrf.mxu0
      %v3283 = vadd.f32 0.0, %v3282
      %v3284 = vpop.f32.mrf.mxu0
      %v3285 = vadd.f32 0.0, %v3284
      %3286 = vmatmul.bf16.gmra.mxu0 %v2093
      %v3287 = vpop.f32.mrf.mxu0
      %v3288 = vadd.f32 0.0, %v3287
      %v3289 = vpop.f32.mrf.mxu0
      %v3290 = vadd.f32 0.0, %v3289
      %3291 = vmatmul.bf16.gmra.mxu0 %v2096
      %v3292 = vpop.f32.mrf.mxu0
      %v3293 = vadd.f32 0.0, %v3292
      %v3294 = vpop.f32.mrf.mxu0
      %v3295 = vadd.f32 0.0, %v3294
      %3296 = vmatmul.bf16.gmra.mxu0 %v2099
      %v3297 = vpop.f32.mrf.mxu0
      %v3298 = vadd.f32 0.0, %v3297
      %v3299 = vpop.f32.mrf.mxu0
      %v3300 = vadd.f32 0.0, %v3299
      %3301 = vmatmul.bf16.gmra.mxu0 %v2102
      %v3302 = vpop.f32.mrf.mxu0
      %v3303 = vadd.f32 0.0, %v3302
      %v3304 = vpop.f32.mrf.mxu0
      %v3305 = vadd.f32 0.0, %v3304
      %3306 = vmatmul.bf16.gmra.mxu0 %v2105
      %v3307 = vpop.f32.mrf.mxu0
      %v3308 = vadd.f32 0.0, %v3307
      %v3309 = vpop.f32.mrf.mxu0
      %v3310 = vadd.f32 0.0, %v3309
      %3311 = vmatmul.bf16.gmra.mxu0 %v2108
      %v3312 = vpop.f32.mrf.mxu0
      %v3313 = vadd.f32 0.0, %v3312
      %v3314 = vpop.f32.mrf.mxu0
      %v3315 = vadd.f32 0.0, %v3314
      %3316 = vmatmul.bf16.gmra.mxu0 %v2111
      %v3317 = vpop.f32.mrf.mxu0
      %v3318 = vadd.f32 0.0, %v3317
      %v3319 = vpop.f32.mrf.mxu0
      %v3320 = vadd.f32 0.0, %v3319
      %3321 = vmatmul.bf16.gmra.mxu0 %v2114
      %v3322 = vpop.f32.mrf.mxu0
      %v3323 = vadd.f32 0.0, %v3322
      %v3324 = vpop.f32.mrf.mxu0
      %v3325 = vadd.f32 0.0, %v3324
      %3326 = vmatmul.bf16.gmra.mxu0 %v2117
      %v3327 = vpop.f32.mrf.mxu0
      %v3328 = vadd.f32 0.0, %v3327
      %v3329 = vpop.f32.mrf.mxu0
      %v3330 = vadd.f32 0.0, %v3329
      %3331 = vmatmul.bf16.gmra.mxu0 %v2120
      %v3332 = vpop.f32.mrf.mxu0
      %v3333 = vadd.f32 0.0, %v3332
      %v3334 = vpop.f32.mrf.mxu0
      %v3335 = vadd.f32 0.0, %v3334
      %3336 = vmatmul.bf16.gmra.mxu0 %v2123
      %v3337 = vpop.f32.mrf.mxu0
      %v3338 = vadd.f32 0.0, %v3337
      %v3339 = vpop.f32.mrf.mxu0
      %v3340 = vadd.f32 0.0, %v3339
      %3341 = vmatmul.bf16.gmra.mxu0 %v2126
      %v3342 = vpop.f32.mrf.mxu0
      %v3343 = vadd.f32 0.0, %v3342
      %v3344 = vpop.f32.mrf.mxu0
      %v3345 = vadd.f32 0.0, %v3344
      %3346 = vmatmul.bf16.gmra.mxu0 %v2129
      %v3347 = vpop.f32.mrf.mxu0
      %v3348 = vadd.f32 0.0, %v3347
      %v3349 = vpop.f32.mrf.mxu0
      %v3350 = vadd.f32 0.0, %v3349
      %3351 = vmatmul.bf16.gmra.mxu0 %v2132
      %v3352 = vpop.f32.mrf.mxu0
      %v3353 = vadd.f32 0.0, %v3352
      %v3354 = vpop.f32.mrf.mxu0
      %v3355 = vadd.f32 0.0, %v3354
      %3356 = vmatmul.bf16.gmra.mxu0 %v2135
      %v3357 = vpop.f32.mrf.mxu0
      %v3358 = vadd.f32 0.0, %v3357
      %v3359 = vpop.f32.mrf.mxu0
      %v3360 = vadd.f32 0.0, %v3359
      %3361 = vmatmul.bf16.gmra.mxu0 %v2138
      %v3362 = vpop.f32.mrf.mxu0
      %v3363 = vadd.f32 0.0, %v3362
      %v3364 = vpop.f32.mrf.mxu0
      %v3365 = vadd.f32 0.0, %v3364
      %3366 = vmatmul.bf16.gmra.mxu0 %v2141
      %v3367 = vpop.f32.mrf.mxu0
      %v3368 = vadd.f32 0.0, %v3367
      %v3369 = vpop.f32.mrf.mxu0
      %v3370 = vadd.f32 0.0, %v3369
      %3371 = vmatmul.bf16.gmra.mxu0 %v2144
      %v3372 = vpop.f32.mrf.mxu0
      %v3373 = vadd.f32 0.0, %v3372
      %v3374 = vpop.f32.mrf.mxu0
      %v3375 = vadd.f32 0.0, %v3374
      %3376 = vmatmul.bf16.gmra.mxu0 %v2147
      %v3377 = vpop.f32.mrf.mxu0
      %v3378 = vadd.f32 0.0, %v3377
      %v3379 = vpop.f32.mrf.mxu0
      %v3380 = vadd.f32 0.0, %v3379
      %3381 = vmatmul.bf16.gmra.mxu0 %v2150
      %v3382 = vpop.f32.mrf.mxu0
      %v3383 = vadd.f32 0.0, %v3382
      %v3384 = vpop.f32.mrf.mxu0
      %v3385 = vadd.f32 0.0, %v3384
      %3386 = vmatmul.bf16.gmra.mxu0 %v2153
      %v3387 = vpop.f32.mrf.mxu0
      %v3388 = vadd.f32 0.0, %v3387
      %v3389 = vpop.f32.mrf.mxu0
      %v3390 = vadd.f32 0.0, %v3389
      %3391 = vmatmul.bf16.gmra.mxu0 %v2156
      %v3392 = vpop.f32.mrf.mxu0
      %v3393 = vadd.f32 0.0, %v3392
      %v3394 = vpop.f32.mrf.mxu0
      %v3395 = vadd.f32 0.0, %v3394
      %3396 = vmatmul.bf16.gmra.mxu0 %v2159
      %v3397 = vpop.f32.mrf.mxu0
      %v3398 = vadd.f32 0.0, %v3397
      %v3399 = vpop.f32.mrf.mxu0
      %v3400 = vadd.f32 0.0, %v3399
      %3401 = vmatmul.bf16.gmra.mxu0 %v2162
      %v3402 = vpop.f32.mrf.mxu0
      %v3403 = vadd.f32 0.0, %v3402
      %v3404 = vpop.f32.mrf.mxu0
      %v3405 = vadd.f32 0.0, %v3404
      %3406 = vmatmul.bf16.gmra.mxu0 %v2165
      %v3407 = vpop.f32.mrf.mxu0
      %v3408 = vadd.f32 0.0, %v3407
      %v3409 = vpop.f32.mrf.mxu0
      %v3410 = vadd.f32 0.0, %v3409
      %3411 = vmatmul.bf16.gmra.mxu0 %v2168
      %v3412 = vpop.f32.mrf.mxu0
      %v3413 = vadd.f32 0.0, %v3412
      %v3414 = vpop.f32.mrf.mxu0
      %v3415 = vadd.f32 0.0, %v3414
      %3416 = vmatmul.bf16.gmra.mxu0 %v2171
      %v3417 = vpop.f32.mrf.mxu0
      %v3418 = vadd.f32 0.0, %v3417
      %v3419 = vpop.f32.mrf.mxu0
      %v3420 = vadd.f32 0.0, %v3419
      %3421 = vmatmul.bf16.gmra.mxu0 %v2174
      %v3422 = vpop.f32.mrf.mxu0
      %v3423 = vadd.f32 0.0, %v3422
      %v3424 = vpop.f32.mrf.mxu0
      %v3425 = vadd.f32 0.0, %v3424
      %3426 = vmatmul.bf16.gmra.mxu0 %v2177
      %v3427 = vpop.f32.mrf.mxu0
      %v3428 = vadd.f32 0.0, %v3427
      %v3429 = vpop.f32.mrf.mxu0
      %v3430 = vadd.f32 0.0, %v3429
      %3431 = vmatmul.bf16.gmra.mxu0 %v2180
      %v3432 = vpop.f32.mrf.mxu0
      %v3433 = vadd.f32 0.0, %v3432
      %v3434 = vpop.f32.mrf.mxu0
      %v3435 = vadd.f32 0.0, %v3434
      %3436 = vmatmul.bf16.gmra.mxu0 %v2183
      %v3437 = vpop.f32.mrf.mxu0
      %v3438 = vadd.f32 0.0, %v3437
      %v3439 = vpop.f32.mrf.mxu0
      %v3440 = vadd.f32 0.0, %v3439
      %3441 = vmatmul.bf16.gmra.mxu0 %v2186
      %v3442 = vpop.f32.mrf.mxu0
      %v3443 = vadd.f32 0.0, %v3442
      %v3444 = vpop.f32.mrf.mxu0
      %v3445 = vadd.f32 0.0, %v3444
      %3446 = vmatmul.bf16.gmra.mxu0 %v2189
      %v3447 = vpop.f32.mrf.mxu0
      %v3448 = vadd.f32 0.0, %v3447
      %v3449 = vpop.f32.mrf.mxu0
      %v3450 = vadd.f32 0.0, %v3449
      %3451 = vmatmul.bf16.gmra.mxu0 %v2192
      %v3452 = vpop.f32.mrf.mxu0
      %v3453 = vadd.f32 0.0, %v3452
      %v3454 = vpop.f32.mrf.mxu0
      %v3455 = vadd.f32 0.0, %v3454
      %3456 = vmatmul.bf16.gmra.mxu0 %v2195
      %v3457 = vpop.f32.mrf.mxu0
      %v3458 = vadd.f32 0.0, %v3457
      %v3459 = vpop.f32.mrf.mxu0
      %v3460 = vadd.f32 0.0, %v3459
      %3461 = vmatmul.bf16.gmra.mxu0 %v2198
      %v3462 = vpop.f32.mrf.mxu0
      %v3463 = vadd.f32 0.0, %v3462
      %v3464 = vpop.f32.mrf.mxu0
      %v3465 = vadd.f32 0.0, %v3464
      %3466 = vmatmul.bf16.gmra.mxu0 %v2201
      %v3467 = vpop.f32.mrf.mxu0
      %v3468 = vadd.f32 0.0, %v3467
      %v3469 = vpop.f32.mrf.mxu0
      %v3470 = vadd.f32 0.0, %v3469
      %3471 = vmatmul.bf16.gmra.mxu0 %v2204
      %v3472 = vpop.f32.mrf.mxu0
      %v3473 = vadd.f32 0.0, %v3472
      %v3474 = vpop.f32.mrf.mxu0
      %v3475 = vadd.f32 0.0, %v3474
      %3476 = vmatmul.bf16.gmra.mxu0 %v2207
      %v3477 = vpop.f32.mrf.mxu0
      %v3478 = vadd.f32 0.0, %v3477
      %v3479 = vpop.f32.mrf.mxu0
      %v3480 = vadd.f32 0.0, %v3479
      %3481 = vmatmul.bf16.gmra.mxu0 %v2210
      %v3482 = vpop.f32.mrf.mxu0
      %v3483 = vadd.f32 0.0, %v3482
      %v3484 = vpop.f32.mrf.mxu0
      %v3485 = vadd.f32 0.0, %v3484
      %3486 = vmatmul.bf16.gmra.mxu0 %v2213
      %v3487 = vpop.f32.mrf.mxu0
      %v3488 = vadd.f32 0.0, %v3487
      %v3489 = vpop.f32.mrf.mxu0
      %v3490 = vadd.f32 0.0, %v3489
      %3491 = vmatmul.bf16.gmra.mxu0 %v2216
      %v3492 = vpop.f32.mrf.mxu0
      %v3493 = vadd.f32 0.0, %v3492
      %v3494 = vpop.f32.mrf.mxu0
      %v3495 = vadd.f32 0.0, %v3494
      %3496 = vmatmul.bf16.gmra.mxu0 %v2219
      %v3497 = vpop.f32.mrf.mxu0
      %v3498 = vadd.f32 0.0, %v3497
      %v3499 = vpop.f32.mrf.mxu0
      %v3500 = vadd.f32 0.0, %v3499
      %3501 = vmatmul.bf16.gmra.mxu0 %v2222
      %v3502 = vpop.f32.mrf.mxu0
      %v3503 = vadd.f32 0.0, %v3502
      %v3504 = vpop.f32.mrf.mxu0
      %v3505 = vadd.f32 0.0, %v3504
      %3506 = vmatmul.bf16.gmra.mxu0 %v2225
      %v3507 = vpop.f32.mrf.mxu0
      %v3508 = vadd.f32 0.0, %v3507
      %v3509 = vpop.f32.mrf.mxu0
      %v3510 = vadd.f32 0.0, %v3509
      %3511 = vmatmul.bf16.gmra.mxu0 %v2228
      %v3512 = vpop.f32.mrf.mxu0
      %v3513 = vadd.f32 0.0, %v3512
      %v3514 = vpop.f32.mrf.mxu0
      %v3515 = vadd.f32 0.0, %v3514
      %3516 = vmatmul.bf16.gmra.mxu0 %v2231
      %v3517 = vpop.f32.mrf.mxu0
      %v3518 = vadd.f32 0.0, %v3517
      %v3519 = vpop.f32.mrf.mxu0
      %v3520 = vadd.f32 0.0, %v3519
      %3521 = vmatmul.bf16.gmra.mxu0 %v2234
      %v3522 = vpop.f32.mrf.mxu0
      %v3523 = vadd.f32 0.0, %v3522
      %v3524 = vpop.f32.mrf.mxu0
      %v3525 = vadd.f32 0.0, %v3524
      %3526 = vmatmul.bf16.gmra.mxu0 %v2237
      %v3527 = vpop.f32.mrf.mxu0
      %v3528 = vadd.f32 0.0, %v3527
      %v3529 = vpop.f32.mrf.mxu0
      %v3530 = vadd.f32 0.0, %v3529
      %3531 = vmatmul.bf16.gmra.mxu0 %v2240
      %v3532 = vpop.f32.mrf.mxu0
      %v3533 = vadd.f32 0.0, %v3532
      %v3534 = vpop.f32.mrf.mxu0
      %v3535 = vadd.f32 0.0, %v3534
      %3536 = vmatmul.bf16.gmra.mxu0 %v2243
      %v3537 = vpop.f32.mrf.mxu0
      %v3538 = vadd.f32 0.0, %v3537
      %v3539 = vpop.f32.mrf.mxu0
      %v3540 = vadd.f32 0.0, %v3539
      %3541 = vmatmul.bf16.gmra.mxu0 %v2246
      %v3542 = vpop.f32.mrf.mxu0
      %v3543 = vadd.f32 0.0, %v3542
      %v3544 = vpop.f32.mrf.mxu0
      %v3545 = vadd.f32 0.0, %v3544
      %3546 = vmatmul.bf16.gmra.mxu0 %v2249
      %v3547 = vpop.f32.mrf.mxu0
      %v3548 = vadd.f32 0.0, %v3547
      %v3549 = vpop.f32.mrf.mxu0
      %v3550 = vadd.f32 0.0, %v3549
      %3551 = vmatmul.bf16.gmra.mxu0 %v2252
      %v3552 = vpop.f32.mrf.mxu0
      %v3553 = vadd.f32 0.0, %v3552
      %v3554 = vpop.f32.mrf.mxu0
      %v3555 = vadd.f32 0.0, %v3554
      %3556 = vmatmul.bf16.gmra.mxu0 %v2255
      %v3557 = vpop.f32.mrf.mxu0
      %v3558 = vadd.f32 0.0, %v3557
      %v3559 = vpop.f32.mrf.mxu0
      %v3560 = vadd.f32 0.0, %v3559
      %3561 = vmatmul.bf16.gmra.mxu0 %v2258
      %v3562 = vpop.f32.mrf.mxu0
      %v3563 = vadd.f32 0.0, %v3562
      %v3564 = vpop.f32.mrf.mxu0
      %v3565 = vadd.f32 0.0, %v3564
      %3566 = vmatmul.bf16.gmra.mxu0 %v2261
      %v3567 = vpop.f32.mrf.mxu0
      %v3568 = vadd.f32 0.0, %v3567
      %v3569 = vpop.f32.mrf.mxu0
      %v3570 = vadd.f32 0.0, %v3569
      %3571 = vmatmul.bf16.gmra.mxu0 %v2264
      %v3572 = vpop.f32.mrf.mxu0
      %v3573 = vadd.f32 0.0, %v3572
      %v3574 = vpop.f32.mrf.mxu0
      %v3575 = vadd.f32 0.0, %v3574
      %3576 = vmatmul.bf16.gmra.mxu0 %v2267
      %v3577 = vpop.f32.mrf.mxu0
      %v3578 = vadd.f32 0.0, %v3577
      %v3579 = vpop.f32.mrf.mxu0
      %v3580 = vadd.f32 0.0, %v3579
      %3581 = vmatmul.bf16.gmra.mxu0 %v2270
      %v3582 = vpop.f32.mrf.mxu0
      %v3583 = vadd.f32 0.0, %v3582
      %v3584 = vpop.f32.mrf.mxu0
      %v3585 = vadd.f32 0.0, %v3584
      %3586 = vmatmul.bf16.gmra.mxu0 %v2273
      %v3587 = vpop.f32.mrf.mxu0
      %v3588 = vadd.f32 0.0, %v3587
      %v3589 = vpop.f32.mrf.mxu0
      %v3590 = vadd.f32 0.0, %v3589
      %3591 = vmatmul.bf16.gmra.mxu0 %v2276
      %v3592 = vpop.f32.mrf.mxu0
      %v3593 = vadd.f32 0.0, %v3592
      %v3594 = vpop.f32.mrf.mxu0
      %v3595 = vadd.f32 0.0, %v3594
      %3596 = vmatmul.bf16.gmra.mxu0 %v2279
      %v3597 = vpop.f32.mrf.mxu0
      %v3598 = vadd.f32 0.0, %v3597
      %v3599 = vpop.f32.mrf.mxu0
      %v3600 = vadd.f32 0.0, %v3599
      %3601 = vmatmul.bf16.gmra.mxu0 %v2282
      %v3602 = vpop.f32.mrf.mxu0
      %v3603 = vadd.f32 0.0, %v3602
      %v3604 = vpop.f32.mrf.mxu0
      %v3605 = vadd.f32 0.0, %v3604
      %3606 = vmatmul.bf16.gmra.mxu0 %v2285
      %v3607 = vpop.f32.mrf.mxu0
      %v3608 = vadd.f32 0.0, %v3607
      %v3609 = vpop.f32.mrf.mxu0
      %v3610 = vadd.f32 0.0, %v3609
      %3611 = vmatmul.bf16.gmra.mxu0 %v2288
      %v3612 = vpop.f32.mrf.mxu0
      %v3613 = vadd.f32 0.0, %v3612
      %v3614 = vpop.f32.mrf.mxu0
      %v3615 = vadd.f32 0.0, %v3614
      %3616 = vmatmul.bf16.gmra.mxu0 %v2291
      %v3617 = vpop.f32.mrf.mxu0
      %v3618 = vadd.f32 0.0, %v3617
      %v3619 = vpop.f32.mrf.mxu0
      %v3620 = vadd.f32 0.0, %v3619
      %3621 = vmatmul.bf16.gmra.mxu0 %v2294
      %v3622 = vpop.f32.mrf.mxu0
      %v3623 = vadd.f32 0.0, %v3622
      %v3624 = vpop.f32.mrf.mxu0
      %v3625 = vadd.f32 0.0, %v3624
      %3626 = vmatmul.bf16.gmra.mxu0 %v2297
      %v3627 = vpop.f32.mrf.mxu0
      %v3628 = vadd.f32 0.0, %v3627
      %v3629 = vpop.f32.mrf.mxu0
      %v3630 = vadd.f32 0.0, %v3629
      %3631 = vmatmul.bf16.gmra.mxu0 %v2300
      %v3632 = vpop.f32.mrf.mxu0
      %v3633 = vadd.f32 0.0, %v3632
      %v3634 = vpop.f32.mrf.mxu0
      %v3635 = vadd.f32 0.0, %v3634
      %3636 = vmatmul.bf16.gmra.mxu0 %v2303
      %v3637 = vpop.f32.mrf.mxu0
      %v3638 = vadd.f32 0.0, %v3637
      %v3639 = vpop.f32.mrf.mxu0
      %v3640 = vadd.f32 0.0, %v3639
      %3641 = vmatmul.bf16.gmra.mxu0 %v2306
      %v3642 = vpop.f32.mrf.mxu0
      %v3643 = vadd.f32 0.0, %v3642
      %v3644 = vpop.f32.mrf.mxu0
      %v3645 = vadd.f32 0.0, %v3644
      %3646 = vmatmul.bf16.gmra.mxu0 %v2309
      %v3647 = vpop.f32.mrf.mxu0
      %v3648 = vadd.f32 0.0, %v3647
      %v3649 = vpop.f32.mrf.mxu0
      %v3650 = vadd.f32 0.0, %v3649
      %3651 = vmatmul.bf16.gmra.mxu0 %v2312
      %v3652 = vpop.f32.mrf.mxu0
      %v3653 = vadd.f32 0.0, %v3652
      %v3654 = vpop.f32.mrf.mxu0
      %v3655 = vadd.f32 0.0, %v3654
      %3656 = vmatmul.bf16.gmra.mxu0 %v2315
      %v3657 = vpop.f32.mrf.mxu0
      %v3658 = vadd.f32 0.0, %v3657
      %v3659 = vpop.f32.mrf.mxu0
      %v3660 = vadd.f32 0.0, %v3659
      %3661 = vmatmul.bf16.gmra.mxu0 %v2318
      %v3662 = vpop.f32.mrf.mxu0
      %v3663 = vadd.f32 0.0, %v3662
      %v3664 = vpop.f32.mrf.mxu0
      %v3665 = vadd.f32 0.0, %v3664
      %3666 = vmatmul.bf16.gmra.mxu0 %v2321
      %v3667 = vpop.f32.mrf.mxu0
      %v3668 = vadd.f32 0.0, %v3667
      %v3669 = vpop.f32.mrf.mxu0
      %v3670 = vadd.f32 0.0, %v3669
      %3671 = vmatmul.bf16.gmra.mxu0 %v2324
      %v3672 = vpop.f32.mrf.mxu0
      %v3673 = vadd.f32 0.0, %v3672
      %v3674 = vpop.f32.mrf.mxu0
      %v3675 = vadd.f32 0.0, %v3674
      %3676 = vmatmul.bf16.gmra.mxu0 %v2327
      %v3677 = vpop.f32.mrf.mxu0
      %v3678 = vadd.f32 0.0, %v3677
      %v3679 = vpop.f32.mrf.mxu0
      %v3680 = vadd.f32 0.0, %v3679
      %3681 = vmatmul.bf16.gmra.mxu0 %v2330
      %v3682 = vpop.f32.mrf.mxu0
      %v3683 = vadd.f32 0.0, %v3682
      %v3684 = vpop.f32.mrf.mxu0
      %v3685 = vadd.f32 0.0, %v3684
      %3686 = vmatmul.bf16.gmra.mxu0 %v2333
      %v3687 = vpop.f32.mrf.mxu0
      %v3688 = vadd.f32 0.0, %v3687
      %v3689 = vpop.f32.mrf.mxu0
      %v3690 = vadd.f32 0.0, %v3689
      %3691 = vmatmul.bf16.gmra.mxu0 %v2336
      %v3692 = vpop.f32.mrf.mxu0
      %v3693 = vadd.f32 0.0, %v3692
      %v3694 = vpop.f32.mrf.mxu0
      %v3695 = vadd.f32 0.0, %v3694
      %3696 = vmatmul.bf16.gmra.mxu0 %v2339
      %v3697 = vpop.f32.mrf.mxu0
      %v3698 = vadd.f32 0.0, %v3697
      %v3699 = vpop.f32.mrf.mxu0
      %v3700 = vadd.f32 0.0, %v3699
      %3701 = vmatmul.bf16.gmra.mxu0 %v2342
      %v3702 = vpop.f32.mrf.mxu0
      %v3703 = vadd.f32 0.0, %v3702
      %v3704 = vpop.f32.mrf.mxu0
      %v3705 = vadd.f32 0.0, %v3704
      %3706 = vmatmul.bf16.gmra.mxu0 %v2345
      %v3707 = vpop.f32.mrf.mxu0
      %v3708 = vadd.f32 0.0, %v3707
      %v3709 = vpop.f32.mrf.mxu0
      %v3710 = vadd.f32 0.0, %v3709
      %3711 = vmatmul.bf16.gmra.mxu0 %v2348
      %v3712 = vpop.f32.mrf.mxu0
      %v3713 = vadd.f32 0.0, %v3712
      %v3714 = vpop.f32.mrf.mxu0
      %v3715 = vadd.f32 0.0, %v3714
      %3716 = vmatmul.bf16.gmra.mxu0 %v2351
      %v3717 = vpop.f32.mrf.mxu0
      %v3718 = vadd.f32 0.0, %v3717
      %v3719 = vpop.f32.mrf.mxu0
      %v3720 = vadd.f32 0.0, %v3719
      %3721 = vmatmul.bf16.gmra.mxu0 %v2354
      %v3722 = vpop.f32.mrf.mxu0
      %v3723 = vadd.f32 0.0, %v3722
      %v3724 = vpop.f32.mrf.mxu0
      %v3725 = vadd.f32 0.0, %v3724
      %3726 = vmatmul.bf16.gmra.mxu0 %v2357
      %v3727 = vpop.f32.mrf.mxu0
      %v3728 = vadd.f32 0.0, %v3727
      %v3729 = vpop.f32.mrf.mxu0
      %v3730 = vadd.f32 0.0, %v3729
      %3731 = vmatmul.bf16.gmra.mxu0 %v2360
      %v3732 = vpop.f32.mrf.mxu0
      %v3733 = vadd.f32 0.0, %v3732
      %v3734 = vpop.f32.mrf.mxu0
      %v3735 = vadd.f32 0.0, %v3734
      %3736 = vmatmul.bf16.gmra.mxu0 %v2363
      %v3737 = vpop.f32.mrf.mxu0
      %v3738 = vadd.f32 0.0, %v3737
      %v3739 = vpop.f32.mrf.mxu0
      %v3740 = vadd.f32 0.0, %v3739
      %3741 = vmatmul.bf16.gmra.mxu0 %v2366
      %v3742 = vpop.f32.mrf.mxu0
      %v3743 = vadd.f32 0.0, %v3742
      %v3744 = vpop.f32.mrf.mxu0
      %v3745 = vadd.f32 0.0, %v3744
      %3746 = vmatmul.bf16.gmra.mxu0 %v2369
      %v3747 = vpop.f32.mrf.mxu0
      %v3748 = vadd.f32 0.0, %v3747
      %v3749 = vpop.f32.mrf.mxu0
      %v3750 = vadd.f32 0.0, %v3749
      %3751 = vmatmul.bf16.gmra.mxu0 %v2372
      %v3752 = vpop.f32.mrf.mxu0
      %v3753 = vadd.f32 0.0, %v3752
      %v3754 = vpop.f32.mrf.mxu0
      %v3755 = vadd.f32 0.0, %v3754
      %3756 = vmatmul.bf16.gmra.mxu0 %v2375
      %v3757 = vpop.f32.mrf.mxu0
      %v3758 = vadd.f32 0.0, %v3757
      %v3759 = vpop.f32.mrf.mxu0
      %v3760 = vadd.f32 0.0, %v3759
      %3761 = vmatmul.bf16.gmra.mxu0 %v2378
      %v3762 = vpop.f32.mrf.mxu0
      %v3763 = vadd.f32 0.0, %v3762
      %v3764 = vpop.f32.mrf.mxu0
      %v3765 = vadd.f32 0.0, %v3764
      %3766 = vmatmul.bf16.gmra.mxu0 %v2381
      %v3767 = vpop.f32.mrf.mxu0
      %v3768 = vadd.f32 0.0, %v3767
      %v3769 = vpop.f32.mrf.mxu0
      %v3770 = vadd.f32 0.0, %v3769
      %3771 = vmatmul.bf16.gmra.mxu0 %v2384
      %v3772 = vpop.f32.mrf.mxu0
      %v3773 = vadd.f32 0.0, %v3772
      %v3774 = vpop.f32.mrf.mxu0
      %v3775 = vadd.f32 0.0, %v3774
      %3776 = vmatmul.bf16.gmra.mxu0 %v2387
      %v3777 = vpop.f32.mrf.mxu0
      %v3778 = vadd.f32 0.0, %v3777
      %v3779 = vpop.f32.mrf.mxu0
      %v3780 = vadd.f32 0.0, %v3779
      %3781 = vmatmul.bf16.gmra.mxu0 %v2390
      %v3782 = vpop.f32.mrf.mxu0
      %v3783 = vadd.f32 0.0, %v3782
      %v3784 = vpop.f32.mrf.mxu0
      %v3785 = vadd.f32 0.0, %v3784
      %3786 = vmatmul.bf16.gmra.mxu0 %v2393
      %v3787 = vpop.f32.mrf.mxu0
      %v3788 = vadd.f32 0.0, %v3787
      %v3789 = vpop.f32.mrf.mxu0
      %v3790 = vadd.f32 0.0, %v3789
      %3791 = vmatmul.bf16.gmra.mxu0 %v2396
      %v3792 = vpop.f32.mrf.mxu0
      %v3793 = vadd.f32 0.0, %v3792
      %v3794 = vpop.f32.mrf.mxu0
      %v3795 = vadd.f32 0.0, %v3794
      %3796 = vdwg.mxu0
      %3797 = vmatpush.bf16.msra.mxu0 %v2742
      %3798 = vmatpush.bf16.msra.mxu0 %v2741
      %3799 = vmatpush.bf16.msra.mxu0 %v2740
      %3800 = vmatpush.bf16.msra.mxu0 %v2739
      %3801 = vmatpush.bf16.msra.mxu0 %v2738
      %3802 = vmatpush.bf16.msra.mxu0 %v2737
      %3803 = vmatpush.bf16.msra.mxu0 %v2736
      %3804 = vmatpush.bf16.msra.mxu0 %v2735
      %3805 = vmatmul.bf16.gmra.mxu0 %v2016
      %v3806 = vpop.f32.mrf.mxu0
      %v3807 = vadd.f32 %v3158, %v3806
      %v3808 = vpop.f32.mrf.mxu0
      %v3809 = vadd.f32 %v3160, %v3808
      %3810 = vmatmul.bf16.gmra.mxu0 %v2019
      %v3811 = vpop.f32.mrf.mxu0
      %v3812 = vadd.f32 %v3163, %v3811
      %v3813 = vpop.f32.mrf.mxu0
      %v3814 = vadd.f32 %v3165, %v3813
      %3815 = vmatmul.bf16.gmra.mxu0 %v2022
      %v3816 = vpop.f32.mrf.mxu0
      %v3817 = vadd.f32 %v3168, %v3816
      %v3818 = vpop.f32.mrf.mxu0
      %v3819 = vadd.f32 %v3170, %v3818
      %3820 = vmatmul.bf16.gmra.mxu0 %v2025
      %v3821 = vpop.f32.mrf.mxu0
      %v3822 = vadd.f32 %v3173, %v3821
      %v3823 = vpop.f32.mrf.mxu0
      %v3824 = vadd.f32 %v3175, %v3823
      %3825 = vmatmul.bf16.gmra.mxu0 %v2028
      %v3826 = vpop.f32.mrf.mxu0
      %v3827 = vadd.f32 %v3178, %v3826
      %v3828 = vpop.f32.mrf.mxu0
      %v3829 = vadd.f32 %v3180, %v3828
      %3830 = vmatmul.bf16.gmra.mxu0 %v2031
      %v3831 = vpop.f32.mrf.mxu0
      %v3832 = vadd.f32 %v3183, %v3831
      %v3833 = vpop.f32.mrf.mxu0
      %v3834 = vadd.f32 %v3185, %v3833
      %3835 = vmatmul.bf16.gmra.mxu0 %v2034
      %v3836 = vpop.f32.mrf.mxu0
      %v3837 = vadd.f32 %v3188, %v3836
      %v3838 = vpop.f32.mrf.mxu0
      %v3839 = vadd.f32 %v3190, %v3838
      %3840 = vmatmul.bf16.gmra.mxu0 %v2037
      %v3841 = vpop.f32.mrf.mxu0
      %v3842 = vadd.f32 %v3193, %v3841
      %v3843 = vpop.f32.mrf.mxu0
      %v3844 = vadd.f32 %v3195, %v3843
      %3845 = vmatmul.bf16.gmra.mxu0 %v2040
      %v3846 = vpop.f32.mrf.mxu0
      %v3847 = vadd.f32 %v3198, %v3846
      %v3848 = vpop.f32.mrf.mxu0
      %v3849 = vadd.f32 %v3200, %v3848
      %3850 = vmatmul.bf16.gmra.mxu0 %v2043
      %v3851 = vpop.f32.mrf.mxu0
      %v3852 = vadd.f32 %v3203, %v3851
      %v3853 = vpop.f32.mrf.mxu0
      %v3854 = vadd.f32 %v3205, %v3853
      %3855 = vmatmul.bf16.gmra.mxu0 %v2046
      %v3856 = vpop.f32.mrf.mxu0
      %v3857 = vadd.f32 %v3208, %v3856
      %v3858 = vpop.f32.mrf.mxu0
      %v3859 = vadd.f32 %v3210, %v3858
      %3860 = vmatmul.bf16.gmra.mxu0 %v2049
      %v3861 = vpop.f32.mrf.mxu0
      %v3862 = vadd.f32 %v3213, %v3861
      %v3863 = vpop.f32.mrf.mxu0
      %v3864 = vadd.f32 %v3215, %v3863
      %3865 = vmatmul.bf16.gmra.mxu0 %v2052
      %v3866 = vpop.f32.mrf.mxu0
      %v3867 = vadd.f32 %v3218, %v3866
      %v3868 = vpop.f32.mrf.mxu0
      %v3869 = vadd.f32 %v3220, %v3868
      %3870 = vmatmul.bf16.gmra.mxu0 %v2055
      %v3871 = vpop.f32.mrf.mxu0
      %v3872 = vadd.f32 %v3223, %v3871
      %v3873 = vpop.f32.mrf.mxu0
      %v3874 = vadd.f32 %v3225, %v3873
      %3875 = vmatmul.bf16.gmra.mxu0 %v2058
      %v3876 = vpop.f32.mrf.mxu0
      %v3877 = vadd.f32 %v3228, %v3876
      %v3878 = vpop.f32.mrf.mxu0
      %v3879 = vadd.f32 %v3230, %v3878
      %3880 = vmatmul.bf16.gmra.mxu0 %v2061
      %v3881 = vpop.f32.mrf.mxu0
      %v3882 = vadd.f32 %v3233, %v3881
      %v3883 = vpop.f32.mrf.mxu0
      %v3884 = vadd.f32 %v3235, %v3883
      %3885 = vmatmul.bf16.gmra.mxu0 %v2064
      %v3886 = vpop.f32.mrf.mxu0
      %v3887 = vadd.f32 %v3238, %v3886
      %v3888 = vpop.f32.mrf.mxu0
      %v3889 = vadd.f32 %v3240, %v3888
      %3890 = vmatmul.bf16.gmra.mxu0 %v2067
      %v3891 = vpop.f32.mrf.mxu0
      %v3892 = vadd.f32 %v3243, %v3891
      %v3893 = vpop.f32.mrf.mxu0
      %v3894 = vadd.f32 %v3245, %v3893
      %3895 = vmatmul.bf16.gmra.mxu0 %v2070
      %v3896 = vpop.f32.mrf.mxu0
      %v3897 = vadd.f32 %v3248, %v3896
      %v3898 = vpop.f32.mrf.mxu0
      %v3899 = vadd.f32 %v3250, %v3898
      %3900 = vmatmul.bf16.gmra.mxu0 %v2073
      %v3901 = vpop.f32.mrf.mxu0
      %v3902 = vadd.f32 %v3253, %v3901
      %v3903 = vpop.f32.mrf.mxu0
      %v3904 = vadd.f32 %v3255, %v3903
      %3905 = vmatmul.bf16.gmra.mxu0 %v2076
      %v3906 = vpop.f32.mrf.mxu0
      %v3907 = vadd.f32 %v3258, %v3906
      %v3908 = vpop.f32.mrf.mxu0
      %v3909 = vadd.f32 %v3260, %v3908
      %3910 = vmatmul.bf16.gmra.mxu0 %v2079
      %v3911 = vpop.f32.mrf.mxu0
      %v3912 = vadd.f32 %v3263, %v3911
      %v3913 = vpop.f32.mrf.mxu0
      %v3914 = vadd.f32 %v3265, %v3913
      %3915 = vmatmul.bf16.gmra.mxu0 %v2082
      %v3916 = vpop.f32.mrf.mxu0
      %v3917 = vadd.f32 %v3268, %v3916
      %v3918 = vpop.f32.mrf.mxu0
      %v3919 = vadd.f32 %v3270, %v3918
      %3920 = vmatmul.bf16.gmra.mxu0 %v2085
      %v3921 = vpop.f32.mrf.mxu0
      %v3922 = vadd.f32 %v3273, %v3921
      %v3923 = vpop.f32.mrf.mxu0
      %v3924 = vadd.f32 %v3275, %v3923
      %3925 = vmatmul.bf16.gmra.mxu0 %v2088
      %v3926 = vpop.f32.mrf.mxu0
      %v3927 = vadd.f32 %v3278, %v3926
      %v3928 = vpop.f32.mrf.mxu0
      %v3929 = vadd.f32 %v3280, %v3928
      %3930 = vmatmul.bf16.gmra.mxu0 %v2091
      %v3931 = vpop.f32.mrf.mxu0
      %v3932 = vadd.f32 %v3283, %v3931
      %v3933 = vpop.f32.mrf.mxu0
      %v3934 = vadd.f32 %v3285, %v3933
      %3935 = vmatmul.bf16.gmra.mxu0 %v2094
      %v3936 = vpop.f32.mrf.mxu0
      %v3937 = vadd.f32 %v3288, %v3936
      %v3938 = vpop.f32.mrf.mxu0
      %v3939 = vadd.f32 %v3290, %v3938
      %3940 = vmatmul.bf16.gmra.mxu0 %v2097
      %v3941 = vpop.f32.mrf.mxu0
      %v3942 = vadd.f32 %v3293, %v3941
      %v3943 = vpop.f32.mrf.mxu0
      %v3944 = vadd.f32 %v3295, %v3943
      %3945 = vmatmul.bf16.gmra.mxu0 %v2100
      %v3946 = vpop.f32.mrf.mxu0
      %v3947 = vadd.f32 %v3298, %v3946
      %v3948 = vpop.f32.mrf.mxu0
      %v3949 = vadd.f32 %v3300, %v3948
      %3950 = vmatmul.bf16.gmra.mxu0 %v2103
      %v3951 = vpop.f32.mrf.mxu0
      %v3952 = vadd.f32 %v3303, %v3951
      %v3953 = vpop.f32.mrf.mxu0
      %v3954 = vadd.f32 %v3305, %v3953
      %3955 = vmatmul.bf16.gmra.mxu0 %v2106
      %v3956 = vpop.f32.mrf.mxu0
      %v3957 = vadd.f32 %v3308, %v3956
      %v3958 = vpop.f32.mrf.mxu0
      %v3959 = vadd.f32 %v3310, %v3958
      %3960 = vmatmul.bf16.gmra.mxu0 %v2109
      %v3961 = vpop.f32.mrf.mxu0
      %v3962 = vadd.f32 %v3313, %v3961
      %v3963 = vpop.f32.mrf.mxu0
      %v3964 = vadd.f32 %v3315, %v3963
      %3965 = vmatmul.bf16.gmra.mxu0 %v2112
      %v3966 = vpop.f32.mrf.mxu0
      %v3967 = vadd.f32 %v3318, %v3966
      %v3968 = vpop.f32.mrf.mxu0
      %v3969 = vadd.f32 %v3320, %v3968
      %3970 = vmatmul.bf16.gmra.mxu0 %v2115
      %v3971 = vpop.f32.mrf.mxu0
      %v3972 = vadd.f32 %v3323, %v3971
      %v3973 = vpop.f32.mrf.mxu0
      %v3974 = vadd.f32 %v3325, %v3973
      %3975 = vmatmul.bf16.gmra.mxu0 %v2118
      %v3976 = vpop.f32.mrf.mxu0
      %v3977 = vadd.f32 %v3328, %v3976
      %v3978 = vpop.f32.mrf.mxu0
      %v3979 = vadd.f32 %v3330, %v3978
      %3980 = vmatmul.bf16.gmra.mxu0 %v2121
      %v3981 = vpop.f32.mrf.mxu0
      %v3982 = vadd.f32 %v3333, %v3981
      %v3983 = vpop.f32.mrf.mxu0
      %v3984 = vadd.f32 %v3335, %v3983
      %3985 = vmatmul.bf16.gmra.mxu0 %v2124
      %v3986 = vpop.f32.mrf.mxu0
      %v3987 = vadd.f32 %v3338, %v3986
      %v3988 = vpop.f32.mrf.mxu0
      %v3989 = vadd.f32 %v3340, %v3988
      %3990 = vmatmul.bf16.gmra.mxu0 %v2127
      %v3991 = vpop.f32.mrf.mxu0
      %v3992 = vadd.f32 %v3343, %v3991
      %v3993 = vpop.f32.mrf.mxu0
      %v3994 = vadd.f32 %v3345, %v3993
      %3995 = vmatmul.bf16.gmra.mxu0 %v2130
      %v3996 = vpop.f32.mrf.mxu0
      %v3997 = vadd.f32 %v3348, %v3996
      %v3998 = vpop.f32.mrf.mxu0
      %v3999 = vadd.f32 %v3350, %v3998
      %4000 = vmatmul.bf16.gmra.mxu0 %v2133
      %v4001 = vpop.f32.mrf.mxu0
      %v4002 = vadd.f32 %v3353, %v4001
      %v4003 = vpop.f32.mrf.mxu0
      %v4004 = vadd.f32 %v3355, %v4003
      %4005 = vmatmul.bf16.gmra.mxu0 %v2136
      %v4006 = vpop.f32.mrf.mxu0
      %v4007 = vadd.f32 %v3358, %v4006
      %v4008 = vpop.f32.mrf.mxu0
      %v4009 = vadd.f32 %v3360, %v4008
      %4010 = vmatmul.bf16.gmra.mxu0 %v2139
      %v4011 = vpop.f32.mrf.mxu0
      %v4012 = vadd.f32 %v3363, %v4011
      %v4013 = vpop.f32.mrf.mxu0
      %v4014 = vadd.f32 %v3365, %v4013
      %4015 = vmatmul.bf16.gmra.mxu0 %v2142
      %v4016 = vpop.f32.mrf.mxu0
      %v4017 = vadd.f32 %v3368, %v4016
      %v4018 = vpop.f32.mrf.mxu0
      %v4019 = vadd.f32 %v3370, %v4018
      %4020 = vmatmul.bf16.gmra.mxu0 %v2145
      %v4021 = vpop.f32.mrf.mxu0
      %v4022 = vadd.f32 %v3373, %v4021
      %v4023 = vpop.f32.mrf.mxu0
      %v4024 = vadd.f32 %v3375, %v4023
      %4025 = vmatmul.bf16.gmra.mxu0 %v2148
      %v4026 = vpop.f32.mrf.mxu0
      %v4027 = vadd.f32 %v3378, %v4026
      %v4028 = vpop.f32.mrf.mxu0
      %v4029 = vadd.f32 %v3380, %v4028
      %4030 = vmatmul.bf16.gmra.mxu0 %v2151
      %v4031 = vpop.f32.mrf.mxu0
      %v4032 = vadd.f32 %v3383, %v4031
      %v4033 = vpop.f32.mrf.mxu0
      %v4034 = vadd.f32 %v3385, %v4033
      %4035 = vmatmul.bf16.gmra.mxu0 %v2154
      %v4036 = vpop.f32.mrf.mxu0
      %v4037 = vadd.f32 %v3388, %v4036
      %v4038 = vpop.f32.mrf.mxu0
      %v4039 = vadd.f32 %v3390, %v4038
      %4040 = vmatmul.bf16.gmra.mxu0 %v2157
      %v4041 = vpop.f32.mrf.mxu0
      %v4042 = vadd.f32 %v3393, %v4041
      %v4043 = vpop.f32.mrf.mxu0
      %v4044 = vadd.f32 %v3395, %v4043
      %4045 = vmatmul.bf16.gmra.mxu0 %v2160
      %v4046 = vpop.f32.mrf.mxu0
      %v4047 = vadd.f32 %v3398, %v4046
      %v4048 = vpop.f32.mrf.mxu0
      %v4049 = vadd.f32 %v3400, %v4048
      %4050 = vmatmul.bf16.gmra.mxu0 %v2163
      %v4051 = vpop.f32.mrf.mxu0
      %v4052 = vadd.f32 %v3403, %v4051
      %v4053 = vpop.f32.mrf.mxu0
      %v4054 = vadd.f32 %v3405, %v4053
      %4055 = vmatmul.bf16.gmra.mxu0 %v2166
      %v4056 = vpop.f32.mrf.mxu0
      %v4057 = vadd.f32 %v3408, %v4056
      %v4058 = vpop.f32.mrf.mxu0
      %v4059 = vadd.f32 %v3410, %v4058
      %4060 = vmatmul.bf16.gmra.mxu0 %v2169
      %v4061 = vpop.f32.mrf.mxu0
      %v4062 = vadd.f32 %v3413, %v4061
      %v4063 = vpop.f32.mrf.mxu0
      %v4064 = vadd.f32 %v3415, %v4063
      %4065 = vmatmul.bf16.gmra.mxu0 %v2172
      %v4066 = vpop.f32.mrf.mxu0
      %v4067 = vadd.f32 %v3418, %v4066
      %v4068 = vpop.f32.mrf.mxu0
      %v4069 = vadd.f32 %v3420, %v4068
      %4070 = vmatmul.bf16.gmra.mxu0 %v2175
      %v4071 = vpop.f32.mrf.mxu0
      %v4072 = vadd.f32 %v3423, %v4071
      %v4073 = vpop.f32.mrf.mxu0
      %v4074 = vadd.f32 %v3425, %v4073
      %4075 = vmatmul.bf16.gmra.mxu0 %v2178
      %v4076 = vpop.f32.mrf.mxu0
      %v4077 = vadd.f32 %v3428, %v4076
      %v4078 = vpop.f32.mrf.mxu0
      %v4079 = vadd.f32 %v3430, %v4078
      %4080 = vmatmul.bf16.gmra.mxu0 %v2181
      %v4081 = vpop.f32.mrf.mxu0
      %v4082 = vadd.f32 %v3433, %v4081
      %v4083 = vpop.f32.mrf.mxu0
      %v4084 = vadd.f32 %v3435, %v4083
      %4085 = vmatmul.bf16.gmra.mxu0 %v2184
      %v4086 = vpop.f32.mrf.mxu0
      %v4087 = vadd.f32 %v3438, %v4086
      %v4088 = vpop.f32.mrf.mxu0
      %v4089 = vadd.f32 %v3440, %v4088
      %4090 = vmatmul.bf16.gmra.mxu0 %v2187
      %v4091 = vpop.f32.mrf.mxu0
      %v4092 = vadd.f32 %v3443, %v4091
      %v4093 = vpop.f32.mrf.mxu0
      %v4094 = vadd.f32 %v3445, %v4093
      %4095 = vmatmul.bf16.gmra.mxu0 %v2190
      %v4096 = vpop.f32.mrf.mxu0
      %v4097 = vadd.f32 %v3448, %v4096
      %v4098 = vpop.f32.mrf.mxu0
      %v4099 = vadd.f32 %v3450, %v4098
      %4100 = vmatmul.bf16.gmra.mxu0 %v2193
      %v4101 = vpop.f32.mrf.mxu0
      %v4102 = vadd.f32 %v3453, %v4101
      %v4103 = vpop.f32.mrf.mxu0
      %v4104 = vadd.f32 %v3455, %v4103
      %4105 = vmatmul.bf16.gmra.mxu0 %v2196
      %v4106 = vpop.f32.mrf.mxu0
      %v4107 = vadd.f32 %v3458, %v4106
      %v4108 = vpop.f32.mrf.mxu0
      %v4109 = vadd.f32 %v3460, %v4108
      %4110 = vmatmul.bf16.gmra.mxu0 %v2199
      %v4111 = vpop.f32.mrf.mxu0
      %v4112 = vadd.f32 %v3463, %v4111
      %v4113 = vpop.f32.mrf.mxu0
      %v4114 = vadd.f32 %v3465, %v4113
      %4115 = vmatmul.bf16.gmra.mxu0 %v2202
      %v4116 = vpop.f32.mrf.mxu0
      %v4117 = vadd.f32 %v3468, %v4116
      %v4118 = vpop.f32.mrf.mxu0
      %v4119 = vadd.f32 %v3470, %v4118
      %4120 = vmatmul.bf16.gmra.mxu0 %v2205
      %v4121 = vpop.f32.mrf.mxu0
      %v4122 = vadd.f32 %v3473, %v4121
      %v4123 = vpop.f32.mrf.mxu0
      %v4124 = vadd.f32 %v3475, %v4123
      %4125 = vmatmul.bf16.gmra.mxu0 %v2208
      %v4126 = vpop.f32.mrf.mxu0
      %v4127 = vadd.f32 %v3478, %v4126
      %v4128 = vpop.f32.mrf.mxu0
      %v4129 = vadd.f32 %v3480, %v4128
      %4130 = vmatmul.bf16.gmra.mxu0 %v2211
      %v4131 = vpop.f32.mrf.mxu0
      %v4132 = vadd.f32 %v3483, %v4131
      %v4133 = vpop.f32.mrf.mxu0
      %v4134 = vadd.f32 %v3485, %v4133
      %4135 = vmatmul.bf16.gmra.mxu0 %v2214
      %v4136 = vpop.f32.mrf.mxu0
      %v4137 = vadd.f32 %v3488, %v4136
      %v4138 = vpop.f32.mrf.mxu0
      %v4139 = vadd.f32 %v3490, %v4138
      %4140 = vmatmul.bf16.gmra.mxu0 %v2217
      %v4141 = vpop.f32.mrf.mxu0
      %v4142 = vadd.f32 %v3493, %v4141
      %v4143 = vpop.f32.mrf.mxu0
      %v4144 = vadd.f32 %v3495, %v4143
      %4145 = vmatmul.bf16.gmra.mxu0 %v2220
      %v4146 = vpop.f32.mrf.mxu0
      %v4147 = vadd.f32 %v3498, %v4146
      %v4148 = vpop.f32.mrf.mxu0
      %v4149 = vadd.f32 %v3500, %v4148
      %4150 = vmatmul.bf16.gmra.mxu0 %v2223
      %v4151 = vpop.f32.mrf.mxu0
      %v4152 = vadd.f32 %v3503, %v4151
      %v4153 = vpop.f32.mrf.mxu0
      %v4154 = vadd.f32 %v3505, %v4153
      %4155 = vmatmul.bf16.gmra.mxu0 %v2226
      %v4156 = vpop.f32.mrf.mxu0
      %v4157 = vadd.f32 %v3508, %v4156
      %v4158 = vpop.f32.mrf.mxu0
      %v4159 = vadd.f32 %v3510, %v4158
      %4160 = vmatmul.bf16.gmra.mxu0 %v2229
      %v4161 = vpop.f32.mrf.mxu0
      %v4162 = vadd.f32 %v3513, %v4161
      %v4163 = vpop.f32.mrf.mxu0
      %v4164 = vadd.f32 %v3515, %v4163
      %4165 = vmatmul.bf16.gmra.mxu0 %v2232
      %v4166 = vpop.f32.mrf.mxu0
      %v4167 = vadd.f32 %v3518, %v4166
      %v4168 = vpop.f32.mrf.mxu0
      %v4169 = vadd.f32 %v3520, %v4168
      %4170 = vmatmul.bf16.gmra.mxu0 %v2235
      %v4171 = vpop.f32.mrf.mxu0
      %v4172 = vadd.f32 %v3523, %v4171
      %v4173 = vpop.f32.mrf.mxu0
      %v4174 = vadd.f32 %v3525, %v4173
      %4175 = vmatmul.bf16.gmra.mxu0 %v2238
      %v4176 = vpop.f32.mrf.mxu0
      %v4177 = vadd.f32 %v3528, %v4176
      %v4178 = vpop.f32.mrf.mxu0
      %v4179 = vadd.f32 %v3530, %v4178
      %4180 = vmatmul.bf16.gmra.mxu0 %v2241
      %v4181 = vpop.f32.mrf.mxu0
      %v4182 = vadd.f32 %v3533, %v4181
      %v4183 = vpop.f32.mrf.mxu0
      %v4184 = vadd.f32 %v3535, %v4183
      %4185 = vmatmul.bf16.gmra.mxu0 %v2244
      %v4186 = vpop.f32.mrf.mxu0
      %v4187 = vadd.f32 %v3538, %v4186
      %v4188 = vpop.f32.mrf.mxu0
      %v4189 = vadd.f32 %v3540, %v4188
      %4190 = vmatmul.bf16.gmra.mxu0 %v2247
      %v4191 = vpop.f32.mrf.mxu0
      %v4192 = vadd.f32 %v3543, %v4191
      %v4193 = vpop.f32.mrf.mxu0
      %v4194 = vadd.f32 %v3545, %v4193
      %4195 = vmatmul.bf16.gmra.mxu0 %v2250
      %v4196 = vpop.f32.mrf.mxu0
      %v4197 = vadd.f32 %v3548, %v4196
      %v4198 = vpop.f32.mrf.mxu0
      %v4199 = vadd.f32 %v3550, %v4198
      %4200 = vmatmul.bf16.gmra.mxu0 %v2253
      %v4201 = vpop.f32.mrf.mxu0
      %v4202 = vadd.f32 %v3553, %v4201
      %v4203 = vpop.f32.mrf.mxu0
      %v4204 = vadd.f32 %v3555, %v4203
      %4205 = vmatmul.bf16.gmra.mxu0 %v2256
      %v4206 = vpop.f32.mrf.mxu0
      %v4207 = vadd.f32 %v3558, %v4206
      %v4208 = vpop.f32.mrf.mxu0
      %v4209 = vadd.f32 %v3560, %v4208
      %4210 = vmatmul.bf16.gmra.mxu0 %v2259
      %v4211 = vpop.f32.mrf.mxu0
      %v4212 = vadd.f32 %v3563, %v4211
      %v4213 = vpop.f32.mrf.mxu0
      %v4214 = vadd.f32 %v3565, %v4213
      %4215 = vmatmul.bf16.gmra.mxu0 %v2262
      %v4216 = vpop.f32.mrf.mxu0
      %v4217 = vadd.f32 %v3568, %v4216
      %v4218 = vpop.f32.mrf.mxu0
      %v4219 = vadd.f32 %v3570, %v4218
      %4220 = vmatmul.bf16.gmra.mxu0 %v2265
      %v4221 = vpop.f32.mrf.mxu0
      %v4222 = vadd.f32 %v3573, %v4221
      %v4223 = vpop.f32.mrf.mxu0
      %v4224 = vadd.f32 %v3575, %v4223
      %4225 = vmatmul.bf16.gmra.mxu0 %v2268
      %v4226 = vpop.f32.mrf.mxu0
      %v4227 = vadd.f32 %v3578, %v4226
      %v4228 = vpop.f32.mrf.mxu0
      %v4229 = vadd.f32 %v3580, %v4228
      %4230 = vmatmul.bf16.gmra.mxu0 %v2271
      %v4231 = vpop.f32.mrf.mxu0
      %v4232 = vadd.f32 %v3583, %v4231
      %v4233 = vpop.f32.mrf.mxu0
      %v4234 = vadd.f32 %v3585, %v4233
      %4235 = vmatmul.bf16.gmra.mxu0 %v2274
      %v4236 = vpop.f32.mrf.mxu0
      %v4237 = vadd.f32 %v3588, %v4236
      %v4238 = vpop.f32.mrf.mxu0
      %v4239 = vadd.f32 %v3590, %v4238
      %4240 = vmatmul.bf16.gmra.mxu0 %v2277
      %v4241 = vpop.f32.mrf.mxu0
      %v4242 = vadd.f32 %v3593, %v4241
      %v4243 = vpop.f32.mrf.mxu0
      %v4244 = vadd.f32 %v3595, %v4243
      %4245 = vmatmul.bf16.gmra.mxu0 %v2280
      %v4246 = vpop.f32.mrf.mxu0
      %v4247 = vadd.f32 %v3598, %v4246
      %v4248 = vpop.f32.mrf.mxu0
      %v4249 = vadd.f32 %v3600, %v4248
      %4250 = vmatmul.bf16.gmra.mxu0 %v2283
      %v4251 = vpop.f32.mrf.mxu0
      %v4252 = vadd.f32 %v3603, %v4251
      %v4253 = vpop.f32.mrf.mxu0
      %v4254 = vadd.f32 %v3605, %v4253
      %4255 = vmatmul.bf16.gmra.mxu0 %v2286
      %v4256 = vpop.f32.mrf.mxu0
      %v4257 = vadd.f32 %v3608, %v4256
      %v4258 = vpop.f32.mrf.mxu0
      %v4259 = vadd.f32 %v3610, %v4258
      %4260 = vmatmul.bf16.gmra.mxu0 %v2289
      %v4261 = vpop.f32.mrf.mxu0
      %v4262 = vadd.f32 %v3613, %v4261
      %v4263 = vpop.f32.mrf.mxu0
      %v4264 = vadd.f32 %v3615, %v4263
      %4265 = vmatmul.bf16.gmra.mxu0 %v2292
      %v4266 = vpop.f32.mrf.mxu0
      %v4267 = vadd.f32 %v3618, %v4266
      %v4268 = vpop.f32.mrf.mxu0
      %v4269 = vadd.f32 %v3620, %v4268
      %4270 = vmatmul.bf16.gmra.mxu0 %v2295
      %v4271 = vpop.f32.mrf.mxu0
      %v4272 = vadd.f32 %v3623, %v4271
      %v4273 = vpop.f32.mrf.mxu0
      %v4274 = vadd.f32 %v3625, %v4273
      %4275 = vmatmul.bf16.gmra.mxu0 %v2298
      %v4276 = vpop.f32.mrf.mxu0
      %v4277 = vadd.f32 %v3628, %v4276
      %v4278 = vpop.f32.mrf.mxu0
      %v4279 = vadd.f32 %v3630, %v4278
      %4280 = vmatmul.bf16.gmra.mxu0 %v2301
      %v4281 = vpop.f32.mrf.mxu0
      %v4282 = vadd.f32 %v3633, %v4281
      %v4283 = vpop.f32.mrf.mxu0
      %v4284 = vadd.f32 %v3635, %v4283
      %4285 = vmatmul.bf16.gmra.mxu0 %v2304
      %v4286 = vpop.f32.mrf.mxu0
      %v4287 = vadd.f32 %v3638, %v4286
      %v4288 = vpop.f32.mrf.mxu0
      %v4289 = vadd.f32 %v3640, %v4288
      %4290 = vmatmul.bf16.gmra.mxu0 %v2307
      %v4291 = vpop.f32.mrf.mxu0
      %v4292 = vadd.f32 %v3643, %v4291
      %v4293 = vpop.f32.mrf.mxu0
      %v4294 = vadd.f32 %v3645, %v4293
      %4295 = vmatmul.bf16.gmra.mxu0 %v2310
      %v4296 = vpop.f32.mrf.mxu0
      %v4297 = vadd.f32 %v3648, %v4296
      %v4298 = vpop.f32.mrf.mxu0
      %v4299 = vadd.f32 %v3650, %v4298
      %4300 = vmatmul.bf16.gmra.mxu0 %v2313
      %v4301 = vpop.f32.mrf.mxu0
      %v4302 = vadd.f32 %v3653, %v4301
      %v4303 = vpop.f32.mrf.mxu0
      %v4304 = vadd.f32 %v3655, %v4303
      %4305 = vmatmul.bf16.gmra.mxu0 %v2316
      %v4306 = vpop.f32.mrf.mxu0
      %v4307 = vadd.f32 %v3658, %v4306
      %v4308 = vpop.f32.mrf.mxu0
      %v4309 = vadd.f32 %v3660, %v4308
      %4310 = vmatmul.bf16.gmra.mxu0 %v2319
      %v4311 = vpop.f32.mrf.mxu0
      %v4312 = vadd.f32 %v3663, %v4311
      %v4313 = vpop.f32.mrf.mxu0
      %v4314 = vadd.f32 %v3665, %v4313
      %4315 = vmatmul.bf16.gmra.mxu0 %v2322
      %v4316 = vpop.f32.mrf.mxu0
      %v4317 = vadd.f32 %v3668, %v4316
      %v4318 = vpop.f32.mrf.mxu0
      %v4319 = vadd.f32 %v3670, %v4318
      %4320 = vmatmul.bf16.gmra.mxu0 %v2325
      %v4321 = vpop.f32.mrf.mxu0
      %v4322 = vadd.f32 %v3673, %v4321
      %v4323 = vpop.f32.mrf.mxu0
      %v4324 = vadd.f32 %v3675, %v4323
      %4325 = vmatmul.bf16.gmra.mxu0 %v2328
      %v4326 = vpop.f32.mrf.mxu0
      %v4327 = vadd.f32 %v3678, %v4326
      %v4328 = vpop.f32.mrf.mxu0
      %v4329 = vadd.f32 %v3680, %v4328
      %4330 = vmatmul.bf16.gmra.mxu0 %v2331
      %v4331 = vpop.f32.mrf.mxu0
      %v4332 = vadd.f32 %v3683, %v4331
      %v4333 = vpop.f32.mrf.mxu0
      %v4334 = vadd.f32 %v3685, %v4333
      %4335 = vmatmul.bf16.gmra.mxu0 %v2334
      %v4336 = vpop.f32.mrf.mxu0
      %v4337 = vadd.f32 %v3688, %v4336
      %v4338 = vpop.f32.mrf.mxu0
      %v4339 = vadd.f32 %v3690, %v4338
      %4340 = vmatmul.bf16.gmra.mxu0 %v2337
      %v4341 = vpop.f32.mrf.mxu0
      %v4342 = vadd.f32 %v3693, %v4341
      %v4343 = vpop.f32.mrf.mxu0
      %v4344 = vadd.f32 %v3695, %v4343
      %4345 = vmatmul.bf16.gmra.mxu0 %v2340
      %v4346 = vpop.f32.mrf.mxu0
      %v4347 = vadd.f32 %v3698, %v4346
      %v4348 = vpop.f32.mrf.mxu0
      %v4349 = vadd.f32 %v3700, %v4348
      %4350 = vmatmul.bf16.gmra.mxu0 %v2343
      %v4351 = vpop.f32.mrf.mxu0
      %v4352 = vadd.f32 %v3703, %v4351
      %v4353 = vpop.f32.mrf.mxu0
      %v4354 = vadd.f32 %v3705, %v4353
      %4355 = vmatmul.bf16.gmra.mxu0 %v2346
      %v4356 = vpop.f32.mrf.mxu0
      %v4357 = vadd.f32 %v3708, %v4356
      %v4358 = vpop.f32.mrf.mxu0
      %v4359 = vadd.f32 %v3710, %v4358
      %4360 = vmatmul.bf16.gmra.mxu0 %v2349
      %v4361 = vpop.f32.mrf.mxu0
      %v4362 = vadd.f32 %v3713, %v4361
      %v4363 = vpop.f32.mrf.mxu0
      %v4364 = vadd.f32 %v3715, %v4363
      %4365 = vmatmul.bf16.gmra.mxu0 %v2352
      %v4366 = vpop.f32.mrf.mxu0
      %v4367 = vadd.f32 %v3718, %v4366
      %v4368 = vpop.f32.mrf.mxu0
      %v4369 = vadd.f32 %v3720, %v4368
      %4370 = vmatmul.bf16.gmra.mxu0 %v2355
      %v4371 = vpop.f32.mrf.mxu0
      %v4372 = vadd.f32 %v3723, %v4371
      %v4373 = vpop.f32.mrf.mxu0
      %v4374 = vadd.f32 %v3725, %v4373
      %4375 = vmatmul.bf16.gmra.mxu0 %v2358
      %v4376 = vpop.f32.mrf.mxu0
      %v4377 = vadd.f32 %v3728, %v4376
      %v4378 = vpop.f32.mrf.mxu0
      %v4379 = vadd.f32 %v3730, %v4378
      %4380 = vmatmul.bf16.gmra.mxu0 %v2361
      %v4381 = vpop.f32.mrf.mxu0
      %v4382 = vadd.f32 %v3733, %v4381
      %v4383 = vpop.f32.mrf.mxu0
      %v4384 = vadd.f32 %v3735, %v4383
      %4385 = vmatmul.bf16.gmra.mxu0 %v2364
      %v4386 = vpop.f32.mrf.mxu0
      %v4387 = vadd.f32 %v3738, %v4386
      %v4388 = vpop.f32.mrf.mxu0
      %v4389 = vadd.f32 %v3740, %v4388
      %4390 = vmatmul.bf16.gmra.mxu0 %v2367
      %v4391 = vpop.f32.mrf.mxu0
      %v4392 = vadd.f32 %v3743, %v4391
      %v4393 = vpop.f32.mrf.mxu0
      %v4394 = vadd.f32 %v3745, %v4393
      %4395 = vmatmul.bf16.gmra.mxu0 %v2370
      %v4396 = vpop.f32.mrf.mxu0
      %v4397 = vadd.f32 %v3748, %v4396
      %v4398 = vpop.f32.mrf.mxu0
      %v4399 = vadd.f32 %v3750, %v4398
      %4400 = vmatmul.bf16.gmra.mxu0 %v2373
      %v4401 = vpop.f32.mrf.mxu0
      %v4402 = vadd.f32 %v3753, %v4401
      %v4403 = vpop.f32.mrf.mxu0
      %v4404 = vadd.f32 %v3755, %v4403
      %4405 = vmatmul.bf16.gmra.mxu0 %v2376
      %v4406 = vpop.f32.mrf.mxu0
      %v4407 = vadd.f32 %v3758, %v4406
      %v4408 = vpop.f32.mrf.mxu0
      %v4409 = vadd.f32 %v3760, %v4408
      %4410 = vmatmul.bf16.gmra.mxu0 %v2379
      %v4411 = vpop.f32.mrf.mxu0
      %v4412 = vadd.f32 %v3763, %v4411
      %v4413 = vpop.f32.mrf.mxu0
      %v4414 = vadd.f32 %v3765, %v4413
      %4415 = vmatmul.bf16.gmra.mxu0 %v2382
      %v4416 = vpop.f32.mrf.mxu0
      %v4417 = vadd.f32 %v3768, %v4416
      %v4418 = vpop.f32.mrf.mxu0
      %v4419 = vadd.f32 %v3770, %v4418
      %4420 = vmatmul.bf16.gmra.mxu0 %v2385
      %v4421 = vpop.f32.mrf.mxu0
      %v4422 = vadd.f32 %v3773, %v4421
      %v4423 = vpop.f32.mrf.mxu0
      %v4424 = vadd.f32 %v3775, %v4423
      %4425 = vmatmul.bf16.gmra.mxu0 %v2388
      %v4426 = vpop.f32.mrf.mxu0
      %v4427 = vadd.f32 %v3778, %v4426
      %v4428 = vpop.f32.mrf.mxu0
      %v4429 = vadd.f32 %v3780, %v4428
      %4430 = vmatmul.bf16.gmra.mxu0 %v2391
      %v4431 = vpop.f32.mrf.mxu0
      %v4432 = vadd.f32 %v3783, %v4431
      %v4433 = vpop.f32.mrf.mxu0
      %v4434 = vadd.f32 %v3785, %v4433
      %4435 = vmatmul.bf16.gmra.mxu0 %v2394
      %v4436 = vpop.f32.mrf.mxu0
      %v4437 = vadd.f32 %v3788, %v4436
      %v4438 = vpop.f32.mrf.mxu0
      %v4439 = vadd.f32 %v3790, %v4438
      %4440 = vmatmul.bf16.gmra.mxu0 %v2397
      %v4441 = vpop.f32.mrf.mxu0
      %v4442 = vadd.f32 %v3793, %v4441
      %v4443 = vpop.f32.mrf.mxu0
      %v4444 = vadd.f32 %v3795, %v4443
      %4445 = vdwg.mxu0
      %4446 = vmatpush.bf16.msra.mxu0 0
      %4447 = vmatpush.bf16.msra.mxu0 0
      %4448 = vmatpush.bf16.msra.mxu0 0
      %4449 = vmatpush.bf16.msra.mxu0 0
      %4450 = vmatpush.bf16.msra.mxu0 0
      %4451 = vmatpush.bf16.msra.mxu0 0
      %4452 = vmatpush.bf16.msra.mxu0 %v2744
      %4453 = vmatpush.bf16.msra.mxu0 %v2743
      %4454 = vmatmul.bf16.gmra.mxu0 %v2765
      %v4455 = vpop.f32.mrf.mxu0
      %v4456 = vadd.f32 %v3807, %v4455
      %v4457 = vpop.f32.mrf.mxu0
      %v4458 = vadd.f32 %v3809, %v4457
      %4459 = vmatmul.bf16.gmra.mxu0 %v2768
      %v4460 = vpop.f32.mrf.mxu0
      %v4461 = vadd.f32 %v3812, %v4460
      %v4462 = vpop.f32.mrf.mxu0
      %v4463 = vadd.f32 %v3814, %v4462
      %4464 = vmatmul.bf16.gmra.mxu0 %v2771
      %v4465 = vpop.f32.mrf.mxu0
      %v4466 = vadd.f32 %v3817, %v4465
      %v4467 = vpop.f32.mrf.mxu0
      %v4468 = vadd.f32 %v3819, %v4467
      %4469 = vmatmul.bf16.gmra.mxu0 %v2774
      %v4470 = vpop.f32.mrf.mxu0
      %v4471 = vadd.f32 %v3822, %v4470
      %v4472 = vpop.f32.mrf.mxu0
      %v4473 = vadd.f32 %v3824, %v4472
      %4474 = vmatmul.bf16.gmra.mxu0 %v2777
      %v4475 = vpop.f32.mrf.mxu0
      %v4476 = vadd.f32 %v3827, %v4475
      %v4477 = vpop.f32.mrf.mxu0
      %v4478 = vadd.f32 %v3829, %v4477
      %4479 = vmatmul.bf16.gmra.mxu0 %v2780
      %v4480 = vpop.f32.mrf.mxu0
      %v4481 = vadd.f32 %v3832, %v4480
      %v4482 = vpop.f32.mrf.mxu0
      %v4483 = vadd.f32 %v3834, %v4482
      %4484 = vmatmul.bf16.gmra.mxu0 %v2783
      %v4485 = vpop.f32.mrf.mxu0
      %v4486 = vadd.f32 %v3837, %v4485
      %v4487 = vpop.f32.mrf.mxu0
      %v4488 = vadd.f32 %v3839, %v4487
      %4489 = vmatmul.bf16.gmra.mxu0 %v2786
      %v4490 = vpop.f32.mrf.mxu0
      %v4491 = vadd.f32 %v3842, %v4490
      %v4492 = vpop.f32.mrf.mxu0
      %v4493 = vadd.f32 %v3844, %v4492
      %4494 = vmatmul.bf16.gmra.mxu0 %v2789
      %v4495 = vpop.f32.mrf.mxu0
      %v4496 = vadd.f32 %v3847, %v4495
      %v4497 = vpop.f32.mrf.mxu0
      %v4498 = vadd.f32 %v3849, %v4497
      %4499 = vmatmul.bf16.gmra.mxu0 %v2792
      %v4500 = vpop.f32.mrf.mxu0
      %v4501 = vadd.f32 %v3852, %v4500
      %v4502 = vpop.f32.mrf.mxu0
      %v4503 = vadd.f32 %v3854, %v4502
      %4504 = vmatmul.bf16.gmra.mxu0 %v2795
      %v4505 = vpop.f32.mrf.mxu0
      %v4506 = vadd.f32 %v3857, %v4505
      %v4507 = vpop.f32.mrf.mxu0
      %v4508 = vadd.f32 %v3859, %v4507
      %4509 = vmatmul.bf16.gmra.mxu0 %v2798
      %v4510 = vpop.f32.mrf.mxu0
      %v4511 = vadd.f32 %v3862, %v4510
      %v4512 = vpop.f32.mrf.mxu0
      %v4513 = vadd.f32 %v3864, %v4512
      %4514 = vmatmul.bf16.gmra.mxu0 %v2801
      %v4515 = vpop.f32.mrf.mxu0
      %v4516 = vadd.f32 %v3867, %v4515
      %v4517 = vpop.f32.mrf.mxu0
      %v4518 = vadd.f32 %v3869, %v4517
      %4519 = vmatmul.bf16.gmra.mxu0 %v2804
      %v4520 = vpop.f32.mrf.mxu0
      %v4521 = vadd.f32 %v3872, %v4520
      %v4522 = vpop.f32.mrf.mxu0
      %v4523 = vadd.f32 %v3874, %v4522
      %4524 = vmatmul.bf16.gmra.mxu0 %v2807
      %v4525 = vpop.f32.mrf.mxu0
      %v4526 = vadd.f32 %v3877, %v4525
      %v4527 = vpop.f32.mrf.mxu0
      %v4528 = vadd.f32 %v3879, %v4527
      %4529 = vmatmul.bf16.gmra.mxu0 %v2810
      %v4530 = vpop.f32.mrf.mxu0
      %v4531 = vadd.f32 %v3882, %v4530
      %v4532 = vpop.f32.mrf.mxu0
      %v4533 = vadd.f32 %v3884, %v4532
      %4534 = vmatmul.bf16.gmra.mxu0 %v2813
      %v4535 = vpop.f32.mrf.mxu0
      %v4536 = vadd.f32 %v3887, %v4535
      %v4537 = vpop.f32.mrf.mxu0
      %v4538 = vadd.f32 %v3889, %v4537
      %4539 = vmatmul.bf16.gmra.mxu0 %v2816
      %v4540 = vpop.f32.mrf.mxu0
      %v4541 = vadd.f32 %v3892, %v4540
      %v4542 = vpop.f32.mrf.mxu0
      %v4543 = vadd.f32 %v3894, %v4542
      %4544 = vmatmul.bf16.gmra.mxu0 %v2819
      %v4545 = vpop.f32.mrf.mxu0
      %v4546 = vadd.f32 %v3897, %v4545
      %v4547 = vpop.f32.mrf.mxu0
      %v4548 = vadd.f32 %v3899, %v4547
      %4549 = vmatmul.bf16.gmra.mxu0 %v2822
      %v4550 = vpop.f32.mrf.mxu0
      %v4551 = vadd.f32 %v3902, %v4550
      %v4552 = vpop.f32.mrf.mxu0
      %v4553 = vadd.f32 %v3904, %v4552
      %4554 = vmatmul.bf16.gmra.mxu0 %v2825
      %v4555 = vpop.f32.mrf.mxu0
      %v4556 = vadd.f32 %v3907, %v4555
      %v4557 = vpop.f32.mrf.mxu0
      %v4558 = vadd.f32 %v3909, %v4557
      %4559 = vmatmul.bf16.gmra.mxu0 %v2828
      %v4560 = vpop.f32.mrf.mxu0
      %v4561 = vadd.f32 %v3912, %v4560
      %v4562 = vpop.f32.mrf.mxu0
      %v4563 = vadd.f32 %v3914, %v4562
      %4564 = vmatmul.bf16.gmra.mxu0 %v2831
      %v4565 = vpop.f32.mrf.mxu0
      %v4566 = vadd.f32 %v3917, %v4565
      %v4567 = vpop.f32.mrf.mxu0
      %v4568 = vadd.f32 %v3919, %v4567
      %4569 = vmatmul.bf16.gmra.mxu0 %v2834
      %v4570 = vpop.f32.mrf.mxu0
      %v4571 = vadd.f32 %v3922, %v4570
      %v4572 = vpop.f32.mrf.mxu0
      %v4573 = vadd.f32 %v3924, %v4572
      %4574 = vmatmul.bf16.gmra.mxu0 %v2837
      %v4575 = vpop.f32.mrf.mxu0
      %v4576 = vadd.f32 %v3927, %v4575
      %v4577 = vpop.f32.mrf.mxu0
      %v4578 = vadd.f32 %v3929, %v4577
      %4579 = vmatmul.bf16.gmra.mxu0 %v2840
      %v4580 = vpop.f32.mrf.mxu0
      %v4581 = vadd.f32 %v3932, %v4580
      %v4582 = vpop.f32.mrf.mxu0
      %v4583 = vadd.f32 %v3934, %v4582
      %4584 = vmatmul.bf16.gmra.mxu0 %v2843
      %v4585 = vpop.f32.mrf.mxu0
      %v4586 = vadd.f32 %v3937, %v4585
      %v4587 = vpop.f32.mrf.mxu0
      %v4588 = vadd.f32 %v3939, %v4587
      %4589 = vmatmul.bf16.gmra.mxu0 %v2846
      %v4590 = vpop.f32.mrf.mxu0
      %v4591 = vadd.f32 %v3942, %v4590
      %v4592 = vpop.f32.mrf.mxu0
      %v4593 = vadd.f32 %v3944, %v4592
      %4594 = vmatmul.bf16.gmra.mxu0 %v2849
      %v4595 = vpop.f32.mrf.mxu0
      %v4596 = vadd.f32 %v3947, %v4595
      %v4597 = vpop.f32.mrf.mxu0
      %v4598 = vadd.f32 %v3949, %v4597
      %4599 = vmatmul.bf16.gmra.mxu0 %v2852
      %v4600 = vpop.f32.mrf.mxu0
      %v4601 = vadd.f32 %v3952, %v4600
      %v4602 = vpop.f32.mrf.mxu0
      %v4603 = vadd.f32 %v3954, %v4602
      %4604 = vmatmul.bf16.gmra.mxu0 %v2855
      %v4605 = vpop.f32.mrf.mxu0
      %v4606 = vadd.f32 %v3957, %v4605
      %v4607 = vpop.f32.mrf.mxu0
      %v4608 = vadd.f32 %v3959, %v4607
      %4609 = vmatmul.bf16.gmra.mxu0 %v2858
      %v4610 = vpop.f32.mrf.mxu0
      %v4611 = vadd.f32 %v3962, %v4610
      %v4612 = vpop.f32.mrf.mxu0
      %v4613 = vadd.f32 %v3964, %v4612
      %4614 = vmatmul.bf16.gmra.mxu0 %v2861
      %v4615 = vpop.f32.mrf.mxu0
      %v4616 = vadd.f32 %v3967, %v4615
      %v4617 = vpop.f32.mrf.mxu0
      %v4618 = vadd.f32 %v3969, %v4617
      %4619 = vmatmul.bf16.gmra.mxu0 %v2864
      %v4620 = vpop.f32.mrf.mxu0
      %v4621 = vadd.f32 %v3972, %v4620
      %v4622 = vpop.f32.mrf.mxu0
      %v4623 = vadd.f32 %v3974, %v4622
      %4624 = vmatmul.bf16.gmra.mxu0 %v2867
      %v4625 = vpop.f32.mrf.mxu0
      %v4626 = vadd.f32 %v3977, %v4625
      %v4627 = vpop.f32.mrf.mxu0
      %v4628 = vadd.f32 %v3979, %v4627
      %4629 = vmatmul.bf16.gmra.mxu0 %v2870
      %v4630 = vpop.f32.mrf.mxu0
      %v4631 = vadd.f32 %v3982, %v4630
      %v4632 = vpop.f32.mrf.mxu0
      %v4633 = vadd.f32 %v3984, %v4632
      %4634 = vmatmul.bf16.gmra.mxu0 %v2873
      %v4635 = vpop.f32.mrf.mxu0
      %v4636 = vadd.f32 %v3987, %v4635
      %v4637 = vpop.f32.mrf.mxu0
      %v4638 = vadd.f32 %v3989, %v4637
      %4639 = vmatmul.bf16.gmra.mxu0 %v2876
      %v4640 = vpop.f32.mrf.mxu0
      %v4641 = vadd.f32 %v3992, %v4640
      %v4642 = vpop.f32.mrf.mxu0
      %v4643 = vadd.f32 %v3994, %v4642
      %4644 = vmatmul.bf16.gmra.mxu0 %v2879
      %v4645 = vpop.f32.mrf.mxu0
      %v4646 = vadd.f32 %v3997, %v4645
      %v4647 = vpop.f32.mrf.mxu0
      %v4648 = vadd.f32 %v3999, %v4647
      %4649 = vmatmul.bf16.gmra.mxu0 %v2882
      %v4650 = vpop.f32.mrf.mxu0
      %v4651 = vadd.f32 %v4002, %v4650
      %v4652 = vpop.f32.mrf.mxu0
      %v4653 = vadd.f32 %v4004, %v4652
      %4654 = vmatmul.bf16.gmra.mxu0 %v2885
      %v4655 = vpop.f32.mrf.mxu0
      %v4656 = vadd.f32 %v4007, %v4655
      %v4657 = vpop.f32.mrf.mxu0
      %v4658 = vadd.f32 %v4009, %v4657
      %4659 = vmatmul.bf16.gmra.mxu0 %v2888
      %v4660 = vpop.f32.mrf.mxu0
      %v4661 = vadd.f32 %v4012, %v4660
      %v4662 = vpop.f32.mrf.mxu0
      %v4663 = vadd.f32 %v4014, %v4662
      %4664 = vmatmul.bf16.gmra.mxu0 %v2891
      %v4665 = vpop.f32.mrf.mxu0
      %v4666 = vadd.f32 %v4017, %v4665
      %v4667 = vpop.f32.mrf.mxu0
      %v4668 = vadd.f32 %v4019, %v4667
      %4669 = vmatmul.bf16.gmra.mxu0 %v2894
      %v4670 = vpop.f32.mrf.mxu0
      %v4671 = vadd.f32 %v4022, %v4670
      %v4672 = vpop.f32.mrf.mxu0
      %v4673 = vadd.f32 %v4024, %v4672
      %4674 = vmatmul.bf16.gmra.mxu0 %v2897
      %v4675 = vpop.f32.mrf.mxu0
      %v4676 = vadd.f32 %v4027, %v4675
      %v4677 = vpop.f32.mrf.mxu0
      %v4678 = vadd.f32 %v4029, %v4677
      %4679 = vmatmul.bf16.gmra.mxu0 %v2900
      %v4680 = vpop.f32.mrf.mxu0
      %v4681 = vadd.f32 %v4032, %v4680
      %v4682 = vpop.f32.mrf.mxu0
      %v4683 = vadd.f32 %v4034, %v4682
      %4684 = vmatmul.bf16.gmra.mxu0 %v2903
      %v4685 = vpop.f32.mrf.mxu0
      %v4686 = vadd.f32 %v4037, %v4685
      %v4687 = vpop.f32.mrf.mxu0
      %v4688 = vadd.f32 %v4039, %v4687
      %4689 = vmatmul.bf16.gmra.mxu0 %v2906
      %v4690 = vpop.f32.mrf.mxu0
      %v4691 = vadd.f32 %v4042, %v4690
      %v4692 = vpop.f32.mrf.mxu0
      %v4693 = vadd.f32 %v4044, %v4692
      %4694 = vmatmul.bf16.gmra.mxu0 %v2909
      %v4695 = vpop.f32.mrf.mxu0
      %v4696 = vadd.f32 %v4047, %v4695
      %v4697 = vpop.f32.mrf.mxu0
      %v4698 = vadd.f32 %v4049, %v4697
      %4699 = vmatmul.bf16.gmra.mxu0 %v2912
      %v4700 = vpop.f32.mrf.mxu0
      %v4701 = vadd.f32 %v4052, %v4700
      %v4702 = vpop.f32.mrf.mxu0
      %v4703 = vadd.f32 %v4054, %v4702
      %4704 = vmatmul.bf16.gmra.mxu0 %v2915
      %v4705 = vpop.f32.mrf.mxu0
      %v4706 = vadd.f32 %v4057, %v4705
      %v4707 = vpop.f32.mrf.mxu0
      %v4708 = vadd.f32 %v4059, %v4707
      %4709 = vmatmul.bf16.gmra.mxu0 %v2918
      %v4710 = vpop.f32.mrf.mxu0
      %v4711 = vadd.f32 %v4062, %v4710
      %v4712 = vpop.f32.mrf.mxu0
      %v4713 = vadd.f32 %v4064, %v4712
      %4714 = vmatmul.bf16.gmra.mxu0 %v2921
      %v4715 = vpop.f32.mrf.mxu0
      %v4716 = vadd.f32 %v4067, %v4715
      %v4717 = vpop.f32.mrf.mxu0
      %v4718 = vadd.f32 %v4069, %v4717
      %4719 = vmatmul.bf16.gmra.mxu0 %v2924
      %v4720 = vpop.f32.mrf.mxu0
      %v4721 = vadd.f32 %v4072, %v4720
      %v4722 = vpop.f32.mrf.mxu0
      %v4723 = vadd.f32 %v4074, %v4722
      %4724 = vmatmul.bf16.gmra.mxu0 %v2927
      %v4725 = vpop.f32.mrf.mxu0
      %v4726 = vadd.f32 %v4077, %v4725
      %v4727 = vpop.f32.mrf.mxu0
      %v4728 = vadd.f32 %v4079, %v4727
      %4729 = vmatmul.bf16.gmra.mxu0 %v2930
      %v4730 = vpop.f32.mrf.mxu0
      %v4731 = vadd.f32 %v4082, %v4730
      %v4732 = vpop.f32.mrf.mxu0
      %v4733 = vadd.f32 %v4084, %v4732
      %4734 = vmatmul.bf16.gmra.mxu0 %v2933
      %v4735 = vpop.f32.mrf.mxu0
      %v4736 = vadd.f32 %v4087, %v4735
      %v4737 = vpop.f32.mrf.mxu0
      %v4738 = vadd.f32 %v4089, %v4737
      %4739 = vmatmul.bf16.gmra.mxu0 %v2936
      %v4740 = vpop.f32.mrf.mxu0
      %v4741 = vadd.f32 %v4092, %v4740
      %v4742 = vpop.f32.mrf.mxu0
      %v4743 = vadd.f32 %v4094, %v4742
      %4744 = vmatmul.bf16.gmra.mxu0 %v2939
      %v4745 = vpop.f32.mrf.mxu0
      %v4746 = vadd.f32 %v4097, %v4745
      %v4747 = vpop.f32.mrf.mxu0
      %v4748 = vadd.f32 %v4099, %v4747
      %4749 = vmatmul.bf16.gmra.mxu0 %v2942
      %v4750 = vpop.f32.mrf.mxu0
      %v4751 = vadd.f32 %v4102, %v4750
      %v4752 = vpop.f32.mrf.mxu0
      %v4753 = vadd.f32 %v4104, %v4752
      %4754 = vmatmul.bf16.gmra.mxu0 %v2945
      %v4755 = vpop.f32.mrf.mxu0
      %v4756 = vadd.f32 %v4107, %v4755
      %v4757 = vpop.f32.mrf.mxu0
      %v4758 = vadd.f32 %v4109, %v4757
      %4759 = vmatmul.bf16.gmra.mxu0 %v2948
      %v4760 = vpop.f32.mrf.mxu0
      %v4761 = vadd.f32 %v4112, %v4760
      %v4762 = vpop.f32.mrf.mxu0
      %v4763 = vadd.f32 %v4114, %v4762
      %4764 = vmatmul.bf16.gmra.mxu0 %v2951
      %v4765 = vpop.f32.mrf.mxu0
      %v4766 = vadd.f32 %v4117, %v4765
      %v4767 = vpop.f32.mrf.mxu0
      %v4768 = vadd.f32 %v4119, %v4767
      %4769 = vmatmul.bf16.gmra.mxu0 %v2954
      %v4770 = vpop.f32.mrf.mxu0
      %v4771 = vadd.f32 %v4122, %v4770
      %v4772 = vpop.f32.mrf.mxu0
      %v4773 = vadd.f32 %v4124, %v4772
      %4774 = vmatmul.bf16.gmra.mxu0 %v2957
      %v4775 = vpop.f32.mrf.mxu0
      %v4776 = vadd.f32 %v4127, %v4775
      %v4777 = vpop.f32.mrf.mxu0
      %v4778 = vadd.f32 %v4129, %v4777
      %4779 = vmatmul.bf16.gmra.mxu0 %v2960
      %v4780 = vpop.f32.mrf.mxu0
      %v4781 = vadd.f32 %v4132, %v4780
      %v4782 = vpop.f32.mrf.mxu0
      %v4783 = vadd.f32 %v4134, %v4782
      %4784 = vmatmul.bf16.gmra.mxu0 %v2963
      %v4785 = vpop.f32.mrf.mxu0
      %v4786 = vadd.f32 %v4137, %v4785
      %v4787 = vpop.f32.mrf.mxu0
      %v4788 = vadd.f32 %v4139, %v4787
      %4789 = vmatmul.bf16.gmra.mxu0 %v2966
      %v4790 = vpop.f32.mrf.mxu0
      %v4791 = vadd.f32 %v4142, %v4790
      %v4792 = vpop.f32.mrf.mxu0
      %v4793 = vadd.f32 %v4144, %v4792
      %4794 = vmatmul.bf16.gmra.mxu0 %v2969
      %v4795 = vpop.f32.mrf.mxu0
      %v4796 = vadd.f32 %v4147, %v4795
      %v4797 = vpop.f32.mrf.mxu0
      %v4798 = vadd.f32 %v4149, %v4797
      %4799 = vmatmul.bf16.gmra.mxu0 %v2972
      %v4800 = vpop.f32.mrf.mxu0
      %v4801 = vadd.f32 %v4152, %v4800
      %v4802 = vpop.f32.mrf.mxu0
      %v4803 = vadd.f32 %v4154, %v4802
      %4804 = vmatmul.bf16.gmra.mxu0 %v2975
      %v4805 = vpop.f32.mrf.mxu0
      %v4806 = vadd.f32 %v4157, %v4805
      %v4807 = vpop.f32.mrf.mxu0
      %v4808 = vadd.f32 %v4159, %v4807
      %4809 = vmatmul.bf16.gmra.mxu0 %v2978
      %v4810 = vpop.f32.mrf.mxu0
      %v4811 = vadd.f32 %v4162, %v4810
      %v4812 = vpop.f32.mrf.mxu0
      %v4813 = vadd.f32 %v4164, %v4812
      %4814 = vmatmul.bf16.gmra.mxu0 %v2981
      %v4815 = vpop.f32.mrf.mxu0
      %v4816 = vadd.f32 %v4167, %v4815
      %v4817 = vpop.f32.mrf.mxu0
      %v4818 = vadd.f32 %v4169, %v4817
      %4819 = vmatmul.bf16.gmra.mxu0 %v2984
      %v4820 = vpop.f32.mrf.mxu0
      %v4821 = vadd.f32 %v4172, %v4820
      %v4822 = vpop.f32.mrf.mxu0
      %v4823 = vadd.f32 %v4174, %v4822
      %4824 = vmatmul.bf16.gmra.mxu0 %v2987
      %v4825 = vpop.f32.mrf.mxu0
      %v4826 = vadd.f32 %v4177, %v4825
      %v4827 = vpop.f32.mrf.mxu0
      %v4828 = vadd.f32 %v4179, %v4827
      %4829 = vmatmul.bf16.gmra.mxu0 %v2990
      %v4830 = vpop.f32.mrf.mxu0
      %v4831 = vadd.f32 %v4182, %v4830
      %v4832 = vpop.f32.mrf.mxu0
      %v4833 = vadd.f32 %v4184, %v4832
      %4834 = vmatmul.bf16.gmra.mxu0 %v2993
      %v4835 = vpop.f32.mrf.mxu0
      %v4836 = vadd.f32 %v4187, %v4835
      %v4837 = vpop.f32.mrf.mxu0
      %v4838 = vadd.f32 %v4189, %v4837
      %4839 = vmatmul.bf16.gmra.mxu0 %v2996
      %v4840 = vpop.f32.mrf.mxu0
      %v4841 = vadd.f32 %v4192, %v4840
      %v4842 = vpop.f32.mrf.mxu0
      %v4843 = vadd.f32 %v4194, %v4842
      %4844 = vmatmul.bf16.gmra.mxu0 %v2999
      %v4845 = vpop.f32.mrf.mxu0
      %v4846 = vadd.f32 %v4197, %v4845
      %v4847 = vpop.f32.mrf.mxu0
      %v4848 = vadd.f32 %v4199, %v4847
      %4849 = vmatmul.bf16.gmra.mxu0 %v3002
      %v4850 = vpop.f32.mrf.mxu0
      %v4851 = vadd.f32 %v4202, %v4850
      %v4852 = vpop.f32.mrf.mxu0
      %v4853 = vadd.f32 %v4204, %v4852
      %4854 = vmatmul.bf16.gmra.mxu0 %v3005
      %v4855 = vpop.f32.mrf.mxu0
      %v4856 = vadd.f32 %v4207, %v4855
      %v4857 = vpop.f32.mrf.mxu0
      %v4858 = vadd.f32 %v4209, %v4857
      %4859 = vmatmul.bf16.gmra.mxu0 %v3008
      %v4860 = vpop.f32.mrf.mxu0
      %v4861 = vadd.f32 %v4212, %v4860
      %v4862 = vpop.f32.mrf.mxu0
      %v4863 = vadd.f32 %v4214, %v4862
      %4864 = vmatmul.bf16.gmra.mxu0 %v3011
      %v4865 = vpop.f32.mrf.mxu0
      %v4866 = vadd.f32 %v4217, %v4865
      %v4867 = vpop.f32.mrf.mxu0
      %v4868 = vadd.f32 %v4219, %v4867
      %4869 = vmatmul.bf16.gmra.mxu0 %v3014
      %v4870 = vpop.f32.mrf.mxu0
      %v4871 = vadd.f32 %v4222, %v4870
      %v4872 = vpop.f32.mrf.mxu0
      %v4873 = vadd.f32 %v4224, %v4872
      %4874 = vmatmul.bf16.gmra.mxu0 %v3017
      %v4875 = vpop.f32.mrf.mxu0
      %v4876 = vadd.f32 %v4227, %v4875
      %v4877 = vpop.f32.mrf.mxu0
      %v4878 = vadd.f32 %v4229, %v4877
      %4879 = vmatmul.bf16.gmra.mxu0 %v3020
      %v4880 = vpop.f32.mrf.mxu0
      %v4881 = vadd.f32 %v4232, %v4880
      %v4882 = vpop.f32.mrf.mxu0
      %v4883 = vadd.f32 %v4234, %v4882
      %4884 = vmatmul.bf16.gmra.mxu0 %v3023
      %v4885 = vpop.f32.mrf.mxu0
      %v4886 = vadd.f32 %v4237, %v4885
      %v4887 = vpop.f32.mrf.mxu0
      %v4888 = vadd.f32 %v4239, %v4887
      %4889 = vmatmul.bf16.gmra.mxu0 %v3026
      %v4890 = vpop.f32.mrf.mxu0
      %v4891 = vadd.f32 %v4242, %v4890
      %v4892 = vpop.f32.mrf.mxu0
      %v4893 = vadd.f32 %v4244, %v4892
      %4894 = vmatmul.bf16.gmra.mxu0 %v3029
      %v4895 = vpop.f32.mrf.mxu0
      %v4896 = vadd.f32 %v4247, %v4895
      %v4897 = vpop.f32.mrf.mxu0
      %v4898 = vadd.f32 %v4249, %v4897
      %4899 = vmatmul.bf16.gmra.mxu0 %v3032
      %v4900 = vpop.f32.mrf.mxu0
      %v4901 = vadd.f32 %v4252, %v4900
      %v4902 = vpop.f32.mrf.mxu0
      %v4903 = vadd.f32 %v4254, %v4902
      %4904 = vmatmul.bf16.gmra.mxu0 %v3035
      %v4905 = vpop.f32.mrf.mxu0
      %v4906 = vadd.f32 %v4257, %v4905
      %v4907 = vpop.f32.mrf.mxu0
      %v4908 = vadd.f32 %v4259, %v4907
      %4909 = vmatmul.bf16.gmra.mxu0 %v3038
      %v4910 = vpop.f32.mrf.mxu0
      %v4911 = vadd.f32 %v4262, %v4910
      %v4912 = vpop.f32.mrf.mxu0
      %v4913 = vadd.f32 %v4264, %v4912
      %4914 = vmatmul.bf16.gmra.mxu0 %v3041
      %v4915 = vpop.f32.mrf.mxu0
      %v4916 = vadd.f32 %v4267, %v4915
      %v4917 = vpop.f32.mrf.mxu0
      %v4918 = vadd.f32 %v4269, %v4917
      %4919 = vmatmul.bf16.gmra.mxu0 %v3044
      %v4920 = vpop.f32.mrf.mxu0
      %v4921 = vadd.f32 %v4272, %v4920
      %v4922 = vpop.f32.mrf.mxu0
      %v4923 = vadd.f32 %v4274, %v4922
      %4924 = vmatmul.bf16.gmra.mxu0 %v3047
      %v4925 = vpop.f32.mrf.mxu0
      %v4926 = vadd.f32 %v4277, %v4925
      %v4927 = vpop.f32.mrf.mxu0
      %v4928 = vadd.f32 %v4279, %v4927
      %4929 = vmatmul.bf16.gmra.mxu0 %v3050
      %v4930 = vpop.f32.mrf.mxu0
      %v4931 = vadd.f32 %v4282, %v4930
      %v4932 = vpop.f32.mrf.mxu0
      %v4933 = vadd.f32 %v4284, %v4932
      %4934 = vmatmul.bf16.gmra.mxu0 %v3053
      %v4935 = vpop.f32.mrf.mxu0
      %v4936 = vadd.f32 %v4287, %v4935
      %v4937 = vpop.f32.mrf.mxu0
      %v4938 = vadd.f32 %v4289, %v4937
      %4939 = vmatmul.bf16.gmra.mxu0 %v3056
      %v4940 = vpop.f32.mrf.mxu0
      %v4941 = vadd.f32 %v4292, %v4940
      %v4942 = vpop.f32.mrf.mxu0
      %v4943 = vadd.f32 %v4294, %v4942
      %4944 = vmatmul.bf16.gmra.mxu0 %v3059
      %v4945 = vpop.f32.mrf.mxu0
      %v4946 = vadd.f32 %v4297, %v4945
      %v4947 = vpop.f32.mrf.mxu0
      %v4948 = vadd.f32 %v4299, %v4947
      %4949 = vmatmul.bf16.gmra.mxu0 %v3062
      %v4950 = vpop.f32.mrf.mxu0
      %v4951 = vadd.f32 %v4302, %v4950
      %v4952 = vpop.f32.mrf.mxu0
      %v4953 = vadd.f32 %v4304, %v4952
      %4954 = vmatmul.bf16.gmra.mxu0 %v3065
      %v4955 = vpop.f32.mrf.mxu0
      %v4956 = vadd.f32 %v4307, %v4955
      %v4957 = vpop.f32.mrf.mxu0
      %v4958 = vadd.f32 %v4309, %v4957
      %4959 = vmatmul.bf16.gmra.mxu0 %v3068
      %v4960 = vpop.f32.mrf.mxu0
      %v4961 = vadd.f32 %v4312, %v4960
      %v4962 = vpop.f32.mrf.mxu0
      %v4963 = vadd.f32 %v4314, %v4962
      %4964 = vmatmul.bf16.gmra.mxu0 %v3071
      %v4965 = vpop.f32.mrf.mxu0
      %v4966 = vadd.f32 %v4317, %v4965
      %v4967 = vpop.f32.mrf.mxu0
      %v4968 = vadd.f32 %v4319, %v4967
      %4969 = vmatmul.bf16.gmra.mxu0 %v3074
      %v4970 = vpop.f32.mrf.mxu0
      %v4971 = vadd.f32 %v4322, %v4970
      %v4972 = vpop.f32.mrf.mxu0
      %v4973 = vadd.f32 %v4324, %v4972
      %4974 = vmatmul.bf16.gmra.mxu0 %v3077
      %v4975 = vpop.f32.mrf.mxu0
      %v4976 = vadd.f32 %v4327, %v4975
      %v4977 = vpop.f32.mrf.mxu0
      %v4978 = vadd.f32 %v4329, %v4977
      %4979 = vmatmul.bf16.gmra.mxu0 %v3080
      %v4980 = vpop.f32.mrf.mxu0
      %v4981 = vadd.f32 %v4332, %v4980
      %v4982 = vpop.f32.mrf.mxu0
      %v4983 = vadd.f32 %v4334, %v4982
      %4984 = vmatmul.bf16.gmra.mxu0 %v3083
      %v4985 = vpop.f32.mrf.mxu0
      %v4986 = vadd.f32 %v4337, %v4985
      %v4987 = vpop.f32.mrf.mxu0
      %v4988 = vadd.f32 %v4339, %v4987
      %4989 = vmatmul.bf16.gmra.mxu0 %v3086
      %v4990 = vpop.f32.mrf.mxu0
      %v4991 = vadd.f32 %v4342, %v4990
      %v4992 = vpop.f32.mrf.mxu0
      %v4993 = vadd.f32 %v4344, %v4992
      %4994 = vmatmul.bf16.gmra.mxu0 %v3089
      %v4995 = vpop.f32.mrf.mxu0
      %v4996 = vadd.f32 %v4347, %v4995
      %v4997 = vpop.f32.mrf.mxu0
      %v4998 = vadd.f32 %v4349, %v4997
      %4999 = vmatmul.bf16.gmra.mxu0 %v3092
      %v5000 = vpop.f32.mrf.mxu0
      %v5001 = vadd.f32 %v4352, %v5000
      %v5002 = vpop.f32.mrf.mxu0
      %v5003 = vadd.f32 %v4354, %v5002
      %5004 = vmatmul.bf16.gmra.mxu0 %v3095
      %v5005 = vpop.f32.mrf.mxu0
      %v5006 = vadd.f32 %v4357, %v5005
      %v5007 = vpop.f32.mrf.mxu0
      %v5008 = vadd.f32 %v4359, %v5007
      %5009 = vmatmul.bf16.gmra.mxu0 %v3098
      %v5010 = vpop.f32.mrf.mxu0
      %v5011 = vadd.f32 %v4362, %v5010
      %v5012 = vpop.f32.mrf.mxu0
      %v5013 = vadd.f32 %v4364, %v5012
      %5014 = vmatmul.bf16.gmra.mxu0 %v3101
      %v5015 = vpop.f32.mrf.mxu0
      %v5016 = vadd.f32 %v4367, %v5015
      %v5017 = vpop.f32.mrf.mxu0
      %v5018 = vadd.f32 %v4369, %v5017
      %5019 = vmatmul.bf16.gmra.mxu0 %v3104
      %v5020 = vpop.f32.mrf.mxu0
      %v5021 = vadd.f32 %v4372, %v5020
      %v5022 = vpop.f32.mrf.mxu0
      %v5023 = vadd.f32 %v4374, %v5022
      %5024 = vmatmul.bf16.gmra.mxu0 %v3107
      %v5025 = vpop.f32.mrf.mxu0
      %v5026 = vadd.f32 %v4377, %v5025
      %v5027 = vpop.f32.mrf.mxu0
      %v5028 = vadd.f32 %v4379, %v5027
      %5029 = vmatmul.bf16.gmra.mxu0 %v3110
      %v5030 = vpop.f32.mrf.mxu0
      %v5031 = vadd.f32 %v4382, %v5030
      %v5032 = vpop.f32.mrf.mxu0
      %v5033 = vadd.f32 %v4384, %v5032
      %5034 = vmatmul.bf16.gmra.mxu0 %v3113
      %v5035 = vpop.f32.mrf.mxu0
      %v5036 = vadd.f32 %v4387, %v5035
      %v5037 = vpop.f32.mrf.mxu0
      %v5038 = vadd.f32 %v4389, %v5037
      %5039 = vmatmul.bf16.gmra.mxu0 %v3116
      %v5040 = vpop.f32.mrf.mxu0
      %v5041 = vadd.f32 %v4392, %v5040
      %v5042 = vpop.f32.mrf.mxu0
      %v5043 = vadd.f32 %v4394, %v5042
      %5044 = vmatmul.bf16.gmra.mxu0 %v3119
      %v5045 = vpop.f32.mrf.mxu0
      %v5046 = vadd.f32 %v4397, %v5045
      %v5047 = vpop.f32.mrf.mxu0
      %v5048 = vadd.f32 %v4399, %v5047
      %5049 = vmatmul.bf16.gmra.mxu0 %v3122
      %v5050 = vpop.f32.mrf.mxu0
      %v5051 = vadd.f32 %v4402, %v5050
      %v5052 = vpop.f32.mrf.mxu0
      %v5053 = vadd.f32 %v4404, %v5052
      %5054 = vmatmul.bf16.gmra.mxu0 %v3125
      %v5055 = vpop.f32.mrf.mxu0
      %v5056 = vadd.f32 %v4407, %v5055
      %v5057 = vpop.f32.mrf.mxu0
      %v5058 = vadd.f32 %v4409, %v5057
      %5059 = vmatmul.bf16.gmra.mxu0 %v3128
      %v5060 = vpop.f32.mrf.mxu0
      %v5061 = vadd.f32 %v4412, %v5060
      %v5062 = vpop.f32.mrf.mxu0
      %v5063 = vadd.f32 %v4414, %v5062
      %5064 = vmatmul.bf16.gmra.mxu0 %v3131
      %v5065 = vpop.f32.mrf.mxu0
      %v5066 = vadd.f32 %v4417, %v5065
      %v5067 = vpop.f32.mrf.mxu0
      %v5068 = vadd.f32 %v4419, %v5067
      %5069 = vmatmul.bf16.gmra.mxu0 %v3134
      %v5070 = vpop.f32.mrf.mxu0
      %v5071 = vadd.f32 %v4422, %v5070
      %v5072 = vpop.f32.mrf.mxu0
      %v5073 = vadd.f32 %v4424, %v5072
      %5074 = vmatmul.bf16.gmra.mxu0 %v3137
      %v5075 = vpop.f32.mrf.mxu0
      %v5076 = vadd.f32 %v4427, %v5075
      %v5077 = vpop.f32.mrf.mxu0
      %v5078 = vadd.f32 %v4429, %v5077
      %5079 = vmatmul.bf16.gmra.mxu0 %v3140
      %v5080 = vpop.f32.mrf.mxu0
      %v5081 = vadd.f32 %v4432, %v5080
      %v5082 = vpop.f32.mrf.mxu0
      %v5083 = vadd.f32 %v4434, %v5082
      %5084 = vmatmul.bf16.gmra.mxu0 %v3143
      %v5085 = vpop.f32.mrf.mxu0
      %v5086 = vadd.f32 %v4437, %v5085
      %v5087 = vpop.f32.mrf.mxu0
      %v5088 = vadd.f32 %v4439, %v5087
      %5089 = vmatmul.bf16.gmra.mxu0 %v3146
      %v5090 = vpop.f32.mrf.mxu0
      %v5091 = vadd.f32 %v4442, %v5090
      %v5092 = vpop.f32.mrf.mxu0
      %v5093 = vadd.f32 %v4444, %v5092
      %5094 = vdwg.mxu0
      %v5095 = vtanh.pop %v4456
      %v5096 = vtanh.pop %v4458
      %v5097 = vtanh.pop %v4461
      %v5098 = vtanh.pop %v4463
      %v5099 = vtanh.pop %v4466
      %v5100 = vtanh.pop %v4468
      %v5101 = vtanh.pop %v4471
      %v5102 = vtanh.pop %v4473
      %v5103 = vtanh.pop %v4476
      %v5104 = vtanh.pop %v4478
      %v5105 = vtanh.pop %v4481
      %v5106 = vtanh.pop %v4483
      %v5107 = vtanh.pop %v4486
      %v5108 = vtanh.pop %v4488
      %v5109 = vtanh.pop %v4491
      %v5110 = vtanh.pop %v4493
      %v5111 = vtanh.pop %v4496
      %v5112 = vtanh.pop %v4498
      %v5113 = vtanh.pop %v4501
      %v5114 = vtanh.pop %v4503
      %v5115 = vtanh.pop %v4506
      %v5116 = vtanh.pop %v4508
      %v5117 = vtanh.pop %v4511
      %v5118 = vtanh.pop %v4513
      %v5119 = vtanh.pop %v4516
      %v5120 = vtanh.pop %v4518
      %v5121 = vtanh.pop %v4521
      %v5122 = vtanh.pop %v4523
      %v5123 = vtanh.pop %v4526
      %v5124 = vtanh.pop %v4528
      %v5125 = vtanh.pop %v4531
      %v5126 = vtanh.pop %v4533
      %v5127 = vtanh.pop %v4536
      %v5128 = vtanh.pop %v4538
      %v5129 = vtanh.pop %v4541
      %v5130 = vtanh.pop %v4543
      %v5131 = vtanh.pop %v4546
      %v5132 = vtanh.pop %v4548
      %v5133 = vtanh.pop %v4551
      %v5134 = vtanh.pop %v4553
      %v5135 = vtanh.pop %v4556
      %v5136 = vtanh.pop %v4558
      %v5137 = vtanh.pop %v4561
      %v5138 = vtanh.pop %v4563
      %v5139 = vtanh.pop %v4566
      %v5140 = vtanh.pop %v4568
      %v5141 = vtanh.pop %v4571
      %v5142 = vtanh.pop %v4573
      %v5143 = vtanh.pop %v4576
      %v5144 = vtanh.pop %v4578
      %v5145 = vtanh.pop %v4581
      %v5146 = vtanh.pop %v4583
      %v5147 = vtanh.pop %v4586
      %v5148 = vtanh.pop %v4588
      %v5149 = vtanh.pop %v4591
      %v5150 = vtanh.pop %v4593
      %v5151 = vtanh.pop %v4596
      %v5152 = vtanh.pop %v4598
      %v5153 = vtanh.pop %v4601
      %v5154 = vtanh.pop %v4603
      %v5155 = vtanh.pop %v4606
      %v5156 = vtanh.pop %v4608
      %v5157 = vtanh.pop %v4611
      %v5158 = vtanh.pop %v4613
      %v5159 = vtanh.pop %v4616
      %v5160 = vtanh.pop %v4618
      %v5161 = vtanh.pop %v4621
      %v5162 = vtanh.pop %v4623
      %v5163 = vtanh.pop %v4626
      %v5164 = vtanh.pop %v4628
      %v5165 = vtanh.pop %v4631
      %v5166 = vtanh.pop %v4633
      %v5167 = vtanh.pop %v4636
      %v5168 = vtanh.pop %v4638
      %v5169 = vtanh.pop %v4641
      %v5170 = vtanh.pop %v4643
      %v5171 = vtanh.pop %v4646
      %v5172 = vtanh.pop %v4648
      %v5173 = vtanh.pop %v4651
      %v5174 = vtanh.pop %v4653
      %v5175 = vtanh.pop %v4656
      %v5176 = vtanh.pop %v4658
      %v5177 = vtanh.pop %v4661
      %v5178 = vtanh.pop %v4663
      %v5179 = vtanh.pop %v4666
      %v5180 = vtanh.pop %v4668
      %v5181 = vtanh.pop %v4671
      %v5182 = vtanh.pop %v4673
      %v5183 = vtanh.pop %v4676
      %v5184 = vtanh.pop %v4678
      %v5185 = vtanh.pop %v4681
      %v5186 = vtanh.pop %v4683
      %v5187 = vtanh.pop %v4686
      %v5188 = vtanh.pop %v4688
      %v5189 = vtanh.pop %v4691
      %v5190 = vtanh.pop %v4693
      %v5191 = vtanh.pop %v4696
      %v5192 = vtanh.pop %v4698
      %v5193 = vtanh.pop %v4701
      %v5194 = vtanh.pop %v4703
      %v5195 = vtanh.pop %v4706
      %v5196 = vtanh.pop %v4708
      %v5197 = vtanh.pop %v4711
      %v5198 = vtanh.pop %v4713
      %v5199 = vtanh.pop %v4716
      %v5200 = vtanh.pop %v4718
      %v5201 = vtanh.pop %v4721
      %v5202 = vtanh.pop %v4723
      %v5203 = vtanh.pop %v4726
      %v5204 = vtanh.pop %v4728
      %v5205 = vtanh.pop %v4731
      %v5206 = vtanh.pop %v4733
      %v5207 = vtanh.pop %v4736
      %v5208 = vtanh.pop %v4738
      %v5209 = vtanh.pop %v4741
      %v5210 = vtanh.pop %v4743
      %v5211 = vtanh.pop %v4746
      %v5212 = vtanh.pop %v4748
      %v5213 = vtanh.pop %v4751
      %v5214 = vtanh.pop %v4753
      %v5215 = vtanh.pop %v4756
      %v5216 = vtanh.pop %v4758
      %v5217 = vtanh.pop %v4761
      %v5218 = vtanh.pop %v4763
      %v5219 = vtanh.pop %v4766
      %v5220 = vtanh.pop %v4768
      %v5221 = vtanh.pop %v4771
      %v5222 = vtanh.pop %v4773
      %v5223 = vtanh.pop %v4776
      %v5224 = vtanh.pop %v4778
      %v5225 = vtanh.pop %v4781
      %v5226 = vtanh.pop %v4783
      %v5227 = vtanh.pop %v4786
      %v5228 = vtanh.pop %v4788
      %v5229 = vtanh.pop %v4791
      %v5230 = vtanh.pop %v4793
      %v5231 = vtanh.pop %v4796
      %v5232 = vtanh.pop %v4798
      %v5233 = vtanh.pop %v4801
      %v5234 = vtanh.pop %v4803
      %v5235 = vtanh.pop %v4806
      %v5236 = vtanh.pop %v4808
      %v5237 = vtanh.pop %v4811
      %v5238 = vtanh.pop %v4813
      %v5239 = vtanh.pop %v4816
      %v5240 = vtanh.pop %v4818
      %v5241 = vtanh.pop %v4821
      %v5242 = vtanh.pop %v4823
      %v5243 = vtanh.pop %v4826
      %v5244 = vtanh.pop %v4828
      %v5245 = vtanh.pop %v4831
      %v5246 = vtanh.pop %v4833
      %v5247 = vtanh.pop %v4836
      %v5248 = vtanh.pop %v4838
      %v5249 = vtanh.pop %v4841
      %v5250 = vtanh.pop %v4843
      %v5251 = vtanh.pop %v4846
      %v5252 = vtanh.pop %v4848
      %v5253 = vtanh.pop %v4851
      %v5254 = vtanh.pop %v4853
      %v5255 = vtanh.pop %v4856
      %v5256 = vtanh.pop %v4858
      %v5257 = vtanh.pop %v4861
      %v5258 = vtanh.pop %v4863
      %v5259 = vtanh.pop %v4866
      %v5260 = vtanh.pop %v4868
      %v5261 = vtanh.pop %v4871
      %v5262 = vtanh.pop %v4873
      %v5263 = vtanh.pop %v4876
      %v5264 = vtanh.pop %v4878
      %v5265 = vtanh.pop %v4881
      %v5266 = vtanh.pop %v4883
      %v5267 = vtanh.pop %v4886
      %v5268 = vtanh.pop %v4888
      %v5269 = vtanh.pop %v4891
      %v5270 = vtanh.pop %v4893
      %v5271 = vtanh.pop %v4896
      %v5272 = vtanh.pop %v4898
      %v5273 = vtanh.pop %v4901
      %v5274 = vtanh.pop %v4903
      %v5275 = vtanh.pop %v4906
      %v5276 = vtanh.pop %v4908
      %v5277 = vtanh.pop %v4911
      %v5278 = vtanh.pop %v4913
      %v5279 = vtanh.pop %v4916
      %v5280 = vtanh.pop %v4918
      %v5281 = vtanh.pop %v4921
      %v5282 = vtanh.pop %v4923
      %v5283 = vtanh.pop %v4926
      %v5284 = vtanh.pop %v4928
      %v5285 = vtanh.pop %v4931
      %v5286 = vtanh.pop %v4933
      %v5287 = vtanh.pop %v4936
      %v5288 = vtanh.pop %v4938
      %v5289 = vtanh.pop %v4941
      %v5290 = vtanh.pop %v4943
      %v5291 = vtanh.pop %v4946
      %v5292 = vtanh.pop %v4948
      %v5293 = vtanh.pop %v4951
      %v5294 = vtanh.pop %v4953
      %v5295 = vtanh.pop %v4956
      %v5296 = vtanh.pop %v4958
      %v5297 = vtanh.pop %v4961
      %v5298 = vtanh.pop %v4963
      %v5299 = vtanh.pop %v4966
      %v5300 = vtanh.pop %v4968
      %v5301 = vtanh.pop %v4971
      %v5302 = vtanh.pop %v4973
      %v5303 = vtanh.pop %v4976
      %v5304 = vtanh.pop %v4978
      %v5305 = vtanh.pop %v4981
      %v5306 = vtanh.pop %v4983
      %v5307 = vtanh.pop %v4986
      %v5308 = vtanh.pop %v4988
      %v5309 = vtanh.pop %v4991
      %v5310 = vtanh.pop %v4993
      %v5311 = vtanh.pop %v4996
      %v5312 = vtanh.pop %v4998
      %v5313 = vtanh.pop %v5001
      %v5314 = vtanh.pop %v5003
      %v5315 = vtanh.pop %v5006
      %v5316 = vtanh.pop %v5008
      %v5317 = vtanh.pop %v5011
      %v5318 = vtanh.pop %v5013
      %v5319 = vtanh.pop %v5016
      %v5320 = vtanh.pop %v5018
      %v5321 = vtanh.pop %v5021
      %v5322 = vtanh.pop %v5023
      %v5323 = vtanh.pop %v5026
      %v5324 = vtanh.pop %v5028
      %v5325 = vtanh.pop %v5031
      %v5326 = vtanh.pop %v5033
      %v5327 = vtanh.pop %v5036
      %v5328 = vtanh.pop %v5038
      %v5329 = vtanh.pop %v5041
      %v5330 = vtanh.pop %v5043
      %v5331 = vtanh.pop %v5046
      %v5332 = vtanh.pop %v5048
      %v5333 = vtanh.pop %v5051
      %v5334 = vtanh.pop %v5053
      %v5335 = vtanh.pop %v5056
      %v5336 = vtanh.pop %v5058
      %v5337 = vtanh.pop %v5061
      %v5338 = vtanh.pop %v5063
      %v5339 = vtanh.pop %v5066
      %v5340 = vtanh.pop %v5068
      %v5341 = vtanh.pop %v5071
      %v5342 = vtanh.pop %v5073
      %v5343 = vtanh.pop %v5076
      %v5344 = vtanh.pop %v5078
      %v5345 = vtanh.pop %v5081
      %v5346 = vtanh.pop %v5083
      %v5347 = vtanh.pop %v5086
      %v5348 = vtanh.pop %v5088
      %v5349 = vtanh.pop %v5091
      %v5350 = vtanh.pop %v5093
      %vm5351 = vcmask 23552
      %5352 = vst.msk [vmem:[%s184] sm:$0xff] %vm5351, %v5095
      %5353 = vst.msk [vmem:[%s184 + $0x8] sm:$0xff] %vm5351, %v5096
      %5354 = vst.msk [vmem:[%s184 + $0x10] sm:$0xff] %vm5351, %v5097
      %5355 = vst.msk [vmem:[%s184 + $0x18] sm:$0xff] %vm5351, %v5098
      %5356 = vst.msk [vmem:[%s184 + $0x20] sm:$0xff] %vm5351, %v5099
      %5357 = vst.msk [vmem:[%s184 + $0x28] sm:$0xff] %vm5351, %v5100
      %5358 = vst.msk [vmem:[%s184 + $0x30] sm:$0xff] %vm5351, %v5101
      %5359 = vst.msk [vmem:[%s184 + $0x38] sm:$0xff] %vm5351, %v5102
      %5360 = vst.msk [vmem:[%s184 + $0x40] sm:$0xff] %vm5351, %v5103
      %5361 = vst.msk [vmem:[%s184 + $0x48] sm:$0xff] %vm5351, %v5104
      %5362 = vst.msk [vmem:[%s184 + $0x50] sm:$0xff] %vm5351, %v5105
      %5363 = vst.msk [vmem:[%s184 + $0x58] sm:$0xff] %vm5351, %v5106
      %5364 = vst.msk [vmem:[%s184 + $0x60] sm:$0xff] %vm5351, %v5107
      %5365 = vst.msk [vmem:[%s184 + $0x68] sm:$0xff] %vm5351, %v5108
      %5366 = vst.msk [vmem:[%s184 + $0x70] sm:$0xff] %vm5351, %v5109
      %5367 = vst.msk [vmem:[%s184 + $0x78] sm:$0xff] %vm5351, %v5110
      %5368 = vst.msk [vmem:[%s184 + $0x80] sm:$0xff] %vm5351, %v5111
      %5369 = vst.msk [vmem:[%s184 + $0x88] sm:$0xff] %vm5351, %v5112
      %5370 = vst.msk [vmem:[%s184 + $0x90] sm:$0xff] %vm5351, %v5113
      %5371 = vst.msk [vmem:[%s184 + $0x98] sm:$0xff] %vm5351, %v5114
      %5372 = vst.msk [vmem:[%s184 + $0xa0] sm:$0xff] %vm5351, %v5115
      %5373 = vst.msk [vmem:[%s184 + $0xa8] sm:$0xff] %vm5351, %v5116
      %5374 = vst.msk [vmem:[%s184 + $0xb0] sm:$0xff] %vm5351, %v5117
      %5375 = vst.msk [vmem:[%s184 + $0xb8] sm:$0xff] %vm5351, %v5118
      %5376 = vst.msk [vmem:[%s184 + $0xc0] sm:$0xff] %vm5351, %v5119
      %5377 = vst.msk [vmem:[%s184 + $0xc8] sm:$0xff] %vm5351, %v5120
      %5378 = vst.msk [vmem:[%s184 + $0xd0] sm:$0xff] %vm5351, %v5121
      %5379 = vst.msk [vmem:[%s184 + $0xd8] sm:$0xff] %vm5351, %v5122
      %5380 = vst.msk [vmem:[%s184 + $0xe0] sm:$0xff] %vm5351, %v5123
      %5381 = vst.msk [vmem:[%s184 + $0xe8] sm:$0xff] %vm5351, %v5124
      %5382 = vst.msk [vmem:[%s184 + $0xf0] sm:$0xff] %vm5351, %v5125
      %5383 = vst.msk [vmem:[%s184 + $0xf8] sm:$0xff] %vm5351, %v5126
      %5384 = vst.msk [vmem:[%s184 + $0x100] sm:$0xff] %vm5351, %v5127
      %5385 = vst.msk [vmem:[%s184 + $0x108] sm:$0xff] %vm5351, %v5128
      %5386 = vst.msk [vmem:[%s184 + $0x110] sm:$0xff] %vm5351, %v5129
      %5387 = vst.msk [vmem:[%s184 + $0x118] sm:$0xff] %vm5351, %v5130
      %5388 = vst.msk [vmem:[%s184 + $0x120] sm:$0xff] %vm5351, %v5131
      %5389 = vst.msk [vmem:[%s184 + $0x128] sm:$0xff] %vm5351, %v5132
      %5390 = vst.msk [vmem:[%s184 + $0x130] sm:$0xff] %vm5351, %v5133
      %5391 = vst.msk [vmem:[%s184 + $0x138] sm:$0xff] %vm5351, %v5134
      %5392 = vst.msk [vmem:[%s184 + $0x140] sm:$0xff] %vm5351, %v5135
      %5393 = vst.msk [vmem:[%s184 + $0x148] sm:$0xff] %vm5351, %v5136
      %5394 = vst.msk [vmem:[%s184 + $0x150] sm:$0xff] %vm5351, %v5137
      %5395 = vst.msk [vmem:[%s184 + $0x158] sm:$0xff] %vm5351, %v5138
      %5396 = vst.msk [vmem:[%s184 + $0x160] sm:$0xff] %vm5351, %v5139
      %5397 = vst.msk [vmem:[%s184 + $0x168] sm:$0xff] %vm5351, %v5140
      %5398 = vst.msk [vmem:[%s184 + $0x170] sm:$0xff] %vm5351, %v5141
      %5399 = vst.msk [vmem:[%s184 + $0x178] sm:$0xff] %vm5351, %v5142
      %5400 = vst.msk [vmem:[%s184 + $0x180] sm:$0xff] %vm5351, %v5143
      %5401 = vst.msk [vmem:[%s184 + $0x188] sm:$0xff] %vm5351, %v5144
      %5402 = vst.msk [vmem:[%s184 + $0x190] sm:$0xff] %vm5351, %v5145
      %5403 = vst.msk [vmem:[%s184 + $0x198] sm:$0xff] %vm5351, %v5146
      %5404 = vst.msk [vmem:[%s184 + $0x1a0] sm:$0xff] %vm5351, %v5147
      %5405 = vst.msk [vmem:[%s184 + $0x1a8] sm:$0xff] %vm5351, %v5148
      %5406 = vst.msk [vmem:[%s184 + $0x1b0] sm:$0xff] %vm5351, %v5149
      %5407 = vst.msk [vmem:[%s184 + $0x1b8] sm:$0xff] %vm5351, %v5150
      %5408 = vst.msk [vmem:[%s184 + $0x1c0] sm:$0xff] %vm5351, %v5151
      %5409 = vst.msk [vmem:[%s184 + $0x1c8] sm:$0xff] %vm5351, %v5152
      %5410 = vst.msk [vmem:[%s184 + $0x1d0] sm:$0xff] %vm5351, %v5153
      %5411 = vst.msk [vmem:[%s184 + $0x1d8] sm:$0xff] %vm5351, %v5154
      %5412 = vst.msk [vmem:[%s184 + $0x1e0] sm:$0xff] %vm5351, %v5155
      %5413 = vst.msk [vmem:[%s184 + $0x1e8] sm:$0xff] %vm5351, %v5156
      %5414 = vst.msk [vmem:[%s184 + $0x1f0] sm:$0xff] %vm5351, %v5157
      %5415 = vst.msk [vmem:[%s184 + $0x1f8] sm:$0xff] %vm5351, %v5158
      %5416 = vst.msk [vmem:[%s184 + $0x200] sm:$0xff] %vm5351, %v5159
      %5417 = vst.msk [vmem:[%s184 + $0x208] sm:$0xff] %vm5351, %v5160
      %5418 = vst.msk [vmem:[%s184 + $0x210] sm:$0xff] %vm5351, %v5161
      %5419 = vst.msk [vmem:[%s184 + $0x218] sm:$0xff] %vm5351, %v5162
      %5420 = vst.msk [vmem:[%s184 + $0x220] sm:$0xff] %vm5351, %v5163
      %5421 = vst.msk [vmem:[%s184 + $0x228] sm:$0xff] %vm5351, %v5164
      %5422 = vst.msk [vmem:[%s184 + $0x230] sm:$0xff] %vm5351, %v5165
      %5423 = vst.msk [vmem:[%s184 + $0x238] sm:$0xff] %vm5351, %v5166
      %5424 = vst.msk [vmem:[%s184 + $0x240] sm:$0xff] %vm5351, %v5167
      %5425 = vst.msk [vmem:[%s184 + $0x248] sm:$0xff] %vm5351, %v5168
      %5426 = vst.msk [vmem:[%s184 + $0x250] sm:$0xff] %vm5351, %v5169
      %5427 = vst.msk [vmem:[%s184 + $0x258] sm:$0xff] %vm5351, %v5170
      %5428 = vst.msk [vmem:[%s184 + $0x260] sm:$0xff] %vm5351, %v5171
      %5429 = vst.msk [vmem:[%s184 + $0x268] sm:$0xff] %vm5351, %v5172
      %5430 = vst.msk [vmem:[%s184 + $0x270] sm:$0xff] %vm5351, %v5173
      %5431 = vst.msk [vmem:[%s184 + $0x278] sm:$0xff] %vm5351, %v5174
      %5432 = vst.msk [vmem:[%s184 + $0x280] sm:$0xff] %vm5351, %v5175
      %5433 = vst.msk [vmem:[%s184 + $0x288] sm:$0xff] %vm5351, %v5176
      %5434 = vst.msk [vmem:[%s184 + $0x290] sm:$0xff] %vm5351, %v5177
      %5435 = vst.msk [vmem:[%s184 + $0x298] sm:$0xff] %vm5351, %v5178
      %5436 = vst.msk [vmem:[%s184 + $0x2a0] sm:$0xff] %vm5351, %v5179
      %5437 = vst.msk [vmem:[%s184 + $0x2a8] sm:$0xff] %vm5351, %v5180
      %5438 = vst.msk [vmem:[%s184 + $0x2b0] sm:$0xff] %vm5351, %v5181
      %5439 = vst.msk [vmem:[%s184 + $0x2b8] sm:$0xff] %vm5351, %v5182
      %5440 = vst.msk [vmem:[%s184 + $0x2c0] sm:$0xff] %vm5351, %v5183
      %5441 = vst.msk [vmem:[%s184 + $0x2c8] sm:$0xff] %vm5351, %v5184
      %5442 = vst.msk [vmem:[%s184 + $0x2d0] sm:$0xff] %vm5351, %v5185
      %5443 = vst.msk [vmem:[%s184 + $0x2d8] sm:$0xff] %vm5351, %v5186
      %5444 = vst.msk [vmem:[%s184 + $0x2e0] sm:$0xff] %vm5351, %v5187
      %5445 = vst.msk [vmem:[%s184 + $0x2e8] sm:$0xff] %vm5351, %v5188
      %5446 = vst.msk [vmem:[%s184 + $0x2f0] sm:$0xff] %vm5351, %v5189
      %5447 = vst.msk [vmem:[%s184 + $0x2f8] sm:$0xff] %vm5351, %v5190
      %5448 = vst.msk [vmem:[%s184 + $0x300] sm:$0xff] %vm5351, %v5191
      %5449 = vst.msk [vmem:[%s184 + $0x308] sm:$0xff] %vm5351, %v5192
      %5450 = vst.msk [vmem:[%s184 + $0x310] sm:$0xff] %vm5351, %v5193
      %5451 = vst.msk [vmem:[%s184 + $0x318] sm:$0xff] %vm5351, %v5194
      %5452 = vst.msk [vmem:[%s184 + $0x320] sm:$0xff] %vm5351, %v5195
      %5453 = vst.msk [vmem:[%s184 + $0x328] sm:$0xff] %vm5351, %v5196
      %5454 = vst.msk [vmem:[%s184 + $0x330] sm:$0xff] %vm5351, %v5197
      %5455 = vst.msk [vmem:[%s184 + $0x338] sm:$0xff] %vm5351, %v5198
      %5456 = vst.msk [vmem:[%s184 + $0x340] sm:$0xff] %vm5351, %v5199
      %5457 = vst.msk [vmem:[%s184 + $0x348] sm:$0xff] %vm5351, %v5200
      %5458 = vst.msk [vmem:[%s184 + $0x350] sm:$0xff] %vm5351, %v5201
      %5459 = vst.msk [vmem:[%s184 + $0x358] sm:$0xff] %vm5351, %v5202
      %5460 = vst.msk [vmem:[%s184 + $0x360] sm:$0xff] %vm5351, %v5203
      %5461 = vst.msk [vmem:[%s184 + $0x368] sm:$0xff] %vm5351, %v5204
      %5462 = vst.msk [vmem:[%s184 + $0x370] sm:$0xff] %vm5351, %v5205
      %5463 = vst.msk [vmem:[%s184 + $0x378] sm:$0xff] %vm5351, %v5206
      %5464 = vst.msk [vmem:[%s184 + $0x380] sm:$0xff] %vm5351, %v5207
      %5465 = vst.msk [vmem:[%s184 + $0x388] sm:$0xff] %vm5351, %v5208
      %5466 = vst.msk [vmem:[%s184 + $0x390] sm:$0xff] %vm5351, %v5209
      %5467 = vst.msk [vmem:[%s184 + $0x398] sm:$0xff] %vm5351, %v5210
      %5468 = vst.msk [vmem:[%s184 + $0x3a0] sm:$0xff] %vm5351, %v5211
      %5469 = vst.msk [vmem:[%s184 + $0x3a8] sm:$0xff] %vm5351, %v5212
      %5470 = vst.msk [vmem:[%s184 + $0x3b0] sm:$0xff] %vm5351, %v5213
      %5471 = vst.msk [vmem:[%s184 + $0x3b8] sm:$0xff] %vm5351, %v5214
      %5472 = vst.msk [vmem:[%s184 + $0x3c0] sm:$0xff] %vm5351, %v5215
      %5473 = vst.msk [vmem:[%s184 + $0x3c8] sm:$0xff] %vm5351, %v5216
      %5474 = vst.msk [vmem:[%s184 + $0x3d0] sm:$0xff] %vm5351, %v5217
      %5475 = vst.msk [vmem:[%s184 + $0x3d8] sm:$0xff] %vm5351, %v5218
      %5476 = vst.msk [vmem:[%s184 + $0x3e0] sm:$0xff] %vm5351, %v5219
      %5477 = vst.msk [vmem:[%s184 + $0x3e8] sm:$0xff] %vm5351, %v5220
      %5478 = vst.msk [vmem:[%s184 + $0x3f0] sm:$0xff] %vm5351, %v5221
      %5479 = vst.msk [vmem:[%s184 + $0x3f8] sm:$0xff] %vm5351, %v5222
      %5480 = vst.msk [vmem:[%s184 + $0x400] sm:$0xff] %vm5351, %v5223
      %5481 = vst.msk [vmem:[%s184 + $0x408] sm:$0xff] %vm5351, %v5224
      %5482 = vst.msk [vmem:[%s184 + $0x410] sm:$0xff] %vm5351, %v5225
      %5483 = vst.msk [vmem:[%s184 + $0x418] sm:$0xff] %vm5351, %v5226
      %5484 = vst.msk [vmem:[%s184 + $0x420] sm:$0xff] %vm5351, %v5227
      %5485 = vst.msk [vmem:[%s184 + $0x428] sm:$0xff] %vm5351, %v5228
      %5486 = vst.msk [vmem:[%s184 + $0x430] sm:$0xff] %vm5351, %v5229
      %5487 = vst.msk [vmem:[%s184 + $0x438] sm:$0xff] %vm5351, %v5230
      %5488 = vst.msk [vmem:[%s184 + $0x440] sm:$0xff] %vm5351, %v5231
      %5489 = vst.msk [vmem:[%s184 + $0x448] sm:$0xff] %vm5351, %v5232
      %5490 = vst.msk [vmem:[%s184 + $0x450] sm:$0xff] %vm5351, %v5233
      %5491 = vst.msk [vmem:[%s184 + $0x458] sm:$0xff] %vm5351, %v5234
      %5492 = vst.msk [vmem:[%s184 + $0x460] sm:$0xff] %vm5351, %v5235
      %5493 = vst.msk [vmem:[%s184 + $0x468] sm:$0xff] %vm5351, %v5236
      %5494 = vst.msk [vmem:[%s184 + $0x470] sm:$0xff] %vm5351, %v5237
      %5495 = vst.msk [vmem:[%s184 + $0x478] sm:$0xff] %vm5351, %v5238
      %5496 = vst.msk [vmem:[%s184 + $0x480] sm:$0xff] %vm5351, %v5239
      %5497 = vst.msk [vmem:[%s184 + $0x488] sm:$0xff] %vm5351, %v5240
      %5498 = vst.msk [vmem:[%s184 + $0x490] sm:$0xff] %vm5351, %v5241
      %5499 = vst.msk [vmem:[%s184 + $0x498] sm:$0xff] %vm5351, %v5242
      %5500 = vst.msk [vmem:[%s184 + $0x4a0] sm:$0xff] %vm5351, %v5243
      %5501 = vst.msk [vmem:[%s184 + $0x4a8] sm:$0xff] %vm5351, %v5244
      %5502 = vst.msk [vmem:[%s184 + $0x4b0] sm:$0xff] %vm5351, %v5245
      %5503 = vst.msk [vmem:[%s184 + $0x4b8] sm:$0xff] %vm5351, %v5246
      %5504 = vst.msk [vmem:[%s184 + $0x4c0] sm:$0xff] %vm5351, %v5247
      %5505 = vst.msk [vmem:[%s184 + $0x4c8] sm:$0xff] %vm5351, %v5248
      %5506 = vst.msk [vmem:[%s184 + $0x4d0] sm:$0xff] %vm5351, %v5249
      %5507 = vst.msk [vmem:[%s184 + $0x4d8] sm:$0xff] %vm5351, %v5250
      %5508 = vst.msk [vmem:[%s184 + $0x4e0] sm:$0xff] %vm5351, %v5251
      %5509 = vst.msk [vmem:[%s184 + $0x4e8] sm:$0xff] %vm5351, %v5252
      %5510 = vst.msk [vmem:[%s184 + $0x4f0] sm:$0xff] %vm5351, %v5253
      %5511 = vst.msk [vmem:[%s184 + $0x4f8] sm:$0xff] %vm5351, %v5254
      %5512 = vst.msk [vmem:[%s184 + $0x500] sm:$0xff] %vm5351, %v5255
      %5513 = vst.msk [vmem:[%s184 + $0x508] sm:$0xff] %vm5351, %v5256
      %5514 = vst.msk [vmem:[%s184 + $0x510] sm:$0xff] %vm5351, %v5257
      %5515 = vst.msk [vmem:[%s184 + $0x518] sm:$0xff] %vm5351, %v5258
      %5516 = vst.msk [vmem:[%s184 + $0x520] sm:$0xff] %vm5351, %v5259
      %5517 = vst.msk [vmem:[%s184 + $0x528] sm:$0xff] %vm5351, %v5260
      %5518 = vst.msk [vmem:[%s184 + $0x530] sm:$0xff] %vm5351, %v5261
      %5519 = vst.msk [vmem:[%s184 + $0x538] sm:$0xff] %vm5351, %v5262
      %5520 = vst.msk [vmem:[%s184 + $0x540] sm:$0xff] %vm5351, %v5263
      %5521 = vst.msk [vmem:[%s184 + $0x548] sm:$0xff] %vm5351, %v5264
      %5522 = vst.msk [vmem:[%s184 + $0x550] sm:$0xff] %vm5351, %v5265
      %5523 = vst.msk [vmem:[%s184 + $0x558] sm:$0xff] %vm5351, %v5266
      %5524 = vst.msk [vmem:[%s184 + $0x560] sm:$0xff] %vm5351, %v5267
      %5525 = vst.msk [vmem:[%s184 + $0x568] sm:$0xff] %vm5351, %v5268
      %5526 = vst.msk [vmem:[%s184 + $0x570] sm:$0xff] %vm5351, %v5269
      %5527 = vst.msk [vmem:[%s184 + $0x578] sm:$0xff] %vm5351, %v5270
      %5528 = vst.msk [vmem:[%s184 + $0x580] sm:$0xff] %vm5351, %v5271
      %5529 = vst.msk [vmem:[%s184 + $0x588] sm:$0xff] %vm5351, %v5272
      %5530 = vst.msk [vmem:[%s184 + $0x590] sm:$0xff] %vm5351, %v5273
      %5531 = vst.msk [vmem:[%s184 + $0x598] sm:$0xff] %vm5351, %v5274
      %5532 = vst.msk [vmem:[%s184 + $0x5a0] sm:$0xff] %vm5351, %v5275
      %5533 = vst.msk [vmem:[%s184 + $0x5a8] sm:$0xff] %vm5351, %v5276
      %5534 = vst.msk [vmem:[%s184 + $0x5b0] sm:$0xff] %vm5351, %v5277
      %5535 = vst.msk [vmem:[%s184 + $0x5b8] sm:$0xff] %vm5351, %v5278
      %5536 = vst.msk [vmem:[%s184 + $0x5c0] sm:$0xff] %vm5351, %v5279
      %5537 = vst.msk [vmem:[%s184 + $0x5c8] sm:$0xff] %vm5351, %v5280
      %5538 = vst.msk [vmem:[%s184 + $0x5d0] sm:$0xff] %vm5351, %v5281
      %5539 = vst.msk [vmem:[%s184 + $0x5d8] sm:$0xff] %vm5351, %v5282
      %5540 = vst.msk [vmem:[%s184 + $0x5e0] sm:$0xff] %vm5351, %v5283
      %5541 = vst.msk [vmem:[%s184 + $0x5e8] sm:$0xff] %vm5351, %v5284
      %5542 = vst.msk [vmem:[%s184 + $0x5f0] sm:$0xff] %vm5351, %v5285
      %5543 = vst.msk [vmem:[%s184 + $0x5f8] sm:$0xff] %vm5351, %v5286
      %5544 = vst.msk [vmem:[%s184 + $0x600] sm:$0xff] %vm5351, %v5287
      %5545 = vst.msk [vmem:[%s184 + $0x608] sm:$0xff] %vm5351, %v5288
      %5546 = vst.msk [vmem:[%s184 + $0x610] sm:$0xff] %vm5351, %v5289
      %5547 = vst.msk [vmem:[%s184 + $0x618] sm:$0xff] %vm5351, %v5290
      %5548 = vst.msk [vmem:[%s184 + $0x620] sm:$0xff] %vm5351, %v5291
      %5549 = vst.msk [vmem:[%s184 + $0x628] sm:$0xff] %vm5351, %v5292
      %5550 = vst.msk [vmem:[%s184 + $0x630] sm:$0xff] %vm5351, %v5293
      %5551 = vst.msk [vmem:[%s184 + $0x638] sm:$0xff] %vm5351, %v5294
      %5552 = vst.msk [vmem:[%s184 + $0x640] sm:$0xff] %vm5351, %v5295
      %5553 = vst.msk [vmem:[%s184 + $0x648] sm:$0xff] %vm5351, %v5296
      %5554 = vst.msk [vmem:[%s184 + $0x650] sm:$0xff] %vm5351, %v5297
      %5555 = vst.msk [vmem:[%s184 + $0x658] sm:$0xff] %vm5351, %v5298
      %5556 = vst.msk [vmem:[%s184 + $0x660] sm:$0xff] %vm5351, %v5299
      %5557 = vst.msk [vmem:[%s184 + $0x668] sm:$0xff] %vm5351, %v5300
      %5558 = vst.msk [vmem:[%s184 + $0x670] sm:$0xff] %vm5351, %v5301
      %5559 = vst.msk [vmem:[%s184 + $0x678] sm:$0xff] %vm5351, %v5302
      %5560 = vst.msk [vmem:[%s184 + $0x680] sm:$0xff] %vm5351, %v5303
      %5561 = vst.msk [vmem:[%s184 + $0x688] sm:$0xff] %vm5351, %v5304
      %5562 = vst.msk [vmem:[%s184 + $0x690] sm:$0xff] %vm5351, %v5305
      %5563 = vst.msk [vmem:[%s184 + $0x698] sm:$0xff] %vm5351, %v5306
      %5564 = vst.msk [vmem:[%s184 + $0x6a0] sm:$0xff] %vm5351, %v5307
      %5565 = vst.msk [vmem:[%s184 + $0x6a8] sm:$0xff] %vm5351, %v5308
      %5566 = vst.msk [vmem:[%s184 + $0x6b0] sm:$0xff] %vm5351, %v5309
      %5567 = vst.msk [vmem:[%s184 + $0x6b8] sm:$0xff] %vm5351, %v5310
      %5568 = vst.msk [vmem:[%s184 + $0x6c0] sm:$0xff] %vm5351, %v5311
      %5569 = vst.msk [vmem:[%s184 + $0x6c8] sm:$0xff] %vm5351, %v5312
      %5570 = vst.msk [vmem:[%s184 + $0x6d0] sm:$0xff] %vm5351, %v5313
      %5571 = vst.msk [vmem:[%s184 + $0x6d8] sm:$0xff] %vm5351, %v5314
      %5572 = vst.msk [vmem:[%s184 + $0x6e0] sm:$0xff] %vm5351, %v5315
      %5573 = vst.msk [vmem:[%s184 + $0x6e8] sm:$0xff] %vm5351, %v5316
      %5574 = vst.msk [vmem:[%s184 + $0x6f0] sm:$0xff] %vm5351, %v5317
      %5575 = vst.msk [vmem:[%s184 + $0x6f8] sm:$0xff] %vm5351, %v5318
      %5576 = vst.msk [vmem:[%s184 + $0x700] sm:$0xff] %vm5351, %v5319
      %5577 = vst.msk [vmem:[%s184 + $0x708] sm:$0xff] %vm5351, %v5320
      %5578 = vst.msk [vmem:[%s184 + $0x710] sm:$0xff] %vm5351, %v5321
      %5579 = vst.msk [vmem:[%s184 + $0x718] sm:$0xff] %vm5351, %v5322
      %5580 = vst.msk [vmem:[%s184 + $0x720] sm:$0xff] %vm5351, %v5323
      %5581 = vst.msk [vmem:[%s184 + $0x728] sm:$0xff] %vm5351, %v5324
      %5582 = vst.msk [vmem:[%s184 + $0x730] sm:$0xff] %vm5351, %v5325
      %5583 = vst.msk [vmem:[%s184 + $0x738] sm:$0xff] %vm5351, %v5326
      %5584 = vst.msk [vmem:[%s184 + $0x740] sm:$0xff] %vm5351, %v5327
      %5585 = vst.msk [vmem:[%s184 + $0x748] sm:$0xff] %vm5351, %v5328
      %5586 = vst.msk [vmem:[%s184 + $0x750] sm:$0xff] %vm5351, %v5329
      %5587 = vst.msk [vmem:[%s184 + $0x758] sm:$0xff] %vm5351, %v5330
      %5588 = vst.msk [vmem:[%s184 + $0x760] sm:$0xff] %vm5351, %v5331
      %5589 = vst.msk [vmem:[%s184 + $0x768] sm:$0xff] %vm5351, %v5332
      %5590 = vst.msk [vmem:[%s184 + $0x770] sm:$0xff] %vm5351, %v5333
      %5591 = vst.msk [vmem:[%s184 + $0x778] sm:$0xff] %vm5351, %v5334
      %5592 = vst.msk [vmem:[%s184 + $0x780] sm:$0xff] %vm5351, %v5335
      %5593 = vst.msk [vmem:[%s184 + $0x788] sm:$0xff] %vm5351, %v5336
      %5594 = vst.msk [vmem:[%s184 + $0x790] sm:$0xff] %vm5351, %v5337
      %5595 = vst.msk [vmem:[%s184 + $0x798] sm:$0xff] %vm5351, %v5338
      %5596 = vst.msk [vmem:[%s184 + $0x7a0] sm:$0xff] %vm5351, %v5339
      %5597 = vst.msk [vmem:[%s184 + $0x7a8] sm:$0xff] %vm5351, %v5340
      %5598 = vst.msk [vmem:[%s184 + $0x7b0] sm:$0xff] %vm5351, %v5341
      %5599 = vst.msk [vmem:[%s184 + $0x7b8] sm:$0xff] %vm5351, %v5342
      %5600 = vst.msk [vmem:[%s184 + $0x7c0] sm:$0xff] %vm5351, %v5343
      %5601 = vst.msk [vmem:[%s184 + $0x7c8] sm:$0xff] %vm5351, %v5344
      %5602 = vst.msk [vmem:[%s184 + $0x7d0] sm:$0xff] %vm5351, %v5345
      %5603 = vst.msk [vmem:[%s184 + $0x7d8] sm:$0xff] %vm5351, %v5346
      %5604 = vst.msk [vmem:[%s184 + $0x7e0] sm:$0xff] %vm5351, %v5347
      %5605 = vst.msk [vmem:[%s184 + $0x7e8] sm:$0xff] %vm5351, %v5348
      %5606 = vst.msk [vmem:[%s184 + $0x7f0] sm:$0xff] %vm5351, %v5349
      %5607 = vst.msk [vmem:[%s184 + $0x7f8] sm:$0xff] %vm5351, %v5350
      %s5608 = smul.u32 256, %s18
      %p5609 = scmp.lt.s32.totalorder %s17, 1
      %s5610 = scalar_select %p5609, %s17, 1
      %p5611 = scmp.lt.s32.totalorder %s5608, 2047
      %s5612 = scalar_select %p5611, %s5608, 2047
      %s5613 = smul.addr %s5610, 2048
      %s5614 = sadd.s32 %s5612, %s5613
      %s5615 = smul.addr %s5614, 8
      %s5616 = scalar_lea.vmem %s2, %s5615
      // Predicated region
      $region29: #{g_forward.13} parent=27 // pred_check
        %p5617 = pneg %p94
      $region30: #{g_forward.13} parent=27 // pred_check_branch
        %5619 = sbr.rel (%p5617) target = $region32
      $region31: #{g_forward.13} parent=27 // pred_region
        %s5620 = smul.u32 256, %s18
      $region32: #{g_forward.13} parent=27 // pred_fallthru
        _
    $region28: #{g_forward.13} parent=5 // pred_fallthru
      _
    %p5621 = scmp.le.s32.totalorder 2, %s8
    // Predicated region
    $region33: #{g_forward.13} parent=5 // pred_check
      %p5622 = pneg %p5621
    $region34: #{g_forward.13} parent=5 // pred_check_branch
      %5624 = sbr.rel (%p5622) target = $region36
    $region35: #{g_forward.13} parent=5 // pred_region
      %s5625 = ssub.s32 %s8, 2
      // Predicated region
      $region37: #{g_forward.13} parent=35 // pred_check
        %p5626 = pneg %p100
      $region38: #{g_forward.13} parent=35 // pred_check_branch
        %5628 = sbr.rel (%p5626) target = $region40
      $region39: #{g_forward.13} parent=35 // pred_region
        %s5629 = smul.u32 256, %s20
        %p5630 = scmp.lt.s32.totalorder %s19, 1
        %s5631 = scalar_select %p5630, %s19, 1
        %p5632 = scmp.lt.s32.totalorder %s5629, 2047
        %s5633 = scalar_select %p5632, %s5629, 2047
        %s5634 = smul.addr %s5631, 2048
        %s5635 = sadd.s32 %s5633, %s5634
        %s5636 = smul.addr %s5635, 8
        %s5637 = scalar_lea.vmem %s2, %s5636
      $region40: #{g_forward.13} parent=35 // pred_fallthru
        _
    $region36: #{g_forward.13} parent=5 // pred_fallthru
      _
  $region6: #{g_forward.13} parent=0 // loop_footer
    %s12 = sadd.s32 1, %s8
  $region7: #{g_forward.13} parent=0 // loop_footer_branch
    %7 = sbr.rel target = $region3
  $region8: #{g_forward.13} parent=0 // loop_exit
    _

</llo_original>
